<compile_context>
chip_gen: v5e
topology: v5e:2x2
jax: 0.10.0
libtpu: 0.0.40
codegen_flags: <defaults>
</compile_context>

<pallas_src>
import functools

import jax
import jax.numpy as jnp
from jax.experimental import pallas as pl
from jax.experimental.pallas import tpu as pltpu

LANE = 128  # TPU lane width; channel dims are padded to a multiple of this


def _round_up(x, m):
    return ((x + m - 1) // m) * m


def _double_conv_kernel(x_ref, w1_ref, w2_ref, shift_ref, o_ref, xp_ref,
                        pat_ref, *, H, W, Cp):
    """Fused (3x3 conv -> BN(eval) -> ReLU) x 2 for one batch element.

    x_ref:     (1, H, W, Cp)    bf16 input, channels zero-padded to Cp
    w1_ref:    (9*Cp, Cp)       bf16 conv1 weights (BN scale folded in),
                                row index = tap*Cp + c_in
    w2_ref:    (9*Cp, Cp)       bf16 conv2 weights (BN scale folded in)
    shift_ref: (2, Cp)          f32 folded BN shifts: [shift1, shift2]
    o_ref:     (1, H, W, Cp)    f32 output (lane-dense, Cp % 128 == 0)
    xp_ref:    (H+2, W+2, Cp)   bf16 scratch: zero-padded activation plane
    pat_ref:   (H*W, 9*Cp)      bf16 scratch: im2col patches
    """
    # ---- in-kernel zero padding (padding=1): zero only the 1-px border ring.
    # The interior is fully overwritten below, so no full-plane memset needed.
    zrow = jnp.zeros((1, W + 2, Cp), xp_ref.dtype)
    zcol = jnp.zeros((H, 1, Cp), xp_ref.dtype)
    xp_ref[0:1, :, :] = zrow
    xp_ref[H + 1:H + 2, :, :] = zrow
    xp_ref[1:H + 1, 0:1, :] = zcol
    xp_ref[1:H + 1, W + 1:W + 2, :] = zcol

    # Interior <- input plane.
    xp_ref[1:H + 1, 1:W + 1, :] = x_ref[0]

    def build_patches():
        # im2col: column block `tap` holds the (dy, dx)-shifted window.
        for dy in range(3):
            for dx in range(3):
                tap = dy * 3 + dx
                win = xp_ref[dy:dy + H, dx:dx + W, :]            # (H, W, Cp)
                pat_ref[:, tap * Cp:(tap + 1) * Cp] = win.reshape(H * W, Cp)

    def conv_bn_relu(w_ref, row):
        build_patches()
        # One MXU matmul per conv: (H*W, 9*Cp) @ (9*Cp, Cp), bf16 in, f32 acc.
        acc = jnp.dot(pat_ref[...], w_ref[...],
                      preferred_element_type=jnp.float32)        # (H*W, Cp) f32
        shift = shift_ref[row:row + 1, :]                        # (1, Cp)
        # BN scale already folded into the weights -> add + ReLU only.
        return jnp.maximum(acc + shift, 0.0)

    # Layer 1: conv + BN + ReLU; intermediate kept in VMEM (no HBM writeback).
    h = conv_bn_relu(w1_ref, 0)
    xp_ref[1:H + 1, 1:W + 1, :] = h.astype(jnp.bfloat16).reshape(H, W, Cp)

    # Layer 2: conv + BN + ReLU; lane-dense store to the output block.
    y = conv_bn_relu(w2_ref, 1)
    o_ref[0] = y.reshape(H, W, Cp).astype(o_ref.dtype)


def _fold_bn(conv_bias, gamma, beta, mean, var, eps=1e-5):
    s = gamma * jax.lax.rsqrt(var + eps)          # per-channel scale
    t = beta - mean * s + conv_bias * s           # per-channel shift
    return s, t


def double_conv(x_nchw, params):
    """Matches DoubleConv.forward (eval-mode BN): NCHW float32 in / out."""
    N, C_in, H, W = x_nchw.shape
    C_out = params["w1"].shape[-1]
    Cp = max(_round_up(C_in, LANE), _round_up(C_out, LANE))

    # ---- glue (outside the kernel): layout, channel padding, BN folding ----
    x = jnp.transpose(x_nchw, (0, 2, 3, 1))                       # NCHW -> NHWC
    x = jnp.pad(x, ((0, 0), (0, 0), (0, 0), (0, Cp - C_in))).astype(jnp.bfloat16)

    s1, t1 = _fold_bn(params["b1"], params["g1"], params["be1"],
                      params["m1"], params["v1"])
    s2, t2 = _fold_bn(params["b2"], params["g2"], params["be2"],
                      params["m2"], params["v2"])

    def prep_w(w_hwio, scale):                                    # (3,3,ci,co)
        # Fold BN per-output-channel scale into the weights (exact in f32).
        w = w_hwio * scale[None, None, None, :]
        ci, co = w.shape[2], w.shape[3]
        wp = jnp.pad(w, ((0, 0), (0, 0), (0, Cp - ci), (0, Cp - co)))
        return wp.reshape(9 * Cp, Cp).astype(jnp.bfloat16)        # row = tap*Cp + ci

    w1 = prep_w(params["w1"], s1)
    w2 = prep_w(params["w2"], s2)

    padc = lambda v: jnp.pad(v, (0, Cp - v.shape[0]))
    shifts = jnp.stack([padc(t1), padc(t2)]).astype(jnp.float32)  # (2, Cp)

    kernel = functools.partial(_double_conv_kernel, H=H, W=W, Cp=Cp)

    out = pl.pallas_call(
        kernel,
        out_shape=jax.ShapeDtypeStruct((N, H, W, Cp), jnp.float32),
        grid_spec=pltpu.PrefetchScalarGridSpec(
            num_scalar_prefetch=0,
            grid=(N,),
            in_specs=[
                pl.BlockSpec((1, H, W, Cp), lambda n: (n, 0, 0, 0)),
                # constant index_map -> weights / shifts stay resident (no re-DMA)
                pl.BlockSpec((9 * Cp, Cp), lambda n: (0, 0)),
                pl.BlockSpec((9 * Cp, Cp), lambda n: (0, 0)),
                pl.BlockSpec((2, Cp), lambda n: (0, 0)),
            ],
            out_specs=pl.BlockSpec((1, H, W, Cp), lambda n: (n, 0, 0, 0)),
            scratch_shapes=[
                pltpu.VMEM((H + 2, W + 2, Cp), jnp.bfloat16),     # padded plane
                pltpu.VMEM((H * W, 9 * Cp), jnp.bfloat16),        # im2col patches
            ],
        ),
        compiler_params=pltpu.CompilerParams(
            # parallel batch axis: shards across v7x's 2 TCs, no-op on v5e/v6e
            dimension_semantics=("parallel",)),
    )(x, w1, w2, shifts)

    return jnp.transpose(out[..., :C_out], (0, 3, 1, 2))          # NHWC -> NCHW


def _reference_double_conv(x_nchw, params):
    """Pure-JAX f32 reference (lax.conv, NCHW/OIHW) for validation."""
    def conv_bn_relu(x, w_hwio, bias, g, be, m, v):
        w_oihw = jnp.transpose(w_hwio, (3, 2, 0, 1))
        y = jax.lax.conv_general_dilated(
            x, w_oihw, window_strides=(1, 1), padding=((1, 1), (1, 1)),
            dimension_numbers=("NCHW", "OIHW", "NCHW"))
        y = y + bias[None, :, None, None]
        y = (y - m[None, :, None, None]) * (g / jnp.sqrt(v + 1e-5))[None, :, None, None] \
            + be[None, :, None, None]
        return jnp.maximum(y, 0.0)

    h = conv_bn_relu(x_nchw, params["w1"], params["b1"], params["g1"],
                     params["be1"], params["m1"], params["v1"])
    return conv_bn_relu(h, params["w2"], params["b2"], params["g2"],
                        params["be2"], params["m2"], params["v2"])


def init_params(key, in_ch, out_ch):
    ks = jax.random.split(key, 12)
    f32 = jnp.float32
    return {
        # conv weights in HWIO layout (3, 3, Cin, Cout)
        "w1": 0.1 * jax.random.normal(ks[0], (3, 3, in_ch, out_ch), f32),
        "b1": 0.05 * jax.random.normal(ks[1], (out_ch,), f32),
        "g1": 1.0 + 0.1 * jax.random.normal(ks[2], (out_ch,), f32),
        "be1": 0.1 * jax.random.normal(ks[3], (out_ch,), f32),
        "m1": 0.1 * jax.random.normal(ks[4], (out_ch,), f32),
        "v1": 1.0 + 0.1 * jax.random.uniform(ks[5], (out_ch,), f32),
        "w2": 0.1 * jax.random.normal(ks[6], (3, 3, out_ch, out_ch), f32),
        "b2": 0.05 * jax.random.normal(ks[7], (out_ch,), f32),
        "g2": 1.0 + 0.1 * jax.random.normal(ks[8], (out_ch,), f32),
        "be2": 0.1 * jax.random.normal(ks[9], (out_ch,), f32),
        "m2": 0.1 * jax.random.normal(ks[10], (out_ch,), f32),
        "v2": 1.0 + 0.1 * jax.random.uniform(ks[11], (out_ch,), f32),
    }


if __name__ == "__main__":
    key = jax.random.PRNGKey(0)
    k_x, k_p = jax.random.split(key)

    N, in_ch, out_ch, H, W = 2, 4, 8, 16, 16
    x = jax.random.normal(k_x, (N, in_ch, H, W), jnp.float32)  # NCHW like PyTorch
    params = init_params(k_p, in_ch, out_ch)

    out = jax.block_until_ready(double_conv(x, params))
    ref = jax.block_until_ready(_reference_double_conv(x, params))

    assert out.shape == (N, out_ch, H, W), out.shape
    # bf16 matmul path -> relaxed tolerance vs the f32 reference.
    assert jnp.allclose(out, ref, atol=5e-2, rtol=5e-2), \
        f"max err {jnp.max(jnp.abs(out - ref))}"
    print("KERNEL_OK")
</pallas_src>

<mosaic_0001>
module attributes {stable_mosaic.version = 11 : i64} {
  func.func @_double_conv_kernel(%arg0: i32, %arg1: memref<1x16x16x128xbf16, #tpu.memory_space<vmem>>, %arg2: memref<1152x128xbf16, #tpu.memory_space<vmem>>, %arg3: memref<1152x128xbf16, #tpu.memory_space<vmem>>, %arg4: memref<2x128xf32, #tpu.memory_space<vmem>>, %arg5: memref<1x16x16x128xf32, #tpu.memory_space<vmem>>, %arg6: memref<18x18x128xbf16, #tpu.memory_space<vmem>>, %arg7: memref<256x1152xbf16, #tpu.memory_space<vmem>>) attributes {dimension_semantics = [#tpu.dimension_semantics<parallel>], iteration_bounds = array<i64: 2>, scalar_prefetch = 0 : i64, scratch_operands = 2 : i64, tpu.core_type = #tpu.core_type<tc>, window_params = [{transform_indices = @transform_0, window_bounds = array<i64: 1, 16, 16, 128>}, {pipeline_mode = #tpu.pipeline_mode<synchronous>, transform_indices = @transform_1, window_bounds = array<i64: 1152, 128>}, {pipeline_mode = #tpu.pipeline_mode<synchronous>, transform_indices = @transform_2, window_bounds = array<i64: 1152, 128>}, {pipeline_mode = #tpu.pipeline_mode<synchronous>, transform_indices = @transform_3, window_bounds = array<i64: 2, 128>}, {transform_indices = @transform_4, window_bounds = array<i64: 1, 16, 16, 128>}]} {
    %cst = arith.constant 0.000000e+00 : bf16
    %0 = vector.broadcast %cst : bf16 to vector<1x18x128xbf16>
    %cst_0 = arith.constant 0.000000e+00 : bf16
    %1 = vector.broadcast %cst_0 : bf16 to vector<16x1x128xbf16>
    %c0 = arith.constant 0 : index
    %c0_1 = arith.constant 0 : index
    %c0_2 = arith.constant 0 : index
    %2 = vector.load %arg6[%c0, %c0_1, %c0_2] : memref<18x18x128xbf16, #tpu.memory_space<vmem>>, vector<1x18x128xbf16>
    tpu.vector_store %arg6[%c0, %c0_1, %c0_2], %0 {strides = array<i32>} : memref<18x18x128xbf16, #tpu.memory_space<vmem>>, vector<1x18x128xbf16>,
    %c17 = arith.constant 17 : index
    %c0_3 = arith.constant 0 : index
    %c0_4 = arith.constant 0 : index
    %3 = vector.load %arg6[%c17, %c0_3, %c0_4] : memref<18x18x128xbf16, #tpu.memory_space<vmem>>, vector<1x18x128xbf16>
    tpu.vector_store %arg6[%c17, %c0_3, %c0_4], %0 {strides = array<i32>} : memref<18x18x128xbf16, #tpu.memory_space<vmem>>, vector<1x18x128xbf16>,
    %c1 = arith.constant 1 : index
    %c0_5 = arith.constant 0 : index
    %c0_6 = arith.constant 0 : index
    %4 = vector.load %arg6[%c1, %c0_5, %c0_6] : memref<18x18x128xbf16, #tpu.memory_space<vmem>>, vector<16x1x128xbf16>
    tpu.vector_store %arg6[%c1, %c0_5, %c0_6], %1 {strides = array<i32>} : memref<18x18x128xbf16, #tpu.memory_space<vmem>>, vector<16x1x128xbf16>,
    %c1_7 = arith.constant 1 : index
    %c17_8 = arith.constant 17 : index
    %c0_9 = arith.constant 0 : index
    %5 = vector.load %arg6[%c1_7, %c17_8, %c0_9] : memref<18x18x128xbf16, #tpu.memory_space<vmem>>, vector<16x1x128xbf16>
    tpu.vector_store %arg6[%c1_7, %c17_8, %c0_9], %1 {strides = array<i32>} : memref<18x18x128xbf16, #tpu.memory_space<vmem>>, vector<16x1x128xbf16>,
    %c0_10 = arith.constant 0 : index
    %c0_11 = arith.constant 0 : index
    %c0_12 = arith.constant 0 : index
    %c0_13 = arith.constant 0 : index
    %6 = vector.load %arg1[%c0_10, %c0_11, %c0_12, %c0_13] : memref<1x16x16x128xbf16, #tpu.memory_space<vmem>>, vector<1x16x16x128xbf16>
    %7 = vector.shape_cast %6 : vector<1x16x16x128xbf16> to vector<16x16x128xbf16>
    %c1_14 = arith.constant 1 : index
    %c1_15 = arith.constant 1 : index
    %c0_16 = arith.constant 0 : index
    %8 = vector.load %arg6[%c1_14, %c1_15, %c0_16] : memref<18x18x128xbf16, #tpu.memory_space<vmem>>, vector<16x16x128xbf16>
    tpu.vector_store %arg6[%c1_14, %c1_15, %c0_16], %7 {strides = array<i32>} : memref<18x18x128xbf16, #tpu.memory_space<vmem>>, vector<16x16x128xbf16>,
    %c0_17 = arith.constant 0 : index
    %c0_18 = arith.constant 0 : index
    %c0_19 = arith.constant 0 : index
    %9 = vector.load %arg6[%c0_17, %c0_18, %c0_19] : memref<18x18x128xbf16, #tpu.memory_space<vmem>>, vector<16x16x128xbf16>
    %10 = vector.shape_cast %9 : vector<16x16x128xbf16> to vector<256x128xbf16>
    %c0_20 = arith.constant 0 : index
    %c0_21 = arith.constant 0 : index
    %11 = vector.load %arg7[%c0_20, %c0_21] : memref<256x1152xbf16, #tpu.memory_space<vmem>>, vector<256x128xbf16>
    tpu.vector_store %arg7[%c0_20, %c0_21], %10 {strides = array<i32>} : memref<256x1152xbf16, #tpu.memory_space<vmem>>, vector<256x128xbf16>,
    %c0_22 = arith.constant 0 : index
    %c1_23 = arith.constant 1 : index
    %c0_24 = arith.constant 0 : index
    %12 = vector.load %arg6[%c0_22, %c1_23, %c0_24] : memref<18x18x128xbf16, #tpu.memory_space<vmem>>, vector<16x16x128xbf16>
    %13 = vector.shape_cast %12 : vector<16x16x128xbf16> to vector<256x128xbf16>
    %c0_25 = arith.constant 0 : index
    %c128 = arith.constant 128 : index
    %14 = vector.load %arg7[%c0_25, %c128] : memref<256x1152xbf16, #tpu.memory_space<vmem>>, vector<256x128xbf16>
    tpu.vector_store %arg7[%c0_25, %c128], %13 {strides = array<i32>} : memref<256x1152xbf16, #tpu.memory_space<vmem>>, vector<256x128xbf16>,
    %c0_26 = arith.constant 0 : index
    %c2 = arith.constant 2 : index
    %c0_27 = arith.constant 0 : index
    %15 = vector.load %arg6[%c0_26, %c2, %c0_27] : memref<18x18x128xbf16, #tpu.memory_space<vmem>>, vector<16x16x128xbf16>
    %16 = vector.shape_cast %15 : vector<16x16x128xbf16> to vector<256x128xbf16>
    %c0_28 = arith.constant 0 : index
    %c256 = arith.constant 256 : index
    %17 = vector.load %arg7[%c0_28, %c256] : memref<256x1152xbf16, #tpu.memory_space<vmem>>, vector<256x128xbf16>
    tpu.vector_store %arg7[%c0_28, %c256], %16 {strides = array<i32>} : memref<256x1152xbf16, #tpu.memory_space<vmem>>, vector<256x128xbf16>,
    %c1_29 = arith.constant 1 : index
    %c0_30 = arith.constant 0 : index
    %c0_31 = arith.constant 0 : index
    %18 = vector.load %arg6[%c1_29, %c0_30, %c0_31] : memref<18x18x128xbf16, #tpu.memory_space<vmem>>, vector<16x16x128xbf16>
    %19 = vector.shape_cast %18 : vector<16x16x128xbf16> to vector<256x128xbf16>
    %c0_32 = arith.constant 0 : index
    %c384 = arith.constant 384 : index
    %20 = vector.load %arg7[%c0_32, %c384] : memref<256x1152xbf16, #tpu.memory_space<vmem>>, vector<256x128xbf16>
    tpu.vector_store %arg7[%c0_32, %c384], %19 {strides = array<i32>} : memref<256x1152xbf16, #tpu.memory_space<vmem>>, vector<256x128xbf16>,
    %c1_33 = arith.constant 1 : index
    %c1_34 = arith.constant 1 : index
    %c0_35 = arith.constant 0 : index
    %21 = vector.load %arg6[%c1_33, %c1_34, %c0_35] : memref<18x18x128xbf16, #tpu.memory_space<vmem>>, vector<16x16x128xbf16>
    %22 = vector.shape_cast %21 : vector<16x16x128xbf16> to vector<256x128xbf16>
    %c0_36 = arith.constant 0 : index
    %c512 = arith.constant 512 : index
    %23 = vector.load %arg7[%c0_36, %c512] : memref<256x1152xbf16, #tpu.memory_space<vmem>>, vector<256x128xbf16>
    tpu.vector_store %arg7[%c0_36, %c512], %22 {strides = array<i32>} : memref<256x1152xbf16, #tpu.memory_space<vmem>>, vector<256x128xbf16>,
    %c1_37 = arith.constant 1 : index
    %c2_38 = arith.constant 2 : index
    %c0_39 = arith.constant 0 : index
    %24 = vector.load %arg6[%c1_37, %c2_38, %c0_39] : memref<18x18x128xbf16, #tpu.memory_space<vmem>>, vector<16x16x128xbf16>
    %25 = vector.shape_cast %24 : vector<16x16x128xbf16> to vector<256x128xbf16>
    %c0_40 = arith.constant 0 : index
    %c640 = arith.constant 640 : index
    %26 = vector.load %arg7[%c0_40, %c640] : memref<256x1152xbf16, #tpu.memory_space<vmem>>, vector<256x128xbf16>
    tpu.vector_store %arg7[%c0_40, %c640], %25 {strides = array<i32>} : memref<256x1152xbf16, #tpu.memory_space<vmem>>, vector<256x128xbf16>,
    %c2_41 = arith.constant 2 : index
    %c0_42 = arith.constant 0 : index
    %c0_43 = arith.constant 0 : index
    %27 = vector.load %arg6[%c2_41, %c0_42, %c0_43] : memref<18x18x128xbf16, #tpu.memory_space<vmem>>, vector<16x16x128xbf16>
    %28 = vector.shape_cast %27 : vector<16x16x128xbf16> to vector<256x128xbf16>
    %c0_44 = arith.constant 0 : index
    %c768 = arith.constant 768 : index
    %29 = vector.load %arg7[%c0_44, %c768] : memref<256x1152xbf16, #tpu.memory_space<vmem>>, vector<256x128xbf16>
    tpu.vector_store %arg7[%c0_44, %c768], %28 {strides = array<i32>} : memref<256x1152xbf16, #tpu.memory_space<vmem>>, vector<256x128xbf16>,
    %c2_45 = arith.constant 2 : index
    %c1_46 = arith.constant 1 : index
    %c0_47 = arith.constant 0 : index
    %30 = vector.load %arg6[%c2_45, %c1_46, %c0_47] : memref<18x18x128xbf16, #tpu.memory_space<vmem>>, vector<16x16x128xbf16>
    %31 = vector.shape_cast %30 : vector<16x16x128xbf16> to vector<256x128xbf16>
    %c0_48 = arith.constant 0 : index
    %c896 = arith.constant 896 : index
    %32 = vector.load %arg7[%c0_48, %c896] : memref<256x1152xbf16, #tpu.memory_space<vmem>>, vector<256x128xbf16>
    tpu.vector_store %arg7[%c0_48, %c896], %31 {strides = array<i32>} : memref<256x1152xbf16, #tpu.memory_space<vmem>>, vector<256x128xbf16>,
    %c2_49 = arith.constant 2 : index
    %c2_50 = arith.constant 2 : index
    %c0_51 = arith.constant 0 : index
    %33 = vector.load %arg6[%c2_49, %c2_50, %c0_51] : memref<18x18x128xbf16, #tpu.memory_space<vmem>>, vector<16x16x128xbf16>
    %34 = vector.shape_cast %33 : vector<16x16x128xbf16> to vector<256x128xbf16>
    %c0_52 = arith.constant 0 : index
    %c1024 = arith.constant 1024 : index
    %35 = vector.load %arg7[%c0_52, %c1024] : memref<256x1152xbf16, #tpu.memory_space<vmem>>, vector<256x128xbf16>
    tpu.vector_store %arg7[%c0_52, %c1024], %34 {strides = array<i32>} : memref<256x1152xbf16, #tpu.memory_space<vmem>>, vector<256x128xbf16>,
    %c0_53 = arith.constant 0 : index
    %c0_54 = arith.constant 0 : index
    %36 = vector.load %arg7[%c0_53, %c0_54] : memref<256x1152xbf16, #tpu.memory_space<vmem>>, vector<256x1152xbf16>
    %c0_55 = arith.constant 0 : index
    %c0_56 = arith.constant 0 : index
    %37 = vector.load %arg2[%c0_55, %c0_56] : memref<1152x128xbf16, #tpu.memory_space<vmem>>, vector<1152x128xbf16>
    %cst_57 = arith.constant dense<0.000000e+00> : vector<256x128xf32>
    %38 = tpu.matmul %36, %37, %cst_57 {dimension_numbers = #tpu.dot_dimension_numbers<[1], [0], [0], [1], [0, 0, 1, 1], [], []>} : vector<256x1152xbf16>, vector<1152x128xbf16>, vector<256x128xf32> -> vector<256x128xf32>
    %c0_58 = arith.constant 0 : index
    %c0_59 = arith.constant 0 : index
    %39 = vector.load %arg4[%c0_58, %c0_59] : memref<2x128xf32, #tpu.memory_space<vmem>>, vector<1x128xf32>
    %40 = vector.broadcast %39 : vector<1x128xf32> to vector<256x128xf32>
    %41 = arith.addf %38, %40 : vector<256x128xf32>
    %cst_60 = arith.constant 0.000000e+00 : f32
    %42 = vector.broadcast %cst_60 : f32 to vector<256x128xf32>
    %43 = arith.maximumf %41, %42 : vector<256x128xf32>
    %44 = arith.truncf %43 : vector<256x128xf32> to vector<256x128xbf16>
    %45 = vector.shape_cast %44 : vector<256x128xbf16> to vector<16x16x128xbf16>
    %c1_61 = arith.constant 1 : index
    %c1_62 = arith.constant 1 : index
    %c0_63 = arith.constant 0 : index
    %46 = vector.load %arg6[%c1_61, %c1_62, %c0_63] : memref<18x18x128xbf16, #tpu.memory_space<vmem>>, vector<16x16x128xbf16>
    tpu.vector_store %arg6[%c1_61, %c1_62, %c0_63], %45 {strides = array<i32>} : memref<18x18x128xbf16, #tpu.memory_space<vmem>>, vector<16x16x128xbf16>,
    %c0_64 = arith.constant 0 : index
    %c0_65 = arith.constant 0 : index
    %c0_66 = arith.constant 0 : index
    %47 = vector.load %arg6[%c0_64, %c0_65, %c0_66] : memref<18x18x128xbf16, #tpu.memory_space<vmem>>, vector<16x16x128xbf16>
    %48 = vector.shape_cast %47 : vector<16x16x128xbf16> to vector<256x128xbf16>
    %c0_67 = arith.constant 0 : index
    %c0_68 = arith.constant 0 : index
    %49 = vector.load %arg7[%c0_67, %c0_68] : memref<256x1152xbf16, #tpu.memory_space<vmem>>, vector<256x128xbf16>
    tpu.vector_store %arg7[%c0_67, %c0_68], %48 {strides = array<i32>} : memref<256x1152xbf16, #tpu.memory_space<vmem>>, vector<256x128xbf16>,
    %c0_69 = arith.constant 0 : index
    %c1_70 = arith.constant 1 : index
    %c0_71 = arith.constant 0 : index
    %50 = vector.load %arg6[%c0_69, %c1_70, %c0_71] : memref<18x18x128xbf16, #tpu.memory_space<vmem>>, vector<16x16x128xbf16>
    %51 = vector.shape_cast %50 : vector<16x16x128xbf16> to vector<256x128xbf16>
    %c0_72 = arith.constant 0 : index
    %c128_73 = arith.constant 128 : index
    %52 = vector.load %arg7[%c0_72, %c128_73] : memref<256x1152xbf16, #tpu.memory_space<vmem>>, vector<256x128xbf16>
    tpu.vector_store %arg7[%c0_72, %c128_73], %51 {strides = array<i32>} : memref<256x1152xbf16, #tpu.memory_space<vmem>>, vector<256x128xbf16>,
    %c0_74 = arith.constant 0 : index
    %c2_75 = arith.constant 2 : index
    %c0_76 = arith.constant 0 : index
    %53 = vector.load %arg6[%c0_74, %c2_75, %c0_76] : memref<18x18x128xbf16, #tpu.memory_space<vmem>>, vector<16x16x128xbf16>
    %54 = vector.shape_cast %53 : vector<16x16x128xbf16> to vector<256x128xbf16>
    %c0_77 = arith.constant 0 : index
    %c256_78 = arith.constant 256 : index
    %55 = vector.load %arg7[%c0_77, %c256_78] : memref<256x1152xbf16, #tpu.memory_space<vmem>>, vector<256x128xbf16>
    tpu.vector_store %arg7[%c0_77, %c256_78], %54 {strides = array<i32>} : memref<256x1152xbf16, #tpu.memory_space<vmem>>, vector<256x128xbf16>,
    %c1_79 = arith.constant 1 : index
    %c0_80 = arith.constant 0 : index
    %c0_81 = arith.constant 0 : index
    %56 = vector.load %arg6[%c1_79, %c0_80, %c0_81] : memref<18x18x128xbf16, #tpu.memory_space<vmem>>, vector<16x16x128xbf16>
    %57 = vector.shape_cast %56 : vector<16x16x128xbf16> to vector<256x128xbf16>
    %c0_82 = arith.constant 0 : index
    %c384_83 = arith.constant 384 : index
    %58 = vector.load %arg7[%c0_82, %c384_83] : memref<256x1152xbf16, #tpu.memory_space<vmem>>, vector<256x128xbf16>
    tpu.vector_store %arg7[%c0_82, %c384_83], %57 {strides = array<i32>} : memref<256x1152xbf16, #tpu.memory_space<vmem>>, vector<256x128xbf16>,
    %c1_84 = arith.constant 1 : index
    %c1_85 = arith.constant 1 : index
    %c0_86 = arith.constant 0 : index
    %59 = vector.load %arg6[%c1_84, %c1_85, %c0_86] : memref<18x18x128xbf16, #tpu.memory_space<vmem>>, vector<16x16x128xbf16>
    %60 = vector.shape_cast %59 : vector<16x16x128xbf16> to vector<256x128xbf16>
    %c0_87 = arith.constant 0 : index
    %c512_88 = arith.constant 512 : index
    %61 = vector.load %arg7[%c0_87, %c512_88] : memref<256x1152xbf16, #tpu.memory_space<vmem>>, vector<256x128xbf16>
    tpu.vector_store %arg7[%c0_87, %c512_88], %60 {strides = array<i32>} : memref<256x1152xbf16, #tpu.memory_space<vmem>>, vector<256x128xbf16>,
    %c1_89 = arith.constant 1 : index
    %c2_90 = arith.constant 2 : index
    %c0_91 = arith.constant 0 : index
    %62 = vector.load %arg6[%c1_89, %c2_90, %c0_91] : memref<18x18x128xbf16, #tpu.memory_space<vmem>>, vector<16x16x128xbf16>
    %63 = vector.shape_cast %62 : vector<16x16x128xbf16> to vector<256x128xbf16>
    %c0_92 = arith.constant 0 : index
    %c640_93 = arith.constant 640 : index
    %64 = vector.load %arg7[%c0_92, %c640_93] : memref<256x1152xbf16, #tpu.memory_space<vmem>>, vector<256x128xbf16>
    tpu.vector_store %arg7[%c0_92, %c640_93], %63 {strides = array<i32>} : memref<256x1152xbf16, #tpu.memory_space<vmem>>, vector<256x128xbf16>,
    %c2_94 = arith.constant 2 : index
    %c0_95 = arith.constant 0 : index
    %c0_96 = arith.constant 0 : index
    %65 = vector.load %arg6[%c2_94, %c0_95, %c0_96] : memref<18x18x128xbf16, #tpu.memory_space<vmem>>, vector<16x16x128xbf16>
    %66 = vector.shape_cast %65 : vector<16x16x128xbf16> to vector<256x128xbf16>
    %c0_97 = arith.constant 0 : index
    %c768_98 = arith.constant 768 : index
    %67 = vector.load %arg7[%c0_97, %c768_98] : memref<256x1152xbf16, #tpu.memory_space<vmem>>, vector<256x128xbf16>
    tpu.vector_store %arg7[%c0_97, %c768_98], %66 {strides = array<i32>} : memref<256x1152xbf16, #tpu.memory_space<vmem>>, vector<256x128xbf16>,
    %c2_99 = arith.constant 2 : index
    %c1_100 = arith.constant 1 : index
    %c0_101 = arith.constant 0 : index
    %68 = vector.load %arg6[%c2_99, %c1_100, %c0_101] : memref<18x18x128xbf16, #tpu.memory_space<vmem>>, vector<16x16x128xbf16>
    %69 = vector.shape_cast %68 : vector<16x16x128xbf16> to vector<256x128xbf16>
    %c0_102 = arith.constant 0 : index
    %c896_103 = arith.constant 896 : index
    %70 = vector.load %arg7[%c0_102, %c896_103] : memref<256x1152xbf16, #tpu.memory_space<vmem>>, vector<256x128xbf16>
    tpu.vector_store %arg7[%c0_102, %c896_103], %69 {strides = array<i32>} : memref<256x1152xbf16, #tpu.memory_space<vmem>>, vector<256x128xbf16>,
    %c2_104 = arith.constant 2 : index
    %c2_105 = arith.constant 2 : index
    %c0_106 = arith.constant 0 : index
    %71 = vector.load %arg6[%c2_104, %c2_105, %c0_106] : memref<18x18x128xbf16, #tpu.memory_space<vmem>>, vector<16x16x128xbf16>
    %72 = vector.shape_cast %71 : vector<16x16x128xbf16> to vector<256x128xbf16>
    %c0_107 = arith.constant 0 : index
    %c1024_108 = arith.constant 1024 : index
    %73 = vector.load %arg7[%c0_107, %c1024_108] : memref<256x1152xbf16, #tpu.memory_space<vmem>>, vector<256x128xbf16>
    tpu.vector_store %arg7[%c0_107, %c1024_108], %72 {strides = array<i32>} : memref<256x1152xbf16, #tpu.memory_space<vmem>>, vector<256x128xbf16>,
    %c0_109 = arith.constant 0 : index
    %c0_110 = arith.constant 0 : index
    %74 = vector.load %arg7[%c0_109, %c0_110] : memref<256x1152xbf16, #tpu.memory_space<vmem>>, vector<256x1152xbf16>
    %c0_111 = arith.constant 0 : index
    %c0_112 = arith.constant 0 : index
    %75 = vector.load %arg3[%c0_111, %c0_112] : memref<1152x128xbf16, #tpu.memory_space<vmem>>, vector<1152x128xbf16>
    %cst_113 = arith.constant dense<0.000000e+00> : vector<256x128xf32>
    %76 = tpu.matmul %74, %75, %cst_113 {dimension_numbers = #tpu.dot_dimension_numbers<[1], [0], [0], [1], [0, 0, 1, 1], [], []>} : vector<256x1152xbf16>, vector<1152x128xbf16>, vector<256x128xf32> -> vector<256x128xf32>
    %c1_114 = arith.constant 1 : index
    %c0_115 = arith.constant 0 : index
    %77 = vector.load %arg4[%c1_114, %c0_115] : memref<2x128xf32, #tpu.memory_space<vmem>>, vector<1x128xf32>
    %78 = vector.broadcast %77 : vector<1x128xf32> to vector<256x128xf32>
    %79 = arith.addf %76, %78 : vector<256x128xf32>
    %cst_116 = arith.constant 0.000000e+00 : f32
    %80 = vector.broadcast %cst_116 : f32 to vector<256x128xf32>
    %81 = arith.maximumf %79, %80 : vector<256x128xf32>
    %82 = vector.shape_cast %81 : vector<256x128xf32> to vector<16x16x128xf32>
    %c0_117 = arith.constant 0 : index
    %c0_118 = arith.constant 0 : index
    %c0_119 = arith.constant 0 : index
    %c0_120 = arith.constant 0 : index
    %83 = vector.load %arg5[%c0_117, %c0_118, %c0_119, %c0_120] : memref<1x16x16x128xf32, #tpu.memory_space<vmem>>, vector<1x16x16x128xf32>
    %84 = vector.shape_cast %83 : vector<1x16x16x128xf32> to vector<16x16x128xf32>
    %85 = vector.shape_cast %82 : vector<16x16x128xf32> to vector<1x16x16x128xf32>
    tpu.vector_store %arg5[%c0_117, %c0_118, %c0_119, %c0_120], %85 {strides = array<i32>} : memref<1x16x16x128xf32, #tpu.memory_space<vmem>>, vector<1x16x16x128xf32>,
    return
  }
  func.func @transform_0(%arg0: i32) -> (i32, i32, i32, i32) {
    %c0_i32 = arith.constant 0 : i32
    %c0_i32_0 = arith.constant 0 : i32
    %c0_i32_1 = arith.constant 0 : i32
    %c0_i32_2 = arith.constant 0 : i32
    return %arg0, %c0_i32, %c0_i32_0, %c0_i32_1 : i32, i32, i32, i32
  }
  func.func @transform_1(%arg0: i32) -> (i32, i32) {
    %c0_i32 = arith.constant 0 : i32
    %c0_i32_0 = arith.constant 0 : i32
    %c0_i32_1 = arith.constant 0 : i32
    return %c0_i32, %c0_i32_0 : i32, i32
  }
  func.func @transform_2(%arg0: i32) -> (i32, i32) {
    %c0_i32 = arith.constant 0 : i32
    %c0_i32_0 = arith.constant 0 : i32
    %c0_i32_1 = arith.constant 0 : i32
    return %c0_i32, %c0_i32_0 : i32, i32
  }
  func.func @transform_3(%arg0: i32) -> (i32, i32) {
    %c0_i32 = arith.constant 0 : i32
    %c0_i32_0 = arith.constant 0 : i32
    %c0_i32_1 = arith.constant 0 : i32
    return %c0_i32, %c0_i32_0 : i32, i32
  }
  func.func @transform_4(%arg0: i32) -> (i32, i32, i32, i32) {
    %c0_i32 = arith.constant 0 : i32
    %c0_i32_0 = arith.constant 0 : i32
    %c0_i32_1 = arith.constant 0 : i32
    %c0_i32_2 = arith.constant 0 : i32
    return %arg0, %c0_i32, %c0_i32_0, %c0_i32_1 : i32, i32, i32, i32
  }
}

</mosaic_0001>

<llo_original>
// kernel: tpu_custom_call.1
$region0: #{tpu_custom_call.1}
  #allocation0 [shape = 'u32[]', space=smem, size = 0x4, offset = 0x4, fixed_abs, tag = 'smem constant byte address 0x4 - core index']
  #allocation1 [shape = 'u32[72,128]{1,0:T(1,128)}', space=vmem, size = 0x9000, scoped, tag = 'internal scratch']
  #allocation2 [shape = 'bf16[18,18,128]{2,1,0:T(8,128)(2,1)}', space=vmem, size = 0x1b000, scoped, tag = 'scratch operand']
  #allocation3 [shape = 'bf16[256,1152]{1,0:T(8,128)(2,1)}', space=vmem, size = 0x90000, scoped, tag = 'scratch operand']
  %s0 = inlined_call_operand.hbm [shape: bf16[2,16,16,128], index: 0, kind: input, shape index: {}]
  %s1 = inlined_call_operand.hbm [shape: bf16[1152,128], index: 1, kind: input, shape index: {}]
  %s2 = inlined_call_operand.hbm [shape: bf16[1152,128], index: 2, kind: input, shape index: {}]
  %s3 = inlined_call_operand.vmem [shape: f32[2,128], index: 3, kind: input, shape index: {}]
  %s4 = inlined_call_operand.hbm [shape: f32[2,16,16,128], index: 4, kind: output, shape index: {}]
  %s5 = sld [smem:[#allocation0]]
  $region61: #{tpu_custom_call.1} parent=0
    _
  %s7 = ssub.s32 1, %s5
  %s8 = scalar_select 0, %s7, %s5
  $region1: #{tpu_custom_call.1} parent=0
    #allocation4 [shape = 'u8[131072]{0}', space=vmem, size = 0x20000, scoped, tag = 'input window, operand 0']
    #allocation5 [shape = 's32[2]{0}', space=sflag, size = 0x8, scoped, tag = 'scoped memory for tpu_custom_call.1']
    #allocation6 [shape = 's32[2]{0}', space=sflag, size = 0x8, scoped, tag = 'scoped memory for tpu_custom_call.1']
    #allocation7 [shape = 'u8[294912]{0}', space=vmem, size = 0x48000, scoped, tag = 'input window, operand 1, single buffered']
    #allocation8 [shape = 's32[1]{0}', space=sflag, size = 0x4, scoped, tag = 'scoped memory for tpu_custom_call.1']
    #allocation9 [shape = 'u8[294912]{0}', space=vmem, size = 0x48000, scoped, tag = 'input window, operand 2, single buffered']
    #allocation10 [shape = 'u8[262144]{0}', space=vmem, size = 0x40000, scoped, tag = 'output window, operand 0']
    %9 = vsyncpa [#allocation5], 0
    %s10 = scalar_lea.sflag [#allocation5], 1
    %11 = vsyncpa %s10, 0
    %12 = vsyncpa [#allocation8], 0
    %13 = vsyncpa [#allocation6], 0
    %s14 = scalar_lea.sflag [#allocation6], 1
    %15 = vsyncpa %s14, 0
    loop: start=0, step=1, limit=4
    $region2: #{tpu_custom_call.1} parent=1 // loop_pre_header
      _
    $region3: #{tpu_custom_call.1} parent=1 // loop_header
      %s17 = sphi 0, %s21
      %p18 = scmp.ge.s32.totalorder %s17, 4
      %s27 = sphi 0, %s29
      %s30 = sphi 0, %s27
      %s31 = sphi 0, %s30
      %s47 = sphi 0, %s31
      %s51 = sphi 0, %s51
      %s53 = sphi 0, %s51
      %s54 = sphi 0, %s53
      %s68 = sphi 0, %s54
      %s72 = sphi 0, %s72
      %s74 = sphi 0, %s72
      %s75 = sphi 0, %s74
      %s89 = sphi 0, %s75
      %s93 = sphi 0, %s93
      %s95 = sphi 0, %s93
      %s96 = sphi 0, %s95
      %s110 = sphi 0, %s96
      %s116 = sphi 0, %s118
      %s119 = sphi 0, %s116
      %s120 = sphi 0, %s119
      %s136 = sphi 0, %s120
    $region4: #{tpu_custom_call.1} parent=1 // loop_header_branch
      %20 = sbr.rel (%p18) target = $region8
    $region5: #{tpu_custom_call.1} parent=1 // loop_body
      %s22 = ssub.s32 %s17, 1
      %s23 = ssub.s32 %s17, 2
      %s24 = sadd.s32 %s17, 1
      %s25 = ssub.s32 %s17, %s24
      %p26 = scmp.eq.s32.totalorder %s25, 0
      %s28 = sadd.s32 %s27, 1
      %s29 = scalar_select %p26, %s27, %s28
      %p32 = pneg %p26
      %p33 = scmp.eq.s32.totalorder %s17, 1
      %p34 = por %p32, %p33
      %p35 = scmp.ne.s32.totalorder %s27, %s30
      %p36 = scmp.eq.s32.totalorder %s17, 0
      %p37 = por %p35, %p36
      %p38 = scmp.ne.s32.totalorder %s27, %s30
      %p39 = scmp.eq.s32.totalorder %s22, 1
      %p40 = por %p38, %p39
      %p41 = scmp.ne.s32.totalorder %s30, %s31
      %p42 = scmp.eq.s32.totalorder %s22, 0
      %p43 = por %p41, %p42
      %p44 = scmp.ne.s32.totalorder %s30, %s31
      %p45 = scmp.eq.s32.totalorder %s23, 1
      %p46 = por %p44, %p45
      %p48 = scmp.ne.s32.totalorder %s31, %s47
      %p49 = scmp.eq.s32.totalorder %s23, 0
      %p50 = por %p48, %p49
      %s52 = sadd.s32 %s51, 1
      %p55 = scmp.eq.s32.totalorder %s17, 1
      %p56 = scmp.ne.s32.totalorder %s51, %s53
      %p57 = scmp.eq.s32.totalorder %s17, 0
      %p58 = por %p56, %p57
      %p59 = scmp.ne.s32.totalorder %s51, %s53
      %p60 = scmp.eq.s32.totalorder %s22, 1
      %p61 = por %p59, %p60
      %p62 = scmp.ne.s32.totalorder %s53, %s54
      %p63 = scmp.eq.s32.totalorder %s22, 0
      %p64 = por %p62, %p63
      %p65 = scmp.ne.s32.totalorder %s53, %s54
      %p66 = scmp.eq.s32.totalorder %s23, 1
      %p67 = por %p65, %p66
      %p69 = scmp.ne.s32.totalorder %s54, %s68
      %p70 = scmp.eq.s32.totalorder %s23, 0
      %p71 = por %p69, %p70
      %s73 = sadd.s32 %s72, 1
      %p76 = scmp.eq.s32.totalorder %s17, 1
      %p77 = scmp.ne.s32.totalorder %s72, %s74
      %p78 = scmp.eq.s32.totalorder %s17, 0
      %p79 = por %p77, %p78
      %p80 = scmp.ne.s32.totalorder %s72, %s74
      %p81 = scmp.eq.s32.totalorder %s22, 1
      %p82 = por %p80, %p81
      %p83 = scmp.ne.s32.totalorder %s74, %s75
      %p84 = scmp.eq.s32.totalorder %s22, 0
      %p85 = por %p83, %p84
      %p86 = scmp.ne.s32.totalorder %s74, %s75
      %p87 = scmp.eq.s32.totalorder %s23, 1
      %p88 = por %p86, %p87
      %p90 = scmp.ne.s32.totalorder %s75, %s89
      %p91 = scmp.eq.s32.totalorder %s23, 0
      %p92 = por %p90, %p91
      %s94 = sadd.s32 %s93, 1
      %p97 = scmp.eq.s32.totalorder %s17, 1
      %p98 = scmp.ne.s32.totalorder %s93, %s95
      %p99 = scmp.eq.s32.totalorder %s17, 0
      %p100 = por %p98, %p99
      %p101 = scmp.ne.s32.totalorder %s93, %s95
      %p102 = scmp.eq.s32.totalorder %s22, 1
      %p103 = por %p101, %p102
      %p104 = scmp.ne.s32.totalorder %s95, %s96
      %p105 = scmp.eq.s32.totalorder %s22, 0
      %p106 = por %p104, %p105
      %p107 = scmp.ne.s32.totalorder %s95, %s96
      %p108 = scmp.eq.s32.totalorder %s23, 1
      %p109 = por %p107, %p108
      %p111 = scmp.ne.s32.totalorder %s96, %s110
      %p112 = scmp.eq.s32.totalorder %s23, 0
      %p113 = por %p111, %p112
      %s114 = ssub.s32 %s17, %s24
      %p115 = scmp.eq.s32.totalorder %s114, 0
      %s117 = sadd.s32 %s116, 1
      %s118 = scalar_select %p115, %s116, %s117
      %p121 = pneg %p115
      %p122 = scmp.eq.s32.totalorder %s17, 1
      %p123 = por %p121, %p122
      %p124 = scmp.ne.s32.totalorder %s116, %s119
      %p125 = scmp.eq.s32.totalorder %s17, 0
      %p126 = por %p124, %p125
      %p127 = scmp.ne.s32.totalorder %s116, %s119
      %p128 = scmp.eq.s32.totalorder %s22, 1
      %p129 = por %p127, %p128
      %p130 = scmp.ne.s32.totalorder %s119, %s120
      %p131 = scmp.eq.s32.totalorder %s22, 0
      %p132 = por %p130, %p131
      %p133 = scmp.ne.s32.totalorder %s119, %s120
      %p134 = scmp.eq.s32.totalorder %s23, 1
      %p135 = por %p133, %p134
      %p137 = scmp.ne.s32.totalorder %s120, %s136
      %p138 = scmp.eq.s32.totalorder %s23, 0
      %p139 = por %p137, %p138
      %p140 = scmp.le.s32.totalorder 1, %s17
      %p141 = scmp.lt.s32.totalorder %s17, 3
      %p142 = pnand %p140, %p141
      %p143 = pneg %p142
      // Predicated region
      $region9: #{tpu_custom_call.1} parent=5 // pred_check
        _
      $region10: #{tpu_custom_call.1} parent=5 // pred_check_branch
        %145 = sbr.rel (%p142) target = $region12
      $region11: #{tpu_custom_call.1} parent=5 // pred_region
        %s146 = ssub.s32 %s17, 1
        // Predicated region
        $region13: #{tpu_custom_call.1} parent=11 // pred_check
          %p147 = pneg %p64
        $region14: #{tpu_custom_call.1} parent=11 // pred_check_branch
          %149 = sbr.rel (%p147) target = $region16
        $region15: #{tpu_custom_call.1} parent=11 // pred_region
          %151 = vsyncadd [#allocation8], 0
          %s152 = sshll.u32 %s1, 4
          %s153 = int_to_ptr.hbm [resolvable:$true] %s152
          %s154 = sshll.u32 [#allocation7], 4
          %s155 = int_to_ptr.vmem [resolvable:$true] %s154
          %160 = dma.hbm_to_vmem [thread:$0]  %s153, 9216, %s155, [#allocation8], 64, 64, 4
        $region16: #{tpu_custom_call.1} parent=11 // pred_fallthru
          _
        // Predicated region
        $region17: #{tpu_custom_call.1} parent=11 // pred_check
          %p161 = pneg %p85
        $region18: #{tpu_custom_call.1} parent=11 // pred_check_branch
          %163 = sbr.rel (%p161) target = $region20
        $region19: #{tpu_custom_call.1} parent=11 // pred_region
          %165 = vsyncadd [#allocation8], 0
          %s166 = sshll.u32 %s2, 4
          %s167 = int_to_ptr.hbm [resolvable:$true] %s166
          %s168 = sshll.u32 [#allocation9], 4
          %s169 = int_to_ptr.vmem [resolvable:$true] %s168
          %174 = dma.hbm_to_vmem [thread:$0]  %s167, 9216, %s169, [#allocation8], 64, 64, 4
        $region20: #{tpu_custom_call.1} parent=11 // pred_fallthru
          _
        // Predicated region
        $region21: #{tpu_custom_call.1} parent=11 // pred_check
          %p175 = pneg %p106
        $region22: #{tpu_custom_call.1} parent=11 // pred_check_branch
          %177 = sbr.rel (%p175) target = $region24
        $region23: #{tpu_custom_call.1} parent=11 // pred_region
          _
        $region24: #{tpu_custom_call.1} parent=11 // pred_fallthru
          _
      $region12: #{tpu_custom_call.1} parent=5 // pred_fallthru
        _
      %p178 = scmp.lt.s32.totalorder %s17, 2
      // Predicated region
      $region25: #{tpu_custom_call.1} parent=5 // pred_check
        %p179 = pneg %p178
      $region26: #{tpu_custom_call.1} parent=5 // pred_check_branch
        %181 = sbr.rel (%p179) target = $region28
      $region27: #{tpu_custom_call.1} parent=5 // pred_region
        // Predicated region
        $region29: #{tpu_custom_call.1} parent=27 // pred_check
          %p182 = pneg %p37
        $region30: #{tpu_custom_call.1} parent=27 // pred_check_branch
          %184 = sbr.rel (%p182) target = $region32
        $region31: #{tpu_custom_call.1} parent=27 // pred_region
          %s185 = sand.u32 %s27, 1
          %s186 = scalar_lea.sflag [#allocation5], %s185
          %s187 = sand.u32 %s27, 1
          %s188 = smul.addr %s187, 128
          %s189 = scalar_lea.vmem [#allocation4], %s188
          %191 = vsyncadd %s186, 0
          %s192 = smul.addr %s17, 32
          %s193 = smul.addr %s192, 4
          %s194 = scalar_lea.hbm %s0, %s193
          %s195 = sshll.u32 %s194, 4
          %s196 = int_to_ptr.hbm [resolvable:$true] %s195
          %s197 = sshll.u32 %s189, 4
          %s198 = int_to_ptr.vmem [resolvable:$true] %s197
          %203 = dma.hbm_to_vmem [thread:$0]  %s196, 2048, %s198, %s186, 64, 64, 4
        $region32: #{tpu_custom_call.1} parent=27 // pred_fallthru
          _
      $region28: #{tpu_custom_call.1} parent=5 // pred_fallthru
        _
      %p204 = scmp.le.s32.totalorder 1, %s17
      %p205 = scmp.lt.s32.totalorder %s17, 3
      %p206 = pnand %p204, %p205
      %p207 = pneg %p206
      // Predicated region
      $region33: #{tpu_custom_call.1} parent=5 // pred_check
        _
      $region34: #{tpu_custom_call.1} parent=5 // pred_check_branch
        %209 = sbr.rel (%p206) target = $region36
      $region35: #{tpu_custom_call.1} parent=5 // pred_region
        %s210 = ssub.s32 %s17, 1
        %s211 = sand.u32 %s30, 1
        %s212 = scalar_lea.sflag [#allocation5], %s211
        %s213 = sand.u32 %s30, 1
        %s214 = smul.addr %s213, 128
        %s215 = scalar_lea.vmem [#allocation4], %s214
        // Predicated region
        $region37: #{tpu_custom_call.1} parent=35 // pred_check
          %p216 = pneg %p43
        $region38: #{tpu_custom_call.1} parent=35 // pred_check_branch
          %218 = sbr.rel (%p216) target = $region40
        $region39: #{tpu_custom_call.1} parent=35 // pred_region
          %220 = dma.done %s212, 2048
        $region40: #{tpu_custom_call.1} parent=35 // pred_fallthru
          _
        // Predicated region
        $region41: #{tpu_custom_call.1} parent=35 // pred_check
          %p221 = pneg %p64
        $region42: #{tpu_custom_call.1} parent=35 // pred_check_branch
          %223 = sbr.rel (%p221) target = $region44
        $region43: #{tpu_custom_call.1} parent=35 // pred_region
          %225 = dma.done [#allocation8], 9216
        $region44: #{tpu_custom_call.1} parent=35 // pred_fallthru
          _
        // Predicated region
        $region45: #{tpu_custom_call.1} parent=35 // pred_check
          %p226 = pneg %p85
        $region46: #{tpu_custom_call.1} parent=35 // pred_check_branch
          %228 = sbr.rel (%p226) target = $region48
        $region47: #{tpu_custom_call.1} parent=35 // pred_region
          %230 = dma.done [#allocation8], 9216
        $region48: #{tpu_custom_call.1} parent=35 // pred_fallthru
          _
        %s231 = sand.u32 %s30, 1
        %s232 = scalar_lea.sflag [#allocation5], %s231
        %s233 = sand.u32 %s30, 1
        %s234 = smul.addr %s233, 128
        %s235 = scalar_lea.vmem [#allocation4], %s234
        %p236 = pneg %p43
        %p237 = pneg %p40
        %p238 = pneg %p64
        %p239 = pneg %p61
        %p240 = pneg %p85
        %p241 = pneg %p82
        %p242 = pneg %p106
        %p243 = pneg %p103
        %p244 = pneg %p132
        %p245 = pneg %p129
        %s246 = sand.u32 %s119, 1
        %s247 = scalar_lea.sflag [#allocation6], %s246
        %s248 = sand.u32 %s119, 1
        %s249 = smul.addr %s248, 256
        %s250 = scalar_lea.vmem [#allocation10], %s249
        %252 = vst [vmem:[#allocation2] sm:$0xf] 0
        %253 = vst [vmem:[#allocation2 + $0x4] sm:$0xf] 0
        %254 = vst [vmem:[#allocation2 + $0x8] sm:$0x1] 0
        %s255 = scalar_lea.vmem [#allocation2], 204
        %256 = vst [vmem:[%s255] sm:$0xf] 0
        %257 = vst [vmem:[%s255 + $0x4] sm:$0xf] 0
        %258 = vst [vmem:[%s255 + $0x8] sm:$0x1] 0
        %s259 = scalar_lea.vmem [#allocation2], 12
        %vm260 = vcmask 1040384
        %vm261 = vsmask.f32 256
        %vm262 = vmand %vm260, %vm261
        %v263 = vld [vmem:[%s259] sm:$0x1]
        %v264 = vsel %vm262, 0, %v263
        %265 = vst [vmem:[%s259] sm:$0x1] %v264
        %v266 = vld [vmem:[%s259 + $0xc] sm:$0x1]
        %v267 = vsel %vm262, 0, %v266
        %268 = vst [vmem:[%s259 + $0xc] sm:$0x1] %v267
        %v269 = vld [vmem:[%s259 + $0x18] sm:$0x1]
        %v270 = vsel %vm262, 0, %v269
        %271 = vst [vmem:[%s259 + $0x18] sm:$0x1] %v270
        %v272 = vld [vmem:[%s259 + $0x24] sm:$0x1]
        %v273 = vsel %vm262, 0, %v272
        %274 = vst [vmem:[%s259 + $0x24] sm:$0x1] %v273
        %v275 = vld [vmem:[%s259 + $0x30] sm:$0x1]
        %v276 = vsel %vm262, 0, %v275
        %277 = vst [vmem:[%s259 + $0x30] sm:$0x1] %v276
        %v278 = vld [vmem:[%s259 + $0x3c] sm:$0x1]
        %v279 = vsel %vm262, 0, %v278
        %280 = vst [vmem:[%s259 + $0x3c] sm:$0x1] %v279
        %v281 = vld [vmem:[%s259 + $0x48] sm:$0x1]
        %v282 = vsel %vm262, 0, %v281
        %283 = vst [vmem:[%s259 + $0x48] sm:$0x1] %v282
        %v284 = vld [vmem:[%s259 + $0x54] sm:$0x1]
        %v285 = vsel %vm262, 0, %v284
        %286 = vst [vmem:[%s259 + $0x54] sm:$0x1] %v285
        %v287 = vld [vmem:[%s259 + $0x60] sm:$0x1]
        %v288 = vsel %vm262, 0, %v287
        %289 = vst [vmem:[%s259 + $0x60] sm:$0x1] %v288
        %v290 = vld [vmem:[%s259 + $0x6c] sm:$0x1]
        %v291 = vsel %vm262, 0, %v290
        %292 = vst [vmem:[%s259 + $0x6c] sm:$0x1] %v291
        %v293 = vld [vmem:[%s259 + $0x78] sm:$0x1]
        %v294 = vsel %vm262, 0, %v293
        %295 = vst [vmem:[%s259 + $0x78] sm:$0x1] %v294
        %v296 = vld [vmem:[%s259 + $0x84] sm:$0x1]
        %v297 = vsel %vm262, 0, %v296
        %298 = vst [vmem:[%s259 + $0x84] sm:$0x1] %v297
        %v299 = vld [vmem:[%s259 + $0x90] sm:$0x1]
        %v300 = vsel %vm262, 0, %v299
        %301 = vst [vmem:[%s259 + $0x90] sm:$0x1] %v300
        %v302 = vld [vmem:[%s259 + $0x9c] sm:$0x1]
        %v303 = vsel %vm262, 0, %v302
        %304 = vst [vmem:[%s259 + $0x9c] sm:$0x1] %v303
        %v305 = vld [vmem:[%s259 + $0xa8] sm:$0x1]
        %v306 = vsel %vm262, 0, %v305
        %307 = vst [vmem:[%s259 + $0xa8] sm:$0x1] %v306
        %v308 = vld [vmem:[%s259 + $0xb4] sm:$0x1]
        %v309 = vsel %vm262, 0, %v308
        %310 = vst [vmem:[%s259 + $0xb4] sm:$0x1] %v309
        %vm311 = vsmask.f32 7938
        %vm312 = vmand %vm260, %vm311
        %v313 = vld [vmem:[%s259 + $0x8] sm:$0x1]
        %v314 = vsel %vm312, 0, %v313
        %315 = vst [vmem:[%s259 + $0x8] sm:$0x1] %v314
        %v316 = vld [vmem:[%s259 + $0x14] sm:$0x1]
        %v317 = vsel %vm312, 0, %v316
        %318 = vst [vmem:[%s259 + $0x14] sm:$0x1] %v317
        %v319 = vld [vmem:[%s259 + $0x20] sm:$0x1]
        %v320 = vsel %vm312, 0, %v319
        %321 = vst [vmem:[%s259 + $0x20] sm:$0x1] %v320
        %v322 = vld [vmem:[%s259 + $0x2c] sm:$0x1]
        %v323 = vsel %vm312, 0, %v322
        %324 = vst [vmem:[%s259 + $0x2c] sm:$0x1] %v323
        %v325 = vld [vmem:[%s259 + $0x38] sm:$0x1]
        %v326 = vsel %vm312, 0, %v325
        %327 = vst [vmem:[%s259 + $0x38] sm:$0x1] %v326
        %v328 = vld [vmem:[%s259 + $0x44] sm:$0x1]
        %v329 = vsel %vm312, 0, %v328
        %330 = vst [vmem:[%s259 + $0x44] sm:$0x1] %v329
        %v331 = vld [vmem:[%s259 + $0x50] sm:$0x1]
        %v332 = vsel %vm312, 0, %v331
        %333 = vst [vmem:[%s259 + $0x50] sm:$0x1] %v332
        %v334 = vld [vmem:[%s259 + $0x5c] sm:$0x1]
        %v335 = vsel %vm312, 0, %v334
        %336 = vst [vmem:[%s259 + $0x5c] sm:$0x1] %v335
        %v337 = vld [vmem:[%s259 + $0x68] sm:$0x1]
        %v338 = vsel %vm312, 0, %v337
        %339 = vst [vmem:[%s259 + $0x68] sm:$0x1] %v338
        %v340 = vld [vmem:[%s259 + $0x74] sm:$0x1]
        %v341 = vsel %vm312, 0, %v340
        %342 = vst [vmem:[%s259 + $0x74] sm:$0x1] %v341
        %v343 = vld [vmem:[%s259 + $0x80] sm:$0x1]
        %v344 = vsel %vm312, 0, %v343
        %345 = vst [vmem:[%s259 + $0x80] sm:$0x1] %v344
        %v346 = vld [vmem:[%s259 + $0x8c] sm:$0x1]
        %v347 = vsel %vm312, 0, %v346
        %348 = vst [vmem:[%s259 + $0x8c] sm:$0x1] %v347
        %v349 = vld [vmem:[%s259 + $0x98] sm:$0x1]
        %v350 = vsel %vm312, 0, %v349
        %351 = vst [vmem:[%s259 + $0x98] sm:$0x1] %v350
        %v352 = vld [vmem:[%s259 + $0xa4] sm:$0x1]
        %v353 = vsel %vm312, 0, %v352
        %354 = vst [vmem:[%s259 + $0xa4] sm:$0x1] %v353
        %v355 = vld [vmem:[%s259 + $0xb0] sm:$0x1]
        %v356 = vsel %vm312, 0, %v355
        %357 = vst [vmem:[%s259 + $0xb0] sm:$0x1] %v356
        %v358 = vld [vmem:[%s259 + $0xbc] sm:$0x1]
        %v359 = vsel %vm312, 0, %v358
        %360 = vst [vmem:[%s259 + $0xbc] sm:$0x1] %v359
        %v361 = vld [vmem:[%s215] sm:$0xf]
        %v362 = vld [vmem:[%s215 + $0x4] sm:$0xf]
        %v363 = vld [vmem:[%s215 + $0x8] sm:$0xf]
        %v364 = vld [vmem:[%s215 + $0xc] sm:$0xf]
        %v365 = vld [vmem:[%s215 + $0x10] sm:$0xf]
        %v366 = vld [vmem:[%s215 + $0x14] sm:$0xf]
        %v367 = vld [vmem:[%s215 + $0x18] sm:$0xf]
        %v368 = vld [vmem:[%s215 + $0x1c] sm:$0xf]
        %v369 = vld [vmem:[%s215 + $0x20] sm:$0xf]
        %v370 = vld [vmem:[%s215 + $0x24] sm:$0xf]
        %v371 = vld [vmem:[%s215 + $0x28] sm:$0xf]
        %v372 = vld [vmem:[%s215 + $0x2c] sm:$0xf]
        %v373 = vld [vmem:[%s215 + $0x30] sm:$0xf]
        %v374 = vld [vmem:[%s215 + $0x34] sm:$0xf]
        %v375 = vld [vmem:[%s215 + $0x38] sm:$0xf]
        %v376 = vld [vmem:[%s215 + $0x3c] sm:$0xf]
        %v377 = vld [vmem:[%s215 + $0x40] sm:$0xf]
        %v378 = vld [vmem:[%s215 + $0x44] sm:$0xf]
        %v379 = vld [vmem:[%s215 + $0x48] sm:$0xf]
        %v380 = vld [vmem:[%s215 + $0x4c] sm:$0xf]
        %v381 = vld [vmem:[%s215 + $0x50] sm:$0xf]
        %v382 = vld [vmem:[%s215 + $0x54] sm:$0xf]
        %v383 = vld [vmem:[%s215 + $0x58] sm:$0xf]
        %v384 = vld [vmem:[%s215 + $0x5c] sm:$0xf]
        %v385 = vld [vmem:[%s215 + $0x60] sm:$0xf]
        %v386 = vld [vmem:[%s215 + $0x64] sm:$0xf]
        %v387 = vld [vmem:[%s215 + $0x68] sm:$0xf]
        %v388 = vld [vmem:[%s215 + $0x6c] sm:$0xf]
        %v389 = vld [vmem:[%s215 + $0x70] sm:$0xf]
        %v390 = vld [vmem:[%s215 + $0x74] sm:$0xf]
        %v391 = vld [vmem:[%s215 + $0x78] sm:$0xf]
        %v392 = vld [vmem:[%s215 + $0x7c] sm:$0xf]
        %vm393 = vsmask.f32 4368
        %vm394 = vmor %vm261, %vm393
        %v396 = vshrl.u32 %v361, 16
        %v398 = vrot.slane %v396, 7
        %v399 = vshll.u32 %v361, 16
        %v401 = vor.u32 %v398, %v399
        %v402 = vrot.slane %v398, 4
        %v404 = vshrl.u32 %v362, 16
        %v406 = vrot.slane %v404, 7
        %v407 = vshll.u32 %v362, 16
        %v409 = vor.u32 %v406, %v407
        %v410 = vsel %vm394, %v402, %v409
        %v411 = vrot.slane %v406, 4
        %v413 = vshrl.u32 %v363, 16
        %v415 = vrot.slane %v413, 7
        %v416 = vshll.u32 %v363, 16
        %v418 = vor.u32 %v415, %v416
        %v419 = vrot.slane %v415, 4
        %v421 = vshrl.u32 %v364, 16
        %v423 = vrot.slane %v421, 7
        %v424 = vshll.u32 %v364, 16
        %v426 = vor.u32 %v423, %v424
        %v427 = vsel %vm394, %v419, %v426
        %v428 = vrot.slane %v423, 4
        %v430 = vshrl.u32 %v365, 16
        %v432 = vrot.slane %v430, 7
        %v433 = vshll.u32 %v365, 16
        %v435 = vor.u32 %v432, %v433
        %v436 = vrot.slane %v432, 4
        %v438 = vshrl.u32 %v366, 16
        %v440 = vrot.slane %v438, 7
        %v441 = vshll.u32 %v366, 16
        %v443 = vor.u32 %v440, %v441
        %v444 = vsel %vm394, %v436, %v443
        %v445 = vrot.slane %v440, 4
        %v447 = vshrl.u32 %v367, 16
        %v449 = vrot.slane %v447, 7
        %v450 = vshll.u32 %v367, 16
        %v452 = vor.u32 %v449, %v450
        %v453 = vrot.slane %v449, 4
        %v455 = vshrl.u32 %v368, 16
        %v457 = vrot.slane %v455, 7
        %v458 = vshll.u32 %v368, 16
        %v460 = vor.u32 %v457, %v458
        %v461 = vsel %vm394, %v453, %v460
        %v462 = vrot.slane %v457, 4
        %v464 = vshrl.u32 %v369, 16
        %v466 = vrot.slane %v464, 7
        %v467 = vshll.u32 %v369, 16
        %v469 = vor.u32 %v466, %v467
        %v470 = vrot.slane %v466, 4
        %v472 = vshrl.u32 %v370, 16
        %v474 = vrot.slane %v472, 7
        %v475 = vshll.u32 %v370, 16
        %v477 = vor.u32 %v474, %v475
        %v478 = vsel %vm394, %v470, %v477
        %v479 = vrot.slane %v474, 4
        %v481 = vshrl.u32 %v371, 16
        %v483 = vrot.slane %v481, 7
        %v484 = vshll.u32 %v371, 16
        %v486 = vor.u32 %v483, %v484
        %v487 = vrot.slane %v483, 4
        %v489 = vshrl.u32 %v372, 16
        %v491 = vrot.slane %v489, 7
        %v492 = vshll.u32 %v372, 16
        %v494 = vor.u32 %v491, %v492
        %v495 = vsel %vm394, %v487, %v494
        %v496 = vrot.slane %v491, 4
        %v498 = vshrl.u32 %v373, 16
        %v500 = vrot.slane %v498, 7
        %v501 = vshll.u32 %v373, 16
        %v503 = vor.u32 %v500, %v501
        %v504 = vrot.slane %v500, 4
        %v506 = vshrl.u32 %v374, 16
        %v508 = vrot.slane %v506, 7
        %v509 = vshll.u32 %v374, 16
        %v511 = vor.u32 %v508, %v509
        %v512 = vsel %vm394, %v504, %v511
        %v513 = vrot.slane %v508, 4
        %v515 = vshrl.u32 %v375, 16
        %v517 = vrot.slane %v515, 7
        %v518 = vshll.u32 %v375, 16
        %v520 = vor.u32 %v517, %v518
        %v521 = vrot.slane %v517, 4
        %v523 = vshrl.u32 %v376, 16
        %v525 = vrot.slane %v523, 7
        %v526 = vshll.u32 %v376, 16
        %v528 = vor.u32 %v525, %v526
        %v529 = vsel %vm394, %v521, %v528
        %v530 = vrot.slane %v525, 4
        %v532 = vshrl.u32 %v377, 16
        %v534 = vrot.slane %v532, 7
        %v535 = vshll.u32 %v377, 16
        %v537 = vor.u32 %v534, %v535
        %v538 = vrot.slane %v534, 4
        %v540 = vshrl.u32 %v378, 16
        %v542 = vrot.slane %v540, 7
        %v543 = vshll.u32 %v378, 16
        %v545 = vor.u32 %v542, %v543
        %v546 = vsel %vm394, %v538, %v545
        %v547 = vrot.slane %v542, 4
        %v549 = vshrl.u32 %v379, 16
        %v551 = vrot.slane %v549, 7
        %v552 = vshll.u32 %v379, 16
        %v554 = vor.u32 %v551, %v552
        %v555 = vrot.slane %v551, 4
        %v557 = vshrl.u32 %v380, 16
        %v559 = vrot.slane %v557, 7
        %v560 = vshll.u32 %v380, 16
        %v562 = vor.u32 %v559, %v560
        %v563 = vsel %vm394, %v555, %v562
        %v564 = vrot.slane %v559, 4
        %v566 = vshrl.u32 %v381, 16
        %v568 = vrot.slane %v566, 7
        %v569 = vshll.u32 %v381, 16
        %v571 = vor.u32 %v568, %v569
        %v572 = vrot.slane %v568, 4
        %v574 = vshrl.u32 %v382, 16
        %v576 = vrot.slane %v574, 7
        %v577 = vshll.u32 %v382, 16
        %v579 = vor.u32 %v576, %v577
        %v580 = vsel %vm394, %v572, %v579
        %v581 = vrot.slane %v576, 4
        %v583 = vshrl.u32 %v383, 16
        %v585 = vrot.slane %v583, 7
        %v586 = vshll.u32 %v383, 16
        %v588 = vor.u32 %v585, %v586
        %v589 = vrot.slane %v585, 4
        %v591 = vshrl.u32 %v384, 16
        %v593 = vrot.slane %v591, 7
        %v594 = vshll.u32 %v384, 16
        %v596 = vor.u32 %v593, %v594
        %v597 = vsel %vm394, %v589, %v596
        %v598 = vrot.slane %v593, 4
        %v600 = vshrl.u32 %v385, 16
        %v602 = vrot.slane %v600, 7
        %v603 = vshll.u32 %v385, 16
        %v605 = vor.u32 %v602, %v603
        %v606 = vrot.slane %v602, 4
        %v608 = vshrl.u32 %v386, 16
        %v610 = vrot.slane %v608, 7
        %v611 = vshll.u32 %v386, 16
        %v613 = vor.u32 %v610, %v611
        %v614 = vsel %vm394, %v606, %v613
        %v615 = vrot.slane %v610, 4
        %v617 = vshrl.u32 %v387, 16
        %v619 = vrot.slane %v617, 7
        %v620 = vshll.u32 %v387, 16
        %v622 = vor.u32 %v619, %v620
        %v623 = vrot.slane %v619, 4
        %v625 = vshrl.u32 %v388, 16
        %v627 = vrot.slane %v625, 7
        %v628 = vshll.u32 %v388, 16
        %v630 = vor.u32 %v627, %v628
        %v631 = vsel %vm394, %v623, %v630
        %v632 = vrot.slane %v627, 4
        %v634 = vshrl.u32 %v389, 16
        %v636 = vrot.slane %v634, 7
        %v637 = vshll.u32 %v389, 16
        %v639 = vor.u32 %v636, %v637
        %v640 = vrot.slane %v636, 4
        %v642 = vshrl.u32 %v390, 16
        %v644 = vrot.slane %v642, 7
        %v645 = vshll.u32 %v390, 16
        %v647 = vor.u32 %v644, %v645
        %v648 = vsel %vm394, %v640, %v647
        %v649 = vrot.slane %v644, 4
        %v651 = vshrl.u32 %v391, 16
        %v653 = vrot.slane %v651, 7
        %v654 = vshll.u32 %v391, 16
        %v656 = vor.u32 %v653, %v654
        %v657 = vrot.slane %v653, 4
        %v659 = vshrl.u32 %v392, 16
        %v661 = vrot.slane %v659, 7
        %v662 = vshll.u32 %v392, 16
        %v664 = vor.u32 %v661, %v662
        %v665 = vsel %vm394, %v657, %v664
        %v666 = vrot.slane %v661, 4
        %vm715 = vcmask 1043456
        %vm716 = vmand %vm715, %vm311
        %v717 = vld [vmem:[%s259] sm:$0xf]
        %v718 = vsel %vm716, %v401, %v717
        %719 = vst [vmem:[%s259] sm:$0xf] %v718
        %720 = vst [vmem:[%s259 + $0x4] sm:$0xf] %v410
        %v721 = vld [vmem:[%s259 + $0x8] sm:$0x1]
        %v722 = vsel %vm262, %v411, %v721
        %723 = vst [vmem:[%s259 + $0x8] sm:$0x1] %v722
        %v724 = vld [vmem:[%s259 + $0xc] sm:$0xf]
        %v725 = vsel %vm716, %v418, %v724
        %726 = vst [vmem:[%s259 + $0xc] sm:$0xf] %v725
        %727 = vst [vmem:[%s259 + $0x10] sm:$0xf] %v427
        %v728 = vld [vmem:[%s259 + $0x14] sm:$0x1]
        %v729 = vsel %vm262, %v428, %v728
        %730 = vst [vmem:[%s259 + $0x14] sm:$0x1] %v729
        %v731 = vld [vmem:[%s259 + $0x18] sm:$0xf]
        %v732 = vsel %vm716, %v435, %v731
        %733 = vst [vmem:[%s259 + $0x18] sm:$0xf] %v732
        %734 = vst [vmem:[%s259 + $0x1c] sm:$0xf] %v444
        %v735 = vld [vmem:[%s259 + $0x20] sm:$0x1]
        %v736 = vsel %vm262, %v445, %v735
        %737 = vst [vmem:[%s259 + $0x20] sm:$0x1] %v736
        %v738 = vld [vmem:[%s259 + $0x24] sm:$0xf]
        %v739 = vsel %vm716, %v452, %v738
        %740 = vst [vmem:[%s259 + $0x24] sm:$0xf] %v739
        %741 = vst [vmem:[%s259 + $0x28] sm:$0xf] %v461
        %v742 = vld [vmem:[%s259 + $0x2c] sm:$0x1]
        %v743 = vsel %vm262, %v462, %v742
        %744 = vst [vmem:[%s259 + $0x2c] sm:$0x1] %v743
        %v745 = vld [vmem:[%s259 + $0x30] sm:$0xf]
        %v746 = vsel %vm716, %v469, %v745
        %747 = vst [vmem:[%s259 + $0x30] sm:$0xf] %v746
        %748 = vst [vmem:[%s259 + $0x34] sm:$0xf] %v478
        %v749 = vld [vmem:[%s259 + $0x38] sm:$0x1]
        %v750 = vsel %vm262, %v479, %v749
        %751 = vst [vmem:[%s259 + $0x38] sm:$0x1] %v750
        %v752 = vld [vmem:[%s259 + $0x3c] sm:$0xf]
        %v753 = vsel %vm716, %v486, %v752
        %754 = vst [vmem:[%s259 + $0x3c] sm:$0xf] %v753
        %755 = vst [vmem:[%s259 + $0x40] sm:$0xf] %v495
        %v756 = vld [vmem:[%s259 + $0x44] sm:$0x1]
        %v757 = vsel %vm262, %v496, %v756
        %758 = vst [vmem:[%s259 + $0x44] sm:$0x1] %v757
        %v759 = vld [vmem:[%s259 + $0x48] sm:$0xf]
        %v760 = vsel %vm716, %v503, %v759
        %761 = vst [vmem:[%s259 + $0x48] sm:$0xf] %v760
        %762 = vst [vmem:[%s259 + $0x4c] sm:$0xf] %v512
        %v763 = vld [vmem:[%s259 + $0x50] sm:$0x1]
        %v764 = vsel %vm262, %v513, %v763
        %765 = vst [vmem:[%s259 + $0x50] sm:$0x1] %v764
        %v766 = vld [vmem:[%s259 + $0x54] sm:$0xf]
        %v767 = vsel %vm716, %v520, %v766
        %768 = vst [vmem:[%s259 + $0x54] sm:$0xf] %v767
        %769 = vst [vmem:[%s259 + $0x58] sm:$0xf] %v529
        %v770 = vld [vmem:[%s259 + $0x5c] sm:$0x1]
        %v771 = vsel %vm262, %v530, %v770
        %772 = vst [vmem:[%s259 + $0x5c] sm:$0x1] %v771
        %v773 = vld [vmem:[%s259 + $0x60] sm:$0xf]
        %v774 = vsel %vm716, %v537, %v773
        %775 = vst [vmem:[%s259 + $0x60] sm:$0xf] %v774
        %776 = vst [vmem:[%s259 + $0x64] sm:$0xf] %v546
        %v777 = vld [vmem:[%s259 + $0x68] sm:$0x1]
        %v778 = vsel %vm262, %v547, %v777
        %779 = vst [vmem:[%s259 + $0x68] sm:$0x1] %v778
        %v780 = vld [vmem:[%s259 + $0x6c] sm:$0xf]
        %v781 = vsel %vm716, %v554, %v780
        %782 = vst [vmem:[%s259 + $0x6c] sm:$0xf] %v781
        %783 = vst [vmem:[%s259 + $0x70] sm:$0xf] %v563
        %v784 = vld [vmem:[%s259 + $0x74] sm:$0x1]
        %v785 = vsel %vm262, %v564, %v784
        %786 = vst [vmem:[%s259 + $0x74] sm:$0x1] %v785
        %v787 = vld [vmem:[%s259 + $0x78] sm:$0xf]
        %v788 = vsel %vm716, %v571, %v787
        %789 = vst [vmem:[%s259 + $0x78] sm:$0xf] %v788
        %790 = vst [vmem:[%s259 + $0x7c] sm:$0xf] %v580
        %v791 = vld [vmem:[%s259 + $0x80] sm:$0x1]
        %v792 = vsel %vm262, %v581, %v791
        %793 = vst [vmem:[%s259 + $0x80] sm:$0x1] %v792
        %v794 = vld [vmem:[%s259 + $0x84] sm:$0xf]
        %v795 = vsel %vm716, %v588, %v794
        %796 = vst [vmem:[%s259 + $0x84] sm:$0xf] %v795
        %797 = vst [vmem:[%s259 + $0x88] sm:$0xf] %v597
        %v798 = vld [vmem:[%s259 + $0x8c] sm:$0x1]
        %v799 = vsel %vm262, %v598, %v798
        %800 = vst [vmem:[%s259 + $0x8c] sm:$0x1] %v799
        %v801 = vld [vmem:[%s259 + $0x90] sm:$0xf]
        %v802 = vsel %vm716, %v605, %v801
        %803 = vst [vmem:[%s259 + $0x90] sm:$0xf] %v802
        %804 = vst [vmem:[%s259 + $0x94] sm:$0xf] %v614
        %v805 = vld [vmem:[%s259 + $0x98] sm:$0x1]
        %v806 = vsel %vm262, %v615, %v805
        %807 = vst [vmem:[%s259 + $0x98] sm:$0x1] %v806
        %v808 = vld [vmem:[%s259 + $0x9c] sm:$0xf]
        %v809 = vsel %vm716, %v622, %v808
        %810 = vst [vmem:[%s259 + $0x9c] sm:$0xf] %v809
        %811 = vst [vmem:[%s259 + $0xa0] sm:$0xf] %v631
        %v812 = vld [vmem:[%s259 + $0xa4] sm:$0x1]
        %v813 = vsel %vm262, %v632, %v812
        %814 = vst [vmem:[%s259 + $0xa4] sm:$0x1] %v813
        %v815 = vld [vmem:[%s259 + $0xa8] sm:$0xf]
        %v816 = vsel %vm716, %v639, %v815
        %817 = vst [vmem:[%s259 + $0xa8] sm:$0xf] %v816
        %818 = vst [vmem:[%s259 + $0xac] sm:$0xf] %v648
        %v819 = vld [vmem:[%s259 + $0xb0] sm:$0x1]
        %v820 = vsel %vm262, %v649, %v819
        %821 = vst [vmem:[%s259 + $0xb0] sm:$0x1] %v820
        %v822 = vld [vmem:[%s259 + $0xb4] sm:$0xf]
        %v823 = vsel %vm716, %v656, %v822
        %824 = vst [vmem:[%s259 + $0xb4] sm:$0xf] %v823
        %825 = vst [vmem:[%s259 + $0xb8] sm:$0xf] %v665
        %v826 = vld [vmem:[%s259 + $0xbc] sm:$0x1]
        %v827 = vsel %vm262, %v666, %v826
        %828 = vst [vmem:[%s259 + $0xbc] sm:$0x1] %v827
        %v829 = vld [vmem:[#allocation2] sm:$0xf]
        %v830 = vld [vmem:[#allocation2 + $0x4] sm:$0xf]
        %v831 = vld [vmem:[#allocation2 + $0xc] sm:$0xf]
        %v832 = vld [vmem:[#allocation2 + $0x10] sm:$0xf]
        %v833 = vld [vmem:[#allocation2 + $0x18] sm:$0xf]
        %v834 = vld [vmem:[#allocation2 + $0x1c] sm:$0xf]
        %v835 = vld [vmem:[#allocation2 + $0x24] sm:$0xf]
        %v836 = vld [vmem:[#allocation2 + $0x28] sm:$0xf]
        %v837 = vld [vmem:[#allocation2 + $0x30] sm:$0xf]
        %v838 = vld [vmem:[#allocation2 + $0x34] sm:$0xf]
        %v839 = vld [vmem:[#allocation2 + $0x3c] sm:$0xf]
        %v840 = vld [vmem:[#allocation2 + $0x40] sm:$0xf]
        %v841 = vld [vmem:[#allocation2 + $0x48] sm:$0xf]
        %v842 = vld [vmem:[#allocation2 + $0x4c] sm:$0xf]
        %v843 = vld [vmem:[#allocation2 + $0x54] sm:$0xf]
        %v844 = vld [vmem:[#allocation2 + $0x58] sm:$0xf]
        %v845 = vld [vmem:[#allocation2 + $0x60] sm:$0xf]
        %v846 = vld [vmem:[#allocation2 + $0x64] sm:$0xf]
        %v847 = vld [vmem:[#allocation2 + $0x6c] sm:$0xf]
        %v848 = vld [vmem:[#allocation2 + $0x70] sm:$0xf]
        %v849 = vld [vmem:[#allocation2 + $0x78] sm:$0xf]
        %v850 = vld [vmem:[#allocation2 + $0x7c] sm:$0xf]
        %v851 = vld [vmem:[#allocation2 + $0x84] sm:$0xf]
        %v852 = vld [vmem:[#allocation2 + $0x88] sm:$0xf]
        %v853 = vld [vmem:[#allocation2 + $0x90] sm:$0xf]
        %v854 = vld [vmem:[#allocation2 + $0x94] sm:$0xf]
        %v855 = vld [vmem:[#allocation2 + $0x9c] sm:$0xf]
        %v856 = vld [vmem:[#allocation2 + $0xa0] sm:$0xf]
        %v857 = vld [vmem:[#allocation2 + $0xa8] sm:$0xf]
        %v858 = vld [vmem:[#allocation2 + $0xac] sm:$0xf]
        %v859 = vld [vmem:[#allocation2 + $0xb4] sm:$0xf]
        %v860 = vld [vmem:[#allocation2 + $0xb8] sm:$0xf]
        %861 = vst [vmem:[#allocation3] sm:$0xf] %v829
        %862 = vst [vmem:[#allocation3 + $0x24] sm:$0xf] %v830
        %863 = vst [vmem:[#allocation3 + $0x48] sm:$0xf] %v831
        %864 = vst [vmem:[#allocation3 + $0x6c] sm:$0xf] %v832
        %865 = vst [vmem:[#allocation3 + $0x90] sm:$0xf] %v833
        %866 = vst [vmem:[#allocation3 + $0xb4] sm:$0xf] %v834
        %867 = vst [vmem:[#allocation3 + $0xd8] sm:$0xf] %v835
        %868 = vst [vmem:[#allocation3 + $0xfc] sm:$0xf] %v836
        %869 = vst [vmem:[#allocation3 + $0x120] sm:$0xf] %v837
        %870 = vst [vmem:[#allocation3 + $0x144] sm:$0xf] %v838
        %871 = vst [vmem:[#allocation3 + $0x168] sm:$0xf] %v839
        %872 = vst [vmem:[#allocation3 + $0x18c] sm:$0xf] %v840
        %873 = vst [vmem:[#allocation3 + $0x1b0] sm:$0xf] %v841
        %874 = vst [vmem:[#allocation3 + $0x1d4] sm:$0xf] %v842
        %875 = vst [vmem:[#allocation3 + $0x1f8] sm:$0xf] %v843
        %876 = vst [vmem:[#allocation3 + $0x21c] sm:$0xf] %v844
        %877 = vst [vmem:[#allocation3 + $0x240] sm:$0xf] %v845
        %878 = vst [vmem:[#allocation3 + $0x264] sm:$0xf] %v846
        %879 = vst [vmem:[#allocation3 + $0x288] sm:$0xf] %v847
        %880 = vst [vmem:[#allocation3 + $0x2ac] sm:$0xf] %v848
        %881 = vst [vmem:[#allocation3 + $0x2d0] sm:$0xf] %v849
        %882 = vst [vmem:[#allocation3 + $0x2f4] sm:$0xf] %v850
        %883 = vst [vmem:[#allocation3 + $0x318] sm:$0xf] %v851
        %884 = vst [vmem:[#allocation3 + $0x33c] sm:$0xf] %v852
        %885 = vst [vmem:[#allocation3 + $0x360] sm:$0xf] %v853
        %886 = vst [vmem:[#allocation3 + $0x384] sm:$0xf] %v854
        %887 = vst [vmem:[#allocation3 + $0x3a8] sm:$0xf] %v855
        %888 = vst [vmem:[#allocation3 + $0x3cc] sm:$0xf] %v856
        %889 = vst [vmem:[#allocation3 + $0x3f0] sm:$0xf] %v857
        %890 = vst [vmem:[#allocation3 + $0x414] sm:$0xf] %v858
        %891 = vst [vmem:[#allocation3 + $0x438] sm:$0xf] %v859
        %892 = vst [vmem:[#allocation3 + $0x45c] sm:$0xf] %v860
        %v893 = vld [vmem:[#allocation2] sm:$0xf]
        %v894 = vld [vmem:[#allocation2 + $0x4] sm:$0xf]
        %v895 = vld [vmem:[#allocation2 + $0x8] sm:$0x1]
        %v896 = vld [vmem:[#allocation2 + $0xc] sm:$0xf]
        %v897 = vld [vmem:[#allocation2 + $0x10] sm:$0xf]
        %v898 = vld [vmem:[#allocation2 + $0x14] sm:$0x1]
        %v899 = vld [vmem:[#allocation2 + $0x18] sm:$0xf]
        %v900 = vld [vmem:[#allocation2 + $0x1c] sm:$0xf]
        %v901 = vld [vmem:[#allocation2 + $0x20] sm:$0x1]
        %v902 = vld [vmem:[#allocation2 + $0x24] sm:$0xf]
        %v903 = vld [vmem:[#allocation2 + $0x28] sm:$0xf]
        %v904 = vld [vmem:[#allocation2 + $0x2c] sm:$0x1]
        %v905 = vld [vmem:[#allocation2 + $0x30] sm:$0xf]
        %v906 = vld [vmem:[#allocation2 + $0x34] sm:$0xf]
        %v907 = vld [vmem:[#allocation2 + $0x38] sm:$0x1]
        %v908 = vld [vmem:[#allocation2 + $0x3c] sm:$0xf]
        %v909 = vld [vmem:[#allocation2 + $0x40] sm:$0xf]
        %v910 = vld [vmem:[#allocation2 + $0x44] sm:$0x1]
        %v911 = vld [vmem:[#allocation2 + $0x48] sm:$0xf]
        %v912 = vld [vmem:[#allocation2 + $0x4c] sm:$0xf]
        %v913 = vld [vmem:[#allocation2 + $0x50] sm:$0x1]
        %v914 = vld [vmem:[#allocation2 + $0x54] sm:$0xf]
        %v915 = vld [vmem:[#allocation2 + $0x58] sm:$0xf]
        %v916 = vld [vmem:[#allocation2 + $0x5c] sm:$0x1]
        %v917 = vld [vmem:[#allocation2 + $0x60] sm:$0xf]
        %v918 = vld [vmem:[#allocation2 + $0x64] sm:$0xf]
        %v919 = vld [vmem:[#allocation2 + $0x68] sm:$0x1]
        %v920 = vld [vmem:[#allocation2 + $0x6c] sm:$0xf]
        %v921 = vld [vmem:[#allocation2 + $0x70] sm:$0xf]
        %v922 = vld [vmem:[#allocation2 + $0x74] sm:$0x1]
        %v923 = vld [vmem:[#allocation2 + $0x78] sm:$0xf]
        %v924 = vld [vmem:[#allocation2 + $0x7c] sm:$0xf]
        %v925 = vld [vmem:[#allocation2 + $0x80] sm:$0x1]
        %v926 = vld [vmem:[#allocation2 + $0x84] sm:$0xf]
        %v927 = vld [vmem:[#allocation2 + $0x88] sm:$0xf]
        %v928 = vld [vmem:[#allocation2 + $0x8c] sm:$0x1]
        %v929 = vld [vmem:[#allocation2 + $0x90] sm:$0xf]
        %v930 = vld [vmem:[#allocation2 + $0x94] sm:$0xf]
        %v931 = vld [vmem:[#allocation2 + $0x98] sm:$0x1]
        %v932 = vld [vmem:[#allocation2 + $0x9c] sm:$0xf]
        %v933 = vld [vmem:[#allocation2 + $0xa0] sm:$0xf]
        %v934 = vld [vmem:[#allocation2 + $0xa4] sm:$0x1]
        %v935 = vld [vmem:[#allocation2 + $0xa8] sm:$0xf]
        %v936 = vld [vmem:[#allocation2 + $0xac] sm:$0xf]
        %v937 = vld [vmem:[#allocation2 + $0xb0] sm:$0x1]
        %v938 = vld [vmem:[#allocation2 + $0xb4] sm:$0xf]
        %v939 = vld [vmem:[#allocation2 + $0xb8] sm:$0xf]
        %v940 = vld [vmem:[#allocation2 + $0xbc] sm:$0x1]
        %vm941 = vsmask.f32 3328
        %vm942 = vsmask.f32 7440
        %vm943 = vmor %vm941, %vm942
        %v945 = vshrl.u32 %v893, 16
        %v947 = vrot.slane %v945, 4
        %v948 = vshll.u32 %v893, 16
        %v950 = vrot.slane %v948, 5
        %v951 = vor.u32 %v947, %v950
        %v952 = vrot.slane %v951, 4
        %v954 = vshll.u32 %v894, 16
        %v956 = vrot.slane %v954, 5
        %v957 = vsel %vm943, %v952, %v956
        %v958 = vshrl.u32 %v894, 16
        %v960 = vrot.slane %v958, 4
        %v961 = vor.u32 %v960, %v956
        %v962 = vrot.slane %v961, 4
        %v964 = vshll.u32 %v895, 16
        %v966 = vrot.slane %v964, 5
        %v967 = vsel %vm943, %v962, %v966
        %v969 = vshrl.u32 %v896, 16
        %v971 = vrot.slane %v969, 4
        %v972 = vshll.u32 %v896, 16
        %v974 = vrot.slane %v972, 5
        %v975 = vor.u32 %v971, %v974
        %v976 = vrot.slane %v975, 4
        %v978 = vshll.u32 %v897, 16
        %v980 = vrot.slane %v978, 5
        %v981 = vsel %vm943, %v976, %v980
        %v982 = vshrl.u32 %v897, 16
        %v984 = vrot.slane %v982, 4
        %v985 = vor.u32 %v984, %v980
        %v986 = vrot.slane %v985, 4
        %v988 = vshll.u32 %v898, 16
        %v990 = vrot.slane %v988, 5
        %v991 = vsel %vm943, %v986, %v990
        %v993 = vshrl.u32 %v899, 16
        %v995 = vrot.slane %v993, 4
        %v996 = vshll.u32 %v899, 16
        %v998 = vrot.slane %v996, 5
        %v999 = vor.u32 %v995, %v998
        %v1000 = vrot.slane %v999, 4
        %v1002 = vshll.u32 %v900, 16
        %v1004 = vrot.slane %v1002, 5
        %v1005 = vsel %vm943, %v1000, %v1004
        %v1006 = vshrl.u32 %v900, 16
        %v1008 = vrot.slane %v1006, 4
        %v1009 = vor.u32 %v1008, %v1004
        %v1010 = vrot.slane %v1009, 4
        %v1012 = vshll.u32 %v901, 16
        %v1014 = vrot.slane %v1012, 5
        %v1015 = vsel %vm943, %v1010, %v1014
        %v1017 = vshrl.u32 %v902, 16
        %v1019 = vrot.slane %v1017, 4
        %v1020 = vshll.u32 %v902, 16
        %v1022 = vrot.slane %v1020, 5
        %v1023 = vor.u32 %v1019, %v1022
        %v1024 = vrot.slane %v1023, 4
        %v1026 = vshll.u32 %v903, 16
        %v1028 = vrot.slane %v1026, 5
        %v1029 = vsel %vm943, %v1024, %v1028
        %v1030 = vshrl.u32 %v903, 16
        %v1032 = vrot.slane %v1030, 4
        %v1033 = vor.u32 %v1032, %v1028
        %v1034 = vrot.slane %v1033, 4
        %v1036 = vshll.u32 %v904, 16
        %v1038 = vrot.slane %v1036, 5
        %v1039 = vsel %vm943, %v1034, %v1038
        %v1041 = vshrl.u32 %v905, 16
        %v1043 = vrot.slane %v1041, 4
        %v1044 = vshll.u32 %v905, 16
        %v1046 = vrot.slane %v1044, 5
        %v1047 = vor.u32 %v1043, %v1046
        %v1048 = vrot.slane %v1047, 4
        %v1050 = vshll.u32 %v906, 16
        %v1052 = vrot.slane %v1050, 5
        %v1053 = vsel %vm943, %v1048, %v1052
        %v1054 = vshrl.u32 %v906, 16
        %v1056 = vrot.slane %v1054, 4
        %v1057 = vor.u32 %v1056, %v1052
        %v1058 = vrot.slane %v1057, 4
        %v1060 = vshll.u32 %v907, 16
        %v1062 = vrot.slane %v1060, 5
        %v1063 = vsel %vm943, %v1058, %v1062
        %v1065 = vshrl.u32 %v908, 16
        %v1067 = vrot.slane %v1065, 4
        %v1068 = vshll.u32 %v908, 16
        %v1070 = vrot.slane %v1068, 5
        %v1071 = vor.u32 %v1067, %v1070
        %v1072 = vrot.slane %v1071, 4
        %v1074 = vshll.u32 %v909, 16
        %v1076 = vrot.slane %v1074, 5
        %v1077 = vsel %vm943, %v1072, %v1076
        %v1078 = vshrl.u32 %v909, 16
        %v1080 = vrot.slane %v1078, 4
        %v1081 = vor.u32 %v1080, %v1076
        %v1082 = vrot.slane %v1081, 4
        %v1084 = vshll.u32 %v910, 16
        %v1086 = vrot.slane %v1084, 5
        %v1087 = vsel %vm943, %v1082, %v1086
        %v1089 = vshrl.u32 %v911, 16
        %v1091 = vrot.slane %v1089, 4
        %v1092 = vshll.u32 %v911, 16
        %v1094 = vrot.slane %v1092, 5
        %v1095 = vor.u32 %v1091, %v1094
        %v1096 = vrot.slane %v1095, 4
        %v1098 = vshll.u32 %v912, 16
        %v1100 = vrot.slane %v1098, 5
        %v1101 = vsel %vm943, %v1096, %v1100
        %v1102 = vshrl.u32 %v912, 16
        %v1104 = vrot.slane %v1102, 4
        %v1105 = vor.u32 %v1104, %v1100
        %v1106 = vrot.slane %v1105, 4
        %v1108 = vshll.u32 %v913, 16
        %v1110 = vrot.slane %v1108, 5
        %v1111 = vsel %vm943, %v1106, %v1110
        %v1113 = vshrl.u32 %v914, 16
        %v1115 = vrot.slane %v1113, 4
        %v1116 = vshll.u32 %v914, 16
        %v1118 = vrot.slane %v1116, 5
        %v1119 = vor.u32 %v1115, %v1118
        %v1120 = vrot.slane %v1119, 4
        %v1122 = vshll.u32 %v915, 16
        %v1124 = vrot.slane %v1122, 5
        %v1125 = vsel %vm943, %v1120, %v1124
        %v1126 = vshrl.u32 %v915, 16
        %v1128 = vrot.slane %v1126, 4
        %v1129 = vor.u32 %v1128, %v1124
        %v1130 = vrot.slane %v1129, 4
        %v1132 = vshll.u32 %v916, 16
        %v1134 = vrot.slane %v1132, 5
        %v1135 = vsel %vm943, %v1130, %v1134
        %v1137 = vshrl.u32 %v917, 16
        %v1139 = vrot.slane %v1137, 4
        %v1140 = vshll.u32 %v917, 16
        %v1142 = vrot.slane %v1140, 5
        %v1143 = vor.u32 %v1139, %v1142
        %v1144 = vrot.slane %v1143, 4
        %v1146 = vshll.u32 %v918, 16
        %v1148 = vrot.slane %v1146, 5
        %v1149 = vsel %vm943, %v1144, %v1148
        %v1150 = vshrl.u32 %v918, 16
        %v1152 = vrot.slane %v1150, 4
        %v1153 = vor.u32 %v1152, %v1148
        %v1154 = vrot.slane %v1153, 4
        %v1156 = vshll.u32 %v919, 16
        %v1158 = vrot.slane %v1156, 5
        %v1159 = vsel %vm943, %v1154, %v1158
        %v1161 = vshrl.u32 %v920, 16
        %v1163 = vrot.slane %v1161, 4
        %v1164 = vshll.u32 %v920, 16
        %v1166 = vrot.slane %v1164, 5
        %v1167 = vor.u32 %v1163, %v1166
        %v1168 = vrot.slane %v1167, 4
        %v1170 = vshll.u32 %v921, 16
        %v1172 = vrot.slane %v1170, 5
        %v1173 = vsel %vm943, %v1168, %v1172
        %v1174 = vshrl.u32 %v921, 16
        %v1176 = vrot.slane %v1174, 4
        %v1177 = vor.u32 %v1176, %v1172
        %v1178 = vrot.slane %v1177, 4
        %v1180 = vshll.u32 %v922, 16
        %v1182 = vrot.slane %v1180, 5
        %v1183 = vsel %vm943, %v1178, %v1182
        %v1185 = vshrl.u32 %v923, 16
        %v1187 = vrot.slane %v1185, 4
        %v1188 = vshll.u32 %v923, 16
        %v1190 = vrot.slane %v1188, 5
        %v1191 = vor.u32 %v1187, %v1190
        %v1192 = vrot.slane %v1191, 4
        %v1194 = vshll.u32 %v924, 16
        %v1196 = vrot.slane %v1194, 5
        %v1197 = vsel %vm943, %v1192, %v1196
        %v1198 = vshrl.u32 %v924, 16
        %v1200 = vrot.slane %v1198, 4
        %v1201 = vor.u32 %v1200, %v1196
        %v1202 = vrot.slane %v1201, 4
        %v1204 = vshll.u32 %v925, 16
        %v1206 = vrot.slane %v1204, 5
        %v1207 = vsel %vm943, %v1202, %v1206
        %v1209 = vshrl.u32 %v926, 16
        %v1211 = vrot.slane %v1209, 4
        %v1212 = vshll.u32 %v926, 16
        %v1214 = vrot.slane %v1212, 5
        %v1215 = vor.u32 %v1211, %v1214
        %v1216 = vrot.slane %v1215, 4
        %v1218 = vshll.u32 %v927, 16
        %v1220 = vrot.slane %v1218, 5
        %v1221 = vsel %vm943, %v1216, %v1220
        %v1222 = vshrl.u32 %v927, 16
        %v1224 = vrot.slane %v1222, 4
        %v1225 = vor.u32 %v1224, %v1220
        %v1226 = vrot.slane %v1225, 4
        %v1228 = vshll.u32 %v928, 16
        %v1230 = vrot.slane %v1228, 5
        %v1231 = vsel %vm943, %v1226, %v1230
        %v1233 = vshrl.u32 %v929, 16
        %v1235 = vrot.slane %v1233, 4
        %v1236 = vshll.u32 %v929, 16
        %v1238 = vrot.slane %v1236, 5
        %v1239 = vor.u32 %v1235, %v1238
        %v1240 = vrot.slane %v1239, 4
        %v1242 = vshll.u32 %v930, 16
        %v1244 = vrot.slane %v1242, 5
        %v1245 = vsel %vm943, %v1240, %v1244
        %v1246 = vshrl.u32 %v930, 16
        %v1248 = vrot.slane %v1246, 4
        %v1249 = vor.u32 %v1248, %v1244
        %v1250 = vrot.slane %v1249, 4
        %v1252 = vshll.u32 %v931, 16
        %v1254 = vrot.slane %v1252, 5
        %v1255 = vsel %vm943, %v1250, %v1254
        %v1257 = vshrl.u32 %v932, 16
        %v1259 = vrot.slane %v1257, 4
        %v1260 = vshll.u32 %v932, 16
        %v1262 = vrot.slane %v1260, 5
        %v1263 = vor.u32 %v1259, %v1262
        %v1264 = vrot.slane %v1263, 4
        %v1266 = vshll.u32 %v933, 16
        %v1268 = vrot.slane %v1266, 5
        %v1269 = vsel %vm943, %v1264, %v1268
        %v1270 = vshrl.u32 %v933, 16
        %v1272 = vrot.slane %v1270, 4
        %v1273 = vor.u32 %v1272, %v1268
        %v1274 = vrot.slane %v1273, 4
        %v1276 = vshll.u32 %v934, 16
        %v1278 = vrot.slane %v1276, 5
        %v1279 = vsel %vm943, %v1274, %v1278
        %v1281 = vshrl.u32 %v935, 16
        %v1283 = vrot.slane %v1281, 4
        %v1284 = vshll.u32 %v935, 16
        %v1286 = vrot.slane %v1284, 5
        %v1287 = vor.u32 %v1283, %v1286
        %v1288 = vrot.slane %v1287, 4
        %v1290 = vshll.u32 %v936, 16
        %v1292 = vrot.slane %v1290, 5
        %v1293 = vsel %vm943, %v1288, %v1292
        %v1294 = vshrl.u32 %v936, 16
        %v1296 = vrot.slane %v1294, 4
        %v1297 = vor.u32 %v1296, %v1292
        %v1298 = vrot.slane %v1297, 4
        %v1300 = vshll.u32 %v937, 16
        %v1302 = vrot.slane %v1300, 5
        %v1303 = vsel %vm943, %v1298, %v1302
        %v1305 = vshrl.u32 %v938, 16
        %v1307 = vrot.slane %v1305, 4
        %v1308 = vshll.u32 %v938, 16
        %v1310 = vrot.slane %v1308, 5
        %v1311 = vor.u32 %v1307, %v1310
        %v1312 = vrot.slane %v1311, 4
        %v1314 = vshll.u32 %v939, 16
        %v1316 = vrot.slane %v1314, 5
        %v1317 = vsel %vm943, %v1312, %v1316
        %v1318 = vshrl.u32 %v939, 16
        %v1320 = vrot.slane %v1318, 4
        %v1321 = vor.u32 %v1320, %v1316
        %v1322 = vrot.slane %v1321, 4
        %v1324 = vshll.u32 %v940, 16
        %v1326 = vrot.slane %v1324, 5
        %v1327 = vsel %vm943, %v1322, %v1326
        %1360 = vst [vmem:[#allocation3 + $0x4] sm:$0xf] %v957
        %1361 = vst [vmem:[#allocation3 + $0x28] sm:$0xf] %v967
        %1362 = vst [vmem:[#allocation3 + $0x4c] sm:$0xf] %v981
        %1363 = vst [vmem:[#allocation3 + $0x70] sm:$0xf] %v991
        %1364 = vst [vmem:[#allocation3 + $0x94] sm:$0xf] %v1005
        %1365 = vst [vmem:[#allocation3 + $0xb8] sm:$0xf] %v1015
        %1366 = vst [vmem:[#allocation3 + $0xdc] sm:$0xf] %v1029
        %1367 = vst [vmem:[#allocation3 + $0x100] sm:$0xf] %v1039
        %1368 = vst [vmem:[#allocation3 + $0x124] sm:$0xf] %v1053
        %1369 = vst [vmem:[#allocation3 + $0x148] sm:$0xf] %v1063
        %1370 = vst [vmem:[#allocation3 + $0x16c] sm:$0xf] %v1077
        %1371 = vst [vmem:[#allocation3 + $0x190] sm:$0xf] %v1087
        %1372 = vst [vmem:[#allocation3 + $0x1b4] sm:$0xf] %v1101
        %1373 = vst [vmem:[#allocation3 + $0x1d8] sm:$0xf] %v1111
        %1374 = vst [vmem:[#allocation3 + $0x1fc] sm:$0xf] %v1125
        %1375 = vst [vmem:[#allocation3 + $0x220] sm:$0xf] %v1135
        %1376 = vst [vmem:[#allocation3 + $0x244] sm:$0xf] %v1149
        %1377 = vst [vmem:[#allocation3 + $0x268] sm:$0xf] %v1159
        %1378 = vst [vmem:[#allocation3 + $0x28c] sm:$0xf] %v1173
        %1379 = vst [vmem:[#allocation3 + $0x2b0] sm:$0xf] %v1183
        %1380 = vst [vmem:[#allocation3 + $0x2d4] sm:$0xf] %v1197
        %1381 = vst [vmem:[#allocation3 + $0x2f8] sm:$0xf] %v1207
        %1382 = vst [vmem:[#allocation3 + $0x31c] sm:$0xf] %v1221
        %1383 = vst [vmem:[#allocation3 + $0x340] sm:$0xf] %v1231
        %1384 = vst [vmem:[#allocation3 + $0x364] sm:$0xf] %v1245
        %1385 = vst [vmem:[#allocation3 + $0x388] sm:$0xf] %v1255
        %1386 = vst [vmem:[#allocation3 + $0x3ac] sm:$0xf] %v1269
        %1387 = vst [vmem:[#allocation3 + $0x3d0] sm:$0xf] %v1279
        %1388 = vst [vmem:[#allocation3 + $0x3f4] sm:$0xf] %v1293
        %1389 = vst [vmem:[#allocation3 + $0x418] sm:$0xf] %v1303
        %1390 = vst [vmem:[#allocation3 + $0x43c] sm:$0xf] %v1317
        %1391 = vst [vmem:[#allocation3 + $0x460] sm:$0xf] %v1327
        %v1392 = vld [vmem:[#allocation2] sm:$0xe]
        %v1393 = vld [vmem:[#allocation2 + $0x4] sm:$0xf]
        %v1394 = vld [vmem:[#allocation2 + $0x8] sm:$0x1]
        %v1395 = vld [vmem:[#allocation2 + $0xc] sm:$0xe]
        %v1396 = vld [vmem:[#allocation2 + $0x10] sm:$0xf]
        %v1397 = vld [vmem:[#allocation2 + $0x14] sm:$0x1]
        %v1398 = vld [vmem:[#allocation2 + $0x18] sm:$0xe]
        %v1399 = vld [vmem:[#allocation2 + $0x1c] sm:$0xf]
        %v1400 = vld [vmem:[#allocation2 + $0x20] sm:$0x1]
        %v1401 = vld [vmem:[#allocation2 + $0x24] sm:$0xe]
        %v1402 = vld [vmem:[#allocation2 + $0x28] sm:$0xf]
        %v1403 = vld [vmem:[#allocation2 + $0x2c] sm:$0x1]
        %v1404 = vld [vmem:[#allocation2 + $0x30] sm:$0xe]
        %v1405 = vld [vmem:[#allocation2 + $0x34] sm:$0xf]
        %v1406 = vld [vmem:[#allocation2 + $0x38] sm:$0x1]
        %v1407 = vld [vmem:[#allocation2 + $0x3c] sm:$0xe]
        %v1408 = vld [vmem:[#allocation2 + $0x40] sm:$0xf]
        %v1409 = vld [vmem:[#allocation2 + $0x44] sm:$0x1]
        %v1410 = vld [vmem:[#allocation2 + $0x48] sm:$0xe]
        %v1411 = vld [vmem:[#allocation2 + $0x4c] sm:$0xf]
        %v1412 = vld [vmem:[#allocation2 + $0x50] sm:$0x1]
        %v1413 = vld [vmem:[#allocation2 + $0x54] sm:$0xe]
        %v1414 = vld [vmem:[#allocation2 + $0x58] sm:$0xf]
        %v1415 = vld [vmem:[#allocation2 + $0x5c] sm:$0x1]
        %v1416 = vld [vmem:[#allocation2 + $0x60] sm:$0xe]
        %v1417 = vld [vmem:[#allocation2 + $0x64] sm:$0xf]
        %v1418 = vld [vmem:[#allocation2 + $0x68] sm:$0x1]
        %v1419 = vld [vmem:[#allocation2 + $0x6c] sm:$0xe]
        %v1420 = vld [vmem:[#allocation2 + $0x70] sm:$0xf]
        %v1421 = vld [vmem:[#allocation2 + $0x74] sm:$0x1]
        %v1422 = vld [vmem:[#allocation2 + $0x78] sm:$0xe]
        %v1423 = vld [vmem:[#allocation2 + $0x7c] sm:$0xf]
        %v1424 = vld [vmem:[#allocation2 + $0x80] sm:$0x1]
        %v1425 = vld [vmem:[#allocation2 + $0x84] sm:$0xe]
        %v1426 = vld [vmem:[#allocation2 + $0x88] sm:$0xf]
        %v1427 = vld [vmem:[#allocation2 + $0x8c] sm:$0x1]
        %v1428 = vld [vmem:[#allocation2 + $0x90] sm:$0xe]
        %v1429 = vld [vmem:[#allocation2 + $0x94] sm:$0xf]
        %v1430 = vld [vmem:[#allocation2 + $0x98] sm:$0x1]
        %v1431 = vld [vmem:[#allocation2 + $0x9c] sm:$0xe]
        %v1432 = vld [vmem:[#allocation2 + $0xa0] sm:$0xf]
        %v1433 = vld [vmem:[#allocation2 + $0xa4] sm:$0x1]
        %v1434 = vld [vmem:[#allocation2 + $0xa8] sm:$0xe]
        %v1435 = vld [vmem:[#allocation2 + $0xac] sm:$0xf]
        %v1436 = vld [vmem:[#allocation2 + $0xb0] sm:$0x1]
        %v1437 = vld [vmem:[#allocation2 + $0xb4] sm:$0xe]
        %v1438 = vld [vmem:[#allocation2 + $0xb8] sm:$0xf]
        %v1439 = vld [vmem:[#allocation2 + $0xbc] sm:$0x1]
        %vm1488 = vcmask 1042432
        %vm1489 = vcmask 1046532
        %vm1490 = vmor %vm1488, %vm1489
        %v1491 = vrot.slane %v1392, 5
        %v1492 = vrot.slane %v1491, 4
        %v1493 = vrot.slane %v1393, 5
        %v1494 = vsel %vm1490, %v1492, %v1493
        %v1495 = vrot.slane %v1493, 4
        %v1496 = vrot.slane %v1394, 5
        %v1497 = vsel %vm1490, %v1495, %v1496
        %v1498 = vrot.slane %v1395, 5
        %v1499 = vrot.slane %v1498, 4
        %v1500 = vrot.slane %v1396, 5
        %v1501 = vsel %vm1490, %v1499, %v1500
        %v1502 = vrot.slane %v1500, 4
        %v1503 = vrot.slane %v1397, 5
        %v1504 = vsel %vm1490, %v1502, %v1503
        %v1505 = vrot.slane %v1398, 5
        %v1506 = vrot.slane %v1505, 4
        %v1507 = vrot.slane %v1399, 5
        %v1508 = vsel %vm1490, %v1506, %v1507
        %v1509 = vrot.slane %v1507, 4
        %v1510 = vrot.slane %v1400, 5
        %v1511 = vsel %vm1490, %v1509, %v1510
        %v1512 = vrot.slane %v1401, 5
        %v1513 = vrot.slane %v1512, 4
        %v1514 = vrot.slane %v1402, 5
        %v1515 = vsel %vm1490, %v1513, %v1514
        %v1516 = vrot.slane %v1514, 4
        %v1517 = vrot.slane %v1403, 5
        %v1518 = vsel %vm1490, %v1516, %v1517
        %v1519 = vrot.slane %v1404, 5
        %v1520 = vrot.slane %v1519, 4
        %v1521 = vrot.slane %v1405, 5
        %v1522 = vsel %vm1490, %v1520, %v1521
        %v1523 = vrot.slane %v1521, 4
        %v1524 = vrot.slane %v1406, 5
        %v1525 = vsel %vm1490, %v1523, %v1524
        %v1526 = vrot.slane %v1407, 5
        %v1527 = vrot.slane %v1526, 4
        %v1528 = vrot.slane %v1408, 5
        %v1529 = vsel %vm1490, %v1527, %v1528
        %v1530 = vrot.slane %v1528, 4
        %v1531 = vrot.slane %v1409, 5
        %v1532 = vsel %vm1490, %v1530, %v1531
        %v1533 = vrot.slane %v1410, 5
        %v1534 = vrot.slane %v1533, 4
        %v1535 = vrot.slane %v1411, 5
        %v1536 = vsel %vm1490, %v1534, %v1535
        %v1537 = vrot.slane %v1535, 4
        %v1538 = vrot.slane %v1412, 5
        %v1539 = vsel %vm1490, %v1537, %v1538
        %v1540 = vrot.slane %v1413, 5
        %v1541 = vrot.slane %v1540, 4
        %v1542 = vrot.slane %v1414, 5
        %v1543 = vsel %vm1490, %v1541, %v1542
        %v1544 = vrot.slane %v1542, 4
        %v1545 = vrot.slane %v1415, 5
        %v1546 = vsel %vm1490, %v1544, %v1545
        %v1547 = vrot.slane %v1416, 5
        %v1548 = vrot.slane %v1547, 4
        %v1549 = vrot.slane %v1417, 5
        %v1550 = vsel %vm1490, %v1548, %v1549
        %v1551 = vrot.slane %v1549, 4
        %v1552 = vrot.slane %v1418, 5
        %v1553 = vsel %vm1490, %v1551, %v1552
        %v1554 = vrot.slane %v1419, 5
        %v1555 = vrot.slane %v1554, 4
        %v1556 = vrot.slane %v1420, 5
        %v1557 = vsel %vm1490, %v1555, %v1556
        %v1558 = vrot.slane %v1556, 4
        %v1559 = vrot.slane %v1421, 5
        %v1560 = vsel %vm1490, %v1558, %v1559
        %v1561 = vrot.slane %v1422, 5
        %v1562 = vrot.slane %v1561, 4
        %v1563 = vrot.slane %v1423, 5
        %v1564 = vsel %vm1490, %v1562, %v1563
        %v1565 = vrot.slane %v1563, 4
        %v1566 = vrot.slane %v1424, 5
        %v1567 = vsel %vm1490, %v1565, %v1566
        %v1568 = vrot.slane %v1425, 5
        %v1569 = vrot.slane %v1568, 4
        %v1570 = vrot.slane %v1426, 5
        %v1571 = vsel %vm1490, %v1569, %v1570
        %v1572 = vrot.slane %v1570, 4
        %v1573 = vrot.slane %v1427, 5
        %v1574 = vsel %vm1490, %v1572, %v1573
        %v1575 = vrot.slane %v1428, 5
        %v1576 = vrot.slane %v1575, 4
        %v1577 = vrot.slane %v1429, 5
        %v1578 = vsel %vm1490, %v1576, %v1577
        %v1579 = vrot.slane %v1577, 4
        %v1580 = vrot.slane %v1430, 5
        %v1581 = vsel %vm1490, %v1579, %v1580
        %v1582 = vrot.slane %v1431, 5
        %v1583 = vrot.slane %v1582, 4
        %v1584 = vrot.slane %v1432, 5
        %v1585 = vsel %vm1490, %v1583, %v1584
        %v1586 = vrot.slane %v1584, 4
        %v1587 = vrot.slane %v1433, 5
        %v1588 = vsel %vm1490, %v1586, %v1587
        %v1589 = vrot.slane %v1434, 5
        %v1590 = vrot.slane %v1589, 4
        %v1591 = vrot.slane %v1435, 5
        %v1592 = vsel %vm1490, %v1590, %v1591
        %v1593 = vrot.slane %v1591, 4
        %v1594 = vrot.slane %v1436, 5
        %v1595 = vsel %vm1490, %v1593, %v1594
        %v1596 = vrot.slane %v1437, 5
        %v1597 = vrot.slane %v1596, 4
        %v1598 = vrot.slane %v1438, 5
        %v1599 = vsel %vm1490, %v1597, %v1598
        %v1600 = vrot.slane %v1598, 4
        %v1601 = vrot.slane %v1439, 5
        %v1602 = vsel %vm1490, %v1600, %v1601
        %1635 = vst [vmem:[#allocation3 + $0x8] sm:$0xf] %v1494
        %1636 = vst [vmem:[#allocation3 + $0x2c] sm:$0xf] %v1497
        %1637 = vst [vmem:[#allocation3 + $0x50] sm:$0xf] %v1501
        %1638 = vst [vmem:[#allocation3 + $0x74] sm:$0xf] %v1504
        %1639 = vst [vmem:[#allocation3 + $0x98] sm:$0xf] %v1508
        %1640 = vst [vmem:[#allocation3 + $0xbc] sm:$0xf] %v1511
        %1641 = vst [vmem:[#allocation3 + $0xe0] sm:$0xf] %v1515
        %1642 = vst [vmem:[#allocation3 + $0x104] sm:$0xf] %v1518
        %1643 = vst [vmem:[#allocation3 + $0x128] sm:$0xf] %v1522
        %1644 = vst [vmem:[#allocation3 + $0x14c] sm:$0xf] %v1525
        %1645 = vst [vmem:[#allocation3 + $0x170] sm:$0xf] %v1529
        %1646 = vst [vmem:[#allocation3 + $0x194] sm:$0xf] %v1532
        %1647 = vst [vmem:[#allocation3 + $0x1b8] sm:$0xf] %v1536
        %1648 = vst [vmem:[#allocation3 + $0x1dc] sm:$0xf] %v1539
        %1649 = vst [vmem:[#allocation3 + $0x200] sm:$0xf] %v1543
        %1650 = vst [vmem:[#allocation3 + $0x224] sm:$0xf] %v1546
        %1651 = vst [vmem:[#allocation3 + $0x248] sm:$0xf] %v1550
        %1652 = vst [vmem:[#allocation3 + $0x26c] sm:$0xf] %v1553
        %1653 = vst [vmem:[#allocation3 + $0x290] sm:$0xf] %v1557
        %1654 = vst [vmem:[#allocation3 + $0x2b4] sm:$0xf] %v1560
        %1655 = vst [vmem:[#allocation3 + $0x2d8] sm:$0xf] %v1564
        %1656 = vst [vmem:[#allocation3 + $0x2fc] sm:$0xf] %v1567
        %1657 = vst [vmem:[#allocation3 + $0x320] sm:$0xf] %v1571
        %1658 = vst [vmem:[#allocation3 + $0x344] sm:$0xf] %v1574
        %1659 = vst [vmem:[#allocation3 + $0x368] sm:$0xf] %v1578
        %1660 = vst [vmem:[#allocation3 + $0x38c] sm:$0xf] %v1581
        %1661 = vst [vmem:[#allocation3 + $0x3b0] sm:$0xf] %v1585
        %1662 = vst [vmem:[#allocation3 + $0x3d4] sm:$0xf] %v1588
        %1663 = vst [vmem:[#allocation3 + $0x3f8] sm:$0xf] %v1592
        %1664 = vst [vmem:[#allocation3 + $0x41c] sm:$0xf] %v1595
        %1665 = vst [vmem:[#allocation3 + $0x440] sm:$0xf] %v1599
        %1666 = vst [vmem:[#allocation3 + $0x464] sm:$0xf] %v1602
        %v1667 = vld [vmem:[%s259] sm:$0xf]
        %v1668 = vld [vmem:[%s259 + $0x4] sm:$0xf]
        %v1669 = vld [vmem:[%s259 + $0xc] sm:$0xf]
        %v1670 = vld [vmem:[%s259 + $0x10] sm:$0xf]
        %v1671 = vld [vmem:[%s259 + $0x18] sm:$0xf]
        %v1672 = vld [vmem:[%s259 + $0x1c] sm:$0xf]
        %v1673 = vld [vmem:[%s259 + $0x24] sm:$0xf]
        %v1674 = vld [vmem:[%s259 + $0x28] sm:$0xf]
        %v1675 = vld [vmem:[%s259 + $0x30] sm:$0xf]
        %v1676 = vld [vmem:[%s259 + $0x34] sm:$0xf]
        %v1677 = vld [vmem:[%s259 + $0x3c] sm:$0xf]
        %v1678 = vld [vmem:[%s259 + $0x40] sm:$0xf]
        %v1679 = vld [vmem:[%s259 + $0x48] sm:$0xf]
        %v1680 = vld [vmem:[%s259 + $0x4c] sm:$0xf]
        %v1681 = vld [vmem:[%s259 + $0x54] sm:$0xf]
        %v1682 = vld [vmem:[%s259 + $0x58] sm:$0xf]
        %v1683 = vld [vmem:[%s259 + $0x60] sm:$0xf]
        %v1684 = vld [vmem:[%s259 + $0x64] sm:$0xf]
        %v1685 = vld [vmem:[%s259 + $0x6c] sm:$0xf]
        %v1686 = vld [vmem:[%s259 + $0x70] sm:$0xf]
        %v1687 = vld [vmem:[%s259 + $0x78] sm:$0xf]
        %v1688 = vld [vmem:[%s259 + $0x7c] sm:$0xf]
        %v1689 = vld [vmem:[%s259 + $0x84] sm:$0xf]
        %v1690 = vld [vmem:[%s259 + $0x88] sm:$0xf]
        %v1691 = vld [vmem:[%s259 + $0x90] sm:$0xf]
        %v1692 = vld [vmem:[%s259 + $0x94] sm:$0xf]
        %v1693 = vld [vmem:[%s259 + $0x9c] sm:$0xf]
        %v1694 = vld [vmem:[%s259 + $0xa0] sm:$0xf]
        %v1695 = vld [vmem:[%s259 + $0xa8] sm:$0xf]
        %v1696 = vld [vmem:[%s259 + $0xac] sm:$0xf]
        %v1697 = vld [vmem:[%s259 + $0xb4] sm:$0xf]
        %v1698 = vld [vmem:[%s259 + $0xb8] sm:$0xf]
        %1699 = vst [vmem:[#allocation3 + $0xc] sm:$0xf] %v1667
        %1700 = vst [vmem:[#allocation3 + $0x30] sm:$0xf] %v1668
        %1701 = vst [vmem:[#allocation3 + $0x54] sm:$0xf] %v1669
        %1702 = vst [vmem:[#allocation3 + $0x78] sm:$0xf] %v1670
        %1703 = vst [vmem:[#allocation3 + $0x9c] sm:$0xf] %v1671
        %1704 = vst [vmem:[#allocation3 + $0xc0] sm:$0xf] %v1672
        %1705 = vst [vmem:[#allocation3 + $0xe4] sm:$0xf] %v1673
        %1706 = vst [vmem:[#allocation3 + $0x108] sm:$0xf] %v1674
        %1707 = vst [vmem:[#allocation3 + $0x12c] sm:$0xf] %v1675
        %1708 = vst [vmem:[#allocation3 + $0x150] sm:$0xf] %v1676
        %1709 = vst [vmem:[#allocation3 + $0x174] sm:$0xf] %v1677
        %1710 = vst [vmem:[#allocation3 + $0x198] sm:$0xf] %v1678
        %1711 = vst [vmem:[#allocation3 + $0x1bc] sm:$0xf] %v1679
        %1712 = vst [vmem:[#allocation3 + $0x1e0] sm:$0xf] %v1680
        %1713 = vst [vmem:[#allocation3 + $0x204] sm:$0xf] %v1681
        %1714 = vst [vmem:[#allocation3 + $0x228] sm:$0xf] %v1682
        %1715 = vst [vmem:[#allocation3 + $0x24c] sm:$0xf] %v1683
        %1716 = vst [vmem:[#allocation3 + $0x270] sm:$0xf] %v1684
        %1717 = vst [vmem:[#allocation3 + $0x294] sm:$0xf] %v1685
        %1718 = vst [vmem:[#allocation3 + $0x2b8] sm:$0xf] %v1686
        %1719 = vst [vmem:[#allocation3 + $0x2dc] sm:$0xf] %v1687
        %1720 = vst [vmem:[#allocation3 + $0x300] sm:$0xf] %v1688
        %1721 = vst [vmem:[#allocation3 + $0x324] sm:$0xf] %v1689
        %1722 = vst [vmem:[#allocation3 + $0x348] sm:$0xf] %v1690
        %1723 = vst [vmem:[#allocation3 + $0x36c] sm:$0xf] %v1691
        %1724 = vst [vmem:[#allocation3 + $0x390] sm:$0xf] %v1692
        %1725 = vst [vmem:[#allocation3 + $0x3b4] sm:$0xf] %v1693
        %1726 = vst [vmem:[#allocation3 + $0x3d8] sm:$0xf] %v1694
        %1727 = vst [vmem:[#allocation3 + $0x3fc] sm:$0xf] %v1695
        %1728 = vst [vmem:[#allocation3 + $0x420] sm:$0xf] %v1696
        %1729 = vst [vmem:[#allocation3 + $0x444] sm:$0xf] %v1697
        %1730 = vst [vmem:[#allocation3 + $0x468] sm:$0xf] %v1698
        %v1731 = vld [vmem:[%s259] sm:$0xf]
        %v1732 = vld [vmem:[%s259 + $0x4] sm:$0xf]
        %v1733 = vld [vmem:[%s259 + $0x8] sm:$0x1]
        %v1734 = vld [vmem:[%s259 + $0xc] sm:$0xf]
        %v1735 = vld [vmem:[%s259 + $0x10] sm:$0xf]
        %v1736 = vld [vmem:[%s259 + $0x14] sm:$0x1]
        %v1737 = vld [vmem:[%s259 + $0x18] sm:$0xf]
        %v1738 = vld [vmem:[%s259 + $0x1c] sm:$0xf]
        %v1739 = vld [vmem:[%s259 + $0x20] sm:$0x1]
        %v1740 = vld [vmem:[%s259 + $0x24] sm:$0xf]
        %v1741 = vld [vmem:[%s259 + $0x28] sm:$0xf]
        %v1742 = vld [vmem:[%s259 + $0x2c] sm:$0x1]
        %v1743 = vld [vmem:[%s259 + $0x30] sm:$0xf]
        %v1744 = vld [vmem:[%s259 + $0x34] sm:$0xf]
        %v1745 = vld [vmem:[%s259 + $0x38] sm:$0x1]
        %v1746 = vld [vmem:[%s259 + $0x3c] sm:$0xf]
        %v1747 = vld [vmem:[%s259 + $0x40] sm:$0xf]
        %v1748 = vld [vmem:[%s259 + $0x44] sm:$0x1]
        %v1749 = vld [vmem:[%s259 + $0x48] sm:$0xf]
        %v1750 = vld [vmem:[%s259 + $0x4c] sm:$0xf]
        %v1751 = vld [vmem:[%s259 + $0x50] sm:$0x1]
        %v1752 = vld [vmem:[%s259 + $0x54] sm:$0xf]
        %v1753 = vld [vmem:[%s259 + $0x58] sm:$0xf]
        %v1754 = vld [vmem:[%s259 + $0x5c] sm:$0x1]
        %v1755 = vld [vmem:[%s259 + $0x60] sm:$0xf]
        %v1756 = vld [vmem:[%s259 + $0x64] sm:$0xf]
        %v1757 = vld [vmem:[%s259 + $0x68] sm:$0x1]
        %v1758 = vld [vmem:[%s259 + $0x6c] sm:$0xf]
        %v1759 = vld [vmem:[%s259 + $0x70] sm:$0xf]
        %v1760 = vld [vmem:[%s259 + $0x74] sm:$0x1]
        %v1761 = vld [vmem:[%s259 + $0x78] sm:$0xf]
        %v1762 = vld [vmem:[%s259 + $0x7c] sm:$0xf]
        %v1763 = vld [vmem:[%s259 + $0x80] sm:$0x1]
        %v1764 = vld [vmem:[%s259 + $0x84] sm:$0xf]
        %v1765 = vld [vmem:[%s259 + $0x88] sm:$0xf]
        %v1766 = vld [vmem:[%s259 + $0x8c] sm:$0x1]
        %v1767 = vld [vmem:[%s259 + $0x90] sm:$0xf]
        %v1768 = vld [vmem:[%s259 + $0x94] sm:$0xf]
        %v1769 = vld [vmem:[%s259 + $0x98] sm:$0x1]
        %v1770 = vld [vmem:[%s259 + $0x9c] sm:$0xf]
        %v1771 = vld [vmem:[%s259 + $0xa0] sm:$0xf]
        %v1772 = vld [vmem:[%s259 + $0xa4] sm:$0x1]
        %v1773 = vld [vmem:[%s259 + $0xa8] sm:$0xf]
        %v1774 = vld [vmem:[%s259 + $0xac] sm:$0xf]
        %v1775 = vld [vmem:[%s259 + $0xb0] sm:$0x1]
        %v1776 = vld [vmem:[%s259 + $0xb4] sm:$0xf]
        %v1777 = vld [vmem:[%s259 + $0xb8] sm:$0xf]
        %v1778 = vld [vmem:[%s259 + $0xbc] sm:$0x1]
        %v1780 = vshrl.u32 %v1731, 16
        %v1782 = vrot.slane %v1780, 4
        %v1783 = vshll.u32 %v1731, 16
        %v1785 = vrot.slane %v1783, 5
        %v1786 = vor.u32 %v1782, %v1785
        %v1787 = vrot.slane %v1786, 4
        %v1789 = vshll.u32 %v1732, 16
        %v1791 = vrot.slane %v1789, 5
        %v1792 = vsel %vm943, %v1787, %v1791
        %v1793 = vshrl.u32 %v1732, 16
        %v1795 = vrot.slane %v1793, 4
        %v1796 = vor.u32 %v1795, %v1791
        %v1797 = vrot.slane %v1796, 4
        %v1799 = vshll.u32 %v1733, 16
        %v1801 = vrot.slane %v1799, 5
        %v1802 = vsel %vm943, %v1797, %v1801
        %v1804 = vshrl.u32 %v1734, 16
        %v1806 = vrot.slane %v1804, 4
        %v1807 = vshll.u32 %v1734, 16
        %v1809 = vrot.slane %v1807, 5
        %v1810 = vor.u32 %v1806, %v1809
        %v1811 = vrot.slane %v1810, 4
        %v1813 = vshll.u32 %v1735, 16
        %v1815 = vrot.slane %v1813, 5
        %v1816 = vsel %vm943, %v1811, %v1815
        %v1817 = vshrl.u32 %v1735, 16
        %v1819 = vrot.slane %v1817, 4
        %v1820 = vor.u32 %v1819, %v1815
        %v1821 = vrot.slane %v1820, 4
        %v1823 = vshll.u32 %v1736, 16
        %v1825 = vrot.slane %v1823, 5
        %v1826 = vsel %vm943, %v1821, %v1825
        %v1828 = vshrl.u32 %v1737, 16
        %v1830 = vrot.slane %v1828, 4
        %v1831 = vshll.u32 %v1737, 16
        %v1833 = vrot.slane %v1831, 5
        %v1834 = vor.u32 %v1830, %v1833
        %v1835 = vrot.slane %v1834, 4
        %v1837 = vshll.u32 %v1738, 16
        %v1839 = vrot.slane %v1837, 5
        %v1840 = vsel %vm943, %v1835, %v1839
        %v1841 = vshrl.u32 %v1738, 16
        %v1843 = vrot.slane %v1841, 4
        %v1844 = vor.u32 %v1843, %v1839
        %v1845 = vrot.slane %v1844, 4
        %v1847 = vshll.u32 %v1739, 16
        %v1849 = vrot.slane %v1847, 5
        %v1850 = vsel %vm943, %v1845, %v1849
        %v1852 = vshrl.u32 %v1740, 16
        %v1854 = vrot.slane %v1852, 4
        %v1855 = vshll.u32 %v1740, 16
        %v1857 = vrot.slane %v1855, 5
        %v1858 = vor.u32 %v1854, %v1857
        %v1859 = vrot.slane %v1858, 4
        %v1861 = vshll.u32 %v1741, 16
        %v1863 = vrot.slane %v1861, 5
        %v1864 = vsel %vm943, %v1859, %v1863
        %v1865 = vshrl.u32 %v1741, 16
        %v1867 = vrot.slane %v1865, 4
        %v1868 = vor.u32 %v1867, %v1863
        %v1869 = vrot.slane %v1868, 4
        %v1871 = vshll.u32 %v1742, 16
        %v1873 = vrot.slane %v1871, 5
        %v1874 = vsel %vm943, %v1869, %v1873
        %v1876 = vshrl.u32 %v1743, 16
        %v1878 = vrot.slane %v1876, 4
        %v1879 = vshll.u32 %v1743, 16
        %v1881 = vrot.slane %v1879, 5
        %v1882 = vor.u32 %v1878, %v1881
        %v1883 = vrot.slane %v1882, 4
        %v1885 = vshll.u32 %v1744, 16
        %v1887 = vrot.slane %v1885, 5
        %v1888 = vsel %vm943, %v1883, %v1887
        %v1889 = vshrl.u32 %v1744, 16
        %v1891 = vrot.slane %v1889, 4
        %v1892 = vor.u32 %v1891, %v1887
        %v1893 = vrot.slane %v1892, 4
        %v1895 = vshll.u32 %v1745, 16
        %v1897 = vrot.slane %v1895, 5
        %v1898 = vsel %vm943, %v1893, %v1897
        %v1900 = vshrl.u32 %v1746, 16
        %v1902 = vrot.slane %v1900, 4
        %v1903 = vshll.u32 %v1746, 16
        %v1905 = vrot.slane %v1903, 5
        %v1906 = vor.u32 %v1902, %v1905
        %v1907 = vrot.slane %v1906, 4
        %v1909 = vshll.u32 %v1747, 16
        %v1911 = vrot.slane %v1909, 5
        %v1912 = vsel %vm943, %v1907, %v1911
        %v1913 = vshrl.u32 %v1747, 16
        %v1915 = vrot.slane %v1913, 4
        %v1916 = vor.u32 %v1915, %v1911
        %v1917 = vrot.slane %v1916, 4
        %v1919 = vshll.u32 %v1748, 16
        %v1921 = vrot.slane %v1919, 5
        %v1922 = vsel %vm943, %v1917, %v1921
        %v1924 = vshrl.u32 %v1749, 16
        %v1926 = vrot.slane %v1924, 4
        %v1927 = vshll.u32 %v1749, 16
        %v1929 = vrot.slane %v1927, 5
        %v1930 = vor.u32 %v1926, %v1929
        %v1931 = vrot.slane %v1930, 4
        %v1933 = vshll.u32 %v1750, 16
        %v1935 = vrot.slane %v1933, 5
        %v1936 = vsel %vm943, %v1931, %v1935
        %v1937 = vshrl.u32 %v1750, 16
        %v1939 = vrot.slane %v1937, 4
        %v1940 = vor.u32 %v1939, %v1935
        %v1941 = vrot.slane %v1940, 4
        %v1943 = vshll.u32 %v1751, 16
        %v1945 = vrot.slane %v1943, 5
        %v1946 = vsel %vm943, %v1941, %v1945
        %v1948 = vshrl.u32 %v1752, 16
        %v1950 = vrot.slane %v1948, 4
        %v1951 = vshll.u32 %v1752, 16
        %v1953 = vrot.slane %v1951, 5
        %v1954 = vor.u32 %v1950, %v1953
        %v1955 = vrot.slane %v1954, 4
        %v1957 = vshll.u32 %v1753, 16
        %v1959 = vrot.slane %v1957, 5
        %v1960 = vsel %vm943, %v1955, %v1959
        %v1961 = vshrl.u32 %v1753, 16
        %v1963 = vrot.slane %v1961, 4
        %v1964 = vor.u32 %v1963, %v1959
        %v1965 = vrot.slane %v1964, 4
        %v1967 = vshll.u32 %v1754, 16
        %v1969 = vrot.slane %v1967, 5
        %v1970 = vsel %vm943, %v1965, %v1969
        %v1972 = vshrl.u32 %v1755, 16
        %v1974 = vrot.slane %v1972, 4
        %v1975 = vshll.u32 %v1755, 16
        %v1977 = vrot.slane %v1975, 5
        %v1978 = vor.u32 %v1974, %v1977
        %v1979 = vrot.slane %v1978, 4
        %v1981 = vshll.u32 %v1756, 16
        %v1983 = vrot.slane %v1981, 5
        %v1984 = vsel %vm943, %v1979, %v1983
        %v1985 = vshrl.u32 %v1756, 16
        %v1987 = vrot.slane %v1985, 4
        %v1988 = vor.u32 %v1987, %v1983
        %v1989 = vrot.slane %v1988, 4
        %v1991 = vshll.u32 %v1757, 16
        %v1993 = vrot.slane %v1991, 5
        %v1994 = vsel %vm943, %v1989, %v1993
        %v1996 = vshrl.u32 %v1758, 16
        %v1998 = vrot.slane %v1996, 4
        %v1999 = vshll.u32 %v1758, 16
        %v2001 = vrot.slane %v1999, 5
        %v2002 = vor.u32 %v1998, %v2001
        %v2003 = vrot.slane %v2002, 4
        %v2005 = vshll.u32 %v1759, 16
        %v2007 = vrot.slane %v2005, 5
        %v2008 = vsel %vm943, %v2003, %v2007
        %v2009 = vshrl.u32 %v1759, 16
        %v2011 = vrot.slane %v2009, 4
        %v2012 = vor.u32 %v2011, %v2007
        %v2013 = vrot.slane %v2012, 4
        %v2015 = vshll.u32 %v1760, 16
        %v2017 = vrot.slane %v2015, 5
        %v2018 = vsel %vm943, %v2013, %v2017
        %v2020 = vshrl.u32 %v1761, 16
        %v2022 = vrot.slane %v2020, 4
        %v2023 = vshll.u32 %v1761, 16
        %v2025 = vrot.slane %v2023, 5
        %v2026 = vor.u32 %v2022, %v2025
        %v2027 = vrot.slane %v2026, 4
        %v2029 = vshll.u32 %v1762, 16
        %v2031 = vrot.slane %v2029, 5
        %v2032 = vsel %vm943, %v2027, %v2031
        %v2033 = vshrl.u32 %v1762, 16
        %v2035 = vrot.slane %v2033, 4
        %v2036 = vor.u32 %v2035, %v2031
        %v2037 = vrot.slane %v2036, 4
        %v2039 = vshll.u32 %v1763, 16
        %v2041 = vrot.slane %v2039, 5
        %v2042 = vsel %vm943, %v2037, %v2041
        %v2044 = vshrl.u32 %v1764, 16
        %v2046 = vrot.slane %v2044, 4
        %v2047 = vshll.u32 %v1764, 16
        %v2049 = vrot.slane %v2047, 5
        %v2050 = vor.u32 %v2046, %v2049
        %v2051 = vrot.slane %v2050, 4
        %v2053 = vshll.u32 %v1765, 16
        %v2055 = vrot.slane %v2053, 5
        %v2056 = vsel %vm943, %v2051, %v2055
        %v2057 = vshrl.u32 %v1765, 16
        %v2059 = vrot.slane %v2057, 4
        %v2060 = vor.u32 %v2059, %v2055
        %v2061 = vrot.slane %v2060, 4
        %v2063 = vshll.u32 %v1766, 16
        %v2065 = vrot.slane %v2063, 5
        %v2066 = vsel %vm943, %v2061, %v2065
        %v2068 = vshrl.u32 %v1767, 16
        %v2070 = vrot.slane %v2068, 4
        %v2071 = vshll.u32 %v1767, 16
        %v2073 = vrot.slane %v2071, 5
        %v2074 = vor.u32 %v2070, %v2073
        %v2075 = vrot.slane %v2074, 4
        %v2077 = vshll.u32 %v1768, 16
        %v2079 = vrot.slane %v2077, 5
        %v2080 = vsel %vm943, %v2075, %v2079
        %v2081 = vshrl.u32 %v1768, 16
        %v2083 = vrot.slane %v2081, 4
        %v2084 = vor.u32 %v2083, %v2079
        %v2085 = vrot.slane %v2084, 4
        %v2087 = vshll.u32 %v1769, 16
        %v2089 = vrot.slane %v2087, 5
        %v2090 = vsel %vm943, %v2085, %v2089
        %v2092 = vshrl.u32 %v1770, 16
        %v2094 = vrot.slane %v2092, 4
        %v2095 = vshll.u32 %v1770, 16
        %v2097 = vrot.slane %v2095, 5
        %v2098 = vor.u32 %v2094, %v2097
        %v2099 = vrot.slane %v2098, 4
        %v2101 = vshll.u32 %v1771, 16
        %v2103 = vrot.slane %v2101, 5
        %v2104 = vsel %vm943, %v2099, %v2103
        %v2105 = vshrl.u32 %v1771, 16
        %v2107 = vrot.slane %v2105, 4
        %v2108 = vor.u32 %v2107, %v2103
        %v2109 = vrot.slane %v2108, 4
        %v2111 = vshll.u32 %v1772, 16
        %v2113 = vrot.slane %v2111, 5
        %v2114 = vsel %vm943, %v2109, %v2113
        %v2116 = vshrl.u32 %v1773, 16
        %v2118 = vrot.slane %v2116, 4
        %v2119 = vshll.u32 %v1773, 16
        %v2121 = vrot.slane %v2119, 5
        %v2122 = vor.u32 %v2118, %v2121
        %v2123 = vrot.slane %v2122, 4
        %v2125 = vshll.u32 %v1774, 16
        %v2127 = vrot.slane %v2125, 5
        %v2128 = vsel %vm943, %v2123, %v2127
        %v2129 = vshrl.u32 %v1774, 16
        %v2131 = vrot.slane %v2129, 4
        %v2132 = vor.u32 %v2131, %v2127
        %v2133 = vrot.slane %v2132, 4
        %v2135 = vshll.u32 %v1775, 16
        %v2137 = vrot.slane %v2135, 5
        %v2138 = vsel %vm943, %v2133, %v2137
        %v2140 = vshrl.u32 %v1776, 16
        %v2142 = vrot.slane %v2140, 4
        %v2143 = vshll.u32 %v1776, 16
        %v2145 = vrot.slane %v2143, 5
        %v2146 = vor.u32 %v2142, %v2145
        %v2147 = vrot.slane %v2146, 4
        %v2149 = vshll.u32 %v1777, 16
        %v2151 = vrot.slane %v2149, 5
        %v2152 = vsel %vm943, %v2147, %v2151
        %v2153 = vshrl.u32 %v1777, 16
        %v2155 = vrot.slane %v2153, 4
        %v2156 = vor.u32 %v2155, %v2151
        %v2157 = vrot.slane %v2156, 4
        %v2159 = vshll.u32 %v1778, 16
        %v2161 = vrot.slane %v2159, 5
        %v2162 = vsel %vm943, %v2157, %v2161
        %2195 = vst [vmem:[#allocation3 + $0x10] sm:$0xf] %v1792
        %2196 = vst [vmem:[#allocation3 + $0x34] sm:$0xf] %v1802
        %2197 = vst [vmem:[#allocation3 + $0x58] sm:$0xf] %v1816
        %2198 = vst [vmem:[#allocation3 + $0x7c] sm:$0xf] %v1826
        %2199 = vst [vmem:[#allocation3 + $0xa0] sm:$0xf] %v1840
        %2200 = vst [vmem:[#allocation3 + $0xc4] sm:$0xf] %v1850
        %2201 = vst [vmem:[#allocation3 + $0xe8] sm:$0xf] %v1864
        %2202 = vst [vmem:[#allocation3 + $0x10c] sm:$0xf] %v1874
        %2203 = vst [vmem:[#allocation3 + $0x130] sm:$0xf] %v1888
        %2204 = vst [vmem:[#allocation3 + $0x154] sm:$0xf] %v1898
        %2205 = vst [vmem:[#allocation3 + $0x178] sm:$0xf] %v1912
        %2206 = vst [vmem:[#allocation3 + $0x19c] sm:$0xf] %v1922
        %2207 = vst [vmem:[#allocation3 + $0x1c0] sm:$0xf] %v1936
        %2208 = vst [vmem:[#allocation3 + $0x1e4] sm:$0xf] %v1946
        %2209 = vst [vmem:[#allocation3 + $0x208] sm:$0xf] %v1960
        %2210 = vst [vmem:[#allocation3 + $0x22c] sm:$0xf] %v1970
        %2211 = vst [vmem:[#allocation3 + $0x250] sm:$0xf] %v1984
        %2212 = vst [vmem:[#allocation3 + $0x274] sm:$0xf] %v1994
        %2213 = vst [vmem:[#allocation3 + $0x298] sm:$0xf] %v2008
        %2214 = vst [vmem:[#allocation3 + $0x2bc] sm:$0xf] %v2018
        %2215 = vst [vmem:[#allocation3 + $0x2e0] sm:$0xf] %v2032
        %2216 = vst [vmem:[#allocation3 + $0x304] sm:$0xf] %v2042
        %2217 = vst [vmem:[#allocation3 + $0x328] sm:$0xf] %v2056
        %2218 = vst [vmem:[#allocation3 + $0x34c] sm:$0xf] %v2066
        %2219 = vst [vmem:[#allocation3 + $0x370] sm:$0xf] %v2080
        %2220 = vst [vmem:[#allocation3 + $0x394] sm:$0xf] %v2090
        %2221 = vst [vmem:[#allocation3 + $0x3b8] sm:$0xf] %v2104
        %2222 = vst [vmem:[#allocation3 + $0x3dc] sm:$0xf] %v2114
        %2223 = vst [vmem:[#allocation3 + $0x400] sm:$0xf] %v2128
        %2224 = vst [vmem:[#allocation3 + $0x424] sm:$0xf] %v2138
        %2225 = vst [vmem:[#allocation3 + $0x448] sm:$0xf] %v2152
        %2226 = vst [vmem:[#allocation3 + $0x46c] sm:$0xf] %v2162
        %v2227 = vld [vmem:[%s259] sm:$0xe]
        %v2228 = vld [vmem:[%s259 + $0x4] sm:$0xf]
        %v2229 = vld [vmem:[%s259 + $0x8] sm:$0x1]
        %v2230 = vld [vmem:[%s259 + $0xc] sm:$0xe]
        %v2231 = vld [vmem:[%s259 + $0x10] sm:$0xf]
        %v2232 = vld [vmem:[%s259 + $0x14] sm:$0x1]
        %v2233 = vld [vmem:[%s259 + $0x18] sm:$0xe]
        %v2234 = vld [vmem:[%s259 + $0x1c] sm:$0xf]
        %v2235 = vld [vmem:[%s259 + $0x20] sm:$0x1]
        %v2236 = vld [vmem:[%s259 + $0x24] sm:$0xe]
        %v2237 = vld [vmem:[%s259 + $0x28] sm:$0xf]
        %v2238 = vld [vmem:[%s259 + $0x2c] sm:$0x1]
        %v2239 = vld [vmem:[%s259 + $0x30] sm:$0xe]
        %v2240 = vld [vmem:[%s259 + $0x34] sm:$0xf]
        %v2241 = vld [vmem:[%s259 + $0x38] sm:$0x1]
        %v2242 = vld [vmem:[%s259 + $0x3c] sm:$0xe]
        %v2243 = vld [vmem:[%s259 + $0x40] sm:$0xf]
        %v2244 = vld [vmem:[%s259 + $0x44] sm:$0x1]
        %v2245 = vld [vmem:[%s259 + $0x48] sm:$0xe]
        %v2246 = vld [vmem:[%s259 + $0x4c] sm:$0xf]
        %v2247 = vld [vmem:[%s259 + $0x50] sm:$0x1]
        %v2248 = vld [vmem:[%s259 + $0x54] sm:$0xe]
        %v2249 = vld [vmem:[%s259 + $0x58] sm:$0xf]
        %v2250 = vld [vmem:[%s259 + $0x5c] sm:$0x1]
        %v2251 = vld [vmem:[%s259 + $0x60] sm:$0xe]
        %v2252 = vld [vmem:[%s259 + $0x64] sm:$0xf]
        %v2253 = vld [vmem:[%s259 + $0x68] sm:$0x1]
        %v2254 = vld [vmem:[%s259 + $0x6c] sm:$0xe]
        %v2255 = vld [vmem:[%s259 + $0x70] sm:$0xf]
        %v2256 = vld [vmem:[%s259 + $0x74] sm:$0x1]
        %v2257 = vld [vmem:[%s259 + $0x78] sm:$0xe]
        %v2258 = vld [vmem:[%s259 + $0x7c] sm:$0xf]
        %v2259 = vld [vmem:[%s259 + $0x80] sm:$0x1]
        %v2260 = vld [vmem:[%s259 + $0x84] sm:$0xe]
        %v2261 = vld [vmem:[%s259 + $0x88] sm:$0xf]
        %v2262 = vld [vmem:[%s259 + $0x8c] sm:$0x1]
        %v2263 = vld [vmem:[%s259 + $0x90] sm:$0xe]
        %v2264 = vld [vmem:[%s259 + $0x94] sm:$0xf]
        %v2265 = vld [vmem:[%s259 + $0x98] sm:$0x1]
        %v2266 = vld [vmem:[%s259 + $0x9c] sm:$0xe]
        %v2267 = vld [vmem:[%s259 + $0xa0] sm:$0xf]
        %v2268 = vld [vmem:[%s259 + $0xa4] sm:$0x1]
        %v2269 = vld [vmem:[%s259 + $0xa8] sm:$0xe]
        %v2270 = vld [vmem:[%s259 + $0xac] sm:$0xf]
        %v2271 = vld [vmem:[%s259 + $0xb0] sm:$0x1]
        %v2272 = vld [vmem:[%s259 + $0xb4] sm:$0xe]
        %v2273 = vld [vmem:[%s259 + $0xb8] sm:$0xf]
        %v2274 = vld [vmem:[%s259 + $0xbc] sm:$0x1]
        %v2323 = vrot.slane %v2227, 5
        %v2324 = vrot.slane %v2323, 4
        %v2325 = vrot.slane %v2228, 5
        %v2326 = vsel %vm1490, %v2324, %v2325
        %v2327 = vrot.slane %v2325, 4
        %v2328 = vrot.slane %v2229, 5
        %v2329 = vsel %vm1490, %v2327, %v2328
        %v2330 = vrot.slane %v2230, 5
        %v2331 = vrot.slane %v2330, 4
        %v2332 = vrot.slane %v2231, 5
        %v2333 = vsel %vm1490, %v2331, %v2332
        %v2334 = vrot.slane %v2332, 4
        %v2335 = vrot.slane %v2232, 5
        %v2336 = vsel %vm1490, %v2334, %v2335
        %v2337 = vrot.slane %v2233, 5
        %v2338 = vrot.slane %v2337, 4
        %v2339 = vrot.slane %v2234, 5
        %v2340 = vsel %vm1490, %v2338, %v2339
        %v2341 = vrot.slane %v2339, 4
        %v2342 = vrot.slane %v2235, 5
        %v2343 = vsel %vm1490, %v2341, %v2342
        %v2344 = vrot.slane %v2236, 5
        %v2345 = vrot.slane %v2344, 4
        %v2346 = vrot.slane %v2237, 5
        %v2347 = vsel %vm1490, %v2345, %v2346
        %v2348 = vrot.slane %v2346, 4
        %v2349 = vrot.slane %v2238, 5
        %v2350 = vsel %vm1490, %v2348, %v2349
        %v2351 = vrot.slane %v2239, 5
        %v2352 = vrot.slane %v2351, 4
        %v2353 = vrot.slane %v2240, 5
        %v2354 = vsel %vm1490, %v2352, %v2353
        %v2355 = vrot.slane %v2353, 4
        %v2356 = vrot.slane %v2241, 5
        %v2357 = vsel %vm1490, %v2355, %v2356
        %v2358 = vrot.slane %v2242, 5
        %v2359 = vrot.slane %v2358, 4
        %v2360 = vrot.slane %v2243, 5
        %v2361 = vsel %vm1490, %v2359, %v2360
        %v2362 = vrot.slane %v2360, 4
        %v2363 = vrot.slane %v2244, 5
        %v2364 = vsel %vm1490, %v2362, %v2363
        %v2365 = vrot.slane %v2245, 5
        %v2366 = vrot.slane %v2365, 4
        %v2367 = vrot.slane %v2246, 5
        %v2368 = vsel %vm1490, %v2366, %v2367
        %v2369 = vrot.slane %v2367, 4
        %v2370 = vrot.slane %v2247, 5
        %v2371 = vsel %vm1490, %v2369, %v2370
        %v2372 = vrot.slane %v2248, 5
        %v2373 = vrot.slane %v2372, 4
        %v2374 = vrot.slane %v2249, 5
        %v2375 = vsel %vm1490, %v2373, %v2374
        %v2376 = vrot.slane %v2374, 4
        %v2377 = vrot.slane %v2250, 5
        %v2378 = vsel %vm1490, %v2376, %v2377
        %v2379 = vrot.slane %v2251, 5
        %v2380 = vrot.slane %v2379, 4
        %v2381 = vrot.slane %v2252, 5
        %v2382 = vsel %vm1490, %v2380, %v2381
        %v2383 = vrot.slane %v2381, 4
        %v2384 = vrot.slane %v2253, 5
        %v2385 = vsel %vm1490, %v2383, %v2384
        %v2386 = vrot.slane %v2254, 5
        %v2387 = vrot.slane %v2386, 4
        %v2388 = vrot.slane %v2255, 5
        %v2389 = vsel %vm1490, %v2387, %v2388
        %v2390 = vrot.slane %v2388, 4
        %v2391 = vrot.slane %v2256, 5
        %v2392 = vsel %vm1490, %v2390, %v2391
        %v2393 = vrot.slane %v2257, 5
        %v2394 = vrot.slane %v2393, 4
        %v2395 = vrot.slane %v2258, 5
        %v2396 = vsel %vm1490, %v2394, %v2395
        %v2397 = vrot.slane %v2395, 4
        %v2398 = vrot.slane %v2259, 5
        %v2399 = vsel %vm1490, %v2397, %v2398
        %v2400 = vrot.slane %v2260, 5
        %v2401 = vrot.slane %v2400, 4
        %v2402 = vrot.slane %v2261, 5
        %v2403 = vsel %vm1490, %v2401, %v2402
        %v2404 = vrot.slane %v2402, 4
        %v2405 = vrot.slane %v2262, 5
        %v2406 = vsel %vm1490, %v2404, %v2405
        %v2407 = vrot.slane %v2263, 5
        %v2408 = vrot.slane %v2407, 4
        %v2409 = vrot.slane %v2264, 5
        %v2410 = vsel %vm1490, %v2408, %v2409
        %v2411 = vrot.slane %v2409, 4
        %v2412 = vrot.slane %v2265, 5
        %v2413 = vsel %vm1490, %v2411, %v2412
        %v2414 = vrot.slane %v2266, 5
        %v2415 = vrot.slane %v2414, 4
        %v2416 = vrot.slane %v2267, 5
        %v2417 = vsel %vm1490, %v2415, %v2416
        %v2418 = vrot.slane %v2416, 4
        %v2419 = vrot.slane %v2268, 5
        %v2420 = vsel %vm1490, %v2418, %v2419
        %v2421 = vrot.slane %v2269, 5
        %v2422 = vrot.slane %v2421, 4
        %v2423 = vrot.slane %v2270, 5
        %v2424 = vsel %vm1490, %v2422, %v2423
        %v2425 = vrot.slane %v2423, 4
        %v2426 = vrot.slane %v2271, 5
        %v2427 = vsel %vm1490, %v2425, %v2426
        %v2428 = vrot.slane %v2272, 5
        %v2429 = vrot.slane %v2428, 4
        %v2430 = vrot.slane %v2273, 5
        %v2431 = vsel %vm1490, %v2429, %v2430
        %v2432 = vrot.slane %v2430, 4
        %v2433 = vrot.slane %v2274, 5
        %v2434 = vsel %vm1490, %v2432, %v2433
        %2467 = vst [vmem:[#allocation3 + $0x14] sm:$0xf] %v2326
        %2468 = vst [vmem:[#allocation3 + $0x38] sm:$0xf] %v2329
        %2469 = vst [vmem:[#allocation3 + $0x5c] sm:$0xf] %v2333
        %2470 = vst [vmem:[#allocation3 + $0x80] sm:$0xf] %v2336
        %2471 = vst [vmem:[#allocation3 + $0xa4] sm:$0xf] %v2340
        %2472 = vst [vmem:[#allocation3 + $0xc8] sm:$0xf] %v2343
        %2473 = vst [vmem:[#allocation3 + $0xec] sm:$0xf] %v2347
        %2474 = vst [vmem:[#allocation3 + $0x110] sm:$0xf] %v2350
        %2475 = vst [vmem:[#allocation3 + $0x134] sm:$0xf] %v2354
        %2476 = vst [vmem:[#allocation3 + $0x158] sm:$0xf] %v2357
        %2477 = vst [vmem:[#allocation3 + $0x17c] sm:$0xf] %v2361
        %2478 = vst [vmem:[#allocation3 + $0x1a0] sm:$0xf] %v2364
        %2479 = vst [vmem:[#allocation3 + $0x1c4] sm:$0xf] %v2368
        %2480 = vst [vmem:[#allocation3 + $0x1e8] sm:$0xf] %v2371
        %2481 = vst [vmem:[#allocation3 + $0x20c] sm:$0xf] %v2375
        %2482 = vst [vmem:[#allocation3 + $0x230] sm:$0xf] %v2378
        %2483 = vst [vmem:[#allocation3 + $0x254] sm:$0xf] %v2382
        %2484 = vst [vmem:[#allocation3 + $0x278] sm:$0xf] %v2385
        %2485 = vst [vmem:[#allocation3 + $0x29c] sm:$0xf] %v2389
        %2486 = vst [vmem:[#allocation3 + $0x2c0] sm:$0xf] %v2392
        %2487 = vst [vmem:[#allocation3 + $0x2e4] sm:$0xf] %v2396
        %2488 = vst [vmem:[#allocation3 + $0x308] sm:$0xf] %v2399
        %2489 = vst [vmem:[#allocation3 + $0x32c] sm:$0xf] %v2403
        %2490 = vst [vmem:[#allocation3 + $0x350] sm:$0xf] %v2406
        %2491 = vst [vmem:[#allocation3 + $0x374] sm:$0xf] %v2410
        %2492 = vst [vmem:[#allocation3 + $0x398] sm:$0xf] %v2413
        %2493 = vst [vmem:[#allocation3 + $0x3bc] sm:$0xf] %v2417
        %2494 = vst [vmem:[#allocation3 + $0x3e0] sm:$0xf] %v2420
        %2495 = vst [vmem:[#allocation3 + $0x404] sm:$0xf] %v2424
        %2496 = vst [vmem:[#allocation3 + $0x428] sm:$0xf] %v2427
        %2497 = vst [vmem:[#allocation3 + $0x44c] sm:$0xf] %v2431
        %2498 = vst [vmem:[#allocation3 + $0x470] sm:$0xf] %v2434
        %s2499 = scalar_lea.vmem [#allocation2], 24
        %v2500 = vld [vmem:[%s2499] sm:$0xf]
        %v2501 = vld [vmem:[%s2499 + $0x4] sm:$0xf]
        %v2502 = vld [vmem:[%s2499 + $0xc] sm:$0xf]
        %v2503 = vld [vmem:[%s2499 + $0x10] sm:$0xf]
        %v2504 = vld [vmem:[%s2499 + $0x18] sm:$0xf]
        %v2505 = vld [vmem:[%s2499 + $0x1c] sm:$0xf]
        %v2506 = vld [vmem:[%s2499 + $0x24] sm:$0xf]
        %v2507 = vld [vmem:[%s2499 + $0x28] sm:$0xf]
        %v2508 = vld [vmem:[%s2499 + $0x30] sm:$0xf]
        %v2509 = vld [vmem:[%s2499 + $0x34] sm:$0xf]
        %v2510 = vld [vmem:[%s2499 + $0x3c] sm:$0xf]
        %v2511 = vld [vmem:[%s2499 + $0x40] sm:$0xf]
        %v2512 = vld [vmem:[%s2499 + $0x48] sm:$0xf]
        %v2513 = vld [vmem:[%s2499 + $0x4c] sm:$0xf]
        %v2514 = vld [vmem:[%s2499 + $0x54] sm:$0xf]
        %v2515 = vld [vmem:[%s2499 + $0x58] sm:$0xf]
        %v2516 = vld [vmem:[%s2499 + $0x60] sm:$0xf]
        %v2517 = vld [vmem:[%s2499 + $0x64] sm:$0xf]
        %v2518 = vld [vmem:[%s2499 + $0x6c] sm:$0xf]
        %v2519 = vld [vmem:[%s2499 + $0x70] sm:$0xf]
        %v2520 = vld [vmem:[%s2499 + $0x78] sm:$0xf]
        %v2521 = vld [vmem:[%s2499 + $0x7c] sm:$0xf]
        %v2522 = vld [vmem:[%s2499 + $0x84] sm:$0xf]
        %v2523 = vld [vmem:[%s2499 + $0x88] sm:$0xf]
        %v2524 = vld [vmem:[%s2499 + $0x90] sm:$0xf]
        %v2525 = vld [vmem:[%s2499 + $0x94] sm:$0xf]
        %v2526 = vld [vmem:[%s2499 + $0x9c] sm:$0xf]
        %v2527 = vld [vmem:[%s2499 + $0xa0] sm:$0xf]
        %v2528 = vld [vmem:[%s2499 + $0xa8] sm:$0xf]
        %v2529 = vld [vmem:[%s2499 + $0xac] sm:$0xf]
        %v2530 = vld [vmem:[%s2499 + $0xb4] sm:$0xf]
        %v2531 = vld [vmem:[%s2499 + $0xb8] sm:$0xf]
        %2532 = vst [vmem:[#allocation3 + $0x18] sm:$0xf] %v2500
        %2533 = vst [vmem:[#allocation3 + $0x3c] sm:$0xf] %v2501
        %2534 = vst [vmem:[#allocation3 + $0x60] sm:$0xf] %v2502
        %2535 = vst [vmem:[#allocation3 + $0x84] sm:$0xf] %v2503
        %2536 = vst [vmem:[#allocation3 + $0xa8] sm:$0xf] %v2504
        %2537 = vst [vmem:[#allocation3 + $0xcc] sm:$0xf] %v2505
        %2538 = vst [vmem:[#allocation3 + $0xf0] sm:$0xf] %v2506
        %2539 = vst [vmem:[#allocation3 + $0x114] sm:$0xf] %v2507
        %2540 = vst [vmem:[#allocation3 + $0x138] sm:$0xf] %v2508
        %2541 = vst [vmem:[#allocation3 + $0x15c] sm:$0xf] %v2509
        %2542 = vst [vmem:[#allocation3 + $0x180] sm:$0xf] %v2510
        %2543 = vst [vmem:[#allocation3 + $0x1a4] sm:$0xf] %v2511
        %2544 = vst [vmem:[#allocation3 + $0x1c8] sm:$0xf] %v2512
        %2545 = vst [vmem:[#allocation3 + $0x1ec] sm:$0xf] %v2513
        %2546 = vst [vmem:[#allocation3 + $0x210] sm:$0xf] %v2514
        %2547 = vst [vmem:[#allocation3 + $0x234] sm:$0xf] %v2515
        %2548 = vst [vmem:[#allocation3 + $0x258] sm:$0xf] %v2516
        %2549 = vst [vmem:[#allocation3 + $0x27c] sm:$0xf] %v2517
        %2550 = vst [vmem:[#allocation3 + $0x2a0] sm:$0xf] %v2518
        %2551 = vst [vmem:[#allocation3 + $0x2c4] sm:$0xf] %v2519
        %2552 = vst [vmem:[#allocation3 + $0x2e8] sm:$0xf] %v2520
        %2553 = vst [vmem:[#allocation3 + $0x30c] sm:$0xf] %v2521
        %2554 = vst [vmem:[#allocation3 + $0x330] sm:$0xf] %v2522
        %2555 = vst [vmem:[#allocation3 + $0x354] sm:$0xf] %v2523
        %2556 = vst [vmem:[#allocation3 + $0x378] sm:$0xf] %v2524
        %2557 = vst [vmem:[#allocation3 + $0x39c] sm:$0xf] %v2525
        %2558 = vst [vmem:[#allocation3 + $0x3c0] sm:$0xf] %v2526
        %2559 = vst [vmem:[#allocation3 + $0x3e4] sm:$0xf] %v2527
        %2560 = vst [vmem:[#allocation3 + $0x408] sm:$0xf] %v2528
        %2561 = vst [vmem:[#allocation3 + $0x42c] sm:$0xf] %v2529
        %2562 = vst [vmem:[#allocation3 + $0x450] sm:$0xf] %v2530
        %2563 = vst [vmem:[#allocation3 + $0x474] sm:$0xf] %v2531
        %v2564 = vld [vmem:[%s2499] sm:$0xf]
        %v2565 = vld [vmem:[%s2499 + $0x4] sm:$0xf]
        %v2566 = vld [vmem:[%s2499 + $0x8] sm:$0x1]
        %v2567 = vld [vmem:[%s2499 + $0xc] sm:$0xf]
        %v2568 = vld [vmem:[%s2499 + $0x10] sm:$0xf]
        %v2569 = vld [vmem:[%s2499 + $0x14] sm:$0x1]
        %v2570 = vld [vmem:[%s2499 + $0x18] sm:$0xf]
        %v2571 = vld [vmem:[%s2499 + $0x1c] sm:$0xf]
        %v2572 = vld [vmem:[%s2499 + $0x20] sm:$0x1]
        %v2573 = vld [vmem:[%s2499 + $0x24] sm:$0xf]
        %v2574 = vld [vmem:[%s2499 + $0x28] sm:$0xf]
        %v2575 = vld [vmem:[%s2499 + $0x2c] sm:$0x1]
        %v2576 = vld [vmem:[%s2499 + $0x30] sm:$0xf]
        %v2577 = vld [vmem:[%s2499 + $0x34] sm:$0xf]
        %v2578 = vld [vmem:[%s2499 + $0x38] sm:$0x1]
        %v2579 = vld [vmem:[%s2499 + $0x3c] sm:$0xf]
        %v2580 = vld [vmem:[%s2499 + $0x40] sm:$0xf]
        %v2581 = vld [vmem:[%s2499 + $0x44] sm:$0x1]
        %v2582 = vld [vmem:[%s2499 + $0x48] sm:$0xf]
        %v2583 = vld [vmem:[%s2499 + $0x4c] sm:$0xf]
        %v2584 = vld [vmem:[%s2499 + $0x50] sm:$0x1]
        %v2585 = vld [vmem:[%s2499 + $0x54] sm:$0xf]
        %v2586 = vld [vmem:[%s2499 + $0x58] sm:$0xf]
        %v2587 = vld [vmem:[%s2499 + $0x5c] sm:$0x1]
        %v2588 = vld [vmem:[%s2499 + $0x60] sm:$0xf]
        %v2589 = vld [vmem:[%s2499 + $0x64] sm:$0xf]
        %v2590 = vld [vmem:[%s2499 + $0x68] sm:$0x1]
        %v2591 = vld [vmem:[%s2499 + $0x6c] sm:$0xf]
        %v2592 = vld [vmem:[%s2499 + $0x70] sm:$0xf]
        %v2593 = vld [vmem:[%s2499 + $0x74] sm:$0x1]
        %v2594 = vld [vmem:[%s2499 + $0x78] sm:$0xf]
        %v2595 = vld [vmem:[%s2499 + $0x7c] sm:$0xf]
        %v2596 = vld [vmem:[%s2499 + $0x80] sm:$0x1]
        %v2597 = vld [vmem:[%s2499 + $0x84] sm:$0xf]
        %v2598 = vld [vmem:[%s2499 + $0x88] sm:$0xf]
        %v2599 = vld [vmem:[%s2499 + $0x8c] sm:$0x1]
        %v2600 = vld [vmem:[%s2499 + $0x90] sm:$0xf]
        %v2601 = vld [vmem:[%s2499 + $0x94] sm:$0xf]
        %v2602 = vld [vmem:[%s2499 + $0x98] sm:$0x1]
        %v2603 = vld [vmem:[%s2499 + $0x9c] sm:$0xf]
        %v2604 = vld [vmem:[%s2499 + $0xa0] sm:$0xf]
        %v2605 = vld [vmem:[%s2499 + $0xa4] sm:$0x1]
        %v2606 = vld [vmem:[%s2499 + $0xa8] sm:$0xf]
        %v2607 = vld [vmem:[%s2499 + $0xac] sm:$0xf]
        %v2608 = vld [vmem:[%s2499 + $0xb0] sm:$0x1]
        %v2609 = vld [vmem:[%s2499 + $0xb4] sm:$0xf]
        %v2610 = vld [vmem:[%s2499 + $0xb8] sm:$0xf]
        %v2611 = vld [vmem:[%s2499 + $0xbc] sm:$0x1]
        %v2613 = vshrl.u32 %v2564, 16
        %v2615 = vrot.slane %v2613, 4
        %v2616 = vshll.u32 %v2564, 16
        %v2618 = vrot.slane %v2616, 5
        %v2619 = vor.u32 %v2615, %v2618
        %v2620 = vrot.slane %v2619, 4
        %v2622 = vshll.u32 %v2565, 16
        %v2624 = vrot.slane %v2622, 5
        %v2625 = vsel %vm943, %v2620, %v2624
        %v2626 = vshrl.u32 %v2565, 16
        %v2628 = vrot.slane %v2626, 4
        %v2629 = vor.u32 %v2628, %v2624
        %v2630 = vrot.slane %v2629, 4
        %v2632 = vshll.u32 %v2566, 16
        %v2634 = vrot.slane %v2632, 5
        %v2635 = vsel %vm943, %v2630, %v2634
        %v2637 = vshrl.u32 %v2567, 16
        %v2639 = vrot.slane %v2637, 4
        %v2640 = vshll.u32 %v2567, 16
        %v2642 = vrot.slane %v2640, 5
        %v2643 = vor.u32 %v2639, %v2642
        %v2644 = vrot.slane %v2643, 4
        %v2646 = vshll.u32 %v2568, 16
        %v2648 = vrot.slane %v2646, 5
        %v2649 = vsel %vm943, %v2644, %v2648
        %v2650 = vshrl.u32 %v2568, 16
        %v2652 = vrot.slane %v2650, 4
        %v2653 = vor.u32 %v2652, %v2648
        %v2654 = vrot.slane %v2653, 4
        %v2656 = vshll.u32 %v2569, 16
        %v2658 = vrot.slane %v2656, 5
        %v2659 = vsel %vm943, %v2654, %v2658
        %v2661 = vshrl.u32 %v2570, 16
        %v2663 = vrot.slane %v2661, 4
        %v2664 = vshll.u32 %v2570, 16
        %v2666 = vrot.slane %v2664, 5
        %v2667 = vor.u32 %v2663, %v2666
        %v2668 = vrot.slane %v2667, 4
        %v2670 = vshll.u32 %v2571, 16
        %v2672 = vrot.slane %v2670, 5
        %v2673 = vsel %vm943, %v2668, %v2672
        %v2674 = vshrl.u32 %v2571, 16
        %v2676 = vrot.slane %v2674, 4
        %v2677 = vor.u32 %v2676, %v2672
        %v2678 = vrot.slane %v2677, 4
        %v2680 = vshll.u32 %v2572, 16
        %v2682 = vrot.slane %v2680, 5
        %v2683 = vsel %vm943, %v2678, %v2682
        %v2685 = vshrl.u32 %v2573, 16
        %v2687 = vrot.slane %v2685, 4
        %v2688 = vshll.u32 %v2573, 16
        %v2690 = vrot.slane %v2688, 5
        %v2691 = vor.u32 %v2687, %v2690
        %v2692 = vrot.slane %v2691, 4
        %v2694 = vshll.u32 %v2574, 16
        %v2696 = vrot.slane %v2694, 5
        %v2697 = vsel %vm943, %v2692, %v2696
        %v2698 = vshrl.u32 %v2574, 16
        %v2700 = vrot.slane %v2698, 4
        %v2701 = vor.u32 %v2700, %v2696
        %v2702 = vrot.slane %v2701, 4
        %v2704 = vshll.u32 %v2575, 16
        %v2706 = vrot.slane %v2704, 5
        %v2707 = vsel %vm943, %v2702, %v2706
        %v2709 = vshrl.u32 %v2576, 16
        %v2711 = vrot.slane %v2709, 4
        %v2712 = vshll.u32 %v2576, 16
        %v2714 = vrot.slane %v2712, 5
        %v2715 = vor.u32 %v2711, %v2714
        %v2716 = vrot.slane %v2715, 4
        %v2718 = vshll.u32 %v2577, 16
        %v2720 = vrot.slane %v2718, 5
        %v2721 = vsel %vm943, %v2716, %v2720
        %v2722 = vshrl.u32 %v2577, 16
        %v2724 = vrot.slane %v2722, 4
        %v2725 = vor.u32 %v2724, %v2720
        %v2726 = vrot.slane %v2725, 4
        %v2728 = vshll.u32 %v2578, 16
        %v2730 = vrot.slane %v2728, 5
        %v2731 = vsel %vm943, %v2726, %v2730
        %v2733 = vshrl.u32 %v2579, 16
        %v2735 = vrot.slane %v2733, 4
        %v2736 = vshll.u32 %v2579, 16
        %v2738 = vrot.slane %v2736, 5
        %v2739 = vor.u32 %v2735, %v2738
        %v2740 = vrot.slane %v2739, 4
        %v2742 = vshll.u32 %v2580, 16
        %v2744 = vrot.slane %v2742, 5
        %v2745 = vsel %vm943, %v2740, %v2744
        %v2746 = vshrl.u32 %v2580, 16
        %v2748 = vrot.slane %v2746, 4
        %v2749 = vor.u32 %v2748, %v2744
        %v2750 = vrot.slane %v2749, 4
        %v2752 = vshll.u32 %v2581, 16
        %v2754 = vrot.slane %v2752, 5
        %v2755 = vsel %vm943, %v2750, %v2754
        %v2757 = vshrl.u32 %v2582, 16
        %v2759 = vrot.slane %v2757, 4
        %v2760 = vshll.u32 %v2582, 16
        %v2762 = vrot.slane %v2760, 5
        %v2763 = vor.u32 %v2759, %v2762
        %v2764 = vrot.slane %v2763, 4
        %v2766 = vshll.u32 %v2583, 16
        %v2768 = vrot.slane %v2766, 5
        %v2769 = vsel %vm943, %v2764, %v2768
        %v2770 = vshrl.u32 %v2583, 16
        %v2772 = vrot.slane %v2770, 4
        %v2773 = vor.u32 %v2772, %v2768
        %v2774 = vrot.slane %v2773, 4
        %v2776 = vshll.u32 %v2584, 16
        %v2778 = vrot.slane %v2776, 5
        %v2779 = vsel %vm943, %v2774, %v2778
        %v2781 = vshrl.u32 %v2585, 16
        %v2783 = vrot.slane %v2781, 4
        %v2784 = vshll.u32 %v2585, 16
        %v2786 = vrot.slane %v2784, 5
        %v2787 = vor.u32 %v2783, %v2786
        %v2788 = vrot.slane %v2787, 4
        %v2790 = vshll.u32 %v2586, 16
        %v2792 = vrot.slane %v2790, 5
        %v2793 = vsel %vm943, %v2788, %v2792
        %v2794 = vshrl.u32 %v2586, 16
        %v2796 = vrot.slane %v2794, 4
        %v2797 = vor.u32 %v2796, %v2792
        %v2798 = vrot.slane %v2797, 4
        %v2800 = vshll.u32 %v2587, 16
        %v2802 = vrot.slane %v2800, 5
        %v2803 = vsel %vm943, %v2798, %v2802
        %v2805 = vshrl.u32 %v2588, 16
        %v2807 = vrot.slane %v2805, 4
        %v2808 = vshll.u32 %v2588, 16
        %v2810 = vrot.slane %v2808, 5
        %v2811 = vor.u32 %v2807, %v2810
        %v2812 = vrot.slane %v2811, 4
        %v2814 = vshll.u32 %v2589, 16
        %v2816 = vrot.slane %v2814, 5
        %v2817 = vsel %vm943, %v2812, %v2816
        %v2818 = vshrl.u32 %v2589, 16
        %v2820 = vrot.slane %v2818, 4
        %v2821 = vor.u32 %v2820, %v2816
        %v2822 = vrot.slane %v2821, 4
        %v2824 = vshll.u32 %v2590, 16
        %v2826 = vrot.slane %v2824, 5
        %v2827 = vsel %vm943, %v2822, %v2826
        %v2829 = vshrl.u32 %v2591, 16
        %v2831 = vrot.slane %v2829, 4
        %v2832 = vshll.u32 %v2591, 16
        %v2834 = vrot.slane %v2832, 5
        %v2835 = vor.u32 %v2831, %v2834
        %v2836 = vrot.slane %v2835, 4
        %v2838 = vshll.u32 %v2592, 16
        %v2840 = vrot.slane %v2838, 5
        %v2841 = vsel %vm943, %v2836, %v2840
        %v2842 = vshrl.u32 %v2592, 16
        %v2844 = vrot.slane %v2842, 4
        %v2845 = vor.u32 %v2844, %v2840
        %v2846 = vrot.slane %v2845, 4
        %v2848 = vshll.u32 %v2593, 16
        %v2850 = vrot.slane %v2848, 5
        %v2851 = vsel %vm943, %v2846, %v2850
        %v2853 = vshrl.u32 %v2594, 16
        %v2855 = vrot.slane %v2853, 4
        %v2856 = vshll.u32 %v2594, 16
        %v2858 = vrot.slane %v2856, 5
        %v2859 = vor.u32 %v2855, %v2858
        %v2860 = vrot.slane %v2859, 4
        %v2862 = vshll.u32 %v2595, 16
        %v2864 = vrot.slane %v2862, 5
        %v2865 = vsel %vm943, %v2860, %v2864
        %v2866 = vshrl.u32 %v2595, 16
        %v2868 = vrot.slane %v2866, 4
        %v2869 = vor.u32 %v2868, %v2864
        %v2870 = vrot.slane %v2869, 4
        %v2872 = vshll.u32 %v2596, 16
        %v2874 = vrot.slane %v2872, 5
        %v2875 = vsel %vm943, %v2870, %v2874
        %v2877 = vshrl.u32 %v2597, 16
        %v2879 = vrot.slane %v2877, 4
        %v2880 = vshll.u32 %v2597, 16
        %v2882 = vrot.slane %v2880, 5
        %v2883 = vor.u32 %v2879, %v2882
        %v2884 = vrot.slane %v2883, 4
        %v2886 = vshll.u32 %v2598, 16
        %v2888 = vrot.slane %v2886, 5
        %v2889 = vsel %vm943, %v2884, %v2888
        %v2890 = vshrl.u32 %v2598, 16
        %v2892 = vrot.slane %v2890, 4
        %v2893 = vor.u32 %v2892, %v2888
        %v2894 = vrot.slane %v2893, 4
        %v2896 = vshll.u32 %v2599, 16
        %v2898 = vrot.slane %v2896, 5
        %v2899 = vsel %vm943, %v2894, %v2898
        %v2901 = vshrl.u32 %v2600, 16
        %v2903 = vrot.slane %v2901, 4
        %v2904 = vshll.u32 %v2600, 16
        %v2906 = vrot.slane %v2904, 5
        %v2907 = vor.u32 %v2903, %v2906
        %v2908 = vrot.slane %v2907, 4
        %v2910 = vshll.u32 %v2601, 16
        %v2912 = vrot.slane %v2910, 5
        %v2913 = vsel %vm943, %v2908, %v2912
        %v2914 = vshrl.u32 %v2601, 16
        %v2916 = vrot.slane %v2914, 4
        %v2917 = vor.u32 %v2916, %v2912
        %v2918 = vrot.slane %v2917, 4
        %v2920 = vshll.u32 %v2602, 16
        %v2922 = vrot.slane %v2920, 5
        %v2923 = vsel %vm943, %v2918, %v2922
        %v2925 = vshrl.u32 %v2603, 16
        %v2927 = vrot.slane %v2925, 4
        %v2928 = vshll.u32 %v2603, 16
        %v2930 = vrot.slane %v2928, 5
        %v2931 = vor.u32 %v2927, %v2930
        %v2932 = vrot.slane %v2931, 4
        %v2934 = vshll.u32 %v2604, 16
        %v2936 = vrot.slane %v2934, 5
        %v2937 = vsel %vm943, %v2932, %v2936
        %v2938 = vshrl.u32 %v2604, 16
        %v2940 = vrot.slane %v2938, 4
        %v2941 = vor.u32 %v2940, %v2936
        %v2942 = vrot.slane %v2941, 4
        %v2944 = vshll.u32 %v2605, 16
        %v2946 = vrot.slane %v2944, 5
        %v2947 = vsel %vm943, %v2942, %v2946
        %v2949 = vshrl.u32 %v2606, 16
        %v2951 = vrot.slane %v2949, 4
        %v2952 = vshll.u32 %v2606, 16
        %v2954 = vrot.slane %v2952, 5
        %v2955 = vor.u32 %v2951, %v2954
        %v2956 = vrot.slane %v2955, 4
        %v2958 = vshll.u32 %v2607, 16
        %v2960 = vrot.slane %v2958, 5
        %v2961 = vsel %vm943, %v2956, %v2960
        %v2962 = vshrl.u32 %v2607, 16
        %v2964 = vrot.slane %v2962, 4
        %v2965 = vor.u32 %v2964, %v2960
        %v2966 = vrot.slane %v2965, 4
        %v2968 = vshll.u32 %v2608, 16
        %v2970 = vrot.slane %v2968, 5
        %v2971 = vsel %vm943, %v2966, %v2970
        %v2973 = vshrl.u32 %v2609, 16
        %v2975 = vrot.slane %v2973, 4
        %v2976 = vshll.u32 %v2609, 16
        %v2978 = vrot.slane %v2976, 5
        %v2979 = vor.u32 %v2975, %v2978
        %v2980 = vrot.slane %v2979, 4
        %v2982 = vshll.u32 %v2610, 16
        %v2984 = vrot.slane %v2982, 5
        %v2985 = vsel %vm943, %v2980, %v2984
        %v2986 = vshrl.u32 %v2610, 16
        %v2988 = vrot.slane %v2986, 4
        %v2989 = vor.u32 %v2988, %v2984
        %v2990 = vrot.slane %v2989, 4
        %v2992 = vshll.u32 %v2611, 16
        %v2994 = vrot.slane %v2992, 5
        %v2995 = vsel %vm943, %v2990, %v2994
        %3028 = vst [vmem:[#allocation3 + $0x1c] sm:$0xf] %v2625
        %3029 = vst [vmem:[#allocation3 + $0x40] sm:$0xf] %v2635
        %3030 = vst [vmem:[#allocation3 + $0x64] sm:$0xf] %v2649
        %3031 = vst [vmem:[#allocation3 + $0x88] sm:$0xf] %v2659
        %3032 = vst [vmem:[#allocation3 + $0xac] sm:$0xf] %v2673
        %3033 = vst [vmem:[#allocation3 + $0xd0] sm:$0xf] %v2683
        %3034 = vst [vmem:[#allocation3 + $0xf4] sm:$0xf] %v2697
        %3035 = vst [vmem:[#allocation3 + $0x118] sm:$0xf] %v2707
        %3036 = vst [vmem:[#allocation3 + $0x13c] sm:$0xf] %v2721
        %3037 = vst [vmem:[#allocation3 + $0x160] sm:$0xf] %v2731
        %3038 = vst [vmem:[#allocation3 + $0x184] sm:$0xf] %v2745
        %3039 = vst [vmem:[#allocation3 + $0x1a8] sm:$0xf] %v2755
        %3040 = vst [vmem:[#allocation3 + $0x1cc] sm:$0xf] %v2769
        %3041 = vst [vmem:[#allocation3 + $0x1f0] sm:$0xf] %v2779
        %3042 = vst [vmem:[#allocation3 + $0x214] sm:$0xf] %v2793
        %3043 = vst [vmem:[#allocation3 + $0x238] sm:$0xf] %v2803
        %3044 = vst [vmem:[#allocation3 + $0x25c] sm:$0xf] %v2817
        %3045 = vst [vmem:[#allocation3 + $0x280] sm:$0xf] %v2827
        %3046 = vst [vmem:[#allocation3 + $0x2a4] sm:$0xf] %v2841
        %3047 = vst [vmem:[#allocation3 + $0x2c8] sm:$0xf] %v2851
        %3048 = vst [vmem:[#allocation3 + $0x2ec] sm:$0xf] %v2865
        %3049 = vst [vmem:[#allocation3 + $0x310] sm:$0xf] %v2875
        %3050 = vst [vmem:[#allocation3 + $0x334] sm:$0xf] %v2889
        %3051 = vst [vmem:[#allocation3 + $0x358] sm:$0xf] %v2899
        %3052 = vst [vmem:[#allocation3 + $0x37c] sm:$0xf] %v2913
        %3053 = vst [vmem:[#allocation3 + $0x3a0] sm:$0xf] %v2923
        %3054 = vst [vmem:[#allocation3 + $0x3c4] sm:$0xf] %v2937
        %3055 = vst [vmem:[#allocation3 + $0x3e8] sm:$0xf] %v2947
        %3056 = vst [vmem:[#allocation3 + $0x40c] sm:$0xf] %v2961
        %3057 = vst [vmem:[#allocation3 + $0x430] sm:$0xf] %v2971
        %3058 = vst [vmem:[#allocation3 + $0x454] sm:$0xf] %v2985
        %3059 = vst [vmem:[#allocation3 + $0x478] sm:$0xf] %v2995
        %v3060 = vld [vmem:[%s2499] sm:$0xe]
        %v3061 = vld [vmem:[%s2499 + $0x4] sm:$0xf]
        %v3062 = vld [vmem:[%s2499 + $0x8] sm:$0x1]
        %v3063 = vld [vmem:[%s2499 + $0xc] sm:$0xe]
        %v3064 = vld [vmem:[%s2499 + $0x10] sm:$0xf]
        %v3065 = vld [vmem:[%s2499 + $0x14] sm:$0x1]
        %v3066 = vld [vmem:[%s2499 + $0x18] sm:$0xe]
        %v3067 = vld [vmem:[%s2499 + $0x1c] sm:$0xf]
        %v3068 = vld [vmem:[%s2499 + $0x20] sm:$0x1]
        %v3069 = vld [vmem:[%s2499 + $0x24] sm:$0xe]
        %v3070 = vld [vmem:[%s2499 + $0x28] sm:$0xf]
        %v3071 = vld [vmem:[%s2499 + $0x2c] sm:$0x1]
        %v3072 = vld [vmem:[%s2499 + $0x30] sm:$0xe]
        %v3073 = vld [vmem:[%s2499 + $0x34] sm:$0xf]
        %v3074 = vld [vmem:[%s2499 + $0x38] sm:$0x1]
        %v3075 = vld [vmem:[%s2499 + $0x3c] sm:$0xe]
        %v3076 = vld [vmem:[%s2499 + $0x40] sm:$0xf]
        %v3077 = vld [vmem:[%s2499 + $0x44] sm:$0x1]
        %v3078 = vld [vmem:[%s2499 + $0x48] sm:$0xe]
        %v3079 = vld [vmem:[%s2499 + $0x4c] sm:$0xf]
        %v3080 = vld [vmem:[%s2499 + $0x50] sm:$0x1]
        %v3081 = vld [vmem:[%s2499 + $0x54] sm:$0xe]
        %v3082 = vld [vmem:[%s2499 + $0x58] sm:$0xf]
        %v3083 = vld [vmem:[%s2499 + $0x5c] sm:$0x1]
        %v3084 = vld [vmem:[%s2499 + $0x60] sm:$0xe]
        %v3085 = vld [vmem:[%s2499 + $0x64] sm:$0xf]
        %v3086 = vld [vmem:[%s2499 + $0x68] sm:$0x1]
        %v3087 = vld [vmem:[%s2499 + $0x6c] sm:$0xe]
        %v3088 = vld [vmem:[%s2499 + $0x70] sm:$0xf]
        %v3089 = vld [vmem:[%s2499 + $0x74] sm:$0x1]
        %v3090 = vld [vmem:[%s2499 + $0x78] sm:$0xe]
        %v3091 = vld [vmem:[%s2499 + $0x7c] sm:$0xf]
        %v3092 = vld [vmem:[%s2499 + $0x80] sm:$0x1]
        %v3093 = vld [vmem:[%s2499 + $0x84] sm:$0xe]
        %v3094 = vld [vmem:[%s2499 + $0x88] sm:$0xf]
        %v3095 = vld [vmem:[%s2499 + $0x8c] sm:$0x1]
        %v3096 = vld [vmem:[%s2499 + $0x90] sm:$0xe]
        %v3097 = vld [vmem:[%s2499 + $0x94] sm:$0xf]
        %v3098 = vld [vmem:[%s2499 + $0x98] sm:$0x1]
        %v3099 = vld [vmem:[%s2499 + $0x9c] sm:$0xe]
        %v3100 = vld [vmem:[%s2499 + $0xa0] sm:$0xf]
        %v3101 = vld [vmem:[%s2499 + $0xa4] sm:$0x1]
        %v3102 = vld [vmem:[%s2499 + $0xa8] sm:$0xe]
        %v3103 = vld [vmem:[%s2499 + $0xac] sm:$0xf]
        %v3104 = vld [vmem:[%s2499 + $0xb0] sm:$0x1]
        %v3105 = vld [vmem:[%s2499 + $0xb4] sm:$0xe]
        %v3106 = vld [vmem:[%s2499 + $0xb8] sm:$0xf]
        %v3107 = vld [vmem:[%s2499 + $0xbc] sm:$0x1]
        %v3156 = vrot.slane %v3060, 5
        %v3157 = vrot.slane %v3156, 4
        %v3158 = vrot.slane %v3061, 5
        %v3159 = vsel %vm1490, %v3157, %v3158
        %v3160 = vrot.slane %v3158, 4
        %v3161 = vrot.slane %v3062, 5
        %v3162 = vsel %vm1490, %v3160, %v3161
        %v3163 = vrot.slane %v3063, 5
        %v3164 = vrot.slane %v3163, 4
        %v3165 = vrot.slane %v3064, 5
        %v3166 = vsel %vm1490, %v3164, %v3165
        %v3167 = vrot.slane %v3165, 4
        %v3168 = vrot.slane %v3065, 5
        %v3169 = vsel %vm1490, %v3167, %v3168
        %v3170 = vrot.slane %v3066, 5
        %v3171 = vrot.slane %v3170, 4
        %v3172 = vrot.slane %v3067, 5
        %v3173 = vsel %vm1490, %v3171, %v3172
        %v3174 = vrot.slane %v3172, 4
        %v3175 = vrot.slane %v3068, 5
        %v3176 = vsel %vm1490, %v3174, %v3175
        %v3177 = vrot.slane %v3069, 5
        %v3178 = vrot.slane %v3177, 4
        %v3179 = vrot.slane %v3070, 5
        %v3180 = vsel %vm1490, %v3178, %v3179
        %v3181 = vrot.slane %v3179, 4
        %v3182 = vrot.slane %v3071, 5
        %v3183 = vsel %vm1490, %v3181, %v3182
        %v3184 = vrot.slane %v3072, 5
        %v3185 = vrot.slane %v3184, 4
        %v3186 = vrot.slane %v3073, 5
        %v3187 = vsel %vm1490, %v3185, %v3186
        %v3188 = vrot.slane %v3186, 4
        %v3189 = vrot.slane %v3074, 5
        %v3190 = vsel %vm1490, %v3188, %v3189
        %v3191 = vrot.slane %v3075, 5
        %v3192 = vrot.slane %v3191, 4
        %v3193 = vrot.slane %v3076, 5
        %v3194 = vsel %vm1490, %v3192, %v3193
        %v3195 = vrot.slane %v3193, 4
        %v3196 = vrot.slane %v3077, 5
        %v3197 = vsel %vm1490, %v3195, %v3196
        %v3198 = vrot.slane %v3078, 5
        %v3199 = vrot.slane %v3198, 4
        %v3200 = vrot.slane %v3079, 5
        %v3201 = vsel %vm1490, %v3199, %v3200
        %v3202 = vrot.slane %v3200, 4
        %v3203 = vrot.slane %v3080, 5
        %v3204 = vsel %vm1490, %v3202, %v3203
        %v3205 = vrot.slane %v3081, 5
        %v3206 = vrot.slane %v3205, 4
        %v3207 = vrot.slane %v3082, 5
        %v3208 = vsel %vm1490, %v3206, %v3207
        %v3209 = vrot.slane %v3207, 4
        %v3210 = vrot.slane %v3083, 5
        %v3211 = vsel %vm1490, %v3209, %v3210
        %v3212 = vrot.slane %v3084, 5
        %v3213 = vrot.slane %v3212, 4
        %v3214 = vrot.slane %v3085, 5
        %v3215 = vsel %vm1490, %v3213, %v3214
        %v3216 = vrot.slane %v3214, 4
        %v3217 = vrot.slane %v3086, 5
        %v3218 = vsel %vm1490, %v3216, %v3217
        %v3219 = vrot.slane %v3087, 5
        %v3220 = vrot.slane %v3219, 4
        %v3221 = vrot.slane %v3088, 5
        %v3222 = vsel %vm1490, %v3220, %v3221
        %v3223 = vrot.slane %v3221, 4
        %v3224 = vrot.slane %v3089, 5
        %v3225 = vsel %vm1490, %v3223, %v3224
        %v3226 = vrot.slane %v3090, 5
        %v3227 = vrot.slane %v3226, 4
        %v3228 = vrot.slane %v3091, 5
        %v3229 = vsel %vm1490, %v3227, %v3228
        %v3230 = vrot.slane %v3228, 4
        %v3231 = vrot.slane %v3092, 5
        %v3232 = vsel %vm1490, %v3230, %v3231
        %v3233 = vrot.slane %v3093, 5
        %v3234 = vrot.slane %v3233, 4
        %v3235 = vrot.slane %v3094, 5
        %v3236 = vsel %vm1490, %v3234, %v3235
        %v3237 = vrot.slane %v3235, 4
        %v3238 = vrot.slane %v3095, 5
        %v3239 = vsel %vm1490, %v3237, %v3238
        %v3240 = vrot.slane %v3096, 5
        %v3241 = vrot.slane %v3240, 4
        %v3242 = vrot.slane %v3097, 5
        %v3243 = vsel %vm1490, %v3241, %v3242
        %v3244 = vrot.slane %v3242, 4
        %v3245 = vrot.slane %v3098, 5
        %v3246 = vsel %vm1490, %v3244, %v3245
        %v3247 = vrot.slane %v3099, 5
        %v3248 = vrot.slane %v3247, 4
        %v3249 = vrot.slane %v3100, 5
        %v3250 = vsel %vm1490, %v3248, %v3249
        %v3251 = vrot.slane %v3249, 4
        %v3252 = vrot.slane %v3101, 5
        %v3253 = vsel %vm1490, %v3251, %v3252
        %v3254 = vrot.slane %v3102, 5
        %v3255 = vrot.slane %v3254, 4
        %v3256 = vrot.slane %v3103, 5
        %v3257 = vsel %vm1490, %v3255, %v3256
        %v3258 = vrot.slane %v3256, 4
        %v3259 = vrot.slane %v3104, 5
        %v3260 = vsel %vm1490, %v3258, %v3259
        %v3261 = vrot.slane %v3105, 5
        %v3262 = vrot.slane %v3261, 4
        %v3263 = vrot.slane %v3106, 5
        %v3264 = vsel %vm1490, %v3262, %v3263
        %v3265 = vrot.slane %v3263, 4
        %v3266 = vrot.slane %v3107, 5
        %v3267 = vsel %vm1490, %v3265, %v3266
        %3300 = vst [vmem:[#allocation3 + $0x20] sm:$0xf] %v3159
        %3301 = vst [vmem:[#allocation3 + $0x44] sm:$0xf] %v3162
        %3302 = vst [vmem:[#allocation3 + $0x68] sm:$0xf] %v3166
        %3303 = vst [vmem:[#allocation3 + $0x8c] sm:$0xf] %v3169
        %3304 = vst [vmem:[#allocation3 + $0xb0] sm:$0xf] %v3173
        %3305 = vst [vmem:[#allocation3 + $0xd4] sm:$0xf] %v3176
        %3306 = vst [vmem:[#allocation3 + $0xf8] sm:$0xf] %v3180
        %3307 = vst [vmem:[#allocation3 + $0x11c] sm:$0xf] %v3183
        %3308 = vst [vmem:[#allocation3 + $0x140] sm:$0xf] %v3187
        %3309 = vst [vmem:[#allocation3 + $0x164] sm:$0xf] %v3190
        %3310 = vst [vmem:[#allocation3 + $0x188] sm:$0xf] %v3194
        %3311 = vst [vmem:[#allocation3 + $0x1ac] sm:$0xf] %v3197
        %3312 = vst [vmem:[#allocation3 + $0x1d0] sm:$0xf] %v3201
        %3313 = vst [vmem:[#allocation3 + $0x1f4] sm:$0xf] %v3204
        %3314 = vst [vmem:[#allocation3 + $0x218] sm:$0xf] %v3208
        %3315 = vst [vmem:[#allocation3 + $0x23c] sm:$0xf] %v3211
        %3316 = vst [vmem:[#allocation3 + $0x260] sm:$0xf] %v3215
        %3317 = vst [vmem:[#allocation3 + $0x284] sm:$0xf] %v3218
        %3318 = vst [vmem:[#allocation3 + $0x2a8] sm:$0xf] %v3222
        %3319 = vst [vmem:[#allocation3 + $0x2cc] sm:$0xf] %v3225
        %3320 = vst [vmem:[#allocation3 + $0x2f0] sm:$0xf] %v3229
        %3321 = vst [vmem:[#allocation3 + $0x314] sm:$0xf] %v3232
        %3322 = vst [vmem:[#allocation3 + $0x338] sm:$0xf] %v3236
        %3323 = vst [vmem:[#allocation3 + $0x35c] sm:$0xf] %v3239
        %3324 = vst [vmem:[#allocation3 + $0x380] sm:$0xf] %v3243
        %3325 = vst [vmem:[#allocation3 + $0x3a4] sm:$0xf] %v3246
        %3326 = vst [vmem:[#allocation3 + $0x3c8] sm:$0xf] %v3250
        %3327 = vst [vmem:[#allocation3 + $0x3ec] sm:$0xf] %v3253
        %3328 = vst [vmem:[#allocation3 + $0x410] sm:$0xf] %v3257
        %3329 = vst [vmem:[#allocation3 + $0x434] sm:$0xf] %v3260
        %3330 = vst [vmem:[#allocation3 + $0x458] sm:$0xf] %v3264
        %3331 = vst [vmem:[#allocation3 + $0x47c] sm:$0xf] %v3267
        %v3332 = vld [vmem:[#allocation3] sm:$0xff]
        %v3333 = vld [vmem:[#allocation3 + $0x8] sm:$0xff]
        %v3334 = vld [vmem:[#allocation3 + $0x10] sm:$0xff]
        %v3335 = vld [vmem:[#allocation3 + $0x18] sm:$0xff]
        %v3336 = vld [vmem:[#allocation3 + $0x20] sm:$0xf]
        %v3337 = vld [vmem:[#allocation3 + $0x24] sm:$0xff]
        %v3338 = vld [vmem:[#allocation3 + $0x2c] sm:$0xff]
        %v3339 = vld [vmem:[#allocation3 + $0x34] sm:$0xff]
        %v3340 = vld [vmem:[#allocation3 + $0x3c] sm:$0xff]
        %v3341 = vld [vmem:[#allocation3 + $0x44] sm:$0xf]
        %v3342 = vld [vmem:[#allocation3 + $0x48] sm:$0xff]
        %v3343 = vld [vmem:[#allocation3 + $0x50] sm:$0xff]
        %v3344 = vld [vmem:[#allocation3 + $0x58] sm:$0xff]
        %v3345 = vld [vmem:[#allocation3 + $0x60] sm:$0xff]
        %v3346 = vld [vmem:[#allocation3 + $0x68] sm:$0xf]
        %v3347 = vld [vmem:[#allocation3 + $0x6c] sm:$0xff]
        %v3348 = vld [vmem:[#allocation3 + $0x74] sm:$0xff]
        %v3349 = vld [vmem:[#allocation3 + $0x7c] sm:$0xff]
        %v3350 = vld [vmem:[#allocation3 + $0x84] sm:$0xff]
        %v3351 = vld [vmem:[#allocation3 + $0x8c] sm:$0xf]
        %v3352 = vld [vmem:[#allocation3 + $0x90] sm:$0xff]
        %v3353 = vld [vmem:[#allocation3 + $0x98] sm:$0xff]
        %v3354 = vld [vmem:[#allocation3 + $0xa0] sm:$0xff]
        %v3355 = vld [vmem:[#allocation3 + $0xa8] sm:$0xff]
        %v3356 = vld [vmem:[#allocation3 + $0xb0] sm:$0xf]
        %v3357 = vld [vmem:[#allocation3 + $0xb4] sm:$0xff]
        %v3358 = vld [vmem:[#allocation3 + $0xbc] sm:$0xff]
        %v3359 = vld [vmem:[#allocation3 + $0xc4] sm:$0xff]
        %v3360 = vld [vmem:[#allocation3 + $0xcc] sm:$0xff]
        %v3361 = vld [vmem:[#allocation3 + $0xd4] sm:$0xf]
        %v3362 = vld [vmem:[#allocation3 + $0xd8] sm:$0xff]
        %v3363 = vld [vmem:[#allocation3 + $0xe0] sm:$0xff]
        %v3364 = vld [vmem:[#allocation3 + $0xe8] sm:$0xff]
        %v3365 = vld [vmem:[#allocation3 + $0xf0] sm:$0xff]
        %v3366 = vld [vmem:[#allocation3 + $0xf8] sm:$0xf]
        %v3367 = vld [vmem:[#allocation3 + $0xfc] sm:$0xff]
        %v3368 = vld [vmem:[#allocation3 + $0x104] sm:$0xff]
        %v3369 = vld [vmem:[#allocation3 + $0x10c] sm:$0xff]
        %v3370 = vld [vmem:[#allocation3 + $0x114] sm:$0xff]
        %v3371 = vld [vmem:[#allocation3 + $0x11c] sm:$0xf]
        %v3372 = vld [vmem:[#allocation3 + $0x120] sm:$0xff]
        %v3373 = vld [vmem:[#allocation3 + $0x128] sm:$0xff]
        %v3374 = vld [vmem:[#allocation3 + $0x130] sm:$0xff]
        %v3375 = vld [vmem:[#allocation3 + $0x138] sm:$0xff]
        %v3376 = vld [vmem:[#allocation3 + $0x140] sm:$0xf]
        %v3377 = vld [vmem:[#allocation3 + $0x144] sm:$0xff]
        %v3378 = vld [vmem:[#allocation3 + $0x14c] sm:$0xff]
        %v3379 = vld [vmem:[#allocation3 + $0x154] sm:$0xff]
        %v3380 = vld [vmem:[#allocation3 + $0x15c] sm:$0xff]
        %v3381 = vld [vmem:[#allocation3 + $0x164] sm:$0xf]
        %v3382 = vld [vmem:[#allocation3 + $0x168] sm:$0xff]
        %v3383 = vld [vmem:[#allocation3 + $0x170] sm:$0xff]
        %v3384 = vld [vmem:[#allocation3 + $0x178] sm:$0xff]
        %v3385 = vld [vmem:[#allocation3 + $0x180] sm:$0xff]
        %v3386 = vld [vmem:[#allocation3 + $0x188] sm:$0xf]
        %v3387 = vld [vmem:[#allocation3 + $0x18c] sm:$0xff]
        %v3388 = vld [vmem:[#allocation3 + $0x194] sm:$0xff]
        %v3389 = vld [vmem:[#allocation3 + $0x19c] sm:$0xff]
        %v3390 = vld [vmem:[#allocation3 + $0x1a4] sm:$0xff]
        %v3391 = vld [vmem:[#allocation3 + $0x1ac] sm:$0xf]
        %v3392 = vld [vmem:[#allocation3 + $0x1b0] sm:$0xff]
        %v3393 = vld [vmem:[#allocation3 + $0x1b8] sm:$0xff]
        %v3394 = vld [vmem:[#allocation3 + $0x1c0] sm:$0xff]
        %v3395 = vld [vmem:[#allocation3 + $0x1c8] sm:$0xff]
        %v3396 = vld [vmem:[#allocation3 + $0x1d0] sm:$0xf]
        %v3397 = vld [vmem:[#allocation3 + $0x1d4] sm:$0xff]
        %v3398 = vld [vmem:[#allocation3 + $0x1dc] sm:$0xff]
        %v3399 = vld [vmem:[#allocation3 + $0x1e4] sm:$0xff]
        %v3400 = vld [vmem:[#allocation3 + $0x1ec] sm:$0xff]
        %v3401 = vld [vmem:[#allocation3 + $0x1f4] sm:$0xf]
        %v3402 = vld [vmem:[#allocation3 + $0x1f8] sm:$0xff]
        %v3403 = vld [vmem:[#allocation3 + $0x200] sm:$0xff]
        %v3404 = vld [vmem:[#allocation3 + $0x208] sm:$0xff]
        %v3405 = vld [vmem:[#allocation3 + $0x210] sm:$0xff]
        %v3406 = vld [vmem:[#allocation3 + $0x218] sm:$0xf]
        %v3407 = vld [vmem:[#allocation3 + $0x21c] sm:$0xff]
        %v3408 = vld [vmem:[#allocation3 + $0x224] sm:$0xff]
        %v3409 = vld [vmem:[#allocation3 + $0x22c] sm:$0xff]
        %v3410 = vld [vmem:[#allocation3 + $0x234] sm:$0xff]
        %v3411 = vld [vmem:[#allocation3 + $0x23c] sm:$0xf]
        %v3412 = vld [vmem:[#allocation3 + $0x240] sm:$0xff]
        %v3413 = vld [vmem:[#allocation3 + $0x248] sm:$0xff]
        %v3414 = vld [vmem:[#allocation3 + $0x250] sm:$0xff]
        %v3415 = vld [vmem:[#allocation3 + $0x258] sm:$0xff]
        %v3416 = vld [vmem:[#allocation3 + $0x260] sm:$0xf]
        %v3417 = vld [vmem:[#allocation3 + $0x264] sm:$0xff]
        %v3418 = vld [vmem:[#allocation3 + $0x26c] sm:$0xff]
        %v3419 = vld [vmem:[#allocation3 + $0x274] sm:$0xff]
        %v3420 = vld [vmem:[#allocation3 + $0x27c] sm:$0xff]
        %v3421 = vld [vmem:[#allocation3 + $0x284] sm:$0xf]
        %v3422 = vld [vmem:[#allocation3 + $0x288] sm:$0xff]
        %v3423 = vld [vmem:[#allocation3 + $0x290] sm:$0xff]
        %v3424 = vld [vmem:[#allocation3 + $0x298] sm:$0xff]
        %v3425 = vld [vmem:[#allocation3 + $0x2a0] sm:$0xff]
        %v3426 = vld [vmem:[#allocation3 + $0x2a8] sm:$0xf]
        %v3427 = vld [vmem:[#allocation3 + $0x2ac] sm:$0xff]
        %v3428 = vld [vmem:[#allocation3 + $0x2b4] sm:$0xff]
        %v3429 = vld [vmem:[#allocation3 + $0x2bc] sm:$0xff]
        %v3430 = vld [vmem:[#allocation3 + $0x2c4] sm:$0xff]
        %v3431 = vld [vmem:[#allocation3 + $0x2cc] sm:$0xf]
        %v3432 = vld [vmem:[#allocation3 + $0x2d0] sm:$0xff]
        %v3433 = vld [vmem:[#allocation3 + $0x2d8] sm:$0xff]
        %v3434 = vld [vmem:[#allocation3 + $0x2e0] sm:$0xff]
        %v3435 = vld [vmem:[#allocation3 + $0x2e8] sm:$0xff]
        %v3436 = vld [vmem:[#allocation3 + $0x2f0] sm:$0xf]
        %v3437 = vld [vmem:[#allocation3 + $0x2f4] sm:$0xff]
        %v3438 = vld [vmem:[#allocation3 + $0x2fc] sm:$0xff]
        %v3439 = vld [vmem:[#allocation3 + $0x304] sm:$0xff]
        %v3440 = vld [vmem:[#allocation3 + $0x30c] sm:$0xff]
        %v3441 = vld [vmem:[#allocation3 + $0x314] sm:$0xf]
        %v3442 = vld [vmem:[#allocation3 + $0x318] sm:$0xff]
        %v3443 = vld [vmem:[#allocation3 + $0x320] sm:$0xff]
        %v3444 = vld [vmem:[#allocation3 + $0x328] sm:$0xff]
        %v3445 = vld [vmem:[#allocation3 + $0x330] sm:$0xff]
        %v3446 = vld [vmem:[#allocation3 + $0x338] sm:$0xf]
        %v3447 = vld [vmem:[#allocation3 + $0x33c] sm:$0xff]
        %v3448 = vld [vmem:[#allocation3 + $0x344] sm:$0xff]
        %v3449 = vld [vmem:[#allocation3 + $0x34c] sm:$0xff]
        %v3450 = vld [vmem:[#allocation3 + $0x354] sm:$0xff]
        %v3451 = vld [vmem:[#allocation3 + $0x35c] sm:$0xf]
        %v3452 = vld [vmem:[#allocation3 + $0x360] sm:$0xff]
        %v3453 = vld [vmem:[#allocation3 + $0x368] sm:$0xff]
        %v3454 = vld [vmem:[#allocation3 + $0x370] sm:$0xff]
        %v3455 = vld [vmem:[#allocation3 + $0x378] sm:$0xff]
        %v3456 = vld [vmem:[#allocation3 + $0x380] sm:$0xf]
        %v3457 = vld [vmem:[#allocation3 + $0x384] sm:$0xff]
        %v3458 = vld [vmem:[#allocation3 + $0x38c] sm:$0xff]
        %v3459 = vld [vmem:[#allocation3 + $0x394] sm:$0xff]
        %v3460 = vld [vmem:[#allocation3 + $0x39c] sm:$0xff]
        %v3461 = vld [vmem:[#allocation3 + $0x3a4] sm:$0xf]
        %v3462 = vld [vmem:[#allocation3 + $0x3a8] sm:$0xff]
        %v3463 = vld [vmem:[#allocation3 + $0x3b0] sm:$0xff]
        %v3464 = vld [vmem:[#allocation3 + $0x3b8] sm:$0xff]
        %v3465 = vld [vmem:[#allocation3 + $0x3c0] sm:$0xff]
        %v3466 = vld [vmem:[#allocation3 + $0x3c8] sm:$0xf]
        %v3467 = vld [vmem:[#allocation3 + $0x3cc] sm:$0xff]
        %v3468 = vld [vmem:[#allocation3 + $0x3d4] sm:$0xff]
        %v3469 = vld [vmem:[#allocation3 + $0x3dc] sm:$0xff]
        %v3470 = vld [vmem:[#allocation3 + $0x3e4] sm:$0xff]
        %v3471 = vld [vmem:[#allocation3 + $0x3ec] sm:$0xf]
        %v3472 = vld [vmem:[#allocation3 + $0x3f0] sm:$0xff]
        %v3473 = vld [vmem:[#allocation3 + $0x3f8] sm:$0xff]
        %v3474 = vld [vmem:[#allocation3 + $0x400] sm:$0xff]
        %v3475 = vld [vmem:[#allocation3 + $0x408] sm:$0xff]
        %v3476 = vld [vmem:[#allocation3 + $0x410] sm:$0xf]
        %v3477 = vld [vmem:[#allocation3 + $0x414] sm:$0xff]
        %v3478 = vld [vmem:[#allocation3 + $0x41c] sm:$0xff]
        %v3479 = vld [vmem:[#allocation3 + $0x424] sm:$0xff]
        %v3480 = vld [vmem:[#allocation3 + $0x42c] sm:$0xff]
        %v3481 = vld [vmem:[#allocation3 + $0x434] sm:$0xf]
        %v3482 = vld [vmem:[#allocation3 + $0x438] sm:$0xff]
        %v3483 = vld [vmem:[#allocation3 + $0x440] sm:$0xff]
        %v3484 = vld [vmem:[#allocation3 + $0x448] sm:$0xff]
        %v3485 = vld [vmem:[#allocation3 + $0x450] sm:$0xff]
        %v3486 = vld [vmem:[#allocation3 + $0x458] sm:$0xf]
        %v3487 = vld [vmem:[#allocation3 + $0x45c] sm:$0xff]
        %v3488 = vld [vmem:[#allocation3 + $0x464] sm:$0xff]
        %v3489 = vld [vmem:[#allocation3 + $0x46c] sm:$0xff]
        %v3490 = vld [vmem:[#allocation3 + $0x474] sm:$0xff]
        %v3491 = vld [vmem:[#allocation3 + $0x47c] sm:$0xf]
        %v3492 = vld [vmem:[#allocation7] sm:$0xf]
        %v3493 = vld [vmem:[#allocation7 + $0x4] sm:$0xf]
        %v3494 = vld [vmem:[#allocation7 + $0x8] sm:$0xf]
        %v3495 = vld [vmem:[#allocation7 + $0xc] sm:$0xf]
        %v3496 = vld [vmem:[#allocation7 + $0x10] sm:$0xf]
        %v3497 = vld [vmem:[#allocation7 + $0x14] sm:$0xf]
        %v3498 = vld [vmem:[#allocation7 + $0x18] sm:$0xf]
        %v3499 = vld [vmem:[#allocation7 + $0x1c] sm:$0xf]
        %v3500 = vld [vmem:[#allocation7 + $0x20] sm:$0xf]
        %v3501 = vld [vmem:[#allocation7 + $0x24] sm:$0xf]
        %v3502 = vld [vmem:[#allocation7 + $0x28] sm:$0xf]
        %v3503 = vld [vmem:[#allocation7 + $0x2c] sm:$0xf]
        %v3504 = vld [vmem:[#allocation7 + $0x30] sm:$0xf]
        %v3505 = vld [vmem:[#allocation7 + $0x34] sm:$0xf]
        %v3506 = vld [vmem:[#allocation7 + $0x38] sm:$0xf]
        %v3507 = vld [vmem:[#allocation7 + $0x3c] sm:$0xf]
        %v3508 = vld [vmem:[#allocation7 + $0x40] sm:$0xf]
        %v3509 = vld [vmem:[#allocation7 + $0x44] sm:$0xf]
        %v3510 = vld [vmem:[#allocation7 + $0x48] sm:$0xf]
        %v3511 = vld [vmem:[#allocation7 + $0x4c] sm:$0xf]
        %v3512 = vld [vmem:[#allocation7 + $0x50] sm:$0xf]
        %v3513 = vld [vmem:[#allocation7 + $0x54] sm:$0xf]
        %v3514 = vld [vmem:[#allocation7 + $0x58] sm:$0xf]
        %v3515 = vld [vmem:[#allocation7 + $0x5c] sm:$0xf]
        %v3516 = vld [vmem:[#allocation7 + $0x60] sm:$0xf]
        %v3517 = vld [vmem:[#allocation7 + $0x64] sm:$0xf]
        %v3518 = vld [vmem:[#allocation7 + $0x68] sm:$0xf]
        %v3519 = vld [vmem:[#allocation7 + $0x6c] sm:$0xf]
        %v3520 = vld [vmem:[#allocation7 + $0x70] sm:$0xf]
        %v3521 = vld [vmem:[#allocation7 + $0x74] sm:$0xf]
        %v3522 = vld [vmem:[#allocation7 + $0x78] sm:$0xf]
        %v3523 = vld [vmem:[#allocation7 + $0x7c] sm:$0xf]
        %v3524 = vld [vmem:[#allocation7 + $0x80] sm:$0xf]
        %v3525 = vld [vmem:[#allocation7 + $0x84] sm:$0xf]
        %v3526 = vld [vmem:[#allocation7 + $0x88] sm:$0xf]
        %v3527 = vld [vmem:[#allocation7 + $0x8c] sm:$0xf]
        %v3528 = vld [vmem:[#allocation7 + $0x90] sm:$0xf]
        %v3529 = vld [vmem:[#allocation7 + $0x94] sm:$0xf]
        %v3530 = vld [vmem:[#allocation7 + $0x98] sm:$0xf]
        %v3531 = vld [vmem:[#allocation7 + $0x9c] sm:$0xf]
        %v3532 = vld [vmem:[#allocation7 + $0xa0] sm:$0xf]
        %v3533 = vld [vmem:[#allocation7 + $0xa4] sm:$0xf]
        %v3534 = vld [vmem:[#allocation7 + $0xa8] sm:$0xf]
        %v3535 = vld [vmem:[#allocation7 + $0xac] sm:$0xf]
        %v3536 = vld [vmem:[#allocation7 + $0xb0] sm:$0xf]
        %v3537 = vld [vmem:[#allocation7 + $0xb4] sm:$0xf]
        %v3538 = vld [vmem:[#allocation7 + $0xb8] sm:$0xf]
        %v3539 = vld [vmem:[#allocation7 + $0xbc] sm:$0xf]
        %v3540 = vld [vmem:[#allocation7 + $0xc0] sm:$0xf]
        %v3541 = vld [vmem:[#allocation7 + $0xc4] sm:$0xf]
        %v3542 = vld [vmem:[#allocation7 + $0xc8] sm:$0xf]
        %v3543 = vld [vmem:[#allocation7 + $0xcc] sm:$0xf]
        %v3544 = vld [vmem:[#allocation7 + $0xd0] sm:$0xf]
        %v3545 = vld [vmem:[#allocation7 + $0xd4] sm:$0xf]
        %v3546 = vld [vmem:[#allocation7 + $0xd8] sm:$0xf]
        %v3547 = vld [vmem:[#allocation7 + $0xdc] sm:$0xf]
        %v3548 = vld [vmem:[#allocation7 + $0xe0] sm:$0xf]
        %v3549 = vld [vmem:[#allocation7 + $0xe4] sm:$0xf]
        %v3550 = vld [vmem:[#allocation7 + $0xe8] sm:$0xf]
        %v3551 = vld [vmem:[#allocation7 + $0xec] sm:$0xf]
        %v3552 = vld [vmem:[#allocation7 + $0xf0] sm:$0xf]
        %v3553 = vld [vmem:[#allocation7 + $0xf4] sm:$0xf]
        %v3554 = vld [vmem:[#allocation7 + $0xf8] sm:$0xf]
        %v3555 = vld [vmem:[#allocation7 + $0xfc] sm:$0xf]
        %v3556 = vld [vmem:[#allocation7 + $0x100] sm:$0xf]
        %v3557 = vld [vmem:[#allocation7 + $0x104] sm:$0xf]
        %v3558 = vld [vmem:[#allocation7 + $0x108] sm:$0xf]
        %v3559 = vld [vmem:[#allocation7 + $0x10c] sm:$0xf]
        %v3560 = vld [vmem:[#allocation7 + $0x110] sm:$0xf]
        %v3561 = vld [vmem:[#allocation7 + $0x114] sm:$0xf]
        %v3562 = vld [vmem:[#allocation7 + $0x118] sm:$0xf]
        %v3563 = vld [vmem:[#allocation7 + $0x11c] sm:$0xf]
        %v3564 = vld [vmem:[#allocation7 + $0x120] sm:$0xf]
        %v3565 = vld [vmem:[#allocation7 + $0x124] sm:$0xf]
        %v3566 = vld [vmem:[#allocation7 + $0x128] sm:$0xf]
        %v3567 = vld [vmem:[#allocation7 + $0x12c] sm:$0xf]
        %v3568 = vld [vmem:[#allocation7 + $0x130] sm:$0xf]
        %v3569 = vld [vmem:[#allocation7 + $0x134] sm:$0xf]
        %v3570 = vld [vmem:[#allocation7 + $0x138] sm:$0xf]
        %v3571 = vld [vmem:[#allocation7 + $0x13c] sm:$0xf]
        %v3572 = vld [vmem:[#allocation7 + $0x140] sm:$0xf]
        %v3573 = vld [vmem:[#allocation7 + $0x144] sm:$0xf]
        %v3574 = vld [vmem:[#allocation7 + $0x148] sm:$0xf]
        %v3575 = vld [vmem:[#allocation7 + $0x14c] sm:$0xf]
        %v3576 = vld [vmem:[#allocation7 + $0x150] sm:$0xf]
        %v3577 = vld [vmem:[#allocation7 + $0x154] sm:$0xf]
        %v3578 = vld [vmem:[#allocation7 + $0x158] sm:$0xf]
        %v3579 = vld [vmem:[#allocation7 + $0x15c] sm:$0xf]
        %v3580 = vld [vmem:[#allocation7 + $0x160] sm:$0xf]
        %v3581 = vld [vmem:[#allocation7 + $0x164] sm:$0xf]
        %v3582 = vld [vmem:[#allocation7 + $0x168] sm:$0xf]
        %v3583 = vld [vmem:[#allocation7 + $0x16c] sm:$0xf]
        %v3584 = vld [vmem:[#allocation7 + $0x170] sm:$0xf]
        %v3585 = vld [vmem:[#allocation7 + $0x174] sm:$0xf]
        %v3586 = vld [vmem:[#allocation7 + $0x178] sm:$0xf]
        %v3587 = vld [vmem:[#allocation7 + $0x17c] sm:$0xf]
        %v3588 = vld [vmem:[#allocation7 + $0x180] sm:$0xf]
        %v3589 = vld [vmem:[#allocation7 + $0x184] sm:$0xf]
        %v3590 = vld [vmem:[#allocation7 + $0x188] sm:$0xf]
        %v3591 = vld [vmem:[#allocation7 + $0x18c] sm:$0xf]
        %v3592 = vld [vmem:[#allocation7 + $0x190] sm:$0xf]
        %v3593 = vld [vmem:[#allocation7 + $0x194] sm:$0xf]
        %v3594 = vld [vmem:[#allocation7 + $0x198] sm:$0xf]
        %v3595 = vld [vmem:[#allocation7 + $0x19c] sm:$0xf]
        %v3596 = vld [vmem:[#allocation7 + $0x1a0] sm:$0xf]
        %v3597 = vld [vmem:[#allocation7 + $0x1a4] sm:$0xf]
        %v3598 = vld [vmem:[#allocation7 + $0x1a8] sm:$0xf]
        %v3599 = vld [vmem:[#allocation7 + $0x1ac] sm:$0xf]
        %v3600 = vld [vmem:[#allocation7 + $0x1b0] sm:$0xf]
        %v3601 = vld [vmem:[#allocation7 + $0x1b4] sm:$0xf]
        %v3602 = vld [vmem:[#allocation7 + $0x1b8] sm:$0xf]
        %v3603 = vld [vmem:[#allocation7 + $0x1bc] sm:$0xf]
        %v3604 = vld [vmem:[#allocation7 + $0x1c0] sm:$0xf]
        %v3605 = vld [vmem:[#allocation7 + $0x1c4] sm:$0xf]
        %v3606 = vld [vmem:[#allocation7 + $0x1c8] sm:$0xf]
        %v3607 = vld [vmem:[#allocation7 + $0x1cc] sm:$0xf]
        %v3608 = vld [vmem:[#allocation7 + $0x1d0] sm:$0xf]
        %v3609 = vld [vmem:[#allocation7 + $0x1d4] sm:$0xf]
        %v3610 = vld [vmem:[#allocation7 + $0x1d8] sm:$0xf]
        %v3611 = vld [vmem:[#allocation7 + $0x1dc] sm:$0xf]
        %v3612 = vld [vmem:[#allocation7 + $0x1e0] sm:$0xf]
        %v3613 = vld [vmem:[#allocation7 + $0x1e4] sm:$0xf]
        %v3614 = vld [vmem:[#allocation7 + $0x1e8] sm:$0xf]
        %v3615 = vld [vmem:[#allocation7 + $0x1ec] sm:$0xf]
        %v3616 = vld [vmem:[#allocation7 + $0x1f0] sm:$0xf]
        %v3617 = vld [vmem:[#allocation7 + $0x1f4] sm:$0xf]
        %v3618 = vld [vmem:[#allocation7 + $0x1f8] sm:$0xf]
        %v3619 = vld [vmem:[#allocation7 + $0x1fc] sm:$0xf]
        %v3620 = vld [vmem:[#allocation7 + $0x200] sm:$0xf]
        %v3621 = vld [vmem:[#allocation7 + $0x204] sm:$0xf]
        %v3622 = vld [vmem:[#allocation7 + $0x208] sm:$0xf]
        %v3623 = vld [vmem:[#allocation7 + $0x20c] sm:$0xf]
        %v3624 = vld [vmem:[#allocation7 + $0x210] sm:$0xf]
        %v3625 = vld [vmem:[#allocation7 + $0x214] sm:$0xf]
        %v3626 = vld [vmem:[#allocation7 + $0x218] sm:$0xf]
        %v3627 = vld [vmem:[#allocation7 + $0x21c] sm:$0xf]
        %v3628 = vld [vmem:[#allocation7 + $0x220] sm:$0xf]
        %v3629 = vld [vmem:[#allocation7 + $0x224] sm:$0xf]
        %v3630 = vld [vmem:[#allocation7 + $0x228] sm:$0xf]
        %v3631 = vld [vmem:[#allocation7 + $0x22c] sm:$0xf]
        %v3632 = vld [vmem:[#allocation7 + $0x230] sm:$0xf]
        %v3633 = vld [vmem:[#allocation7 + $0x234] sm:$0xf]
        %v3634 = vld [vmem:[#allocation7 + $0x238] sm:$0xf]
        %v3635 = vld [vmem:[#allocation7 + $0x23c] sm:$0xf]
        %v3636 = vld [vmem:[%s3] sm:$0x1]
        %v3637 = vperm.slane %v3636, 0
        %v3798 = vunpack.c.l.b16 %v3332
        %v3799 = vunpack.c.h.b16 %v3332
        %v3800 = vunpack.c.l.b16 %v3333
        %v3801 = vunpack.c.h.b16 %v3333
        %v3802 = vunpack.c.l.b16 %v3334
        %v3803 = vunpack.c.h.b16 %v3334
        %v3804 = vunpack.c.l.b16 %v3335
        %v3805 = vunpack.c.h.b16 %v3335
        %v3806 = vunpack.c.l.b16 %v3336
        %v3807 = vunpack.c.l.b16 %v3337
        %v3808 = vunpack.c.h.b16 %v3337
        %v3809 = vunpack.c.l.b16 %v3338
        %v3810 = vunpack.c.h.b16 %v3338
        %v3811 = vunpack.c.l.b16 %v3339
        %v3812 = vunpack.c.h.b16 %v3339
        %v3813 = vunpack.c.l.b16 %v3340
        %v3814 = vunpack.c.h.b16 %v3340
        %v3815 = vunpack.c.l.b16 %v3341
        %v3816 = vunpack.c.l.b16 %v3342
        %v3817 = vunpack.c.h.b16 %v3342
        %v3818 = vunpack.c.l.b16 %v3343
        %v3819 = vunpack.c.h.b16 %v3343
        %v3820 = vunpack.c.l.b16 %v3344
        %v3821 = vunpack.c.h.b16 %v3344
        %v3822 = vunpack.c.l.b16 %v3345
        %v3823 = vunpack.c.h.b16 %v3345
        %v3824 = vunpack.c.l.b16 %v3346
        %v3825 = vunpack.c.l.b16 %v3347
        %v3826 = vunpack.c.h.b16 %v3347
        %v3827 = vunpack.c.l.b16 %v3348
        %v3828 = vunpack.c.h.b16 %v3348
        %v3829 = vunpack.c.l.b16 %v3349
        %v3830 = vunpack.c.h.b16 %v3349
        %v3831 = vunpack.c.l.b16 %v3350
        %v3832 = vunpack.c.h.b16 %v3350
        %v3833 = vunpack.c.l.b16 %v3351
        %v3834 = vunpack.c.l.b16 %v3352
        %v3835 = vunpack.c.h.b16 %v3352
        %v3836 = vunpack.c.l.b16 %v3353
        %v3837 = vunpack.c.h.b16 %v3353
        %v3838 = vunpack.c.l.b16 %v3354
        %v3839 = vunpack.c.h.b16 %v3354
        %v3840 = vunpack.c.l.b16 %v3355
        %v3841 = vunpack.c.h.b16 %v3355
        %v3842 = vunpack.c.l.b16 %v3356
        %v3843 = vunpack.c.l.b16 %v3357
        %v3844 = vunpack.c.h.b16 %v3357
        %v3845 = vunpack.c.l.b16 %v3358
        %v3846 = vunpack.c.h.b16 %v3358
        %v3847 = vunpack.c.l.b16 %v3359
        %v3848 = vunpack.c.h.b16 %v3359
        %v3849 = vunpack.c.l.b16 %v3360
        %v3850 = vunpack.c.h.b16 %v3360
        %v3851 = vunpack.c.l.b16 %v3361
        %v3852 = vunpack.c.l.b16 %v3362
        %v3853 = vunpack.c.h.b16 %v3362
        %v3854 = vunpack.c.l.b16 %v3363
        %v3855 = vunpack.c.h.b16 %v3363
        %v3856 = vunpack.c.l.b16 %v3364
        %v3857 = vunpack.c.h.b16 %v3364
        %v3858 = vunpack.c.l.b16 %v3365
        %v3859 = vunpack.c.h.b16 %v3365
        %v3860 = vunpack.c.l.b16 %v3366
        %v3861 = vunpack.c.l.b16 %v3367
        %v3862 = vunpack.c.h.b16 %v3367
        %v3863 = vunpack.c.l.b16 %v3368
        %v3864 = vunpack.c.h.b16 %v3368
        %v3865 = vunpack.c.l.b16 %v3369
        %v3866 = vunpack.c.h.b16 %v3369
        %v3867 = vunpack.c.l.b16 %v3370
        %v3868 = vunpack.c.h.b16 %v3370
        %v3869 = vunpack.c.l.b16 %v3371
        %v3870 = vunpack.c.l.b16 %v3372
        %v3871 = vunpack.c.h.b16 %v3372
        %v3872 = vunpack.c.l.b16 %v3373
        %v3873 = vunpack.c.h.b16 %v3373
        %v3874 = vunpack.c.l.b16 %v3374
        %v3875 = vunpack.c.h.b16 %v3374
        %v3876 = vunpack.c.l.b16 %v3375
        %v3877 = vunpack.c.h.b16 %v3375
        %v3878 = vunpack.c.l.b16 %v3376
        %v3879 = vunpack.c.l.b16 %v3377
        %v3880 = vunpack.c.h.b16 %v3377
        %v3881 = vunpack.c.l.b16 %v3378
        %v3882 = vunpack.c.h.b16 %v3378
        %v3883 = vunpack.c.l.b16 %v3379
        %v3884 = vunpack.c.h.b16 %v3379
        %v3885 = vunpack.c.l.b16 %v3380
        %v3886 = vunpack.c.h.b16 %v3380
        %v3887 = vunpack.c.l.b16 %v3381
        %v3888 = vunpack.c.l.b16 %v3382
        %v3889 = vunpack.c.h.b16 %v3382
        %v3890 = vunpack.c.l.b16 %v3383
        %v3891 = vunpack.c.h.b16 %v3383
        %v3892 = vunpack.c.l.b16 %v3384
        %v3893 = vunpack.c.h.b16 %v3384
        %v3894 = vunpack.c.l.b16 %v3385
        %v3895 = vunpack.c.h.b16 %v3385
        %v3896 = vunpack.c.l.b16 %v3386
        %v3897 = vunpack.c.l.b16 %v3387
        %v3898 = vunpack.c.h.b16 %v3387
        %v3899 = vunpack.c.l.b16 %v3388
        %v3900 = vunpack.c.h.b16 %v3388
        %v3901 = vunpack.c.l.b16 %v3389
        %v3902 = vunpack.c.h.b16 %v3389
        %v3903 = vunpack.c.l.b16 %v3390
        %v3904 = vunpack.c.h.b16 %v3390
        %v3905 = vunpack.c.l.b16 %v3391
        %v3906 = vunpack.c.l.b16 %v3392
        %v3907 = vunpack.c.h.b16 %v3392
        %v3908 = vunpack.c.l.b16 %v3393
        %v3909 = vunpack.c.h.b16 %v3393
        %v3910 = vunpack.c.l.b16 %v3394
        %v3911 = vunpack.c.h.b16 %v3394
        %v3912 = vunpack.c.l.b16 %v3395
        %v3913 = vunpack.c.h.b16 %v3395
        %v3914 = vunpack.c.l.b16 %v3396
        %v3915 = vunpack.c.l.b16 %v3397
        %v3916 = vunpack.c.h.b16 %v3397
        %v3917 = vunpack.c.l.b16 %v3398
        %v3918 = vunpack.c.h.b16 %v3398
        %v3919 = vunpack.c.l.b16 %v3399
        %v3920 = vunpack.c.h.b16 %v3399
        %v3921 = vunpack.c.l.b16 %v3400
        %v3922 = vunpack.c.h.b16 %v3400
        %v3923 = vunpack.c.l.b16 %v3401
        %v3924 = vunpack.c.l.b16 %v3402
        %v3925 = vunpack.c.h.b16 %v3402
        %v3926 = vunpack.c.l.b16 %v3403
        %v3927 = vunpack.c.h.b16 %v3403
        %v3928 = vunpack.c.l.b16 %v3404
        %v3929 = vunpack.c.h.b16 %v3404
        %v3930 = vunpack.c.l.b16 %v3405
        %v3931 = vunpack.c.h.b16 %v3405
        %v3932 = vunpack.c.l.b16 %v3406
        %v3933 = vunpack.c.l.b16 %v3407
        %v3934 = vunpack.c.h.b16 %v3407
        %v3935 = vunpack.c.l.b16 %v3408
        %v3936 = vunpack.c.h.b16 %v3408
        %v3937 = vunpack.c.l.b16 %v3409
        %v3938 = vunpack.c.h.b16 %v3409
        %v3939 = vunpack.c.l.b16 %v3410
        %v3940 = vunpack.c.h.b16 %v3410
        %v3941 = vunpack.c.l.b16 %v3411
        %v3942 = vunpack.c.l.b16 %v3412
        %v3943 = vunpack.c.h.b16 %v3412
        %v3944 = vunpack.c.l.b16 %v3413
        %v3945 = vunpack.c.h.b16 %v3413
        %v3946 = vunpack.c.l.b16 %v3414
        %v3947 = vunpack.c.h.b16 %v3414
        %v3948 = vunpack.c.l.b16 %v3415
        %v3949 = vunpack.c.h.b16 %v3415
        %v3950 = vunpack.c.l.b16 %v3416
        %v3951 = vunpack.c.l.b16 %v3417
        %v3952 = vunpack.c.h.b16 %v3417
        %v3953 = vunpack.c.l.b16 %v3418
        %v3954 = vunpack.c.h.b16 %v3418
        %v3955 = vunpack.c.l.b16 %v3419
        %v3956 = vunpack.c.h.b16 %v3419
        %v3957 = vunpack.c.l.b16 %v3420
        %v3958 = vunpack.c.h.b16 %v3420
        %v3959 = vunpack.c.l.b16 %v3421
        %v3960 = vunpack.c.l.b16 %v3422
        %v3961 = vunpack.c.h.b16 %v3422
        %v3962 = vunpack.c.l.b16 %v3423
        %v3963 = vunpack.c.h.b16 %v3423
        %v3964 = vunpack.c.l.b16 %v3424
        %v3965 = vunpack.c.h.b16 %v3424
        %v3966 = vunpack.c.l.b16 %v3425
        %v3967 = vunpack.c.h.b16 %v3425
        %v3968 = vunpack.c.l.b16 %v3426
        %v3969 = vunpack.c.l.b16 %v3427
        %v3970 = vunpack.c.h.b16 %v3427
        %v3971 = vunpack.c.l.b16 %v3428
        %v3972 = vunpack.c.h.b16 %v3428
        %v3973 = vunpack.c.l.b16 %v3429
        %v3974 = vunpack.c.h.b16 %v3429
        %v3975 = vunpack.c.l.b16 %v3430
        %v3976 = vunpack.c.h.b16 %v3430
        %v3977 = vunpack.c.l.b16 %v3431
        %v3978 = vunpack.c.l.b16 %v3432
        %v3979 = vunpack.c.h.b16 %v3432
        %v3980 = vunpack.c.l.b16 %v3433
        %v3981 = vunpack.c.h.b16 %v3433
        %v3982 = vunpack.c.l.b16 %v3434
        %v3983 = vunpack.c.h.b16 %v3434
        %v3984 = vunpack.c.l.b16 %v3435
        %v3985 = vunpack.c.h.b16 %v3435
        %v3986 = vunpack.c.l.b16 %v3436
        %v3987 = vunpack.c.l.b16 %v3437
        %v3988 = vunpack.c.h.b16 %v3437
        %v3989 = vunpack.c.l.b16 %v3438
        %v3990 = vunpack.c.h.b16 %v3438
        %v3991 = vunpack.c.l.b16 %v3439
        %v3992 = vunpack.c.h.b16 %v3439
        %v3993 = vunpack.c.l.b16 %v3440
        %v3994 = vunpack.c.h.b16 %v3440
        %v3995 = vunpack.c.l.b16 %v3441
        %v3996 = vunpack.c.l.b16 %v3442
        %v3997 = vunpack.c.h.b16 %v3442
        %v3998 = vunpack.c.l.b16 %v3443
        %v3999 = vunpack.c.h.b16 %v3443
        %v4000 = vunpack.c.l.b16 %v3444
        %v4001 = vunpack.c.h.b16 %v3444
        %v4002 = vunpack.c.l.b16 %v3445
        %v4003 = vunpack.c.h.b16 %v3445
        %v4004 = vunpack.c.l.b16 %v3446
        %v4005 = vunpack.c.l.b16 %v3447
        %v4006 = vunpack.c.h.b16 %v3447
        %v4007 = vunpack.c.l.b16 %v3448
        %v4008 = vunpack.c.h.b16 %v3448
        %v4009 = vunpack.c.l.b16 %v3449
        %v4010 = vunpack.c.h.b16 %v3449
        %v4011 = vunpack.c.l.b16 %v3450
        %v4012 = vunpack.c.h.b16 %v3450
        %v4013 = vunpack.c.l.b16 %v3451
        %v4014 = vunpack.c.l.b16 %v3452
        %v4015 = vunpack.c.h.b16 %v3452
        %v4016 = vunpack.c.l.b16 %v3453
        %v4017 = vunpack.c.h.b16 %v3453
        %v4018 = vunpack.c.l.b16 %v3454
        %v4019 = vunpack.c.h.b16 %v3454
        %v4020 = vunpack.c.l.b16 %v3455
        %v4021 = vunpack.c.h.b16 %v3455
        %v4022 = vunpack.c.l.b16 %v3456
        %v4023 = vunpack.c.l.b16 %v3457
        %v4024 = vunpack.c.h.b16 %v3457
        %v4025 = vunpack.c.l.b16 %v3458
        %v4026 = vunpack.c.h.b16 %v3458
        %v4027 = vunpack.c.l.b16 %v3459
        %v4028 = vunpack.c.h.b16 %v3459
        %v4029 = vunpack.c.l.b16 %v3460
        %v4030 = vunpack.c.h.b16 %v3460
        %v4031 = vunpack.c.l.b16 %v3461
        %v4032 = vunpack.c.l.b16 %v3462
        %v4033 = vunpack.c.h.b16 %v3462
        %v4034 = vunpack.c.l.b16 %v3463
        %v4035 = vunpack.c.h.b16 %v3463
        %v4036 = vunpack.c.l.b16 %v3464
        %v4037 = vunpack.c.h.b16 %v3464
        %v4038 = vunpack.c.l.b16 %v3465
        %v4039 = vunpack.c.h.b16 %v3465
        %v4040 = vunpack.c.l.b16 %v3466
        %v4041 = vunpack.c.l.b16 %v3467
        %v4042 = vunpack.c.h.b16 %v3467
        %v4043 = vunpack.c.l.b16 %v3468
        %v4044 = vunpack.c.h.b16 %v3468
        %v4045 = vunpack.c.l.b16 %v3469
        %v4046 = vunpack.c.h.b16 %v3469
        %v4047 = vunpack.c.l.b16 %v3470
        %v4048 = vunpack.c.h.b16 %v3470
        %v4049 = vunpack.c.l.b16 %v3471
        %v4050 = vunpack.c.l.b16 %v3472
        %v4051 = vunpack.c.h.b16 %v3472
        %v4052 = vunpack.c.l.b16 %v3473
        %v4053 = vunpack.c.h.b16 %v3473
        %v4054 = vunpack.c.l.b16 %v3474
        %v4055 = vunpack.c.h.b16 %v3474
        %v4056 = vunpack.c.l.b16 %v3475
        %v4057 = vunpack.c.h.b16 %v3475
        %v4058 = vunpack.c.l.b16 %v3476
        %v4059 = vunpack.c.l.b16 %v3477
        %v4060 = vunpack.c.h.b16 %v3477
        %v4061 = vunpack.c.l.b16 %v3478
        %v4062 = vunpack.c.h.b16 %v3478
        %v4063 = vunpack.c.l.b16 %v3479
        %v4064 = vunpack.c.h.b16 %v3479
        %v4065 = vunpack.c.l.b16 %v3480
        %v4066 = vunpack.c.h.b16 %v3480
        %v4067 = vunpack.c.l.b16 %v3481
        %v4068 = vunpack.c.l.b16 %v3482
        %v4069 = vunpack.c.h.b16 %v3482
        %v4070 = vunpack.c.l.b16 %v3483
        %v4071 = vunpack.c.h.b16 %v3483
        %v4072 = vunpack.c.l.b16 %v3484
        %v4073 = vunpack.c.h.b16 %v3484
        %v4074 = vunpack.c.l.b16 %v3485
        %v4075 = vunpack.c.h.b16 %v3485
        %v4076 = vunpack.c.l.b16 %v3486
        %v4077 = vunpack.c.l.b16 %v3487
        %v4078 = vunpack.c.h.b16 %v3487
        %v4079 = vunpack.c.l.b16 %v3488
        %v4080 = vunpack.c.h.b16 %v3488
        %v4081 = vunpack.c.l.b16 %v3489
        %v4082 = vunpack.c.h.b16 %v3489
        %v4083 = vunpack.c.l.b16 %v3490
        %v4084 = vunpack.c.h.b16 %v3490
        %v4085 = vunpack.c.l.b16 %v3491
        %v4086 = vpack.c.b16 %v3807, %v3798
        %v4087 = vpack.c.b16 %v3808, %v3799
        %v4088 = vpack.c.b16 %v3809, %v3800
        %v4089 = vpack.c.b16 %v3810, %v3801
        %v4090 = vpack.c.b16 %v3811, %v3802
        %v4091 = vpack.c.b16 %v3812, %v3803
        %v4092 = vpack.c.b16 %v3813, %v3804
        %v4093 = vpack.c.b16 %v3814, %v3805
        %v4094 = vpack.c.b16 %v3815, %v3806
        %v4095 = vpack.c.b16 %v3825, %v3816
        %v4096 = vpack.c.b16 %v3826, %v3817
        %v4097 = vpack.c.b16 %v3827, %v3818
        %v4098 = vpack.c.b16 %v3828, %v3819
        %v4099 = vpack.c.b16 %v3829, %v3820
        %v4100 = vpack.c.b16 %v3830, %v3821
        %v4101 = vpack.c.b16 %v3831, %v3822
        %v4102 = vpack.c.b16 %v3832, %v3823
        %v4103 = vpack.c.b16 %v3833, %v3824
        %v4104 = vpack.c.b16 %v3843, %v3834
        %v4105 = vpack.c.b16 %v3844, %v3835
        %v4106 = vpack.c.b16 %v3845, %v3836
        %v4107 = vpack.c.b16 %v3846, %v3837
        %v4108 = vpack.c.b16 %v3847, %v3838
        %v4109 = vpack.c.b16 %v3848, %v3839
        %v4110 = vpack.c.b16 %v3849, %v3840
        %v4111 = vpack.c.b16 %v3850, %v3841
        %v4112 = vpack.c.b16 %v3851, %v3842
        %v4113 = vpack.c.b16 %v3861, %v3852
        %v4114 = vpack.c.b16 %v3862, %v3853
        %v4115 = vpack.c.b16 %v3863, %v3854
        %v4116 = vpack.c.b16 %v3864, %v3855
        %v4117 = vpack.c.b16 %v3865, %v3856
        %v4118 = vpack.c.b16 %v3866, %v3857
        %v4119 = vpack.c.b16 %v3867, %v3858
        %v4120 = vpack.c.b16 %v3868, %v3859
        %v4121 = vpack.c.b16 %v3869, %v3860
        %v4122 = vpack.c.b16 %v3879, %v3870
        %v4123 = vpack.c.b16 %v3880, %v3871
        %v4124 = vpack.c.b16 %v3881, %v3872
        %v4125 = vpack.c.b16 %v3882, %v3873
        %v4126 = vpack.c.b16 %v3883, %v3874
        %v4127 = vpack.c.b16 %v3884, %v3875
        %v4128 = vpack.c.b16 %v3885, %v3876
        %v4129 = vpack.c.b16 %v3886, %v3877
        %v4130 = vpack.c.b16 %v3887, %v3878
        %v4131 = vpack.c.b16 %v3897, %v3888
        %v4132 = vpack.c.b16 %v3898, %v3889
        %v4133 = vpack.c.b16 %v3899, %v3890
        %v4134 = vpack.c.b16 %v3900, %v3891
        %v4135 = vpack.c.b16 %v3901, %v3892
        %v4136 = vpack.c.b16 %v3902, %v3893
        %v4137 = vpack.c.b16 %v3903, %v3894
        %v4138 = vpack.c.b16 %v3904, %v3895
        %v4139 = vpack.c.b16 %v3905, %v3896
        %v4140 = vpack.c.b16 %v3915, %v3906
        %v4141 = vpack.c.b16 %v3916, %v3907
        %v4142 = vpack.c.b16 %v3917, %v3908
        %v4143 = vpack.c.b16 %v3918, %v3909
        %v4144 = vpack.c.b16 %v3919, %v3910
        %v4145 = vpack.c.b16 %v3920, %v3911
        %v4146 = vpack.c.b16 %v3921, %v3912
        %v4147 = vpack.c.b16 %v3922, %v3913
        %v4148 = vpack.c.b16 %v3923, %v3914
        %v4149 = vpack.c.b16 %v3933, %v3924
        %v4150 = vpack.c.b16 %v3934, %v3925
        %v4151 = vpack.c.b16 %v3935, %v3926
        %v4152 = vpack.c.b16 %v3936, %v3927
        %v4153 = vpack.c.b16 %v3937, %v3928
        %v4154 = vpack.c.b16 %v3938, %v3929
        %v4155 = vpack.c.b16 %v3939, %v3930
        %v4156 = vpack.c.b16 %v3940, %v3931
        %v4157 = vpack.c.b16 %v3941, %v3932
        %v4158 = vpack.c.b16 %v3951, %v3942
        %v4159 = vpack.c.b16 %v3952, %v3943
        %v4160 = vpack.c.b16 %v3953, %v3944
        %v4161 = vpack.c.b16 %v3954, %v3945
        %v4162 = vpack.c.b16 %v3955, %v3946
        %v4163 = vpack.c.b16 %v3956, %v3947
        %v4164 = vpack.c.b16 %v3957, %v3948
        %v4165 = vpack.c.b16 %v3958, %v3949
        %v4166 = vpack.c.b16 %v3959, %v3950
        %v4167 = vpack.c.b16 %v3969, %v3960
        %v4168 = vpack.c.b16 %v3970, %v3961
        %v4169 = vpack.c.b16 %v3971, %v3962
        %v4170 = vpack.c.b16 %v3972, %v3963
        %v4171 = vpack.c.b16 %v3973, %v3964
        %v4172 = vpack.c.b16 %v3974, %v3965
        %v4173 = vpack.c.b16 %v3975, %v3966
        %v4174 = vpack.c.b16 %v3976, %v3967
        %v4175 = vpack.c.b16 %v3977, %v3968
        %v4176 = vpack.c.b16 %v3987, %v3978
        %v4177 = vpack.c.b16 %v3988, %v3979
        %v4178 = vpack.c.b16 %v3989, %v3980
        %v4179 = vpack.c.b16 %v3990, %v3981
        %v4180 = vpack.c.b16 %v3991, %v3982
        %v4181 = vpack.c.b16 %v3992, %v3983
        %v4182 = vpack.c.b16 %v3993, %v3984
        %v4183 = vpack.c.b16 %v3994, %v3985
        %v4184 = vpack.c.b16 %v3995, %v3986
        %v4185 = vpack.c.b16 %v4005, %v3996
        %v4186 = vpack.c.b16 %v4006, %v3997
        %v4187 = vpack.c.b16 %v4007, %v3998
        %v4188 = vpack.c.b16 %v4008, %v3999
        %v4189 = vpack.c.b16 %v4009, %v4000
        %v4190 = vpack.c.b16 %v4010, %v4001
        %v4191 = vpack.c.b16 %v4011, %v4002
        %v4192 = vpack.c.b16 %v4012, %v4003
        %v4193 = vpack.c.b16 %v4013, %v4004
        %v4194 = vpack.c.b16 %v4023, %v4014
        %v4195 = vpack.c.b16 %v4024, %v4015
        %v4196 = vpack.c.b16 %v4025, %v4016
        %v4197 = vpack.c.b16 %v4026, %v4017
        %v4198 = vpack.c.b16 %v4027, %v4018
        %v4199 = vpack.c.b16 %v4028, %v4019
        %v4200 = vpack.c.b16 %v4029, %v4020
        %v4201 = vpack.c.b16 %v4030, %v4021
        %v4202 = vpack.c.b16 %v4031, %v4022
        %v4203 = vpack.c.b16 %v4041, %v4032
        %v4204 = vpack.c.b16 %v4042, %v4033
        %v4205 = vpack.c.b16 %v4043, %v4034
        %v4206 = vpack.c.b16 %v4044, %v4035
        %v4207 = vpack.c.b16 %v4045, %v4036
        %v4208 = vpack.c.b16 %v4046, %v4037
        %v4209 = vpack.c.b16 %v4047, %v4038
        %v4210 = vpack.c.b16 %v4048, %v4039
        %v4211 = vpack.c.b16 %v4049, %v4040
        %v4212 = vpack.c.b16 %v4059, %v4050
        %v4213 = vpack.c.b16 %v4060, %v4051
        %v4214 = vpack.c.b16 %v4061, %v4052
        %v4215 = vpack.c.b16 %v4062, %v4053
        %v4216 = vpack.c.b16 %v4063, %v4054
        %v4217 = vpack.c.b16 %v4064, %v4055
        %v4218 = vpack.c.b16 %v4065, %v4056
        %v4219 = vpack.c.b16 %v4066, %v4057
        %v4220 = vpack.c.b16 %v4067, %v4058
        %v4221 = vpack.c.b16 %v4077, %v4068
        %v4222 = vpack.c.b16 %v4078, %v4069
        %v4223 = vpack.c.b16 %v4079, %v4070
        %v4224 = vpack.c.b16 %v4080, %v4071
        %v4225 = vpack.c.b16 %v4081, %v4072
        %v4226 = vpack.c.b16 %v4082, %v4073
        %v4227 = vpack.c.b16 %v4083, %v4074
        %v4228 = vpack.c.b16 %v4084, %v4075
        %v4229 = vpack.c.b16 %v4085, %v4076
        %v4518 = vunpack.c.l.b16 %v3492
        %v4519 = vunpack.c.l.b16 %v3493
        %v4520 = vunpack.c.l.b16 %v3494
        %v4521 = vunpack.c.l.b16 %v3495
        %v4522 = vunpack.c.l.b16 %v3496
        %v4523 = vunpack.c.l.b16 %v3497
        %v4524 = vunpack.c.l.b16 %v3498
        %v4525 = vunpack.c.l.b16 %v3499
        %v4526 = vunpack.c.l.b16 %v3500
        %v4527 = vunpack.c.l.b16 %v3501
        %v4528 = vunpack.c.l.b16 %v3502
        %v4529 = vunpack.c.l.b16 %v3503
        %v4530 = vunpack.c.l.b16 %v3504
        %v4531 = vunpack.c.l.b16 %v3505
        %v4532 = vunpack.c.l.b16 %v3506
        %v4533 = vunpack.c.l.b16 %v3507
        %v4534 = vunpack.c.l.b16 %v3508
        %v4535 = vunpack.c.l.b16 %v3509
        %v4536 = vunpack.c.l.b16 %v3510
        %v4537 = vunpack.c.l.b16 %v3511
        %v4538 = vunpack.c.l.b16 %v3512
        %v4539 = vunpack.c.l.b16 %v3513
        %v4540 = vunpack.c.l.b16 %v3514
        %v4541 = vunpack.c.l.b16 %v3515
        %v4542 = vunpack.c.l.b16 %v3516
        %v4543 = vunpack.c.l.b16 %v3517
        %v4544 = vunpack.c.l.b16 %v3518
        %v4545 = vunpack.c.l.b16 %v3519
        %v4546 = vunpack.c.l.b16 %v3520
        %v4547 = vunpack.c.l.b16 %v3521
        %v4548 = vunpack.c.l.b16 %v3522
        %v4549 = vunpack.c.l.b16 %v3523
        %v4550 = vunpack.c.l.b16 %v3524
        %v4551 = vunpack.c.l.b16 %v3525
        %v4552 = vunpack.c.l.b16 %v3526
        %v4553 = vunpack.c.l.b16 %v3527
        %v4554 = vunpack.c.l.b16 %v3528
        %v4555 = vunpack.c.l.b16 %v3529
        %v4556 = vunpack.c.l.b16 %v3530
        %v4557 = vunpack.c.l.b16 %v3531
        %v4558 = vunpack.c.l.b16 %v3532
        %v4559 = vunpack.c.l.b16 %v3533
        %v4560 = vunpack.c.l.b16 %v3534
        %v4561 = vunpack.c.l.b16 %v3535
        %v4562 = vunpack.c.l.b16 %v3536
        %v4563 = vunpack.c.l.b16 %v3537
        %v4564 = vunpack.c.l.b16 %v3538
        %v4565 = vunpack.c.l.b16 %v3539
        %v4566 = vunpack.c.l.b16 %v3540
        %v4567 = vunpack.c.l.b16 %v3541
        %v4568 = vunpack.c.l.b16 %v3542
        %v4569 = vunpack.c.l.b16 %v3543
        %v4570 = vunpack.c.l.b16 %v3544
        %v4571 = vunpack.c.l.b16 %v3545
        %v4572 = vunpack.c.l.b16 %v3546
        %v4573 = vunpack.c.l.b16 %v3547
        %v4574 = vunpack.c.l.b16 %v3548
        %v4575 = vunpack.c.l.b16 %v3549
        %v4576 = vunpack.c.l.b16 %v3550
        %v4577 = vunpack.c.l.b16 %v3551
        %v4578 = vunpack.c.l.b16 %v3552
        %v4579 = vunpack.c.l.b16 %v3553
        %v4580 = vunpack.c.l.b16 %v3554
        %v4581 = vunpack.c.l.b16 %v3555
        %v4582 = vunpack.c.l.b16 %v3556
        %v4583 = vunpack.c.l.b16 %v3557
        %v4584 = vunpack.c.l.b16 %v3558
        %v4585 = vunpack.c.l.b16 %v3559
        %v4586 = vunpack.c.l.b16 %v3560
        %v4587 = vunpack.c.l.b16 %v3561
        %v4588 = vunpack.c.l.b16 %v3562
        %v4589 = vunpack.c.l.b16 %v3563
        %v4590 = vunpack.c.l.b16 %v3564
        %v4591 = vunpack.c.l.b16 %v3565
        %v4592 = vunpack.c.l.b16 %v3566
        %v4593 = vunpack.c.l.b16 %v3567
        %v4594 = vunpack.c.l.b16 %v3568
        %v4595 = vunpack.c.l.b16 %v3569
        %v4596 = vunpack.c.l.b16 %v3570
        %v4597 = vunpack.c.l.b16 %v3571
        %v4598 = vunpack.c.l.b16 %v3572
        %v4599 = vunpack.c.l.b16 %v3573
        %v4600 = vunpack.c.l.b16 %v3574
        %v4601 = vunpack.c.l.b16 %v3575
        %v4602 = vunpack.c.l.b16 %v3576
        %v4603 = vunpack.c.l.b16 %v3577
        %v4604 = vunpack.c.l.b16 %v3578
        %v4605 = vunpack.c.l.b16 %v3579
        %v4606 = vunpack.c.l.b16 %v3580
        %v4607 = vunpack.c.l.b16 %v3581
        %v4608 = vunpack.c.l.b16 %v3582
        %v4609 = vunpack.c.l.b16 %v3583
        %v4610 = vunpack.c.l.b16 %v3584
        %v4611 = vunpack.c.l.b16 %v3585
        %v4612 = vunpack.c.l.b16 %v3586
        %v4613 = vunpack.c.l.b16 %v3587
        %v4614 = vunpack.c.l.b16 %v3588
        %v4615 = vunpack.c.l.b16 %v3589
        %v4616 = vunpack.c.l.b16 %v3590
        %v4617 = vunpack.c.l.b16 %v3591
        %v4618 = vunpack.c.l.b16 %v3592
        %v4619 = vunpack.c.l.b16 %v3593
        %v4620 = vunpack.c.l.b16 %v3594
        %v4621 = vunpack.c.l.b16 %v3595
        %v4622 = vunpack.c.l.b16 %v3596
        %v4623 = vunpack.c.l.b16 %v3597
        %v4624 = vunpack.c.l.b16 %v3598
        %v4625 = vunpack.c.l.b16 %v3599
        %v4626 = vunpack.c.l.b16 %v3600
        %v4627 = vunpack.c.l.b16 %v3601
        %v4628 = vunpack.c.l.b16 %v3602
        %v4629 = vunpack.c.l.b16 %v3603
        %v4630 = vunpack.c.l.b16 %v3604
        %v4631 = vunpack.c.l.b16 %v3605
        %v4632 = vunpack.c.l.b16 %v3606
        %v4633 = vunpack.c.l.b16 %v3607
        %v4634 = vunpack.c.l.b16 %v3608
        %v4635 = vunpack.c.l.b16 %v3609
        %v4636 = vunpack.c.l.b16 %v3610
        %v4637 = vunpack.c.l.b16 %v3611
        %v4638 = vunpack.c.l.b16 %v3612
        %v4639 = vunpack.c.l.b16 %v3613
        %v4640 = vunpack.c.l.b16 %v3614
        %v4641 = vunpack.c.l.b16 %v3615
        %v4642 = vunpack.c.l.b16 %v3616
        %v4643 = vunpack.c.l.b16 %v3617
        %v4644 = vunpack.c.l.b16 %v3618
        %v4645 = vunpack.c.l.b16 %v3619
        %v4646 = vunpack.c.l.b16 %v3620
        %v4647 = vunpack.c.l.b16 %v3621
        %v4648 = vunpack.c.l.b16 %v3622
        %v4649 = vunpack.c.l.b16 %v3623
        %v4650 = vunpack.c.l.b16 %v3624
        %v4651 = vunpack.c.l.b16 %v3625
        %v4652 = vunpack.c.l.b16 %v3626
        %v4653 = vunpack.c.l.b16 %v3627
        %v4654 = vunpack.c.l.b16 %v3628
        %v4655 = vunpack.c.l.b16 %v3629
        %v4656 = vunpack.c.l.b16 %v3630
        %v4657 = vunpack.c.l.b16 %v3631
        %v4658 = vunpack.c.l.b16 %v3632
        %v4659 = vunpack.c.l.b16 %v3633
        %v4660 = vunpack.c.l.b16 %v3634
        %v4661 = vunpack.c.l.b16 %v3635
        %v4662 = vpack.c.b16 %v4519, %v4518
        %v4663 = vpack.c.b16 %v4521, %v4520
        %v4664 = vpack.c.b16 %v4523, %v4522
        %v4665 = vpack.c.b16 %v4525, %v4524
        %v4666 = vpack.c.b16 %v4527, %v4526
        %v4667 = vpack.c.b16 %v4529, %v4528
        %v4668 = vpack.c.b16 %v4531, %v4530
        %v4669 = vpack.c.b16 %v4533, %v4532
        %v4670 = vpack.c.b16 %v4535, %v4534
        %v4671 = vpack.c.b16 %v4537, %v4536
        %v4672 = vpack.c.b16 %v4539, %v4538
        %v4673 = vpack.c.b16 %v4541, %v4540
        %v4674 = vpack.c.b16 %v4543, %v4542
        %v4675 = vpack.c.b16 %v4545, %v4544
        %v4676 = vpack.c.b16 %v4547, %v4546
        %v4677 = vpack.c.b16 %v4549, %v4548
        %v4678 = vpack.c.b16 %v4551, %v4550
        %v4679 = vpack.c.b16 %v4553, %v4552
        %v4680 = vpack.c.b16 %v4555, %v4554
        %v4681 = vpack.c.b16 %v4557, %v4556
        %v4682 = vpack.c.b16 %v4559, %v4558
        %v4683 = vpack.c.b16 %v4561, %v4560
        %v4684 = vpack.c.b16 %v4563, %v4562
        %v4685 = vpack.c.b16 %v4565, %v4564
        %v4686 = vpack.c.b16 %v4567, %v4566
        %v4687 = vpack.c.b16 %v4569, %v4568
        %v4688 = vpack.c.b16 %v4571, %v4570
        %v4689 = vpack.c.b16 %v4573, %v4572
        %v4690 = vpack.c.b16 %v4575, %v4574
        %v4691 = vpack.c.b16 %v4577, %v4576
        %v4692 = vpack.c.b16 %v4579, %v4578
        %v4693 = vpack.c.b16 %v4581, %v4580
        %v4694 = vpack.c.b16 %v4583, %v4582
        %v4695 = vpack.c.b16 %v4585, %v4584
        %v4696 = vpack.c.b16 %v4587, %v4586
        %v4697 = vpack.c.b16 %v4589, %v4588
        %v4698 = vpack.c.b16 %v4591, %v4590
        %v4699 = vpack.c.b16 %v4593, %v4592
        %v4700 = vpack.c.b16 %v4595, %v4594
        %v4701 = vpack.c.b16 %v4597, %v4596
        %v4702 = vpack.c.b16 %v4599, %v4598
        %v4703 = vpack.c.b16 %v4601, %v4600
        %v4704 = vpack.c.b16 %v4603, %v4602
        %v4705 = vpack.c.b16 %v4605, %v4604
        %v4706 = vpack.c.b16 %v4607, %v4606
        %v4707 = vpack.c.b16 %v4609, %v4608
        %v4708 = vpack.c.b16 %v4611, %v4610
        %v4709 = vpack.c.b16 %v4613, %v4612
        %v4710 = vpack.c.b16 %v4615, %v4614
        %v4711 = vpack.c.b16 %v4617, %v4616
        %v4712 = vpack.c.b16 %v4619, %v4618
        %v4713 = vpack.c.b16 %v4621, %v4620
        %v4714 = vpack.c.b16 %v4623, %v4622
        %v4715 = vpack.c.b16 %v4625, %v4624
        %v4716 = vpack.c.b16 %v4627, %v4626
        %v4717 = vpack.c.b16 %v4629, %v4628
        %v4718 = vpack.c.b16 %v4631, %v4630
        %v4719 = vpack.c.b16 %v4633, %v4632
        %v4720 = vpack.c.b16 %v4635, %v4634
        %v4721 = vpack.c.b16 %v4637, %v4636
        %v4722 = vpack.c.b16 %v4639, %v4638
        %v4723 = vpack.c.b16 %v4641, %v4640
        %v4724 = vpack.c.b16 %v4643, %v4642
        %v4725 = vpack.c.b16 %v4645, %v4644
        %v4726 = vpack.c.b16 %v4647, %v4646
        %v4727 = vpack.c.b16 %v4649, %v4648
        %v4728 = vpack.c.b16 %v4651, %v4650
        %v4729 = vpack.c.b16 %v4653, %v4652
        %v4730 = vpack.c.b16 %v4655, %v4654
        %v4731 = vpack.c.b16 %v4657, %v4656
        %v4732 = vpack.c.b16 %v4659, %v4658
        %v4733 = vpack.c.b16 %v4661, %v4660
        %4806 = vmatpush.bf16.msra.mxu0 %v4669
        %4807 = vmatpush.bf16.msra.mxu0 %v4668
        %4808 = vmatpush.bf16.msra.mxu0 %v4667
        %4809 = vmatpush.bf16.msra.mxu0 %v4666
        %4810 = vmatpush.bf16.msra.mxu0 %v4665
        %4811 = vmatpush.bf16.msra.mxu0 %v4664
        %4812 = vmatpush.bf16.msra.mxu0 %v4663
        %4813 = vmatpush.bf16.msra.mxu0 %v4662
        %4814 = vmatmul.bf16.gmra.mxu0 %v4086
        %v4815 = vpop.f32.mrf.mxu0
        %v4816 = vadd.f32 %v3637, %v4815
        %v4817 = vpop.f32.mrf.mxu0
        %v4818 = vadd.f32 %v3637, %v4817
        %4819 = vmatmul.bf16.gmra.mxu0 %v4095
        %v4820 = vpop.f32.mrf.mxu0
        %v4821 = vadd.f32 %v3637, %v4820
        %v4822 = vpop.f32.mrf.mxu0
        %v4823 = vadd.f32 %v3637, %v4822
        %4824 = vmatmul.bf16.gmra.mxu0 %v4104
        %v4825 = vpop.f32.mrf.mxu0
        %v4826 = vadd.f32 %v3637, %v4825
        %v4827 = vpop.f32.mrf.mxu0
        %v4828 = vadd.f32 %v3637, %v4827
        %4829 = vmatmul.bf16.gmra.mxu0 %v4113
        %v4830 = vpop.f32.mrf.mxu0
        %v4831 = vadd.f32 %v3637, %v4830
        %v4832 = vpop.f32.mrf.mxu0
        %v4833 = vadd.f32 %v3637, %v4832
        %4834 = vmatmul.bf16.gmra.mxu0 %v4122
        %v4835 = vpop.f32.mrf.mxu0
        %v4836 = vadd.f32 %v3637, %v4835
        %v4837 = vpop.f32.mrf.mxu0
        %v4838 = vadd.f32 %v3637, %v4837
        %4839 = vmatmul.bf16.gmra.mxu0 %v4131
        %v4840 = vpop.f32.mrf.mxu0
        %v4841 = vadd.f32 %v3637, %v4840
        %v4842 = vpop.f32.mrf.mxu0
        %v4843 = vadd.f32 %v3637, %v4842
        %4844 = vmatmul.bf16.gmra.mxu0 %v4140
        %v4845 = vpop.f32.mrf.mxu0
        %v4846 = vadd.f32 %v3637, %v4845
        %v4847 = vpop.f32.mrf.mxu0
        %v4848 = vadd.f32 %v3637, %v4847
        %4849 = vmatmul.bf16.gmra.mxu0 %v4149
        %v4850 = vpop.f32.mrf.mxu0
        %v4851 = vadd.f32 %v3637, %v4850
        %v4852 = vpop.f32.mrf.mxu0
        %v4853 = vadd.f32 %v3637, %v4852
        %4854 = vmatmul.bf16.gmra.mxu0 %v4158
        %v4855 = vpop.f32.mrf.mxu0
        %v4856 = vadd.f32 %v3637, %v4855
        %v4857 = vpop.f32.mrf.mxu0
        %v4858 = vadd.f32 %v3637, %v4857
        %4859 = vmatmul.bf16.gmra.mxu0 %v4167
        %v4860 = vpop.f32.mrf.mxu0
        %v4861 = vadd.f32 %v3637, %v4860
        %v4862 = vpop.f32.mrf.mxu0
        %v4863 = vadd.f32 %v3637, %v4862
        %4864 = vmatmul.bf16.gmra.mxu0 %v4176
        %v4865 = vpop.f32.mrf.mxu0
        %v4866 = vadd.f32 %v3637, %v4865
        %v4867 = vpop.f32.mrf.mxu0
        %v4868 = vadd.f32 %v3637, %v4867
        %4869 = vmatmul.bf16.gmra.mxu0 %v4185
        %v4870 = vpop.f32.mrf.mxu0
        %v4871 = vadd.f32 %v3637, %v4870
        %v4872 = vpop.f32.mrf.mxu0
        %v4873 = vadd.f32 %v3637, %v4872
        %4874 = vmatmul.bf16.gmra.mxu0 %v4194
        %v4875 = vpop.f32.mrf.mxu0
        %v4876 = vadd.f32 %v3637, %v4875
        %v4877 = vpop.f32.mrf.mxu0
        %v4878 = vadd.f32 %v3637, %v4877
        %4879 = vmatmul.bf16.gmra.mxu0 %v4203
        %v4880 = vpop.f32.mrf.mxu0
        %v4881 = vadd.f32 %v3637, %v4880
        %v4882 = vpop.f32.mrf.mxu0
        %v4883 = vadd.f32 %v3637, %v4882
        %4884 = vmatmul.bf16.gmra.mxu0 %v4212
        %v4885 = vpop.f32.mrf.mxu0
        %v4886 = vadd.f32 %v3637, %v4885
        %v4887 = vpop.f32.mrf.mxu0
        %v4888 = vadd.f32 %v3637, %v4887
        %4889 = vmatmul.bf16.gmra.mxu0 %v4221
        %v4890 = vpop.f32.mrf.mxu0
        %v4891 = vadd.f32 %v3637, %v4890
        %v4892 = vpop.f32.mrf.mxu0
        %v4893 = vadd.f32 %v3637, %v4892
        %4894 = vdwg.mxu0
        %4895 = vmatpush.bf16.msra.mxu0 %v4677
        %4896 = vmatpush.bf16.msra.mxu0 %v4676
        %4897 = vmatpush.bf16.msra.mxu0 %v4675
        %4898 = vmatpush.bf16.msra.mxu0 %v4674
        %4899 = vmatpush.bf16.msra.mxu0 %v4673
        %4900 = vmatpush.bf16.msra.mxu0 %v4672
        %4901 = vmatpush.bf16.msra.mxu0 %v4671
        %4902 = vmatpush.bf16.msra.mxu0 %v4670
        %4903 = vmatmul.bf16.gmra.mxu0 %v4087
        %v4904 = vpop.f32.mrf.mxu0
        %v4905 = vadd.f32 %v4816, %v4904
        %v4906 = vpop.f32.mrf.mxu0
        %v4907 = vadd.f32 %v4818, %v4906
        %4908 = vmatmul.bf16.gmra.mxu0 %v4096
        %v4909 = vpop.f32.mrf.mxu0
        %v4910 = vadd.f32 %v4821, %v4909
        %v4911 = vpop.f32.mrf.mxu0
        %v4912 = vadd.f32 %v4823, %v4911
        %4913 = vmatmul.bf16.gmra.mxu0 %v4105
        %v4914 = vpop.f32.mrf.mxu0
        %v4915 = vadd.f32 %v4826, %v4914
        %v4916 = vpop.f32.mrf.mxu0
        %v4917 = vadd.f32 %v4828, %v4916
        %4918 = vmatmul.bf16.gmra.mxu0 %v4114
        %v4919 = vpop.f32.mrf.mxu0
        %v4920 = vadd.f32 %v4831, %v4919
        %v4921 = vpop.f32.mrf.mxu0
        %v4922 = vadd.f32 %v4833, %v4921
        %4923 = vmatmul.bf16.gmra.mxu0 %v4123
        %v4924 = vpop.f32.mrf.mxu0
        %v4925 = vadd.f32 %v4836, %v4924
        %v4926 = vpop.f32.mrf.mxu0
        %v4927 = vadd.f32 %v4838, %v4926
        %4928 = vmatmul.bf16.gmra.mxu0 %v4132
        %v4929 = vpop.f32.mrf.mxu0
        %v4930 = vadd.f32 %v4841, %v4929
        %v4931 = vpop.f32.mrf.mxu0
        %v4932 = vadd.f32 %v4843, %v4931
        %4933 = vmatmul.bf16.gmra.mxu0 %v4141
        %v4934 = vpop.f32.mrf.mxu0
        %v4935 = vadd.f32 %v4846, %v4934
        %v4936 = vpop.f32.mrf.mxu0
        %v4937 = vadd.f32 %v4848, %v4936
        %4938 = vmatmul.bf16.gmra.mxu0 %v4150
        %v4939 = vpop.f32.mrf.mxu0
        %v4940 = vadd.f32 %v4851, %v4939
        %v4941 = vpop.f32.mrf.mxu0
        %v4942 = vadd.f32 %v4853, %v4941
        %4943 = vmatmul.bf16.gmra.mxu0 %v4159
        %v4944 = vpop.f32.mrf.mxu0
        %v4945 = vadd.f32 %v4856, %v4944
        %v4946 = vpop.f32.mrf.mxu0
        %v4947 = vadd.f32 %v4858, %v4946
        %4948 = vmatmul.bf16.gmra.mxu0 %v4168
        %v4949 = vpop.f32.mrf.mxu0
        %v4950 = vadd.f32 %v4861, %v4949
        %v4951 = vpop.f32.mrf.mxu0
        %v4952 = vadd.f32 %v4863, %v4951
        %4953 = vmatmul.bf16.gmra.mxu0 %v4177
        %v4954 = vpop.f32.mrf.mxu0
        %v4955 = vadd.f32 %v4866, %v4954
        %v4956 = vpop.f32.mrf.mxu0
        %v4957 = vadd.f32 %v4868, %v4956
        %4958 = vmatmul.bf16.gmra.mxu0 %v4186
        %v4959 = vpop.f32.mrf.mxu0
        %v4960 = vadd.f32 %v4871, %v4959
        %v4961 = vpop.f32.mrf.mxu0
        %v4962 = vadd.f32 %v4873, %v4961
        %4963 = vmatmul.bf16.gmra.mxu0 %v4195
        %v4964 = vpop.f32.mrf.mxu0
        %v4965 = vadd.f32 %v4876, %v4964
        %v4966 = vpop.f32.mrf.mxu0
        %v4967 = vadd.f32 %v4878, %v4966
        %4968 = vmatmul.bf16.gmra.mxu0 %v4204
        %v4969 = vpop.f32.mrf.mxu0
        %v4970 = vadd.f32 %v4881, %v4969
        %v4971 = vpop.f32.mrf.mxu0
        %v4972 = vadd.f32 %v4883, %v4971
        %4973 = vmatmul.bf16.gmra.mxu0 %v4213
        %v4974 = vpop.f32.mrf.mxu0
        %v4975 = vadd.f32 %v4886, %v4974
        %v4976 = vpop.f32.mrf.mxu0
        %v4977 = vadd.f32 %v4888, %v4976
        %4978 = vmatmul.bf16.gmra.mxu0 %v4222
        %v4979 = vpop.f32.mrf.mxu0
        %v4980 = vadd.f32 %v4891, %v4979
        %v4981 = vpop.f32.mrf.mxu0
        %v4982 = vadd.f32 %v4893, %v4981
        %4983 = vdwg.mxu0
        %4984 = vmatpush.bf16.msra.mxu0 %v4685
        %4985 = vmatpush.bf16.msra.mxu0 %v4684
        %4986 = vmatpush.bf16.msra.mxu0 %v4683
        %4987 = vmatpush.bf16.msra.mxu0 %v4682
        %4988 = vmatpush.bf16.msra.mxu0 %v4681
        %4989 = vmatpush.bf16.msra.mxu0 %v4680
        %4990 = vmatpush.bf16.msra.mxu0 %v4679
        %4991 = vmatpush.bf16.msra.mxu0 %v4678
        %4992 = vmatmul.bf16.gmra.mxu0 %v4088
        %v4993 = vpop.f32.mrf.mxu0
        %v4994 = vadd.f32 %v4905, %v4993
        %v4995 = vpop.f32.mrf.mxu0
        %v4996 = vadd.f32 %v4907, %v4995
        %4997 = vmatmul.bf16.gmra.mxu0 %v4097
        %v4998 = vpop.f32.mrf.mxu0
        %v4999 = vadd.f32 %v4910, %v4998
        %v5000 = vpop.f32.mrf.mxu0
        %v5001 = vadd.f32 %v4912, %v5000
        %5002 = vmatmul.bf16.gmra.mxu0 %v4106
        %v5003 = vpop.f32.mrf.mxu0
        %v5004 = vadd.f32 %v4915, %v5003
        %v5005 = vpop.f32.mrf.mxu0
        %v5006 = vadd.f32 %v4917, %v5005
        %5007 = vmatmul.bf16.gmra.mxu0 %v4115
        %v5008 = vpop.f32.mrf.mxu0
        %v5009 = vadd.f32 %v4920, %v5008
        %v5010 = vpop.f32.mrf.mxu0
        %v5011 = vadd.f32 %v4922, %v5010
        %5012 = vmatmul.bf16.gmra.mxu0 %v4124
        %v5013 = vpop.f32.mrf.mxu0
        %v5014 = vadd.f32 %v4925, %v5013
        %v5015 = vpop.f32.mrf.mxu0
        %v5016 = vadd.f32 %v4927, %v5015
        %5017 = vmatmul.bf16.gmra.mxu0 %v4133
        %v5018 = vpop.f32.mrf.mxu0
        %v5019 = vadd.f32 %v4930, %v5018
        %v5020 = vpop.f32.mrf.mxu0
        %v5021 = vadd.f32 %v4932, %v5020
        %5022 = vmatmul.bf16.gmra.mxu0 %v4142
        %v5023 = vpop.f32.mrf.mxu0
        %v5024 = vadd.f32 %v4935, %v5023
        %v5025 = vpop.f32.mrf.mxu0
        %v5026 = vadd.f32 %v4937, %v5025
        %5027 = vmatmul.bf16.gmra.mxu0 %v4151
        %v5028 = vpop.f32.mrf.mxu0
        %v5029 = vadd.f32 %v4940, %v5028
        %v5030 = vpop.f32.mrf.mxu0
        %v5031 = vadd.f32 %v4942, %v5030
        %5032 = vmatmul.bf16.gmra.mxu0 %v4160
        %v5033 = vpop.f32.mrf.mxu0
        %v5034 = vadd.f32 %v4945, %v5033
        %v5035 = vpop.f32.mrf.mxu0
        %v5036 = vadd.f32 %v4947, %v5035
        %5037 = vmatmul.bf16.gmra.mxu0 %v4169
        %v5038 = vpop.f32.mrf.mxu0
        %v5039 = vadd.f32 %v4950, %v5038
        %v5040 = vpop.f32.mrf.mxu0
        %v5041 = vadd.f32 %v4952, %v5040
        %5042 = vmatmul.bf16.gmra.mxu0 %v4178
        %v5043 = vpop.f32.mrf.mxu0
        %v5044 = vadd.f32 %v4955, %v5043
        %v5045 = vpop.f32.mrf.mxu0
        %v5046 = vadd.f32 %v4957, %v5045
        %5047 = vmatmul.bf16.gmra.mxu0 %v4187
        %v5048 = vpop.f32.mrf.mxu0
        %v5049 = vadd.f32 %v4960, %v5048
        %v5050 = vpop.f32.mrf.mxu0
        %v5051 = vadd.f32 %v4962, %v5050
        %5052 = vmatmul.bf16.gmra.mxu0 %v4196
        %v5053 = vpop.f32.mrf.mxu0
        %v5054 = vadd.f32 %v4965, %v5053
        %v5055 = vpop.f32.mrf.mxu0
        %v5056 = vadd.f32 %v4967, %v5055
        %5057 = vmatmul.bf16.gmra.mxu0 %v4205
        %v5058 = vpop.f32.mrf.mxu0
        %v5059 = vadd.f32 %v4970, %v5058
        %v5060 = vpop.f32.mrf.mxu0
        %v5061 = vadd.f32 %v4972, %v5060
        %5062 = vmatmul.bf16.gmra.mxu0 %v4214
        %v5063 = vpop.f32.mrf.mxu0
        %v5064 = vadd.f32 %v4975, %v5063
        %v5065 = vpop.f32.mrf.mxu0
        %v5066 = vadd.f32 %v4977, %v5065
        %5067 = vmatmul.bf16.gmra.mxu0 %v4223
        %v5068 = vpop.f32.mrf.mxu0
        %v5069 = vadd.f32 %v4980, %v5068
        %v5070 = vpop.f32.mrf.mxu0
        %v5071 = vadd.f32 %v4982, %v5070
        %5072 = vdwg.mxu0
        %5073 = vmatpush.bf16.msra.mxu0 %v4693
        %5074 = vmatpush.bf16.msra.mxu0 %v4692
        %5075 = vmatpush.bf16.msra.mxu0 %v4691
        %5076 = vmatpush.bf16.msra.mxu0 %v4690
        %5077 = vmatpush.bf16.msra.mxu0 %v4689
        %5078 = vmatpush.bf16.msra.mxu0 %v4688
        %5079 = vmatpush.bf16.msra.mxu0 %v4687
        %5080 = vmatpush.bf16.msra.mxu0 %v4686
        %5081 = vmatmul.bf16.gmra.mxu0 %v4089
        %v5082 = vpop.f32.mrf.mxu0
        %v5083 = vadd.f32 %v4994, %v5082
        %v5084 = vpop.f32.mrf.mxu0
        %v5085 = vadd.f32 %v4996, %v5084
        %5086 = vmatmul.bf16.gmra.mxu0 %v4098
        %v5087 = vpop.f32.mrf.mxu0
        %v5088 = vadd.f32 %v4999, %v5087
        %v5089 = vpop.f32.mrf.mxu0
        %v5090 = vadd.f32 %v5001, %v5089
        %5091 = vmatmul.bf16.gmra.mxu0 %v4107
        %v5092 = vpop.f32.mrf.mxu0
        %v5093 = vadd.f32 %v5004, %v5092
        %v5094 = vpop.f32.mrf.mxu0
        %v5095 = vadd.f32 %v5006, %v5094
        %5096 = vmatmul.bf16.gmra.mxu0 %v4116
        %v5097 = vpop.f32.mrf.mxu0
        %v5098 = vadd.f32 %v5009, %v5097
        %v5099 = vpop.f32.mrf.mxu0
        %v5100 = vadd.f32 %v5011, %v5099
        %5101 = vmatmul.bf16.gmra.mxu0 %v4125
        %v5102 = vpop.f32.mrf.mxu0
        %v5103 = vadd.f32 %v5014, %v5102
        %v5104 = vpop.f32.mrf.mxu0
        %v5105 = vadd.f32 %v5016, %v5104
        %5106 = vmatmul.bf16.gmra.mxu0 %v4134
        %v5107 = vpop.f32.mrf.mxu0
        %v5108 = vadd.f32 %v5019, %v5107
        %v5109 = vpop.f32.mrf.mxu0
        %v5110 = vadd.f32 %v5021, %v5109
        %5111 = vmatmul.bf16.gmra.mxu0 %v4143
        %v5112 = vpop.f32.mrf.mxu0
        %v5113 = vadd.f32 %v5024, %v5112
        %v5114 = vpop.f32.mrf.mxu0
        %v5115 = vadd.f32 %v5026, %v5114
        %5116 = vmatmul.bf16.gmra.mxu0 %v4152
        %v5117 = vpop.f32.mrf.mxu0
        %v5118 = vadd.f32 %v5029, %v5117
        %v5119 = vpop.f32.mrf.mxu0
        %v5120 = vadd.f32 %v5031, %v5119
        %5121 = vmatmul.bf16.gmra.mxu0 %v4161
        %v5122 = vpop.f32.mrf.mxu0
        %v5123 = vadd.f32 %v5034, %v5122
        %v5124 = vpop.f32.mrf.mxu0
        %v5125 = vadd.f32 %v5036, %v5124
        %5126 = vmatmul.bf16.gmra.mxu0 %v4170
        %v5127 = vpop.f32.mrf.mxu0
        %v5128 = vadd.f32 %v5039, %v5127
        %v5129 = vpop.f32.mrf.mxu0
        %v5130 = vadd.f32 %v5041, %v5129
        %5131 = vmatmul.bf16.gmra.mxu0 %v4179
        %v5132 = vpop.f32.mrf.mxu0
        %v5133 = vadd.f32 %v5044, %v5132
        %v5134 = vpop.f32.mrf.mxu0
        %v5135 = vadd.f32 %v5046, %v5134
        %5136 = vmatmul.bf16.gmra.mxu0 %v4188
        %v5137 = vpop.f32.mrf.mxu0
        %v5138 = vadd.f32 %v5049, %v5137
        %v5139 = vpop.f32.mrf.mxu0
        %v5140 = vadd.f32 %v5051, %v5139
        %5141 = vmatmul.bf16.gmra.mxu0 %v4197
        %v5142 = vpop.f32.mrf.mxu0
        %v5143 = vadd.f32 %v5054, %v5142
        %v5144 = vpop.f32.mrf.mxu0
        %v5145 = vadd.f32 %v5056, %v5144
        %5146 = vmatmul.bf16.gmra.mxu0 %v4206
        %v5147 = vpop.f32.mrf.mxu0
        %v5148 = vadd.f32 %v5059, %v5147
        %v5149 = vpop.f32.mrf.mxu0
        %v5150 = vadd.f32 %v5061, %v5149
        %5151 = vmatmul.bf16.gmra.mxu0 %v4215
        %v5152 = vpop.f32.mrf.mxu0
        %v5153 = vadd.f32 %v5064, %v5152
        %v5154 = vpop.f32.mrf.mxu0
        %v5155 = vadd.f32 %v5066, %v5154
        %5156 = vmatmul.bf16.gmra.mxu0 %v4224
        %v5157 = vpop.f32.mrf.mxu0
        %v5158 = vadd.f32 %v5069, %v5157
        %v5159 = vpop.f32.mrf.mxu0
        %v5160 = vadd.f32 %v5071, %v5159
        %5161 = vdwg.mxu0
        %5162 = vmatpush.bf16.msra.mxu0 %v4701
        %5163 = vmatpush.bf16.msra.mxu0 %v4700
        %5164 = vmatpush.bf16.msra.mxu0 %v4699
        %5165 = vmatpush.bf16.msra.mxu0 %v4698
        %5166 = vmatpush.bf16.msra.mxu0 %v4697
        %5167 = vmatpush.bf16.msra.mxu0 %v4696
        %5168 = vmatpush.bf16.msra.mxu0 %v4695
        %5169 = vmatpush.bf16.msra.mxu0 %v4694
        %5170 = vmatmul.bf16.gmra.mxu0 %v4090
        %v5171 = vpop.f32.mrf.mxu0
        %v5172 = vadd.f32 %v5083, %v5171
        %v5173 = vpop.f32.mrf.mxu0
        %v5174 = vadd.f32 %v5085, %v5173
        %5175 = vmatmul.bf16.gmra.mxu0 %v4099
        %v5176 = vpop.f32.mrf.mxu0
        %v5177 = vadd.f32 %v5088, %v5176
        %v5178 = vpop.f32.mrf.mxu0
        %v5179 = vadd.f32 %v5090, %v5178
        %5180 = vmatmul.bf16.gmra.mxu0 %v4108
        %v5181 = vpop.f32.mrf.mxu0
        %v5182 = vadd.f32 %v5093, %v5181
        %v5183 = vpop.f32.mrf.mxu0
        %v5184 = vadd.f32 %v5095, %v5183
        %5185 = vmatmul.bf16.gmra.mxu0 %v4117
        %v5186 = vpop.f32.mrf.mxu0
        %v5187 = vadd.f32 %v5098, %v5186
        %v5188 = vpop.f32.mrf.mxu0
        %v5189 = vadd.f32 %v5100, %v5188
        %5190 = vmatmul.bf16.gmra.mxu0 %v4126
        %v5191 = vpop.f32.mrf.mxu0
        %v5192 = vadd.f32 %v5103, %v5191
        %v5193 = vpop.f32.mrf.mxu0
        %v5194 = vadd.f32 %v5105, %v5193
        %5195 = vmatmul.bf16.gmra.mxu0 %v4135
        %v5196 = vpop.f32.mrf.mxu0
        %v5197 = vadd.f32 %v5108, %v5196
        %v5198 = vpop.f32.mrf.mxu0
        %v5199 = vadd.f32 %v5110, %v5198
        %5200 = vmatmul.bf16.gmra.mxu0 %v4144
        %v5201 = vpop.f32.mrf.mxu0
        %v5202 = vadd.f32 %v5113, %v5201
        %v5203 = vpop.f32.mrf.mxu0
        %v5204 = vadd.f32 %v5115, %v5203
        %5205 = vmatmul.bf16.gmra.mxu0 %v4153
        %v5206 = vpop.f32.mrf.mxu0
        %v5207 = vadd.f32 %v5118, %v5206
        %v5208 = vpop.f32.mrf.mxu0
        %v5209 = vadd.f32 %v5120, %v5208
        %5210 = vmatmul.bf16.gmra.mxu0 %v4162
        %v5211 = vpop.f32.mrf.mxu0
        %v5212 = vadd.f32 %v5123, %v5211
        %v5213 = vpop.f32.mrf.mxu0
        %v5214 = vadd.f32 %v5125, %v5213
        %5215 = vmatmul.bf16.gmra.mxu0 %v4171
        %v5216 = vpop.f32.mrf.mxu0
        %v5217 = vadd.f32 %v5128, %v5216
        %v5218 = vpop.f32.mrf.mxu0
        %v5219 = vadd.f32 %v5130, %v5218
        %5220 = vmatmul.bf16.gmra.mxu0 %v4180
        %v5221 = vpop.f32.mrf.mxu0
        %v5222 = vadd.f32 %v5133, %v5221
        %v5223 = vpop.f32.mrf.mxu0
        %v5224 = vadd.f32 %v5135, %v5223
        %5225 = vmatmul.bf16.gmra.mxu0 %v4189
        %v5226 = vpop.f32.mrf.mxu0
        %v5227 = vadd.f32 %v5138, %v5226
        %v5228 = vpop.f32.mrf.mxu0
        %v5229 = vadd.f32 %v5140, %v5228
        %5230 = vmatmul.bf16.gmra.mxu0 %v4198
        %v5231 = vpop.f32.mrf.mxu0
        %v5232 = vadd.f32 %v5143, %v5231
        %v5233 = vpop.f32.mrf.mxu0
        %v5234 = vadd.f32 %v5145, %v5233
        %5235 = vmatmul.bf16.gmra.mxu0 %v4207
        %v5236 = vpop.f32.mrf.mxu0
        %v5237 = vadd.f32 %v5148, %v5236
        %v5238 = vpop.f32.mrf.mxu0
        %v5239 = vadd.f32 %v5150, %v5238
        %5240 = vmatmul.bf16.gmra.mxu0 %v4216
        %v5241 = vpop.f32.mrf.mxu0
        %v5242 = vadd.f32 %v5153, %v5241
        %v5243 = vpop.f32.mrf.mxu0
        %v5244 = vadd.f32 %v5155, %v5243
        %5245 = vmatmul.bf16.gmra.mxu0 %v4225
        %v5246 = vpop.f32.mrf.mxu0
        %v5247 = vadd.f32 %v5158, %v5246
        %v5248 = vpop.f32.mrf.mxu0
        %v5249 = vadd.f32 %v5160, %v5248
        %5250 = vdwg.mxu0
        %5251 = vmatpush.bf16.msra.mxu0 %v4709
        %5252 = vmatpush.bf16.msra.mxu0 %v4708
        %5253 = vmatpush.bf16.msra.mxu0 %v4707
        %5254 = vmatpush.bf16.msra.mxu0 %v4706
        %5255 = vmatpush.bf16.msra.mxu0 %v4705
        %5256 = vmatpush.bf16.msra.mxu0 %v4704
        %5257 = vmatpush.bf16.msra.mxu0 %v4703
        %5258 = vmatpush.bf16.msra.mxu0 %v4702
        %5259 = vmatmul.bf16.gmra.mxu0 %v4091
        %v5260 = vpop.f32.mrf.mxu0
        %v5261 = vadd.f32 %v5172, %v5260
        %v5262 = vpop.f32.mrf.mxu0
        %v5263 = vadd.f32 %v5174, %v5262
        %5264 = vmatmul.bf16.gmra.mxu0 %v4100
        %v5265 = vpop.f32.mrf.mxu0
        %v5266 = vadd.f32 %v5177, %v5265
        %v5267 = vpop.f32.mrf.mxu0
        %v5268 = vadd.f32 %v5179, %v5267
        %5269 = vmatmul.bf16.gmra.mxu0 %v4109
        %v5270 = vpop.f32.mrf.mxu0
        %v5271 = vadd.f32 %v5182, %v5270
        %v5272 = vpop.f32.mrf.mxu0
        %v5273 = vadd.f32 %v5184, %v5272
        %5274 = vmatmul.bf16.gmra.mxu0 %v4118
        %v5275 = vpop.f32.mrf.mxu0
        %v5276 = vadd.f32 %v5187, %v5275
        %v5277 = vpop.f32.mrf.mxu0
        %v5278 = vadd.f32 %v5189, %v5277
        %5279 = vmatmul.bf16.gmra.mxu0 %v4127
        %v5280 = vpop.f32.mrf.mxu0
        %v5281 = vadd.f32 %v5192, %v5280
        %v5282 = vpop.f32.mrf.mxu0
        %v5283 = vadd.f32 %v5194, %v5282
        %5284 = vmatmul.bf16.gmra.mxu0 %v4136
        %v5285 = vpop.f32.mrf.mxu0
        %v5286 = vadd.f32 %v5197, %v5285
        %v5287 = vpop.f32.mrf.mxu0
        %v5288 = vadd.f32 %v5199, %v5287
        %5289 = vmatmul.bf16.gmra.mxu0 %v4145
        %v5290 = vpop.f32.mrf.mxu0
        %v5291 = vadd.f32 %v5202, %v5290
        %v5292 = vpop.f32.mrf.mxu0
        %v5293 = vadd.f32 %v5204, %v5292
        %5294 = vmatmul.bf16.gmra.mxu0 %v4154
        %v5295 = vpop.f32.mrf.mxu0
        %v5296 = vadd.f32 %v5207, %v5295
        %v5297 = vpop.f32.mrf.mxu0
        %v5298 = vadd.f32 %v5209, %v5297
        %5299 = vmatmul.bf16.gmra.mxu0 %v4163
        %v5300 = vpop.f32.mrf.mxu0
        %v5301 = vadd.f32 %v5212, %v5300
        %v5302 = vpop.f32.mrf.mxu0
        %v5303 = vadd.f32 %v5214, %v5302
        %5304 = vmatmul.bf16.gmra.mxu0 %v4172
        %v5305 = vpop.f32.mrf.mxu0
        %v5306 = vadd.f32 %v5217, %v5305
        %v5307 = vpop.f32.mrf.mxu0
        %v5308 = vadd.f32 %v5219, %v5307
        %5309 = vmatmul.bf16.gmra.mxu0 %v4181
        %v5310 = vpop.f32.mrf.mxu0
        %v5311 = vadd.f32 %v5222, %v5310
        %v5312 = vpop.f32.mrf.mxu0
        %v5313 = vadd.f32 %v5224, %v5312
        %5314 = vmatmul.bf16.gmra.mxu0 %v4190
        %v5315 = vpop.f32.mrf.mxu0
        %v5316 = vadd.f32 %v5227, %v5315
        %v5317 = vpop.f32.mrf.mxu0
        %v5318 = vadd.f32 %v5229, %v5317
        %5319 = vmatmul.bf16.gmra.mxu0 %v4199
        %v5320 = vpop.f32.mrf.mxu0
        %v5321 = vadd.f32 %v5232, %v5320
        %v5322 = vpop.f32.mrf.mxu0
        %v5323 = vadd.f32 %v5234, %v5322
        %5324 = vmatmul.bf16.gmra.mxu0 %v4208
        %v5325 = vpop.f32.mrf.mxu0
        %v5326 = vadd.f32 %v5237, %v5325
        %v5327 = vpop.f32.mrf.mxu0
        %v5328 = vadd.f32 %v5239, %v5327
        %5329 = vmatmul.bf16.gmra.mxu0 %v4217
        %v5330 = vpop.f32.mrf.mxu0
        %v5331 = vadd.f32 %v5242, %v5330
        %v5332 = vpop.f32.mrf.mxu0
        %v5333 = vadd.f32 %v5244, %v5332
        %5334 = vmatmul.bf16.gmra.mxu0 %v4226
        %v5335 = vpop.f32.mrf.mxu0
        %v5336 = vadd.f32 %v5247, %v5335
        %v5337 = vpop.f32.mrf.mxu0
        %v5338 = vadd.f32 %v5249, %v5337
        %5339 = vdwg.mxu0
        %5340 = vmatpush.bf16.msra.mxu0 %v4717
        %5341 = vmatpush.bf16.msra.mxu0 %v4716
        %5342 = vmatpush.bf16.msra.mxu0 %v4715
        %5343 = vmatpush.bf16.msra.mxu0 %v4714
        %5344 = vmatpush.bf16.msra.mxu0 %v4713
        %5345 = vmatpush.bf16.msra.mxu0 %v4712
        %5346 = vmatpush.bf16.msra.mxu0 %v4711
        %5347 = vmatpush.bf16.msra.mxu0 %v4710
        %5348 = vmatmul.bf16.gmra.mxu0 %v4092
        %v5349 = vpop.f32.mrf.mxu0
        %v5350 = vadd.f32 %v5261, %v5349
        %v5351 = vpop.f32.mrf.mxu0
        %v5352 = vadd.f32 %v5263, %v5351
        %5353 = vmatmul.bf16.gmra.mxu0 %v4101
        %v5354 = vpop.f32.mrf.mxu0
        %v5355 = vadd.f32 %v5266, %v5354
        %v5356 = vpop.f32.mrf.mxu0
        %v5357 = vadd.f32 %v5268, %v5356
        %5358 = vmatmul.bf16.gmra.mxu0 %v4110
        %v5359 = vpop.f32.mrf.mxu0
        %v5360 = vadd.f32 %v5271, %v5359
        %v5361 = vpop.f32.mrf.mxu0
        %v5362 = vadd.f32 %v5273, %v5361
        %5363 = vmatmul.bf16.gmra.mxu0 %v4119
        %v5364 = vpop.f32.mrf.mxu0
        %v5365 = vadd.f32 %v5276, %v5364
        %v5366 = vpop.f32.mrf.mxu0
        %v5367 = vadd.f32 %v5278, %v5366
        %5368 = vmatmul.bf16.gmra.mxu0 %v4128
        %v5369 = vpop.f32.mrf.mxu0
        %v5370 = vadd.f32 %v5281, %v5369
        %v5371 = vpop.f32.mrf.mxu0
        %v5372 = vadd.f32 %v5283, %v5371
        %5373 = vmatmul.bf16.gmra.mxu0 %v4137
        %v5374 = vpop.f32.mrf.mxu0
        %v5375 = vadd.f32 %v5286, %v5374
        %v5376 = vpop.f32.mrf.mxu0
        %v5377 = vadd.f32 %v5288, %v5376
        %5378 = vmatmul.bf16.gmra.mxu0 %v4146
        %v5379 = vpop.f32.mrf.mxu0
        %v5380 = vadd.f32 %v5291, %v5379
        %v5381 = vpop.f32.mrf.mxu0
        %v5382 = vadd.f32 %v5293, %v5381
        %5383 = vmatmul.bf16.gmra.mxu0 %v4155
        %v5384 = vpop.f32.mrf.mxu0
        %v5385 = vadd.f32 %v5296, %v5384
        %v5386 = vpop.f32.mrf.mxu0
        %v5387 = vadd.f32 %v5298, %v5386
        %5388 = vmatmul.bf16.gmra.mxu0 %v4164
        %v5389 = vpop.f32.mrf.mxu0
        %v5390 = vadd.f32 %v5301, %v5389
        %v5391 = vpop.f32.mrf.mxu0
        %v5392 = vadd.f32 %v5303, %v5391
        %5393 = vmatmul.bf16.gmra.mxu0 %v4173
        %v5394 = vpop.f32.mrf.mxu0
        %v5395 = vadd.f32 %v5306, %v5394
        %v5396 = vpop.f32.mrf.mxu0
        %v5397 = vadd.f32 %v5308, %v5396
        %5398 = vmatmul.bf16.gmra.mxu0 %v4182
        %v5399 = vpop.f32.mrf.mxu0
        %v5400 = vadd.f32 %v5311, %v5399
        %v5401 = vpop.f32.mrf.mxu0
        %v5402 = vadd.f32 %v5313, %v5401
        %5403 = vmatmul.bf16.gmra.mxu0 %v4191
        %v5404 = vpop.f32.mrf.mxu0
        %v5405 = vadd.f32 %v5316, %v5404
        %v5406 = vpop.f32.mrf.mxu0
        %v5407 = vadd.f32 %v5318, %v5406
        %5408 = vmatmul.bf16.gmra.mxu0 %v4200
        %v5409 = vpop.f32.mrf.mxu0
        %v5410 = vadd.f32 %v5321, %v5409
        %v5411 = vpop.f32.mrf.mxu0
        %v5412 = vadd.f32 %v5323, %v5411
        %5413 = vmatmul.bf16.gmra.mxu0 %v4209
        %v5414 = vpop.f32.mrf.mxu0
        %v5415 = vadd.f32 %v5326, %v5414
        %v5416 = vpop.f32.mrf.mxu0
        %v5417 = vadd.f32 %v5328, %v5416
        %5418 = vmatmul.bf16.gmra.mxu0 %v4218
        %v5419 = vpop.f32.mrf.mxu0
        %v5420 = vadd.f32 %v5331, %v5419
        %v5421 = vpop.f32.mrf.mxu0
        %v5422 = vadd.f32 %v5333, %v5421
        %5423 = vmatmul.bf16.gmra.mxu0 %v4227
        %v5424 = vpop.f32.mrf.mxu0
        %v5425 = vadd.f32 %v5336, %v5424
        %v5426 = vpop.f32.mrf.mxu0
        %v5427 = vadd.f32 %v5338, %v5426
        %5428 = vdwg.mxu0
        %5429 = vmatpush.bf16.msra.mxu0 %v4725
        %5430 = vmatpush.bf16.msra.mxu0 %v4724
        %5431 = vmatpush.bf16.msra.mxu0 %v4723
        %5432 = vmatpush.bf16.msra.mxu0 %v4722
        %5433 = vmatpush.bf16.msra.mxu0 %v4721
        %5434 = vmatpush.bf16.msra.mxu0 %v4720
        %5435 = vmatpush.bf16.msra.mxu0 %v4719
        %5436 = vmatpush.bf16.msra.mxu0 %v4718
        %5437 = vmatmul.bf16.gmra.mxu0 %v4093
        %v5438 = vpop.f32.mrf.mxu0
        %v5439 = vadd.f32 %v5350, %v5438
        %v5440 = vpop.f32.mrf.mxu0
        %v5441 = vadd.f32 %v5352, %v5440
        %5442 = vmatmul.bf16.gmra.mxu0 %v4102
        %v5443 = vpop.f32.mrf.mxu0
        %v5444 = vadd.f32 %v5355, %v5443
        %v5445 = vpop.f32.mrf.mxu0
        %v5446 = vadd.f32 %v5357, %v5445
        %5447 = vmatmul.bf16.gmra.mxu0 %v4111
        %v5448 = vpop.f32.mrf.mxu0
        %v5449 = vadd.f32 %v5360, %v5448
        %v5450 = vpop.f32.mrf.mxu0
        %v5451 = vadd.f32 %v5362, %v5450
        %5452 = vmatmul.bf16.gmra.mxu0 %v4120
        %v5453 = vpop.f32.mrf.mxu0
        %v5454 = vadd.f32 %v5365, %v5453
        %v5455 = vpop.f32.mrf.mxu0
        %v5456 = vadd.f32 %v5367, %v5455
        %5457 = vmatmul.bf16.gmra.mxu0 %v4129
        %v5458 = vpop.f32.mrf.mxu0
        %v5459 = vadd.f32 %v5370, %v5458
        %v5460 = vpop.f32.mrf.mxu0
        %v5461 = vadd.f32 %v5372, %v5460
        %5462 = vmatmul.bf16.gmra.mxu0 %v4138
        %v5463 = vpop.f32.mrf.mxu0
        %v5464 = vadd.f32 %v5375, %v5463
        %v5465 = vpop.f32.mrf.mxu0
        %v5466 = vadd.f32 %v5377, %v5465
        %5467 = vmatmul.bf16.gmra.mxu0 %v4147
        %v5468 = vpop.f32.mrf.mxu0
        %v5469 = vadd.f32 %v5380, %v5468
        %v5470 = vpop.f32.mrf.mxu0
        %v5471 = vadd.f32 %v5382, %v5470
        %5472 = vmatmul.bf16.gmra.mxu0 %v4156
        %v5473 = vpop.f32.mrf.mxu0
        %v5474 = vadd.f32 %v5385, %v5473
        %v5475 = vpop.f32.mrf.mxu0
        %v5476 = vadd.f32 %v5387, %v5475
        %5477 = vmatmul.bf16.gmra.mxu0 %v4165
        %v5478 = vpop.f32.mrf.mxu0
        %v5479 = vadd.f32 %v5390, %v5478
        %v5480 = vpop.f32.mrf.mxu0
        %v5481 = vadd.f32 %v5392, %v5480
        %5482 = vmatmul.bf16.gmra.mxu0 %v4174
        %v5483 = vpop.f32.mrf.mxu0
        %v5484 = vadd.f32 %v5395, %v5483
        %v5485 = vpop.f32.mrf.mxu0
        %v5486 = vadd.f32 %v5397, %v5485
        %5487 = vmatmul.bf16.gmra.mxu0 %v4183
        %v5488 = vpop.f32.mrf.mxu0
        %v5489 = vadd.f32 %v5400, %v5488
        %v5490 = vpop.f32.mrf.mxu0
        %v5491 = vadd.f32 %v5402, %v5490
        %5492 = vmatmul.bf16.gmra.mxu0 %v4192
        %v5493 = vpop.f32.mrf.mxu0
        %v5494 = vadd.f32 %v5405, %v5493
        %v5495 = vpop.f32.mrf.mxu0
        %v5496 = vadd.f32 %v5407, %v5495
        %5497 = vmatmul.bf16.gmra.mxu0 %v4201
        %v5498 = vpop.f32.mrf.mxu0
        %v5499 = vadd.f32 %v5410, %v5498
        %v5500 = vpop.f32.mrf.mxu0
        %v5501 = vadd.f32 %v5412, %v5500
        %5502 = vmatmul.bf16.gmra.mxu0 %v4210
        %v5503 = vpop.f32.mrf.mxu0
        %v5504 = vadd.f32 %v5415, %v5503
        %v5505 = vpop.f32.mrf.mxu0
        %v5506 = vadd.f32 %v5417, %v5505
        %5507 = vmatmul.bf16.gmra.mxu0 %v4219
        %v5508 = vpop.f32.mrf.mxu0
        %v5509 = vadd.f32 %v5420, %v5508
        %v5510 = vpop.f32.mrf.mxu0
        %v5511 = vadd.f32 %v5422, %v5510
        %5512 = vmatmul.bf16.gmra.mxu0 %v4228
        %v5513 = vpop.f32.mrf.mxu0
        %v5514 = vadd.f32 %v5425, %v5513
        %v5515 = vpop.f32.mrf.mxu0
        %v5516 = vadd.f32 %v5427, %v5515
        %5517 = vdwg.mxu0
        %5518 = vmatpush.bf16.msra.mxu0 %v4733
        %5519 = vmatpush.bf16.msra.mxu0 %v4732
        %5520 = vmatpush.bf16.msra.mxu0 %v4731
        %5521 = vmatpush.bf16.msra.mxu0 %v4730
        %5522 = vmatpush.bf16.msra.mxu0 %v4729
        %5523 = vmatpush.bf16.msra.mxu0 %v4728
        %5524 = vmatpush.bf16.msra.mxu0 %v4727
        %5525 = vmatpush.bf16.msra.mxu0 %v4726
        %5526 = vmatmul.bf16.gmra.mxu0 %v4094
        %v5527 = vpop.f32.mrf.mxu0
        %v5528 = vadd.f32 %v5439, %v5527
        %v5529 = vpop.f32.mrf.mxu0
        %v5530 = vadd.f32 %v5441, %v5529
        %5531 = vmatmul.bf16.gmra.mxu0 %v4103
        %v5532 = vpop.f32.mrf.mxu0
        %v5533 = vadd.f32 %v5444, %v5532
        %v5534 = vpop.f32.mrf.mxu0
        %v5535 = vadd.f32 %v5446, %v5534
        %5536 = vmatmul.bf16.gmra.mxu0 %v4112
        %v5537 = vpop.f32.mrf.mxu0
        %v5538 = vadd.f32 %v5449, %v5537
        %v5539 = vpop.f32.mrf.mxu0
        %v5540 = vadd.f32 %v5451, %v5539
        %5541 = vmatmul.bf16.gmra.mxu0 %v4121
        %v5542 = vpop.f32.mrf.mxu0
        %v5543 = vadd.f32 %v5454, %v5542
        %v5544 = vpop.f32.mrf.mxu0
        %v5545 = vadd.f32 %v5456, %v5544
        %5546 = vmatmul.bf16.gmra.mxu0 %v4130
        %v5547 = vpop.f32.mrf.mxu0
        %v5548 = vadd.f32 %v5459, %v5547
        %v5549 = vpop.f32.mrf.mxu0
        %v5550 = vadd.f32 %v5461, %v5549
        %5551 = vmatmul.bf16.gmra.mxu0 %v4139
        %v5552 = vpop.f32.mrf.mxu0
        %v5553 = vadd.f32 %v5464, %v5552
        %v5554 = vpop.f32.mrf.mxu0
        %v5555 = vadd.f32 %v5466, %v5554
        %5556 = vmatmul.bf16.gmra.mxu0 %v4148
        %v5557 = vpop.f32.mrf.mxu0
        %v5558 = vadd.f32 %v5469, %v5557
        %v5559 = vpop.f32.mrf.mxu0
        %v5560 = vadd.f32 %v5471, %v5559
        %5561 = vmatmul.bf16.gmra.mxu0 %v4157
        %v5562 = vpop.f32.mrf.mxu0
        %v5563 = vadd.f32 %v5474, %v5562
        %v5564 = vpop.f32.mrf.mxu0
        %v5565 = vadd.f32 %v5476, %v5564
        %5566 = vmatmul.bf16.gmra.mxu0 %v4166
        %v5567 = vpop.f32.mrf.mxu0
        %v5568 = vadd.f32 %v5479, %v5567
        %v5569 = vpop.f32.mrf.mxu0
        %v5570 = vadd.f32 %v5481, %v5569
        %5571 = vmatmul.bf16.gmra.mxu0 %v4175
        %v5572 = vpop.f32.mrf.mxu0
        %v5573 = vadd.f32 %v5484, %v5572
        %v5574 = vpop.f32.mrf.mxu0
        %v5575 = vadd.f32 %v5486, %v5574
        %5576 = vmatmul.bf16.gmra.mxu0 %v4184
        %v5577 = vpop.f32.mrf.mxu0
        %v5578 = vadd.f32 %v5489, %v5577
        %v5579 = vpop.f32.mrf.mxu0
        %v5580 = vadd.f32 %v5491, %v5579
        %5581 = vmatmul.bf16.gmra.mxu0 %v4193
        %v5582 = vpop.f32.mrf.mxu0
        %v5583 = vadd.f32 %v5494, %v5582
        %v5584 = vpop.f32.mrf.mxu0
        %v5585 = vadd.f32 %v5496, %v5584
        %5586 = vmatmul.bf16.gmra.mxu0 %v4202
        %v5587 = vpop.f32.mrf.mxu0
        %v5588 = vadd.f32 %v5499, %v5587
        %v5589 = vpop.f32.mrf.mxu0
        %v5590 = vadd.f32 %v5501, %v5589
        %5591 = vmatmul.bf16.gmra.mxu0 %v4211
        %v5592 = vpop.f32.mrf.mxu0
        %v5593 = vadd.f32 %v5504, %v5592
        %v5594 = vpop.f32.mrf.mxu0
        %v5595 = vadd.f32 %v5506, %v5594
        %5596 = vmatmul.bf16.gmra.mxu0 %v4220
        %v5597 = vpop.f32.mrf.mxu0
        %v5598 = vadd.f32 %v5509, %v5597
        %v5599 = vpop.f32.mrf.mxu0
        %v5600 = vadd.f32 %v5511, %v5599
        %5601 = vmatmul.bf16.gmra.mxu0 %v4229
        %v5602 = vpop.f32.mrf.mxu0
        %v5603 = vadd.f32 %v5514, %v5602
        %v5604 = vpop.f32.mrf.mxu0
        %v5605 = vadd.f32 %v5516, %v5604
        %5606 = vdwg.mxu0
        %v5607 = vmax.f32 %v5528, 0.0
        %v5608 = vmax.f32 %v5530, 0.0
        %v5609 = vmax.f32 %v5533, 0.0
        %v5610 = vmax.f32 %v5535, 0.0
        %v5611 = vmax.f32 %v5538, 0.0
        %v5612 = vmax.f32 %v5540, 0.0
        %v5613 = vmax.f32 %v5543, 0.0
        %v5614 = vmax.f32 %v5545, 0.0
        %v5615 = vmax.f32 %v5548, 0.0
        %v5616 = vmax.f32 %v5550, 0.0
        %v5617 = vmax.f32 %v5553, 0.0
        %v5618 = vmax.f32 %v5555, 0.0
        %v5619 = vmax.f32 %v5558, 0.0
        %v5620 = vmax.f32 %v5560, 0.0
        %v5621 = vmax.f32 %v5563, 0.0
        %v5622 = vmax.f32 %v5565, 0.0
        %v5623 = vmax.f32 %v5568, 0.0
        %v5624 = vmax.f32 %v5570, 0.0
        %v5625 = vmax.f32 %v5573, 0.0
        %v5626 = vmax.f32 %v5575, 0.0
        %v5627 = vmax.f32 %v5578, 0.0
        %v5628 = vmax.f32 %v5580, 0.0
        %v5629 = vmax.f32 %v5583, 0.0
        %v5630 = vmax.f32 %v5585, 0.0
        %v5631 = vmax.f32 %v5588, 0.0
        %v5632 = vmax.f32 %v5590, 0.0
        %v5633 = vmax.f32 %v5593, 0.0
        %v5634 = vmax.f32 %v5595, 0.0
        %v5635 = vmax.f32 %v5598, 0.0
        %v5636 = vmax.f32 %v5600, 0.0
        %v5637 = vmax.f32 %v5603, 0.0
        %v5638 = vmax.f32 %v5605, 0.0
        %v5639 = vpack.c.bf16 %v5607, %v5607
        %v5640 = vpack.c.bf16 %v5608, %v5608
        %v5641 = vpack.c.bf16 %v5609, %v5609
        %v5642 = vpack.c.bf16 %v5610, %v5610
        %v5643 = vpack.c.bf16 %v5611, %v5611
        %v5644 = vpack.c.bf16 %v5612, %v5612
        %v5645 = vpack.c.bf16 %v5613, %v5613
        %v5646 = vpack.c.bf16 %v5614, %v5614
        %v5647 = vpack.c.bf16 %v5615, %v5615
        %v5648 = vpack.c.bf16 %v5616, %v5616
        %v5649 = vpack.c.bf16 %v5617, %v5617
        %v5650 = vpack.c.bf16 %v5618, %v5618
        %v5651 = vpack.c.bf16 %v5619, %v5619
        %v5652 = vpack.c.bf16 %v5620, %v5620
        %v5653 = vpack.c.bf16 %v5621, %v5621
        %v5654 = vpack.c.bf16 %v5622, %v5622
        %v5655 = vpack.c.bf16 %v5623, %v5623
        %v5656 = vpack.c.bf16 %v5624, %v5624
        %v5657 = vpack.c.bf16 %v5625, %v5625
        %v5658 = vpack.c.bf16 %v5626, %v5626
        %v5659 = vpack.c.bf16 %v5627, %v5627
        %v5660 = vpack.c.bf16 %v5628, %v5628
        %v5661 = vpack.c.bf16 %v5629, %v5629
        %v5662 = vpack.c.bf16 %v5630, %v5630
        %v5663 = vpack.c.bf16 %v5631, %v5631
        %v5664 = vpack.c.bf16 %v5632, %v5632
        %v5665 = vpack.c.bf16 %v5633, %v5633
        %v5666 = vpack.c.bf16 %v5634, %v5634
        %v5667 = vpack.c.bf16 %v5635, %v5635
        %v5668 = vpack.c.bf16 %v5636, %v5636
        %v5669 = vpack.c.bf16 %v5637, %v5637
        %v5670 = vpack.c.bf16 %v5638, %v5638
        %v5672 = vshrl.u32 %v5639, 16
        %v5674 = vrot.slane %v5672, 7
        %v5675 = vshll.u32 %v5639, 16
        %v5677 = vor.u32 %v5674, %v5675
        %v5678 = vrot.slane %v5674, 4
        %v5680 = vshrl.u32 %v5640, 16
        %v5682 = vrot.slane %v5680, 7
        %v5683 = vshll.u32 %v5640, 16
        %v5685 = vor.u32 %v5682, %v5683
        %v5686 = vsel %vm394, %v5678, %v5685
        %v5687 = vrot.slane %v5682, 4
        %v5689 = vshrl.u32 %v5641, 16
        %v5691 = vrot.slane %v5689, 7
        %v5692 = vshll.u32 %v5641, 16
        %v5694 = vor.u32 %v5691, %v5692
        %v5695 = vrot.slane %v5691, 4
        %v5697 = vshrl.u32 %v5642, 16
        %v5699 = vrot.slane %v5697, 7
        %v5700 = vshll.u32 %v5642, 16
        %v5702 = vor.u32 %v5699, %v5700
        %v5703 = vsel %vm394, %v5695, %v5702
        %v5704 = vrot.slane %v5699, 4
        %v5706 = vshrl.u32 %v5643, 16
        %v5708 = vrot.slane %v5706, 7
        %v5709 = vshll.u32 %v5643, 16
        %v5711 = vor.u32 %v5708, %v5709
        %v5712 = vrot.slane %v5708, 4
        %v5714 = vshrl.u32 %v5644, 16
        %v5716 = vrot.slane %v5714, 7
        %v5717 = vshll.u32 %v5644, 16
        %v5719 = vor.u32 %v5716, %v5717
        %v5720 = vsel %vm394, %v5712, %v5719
        %v5721 = vrot.slane %v5716, 4
        %v5723 = vshrl.u32 %v5645, 16
        %v5725 = vrot.slane %v5723, 7
        %v5726 = vshll.u32 %v5645, 16
        %v5728 = vor.u32 %v5725, %v5726
        %v5729 = vrot.slane %v5725, 4
        %v5731 = vshrl.u32 %v5646, 16
        %v5733 = vrot.slane %v5731, 7
        %v5734 = vshll.u32 %v5646, 16
        %v5736 = vor.u32 %v5733, %v5734
        %v5737 = vsel %vm394, %v5729, %v5736
        %v5738 = vrot.slane %v5733, 4
        %v5740 = vshrl.u32 %v5647, 16
        %v5742 = vrot.slane %v5740, 7
        %v5743 = vshll.u32 %v5647, 16
        %v5745 = vor.u32 %v5742, %v5743
        %v5746 = vrot.slane %v5742, 4
        %v5748 = vshrl.u32 %v5648, 16
        %v5750 = vrot.slane %v5748, 7
        %v5751 = vshll.u32 %v5648, 16
        %v5753 = vor.u32 %v5750, %v5751
        %v5754 = vsel %vm394, %v5746, %v5753
        %v5755 = vrot.slane %v5750, 4
        %v5757 = vshrl.u32 %v5649, 16
        %v5759 = vrot.slane %v5757, 7
        %v5760 = vshll.u32 %v5649, 16
        %v5762 = vor.u32 %v5759, %v5760
        %v5763 = vrot.slane %v5759, 4
        %v5765 = vshrl.u32 %v5650, 16
        %v5767 = vrot.slane %v5765, 7
        %v5768 = vshll.u32 %v5650, 16
        %v5770 = vor.u32 %v5767, %v5768
        %v5771 = vsel %vm394, %v5763, %v5770
        %v5772 = vrot.slane %v5767, 4
        %v5774 = vshrl.u32 %v5651, 16
        %v5776 = vrot.slane %v5774, 7
        %v5777 = vshll.u32 %v5651, 16
        %v5779 = vor.u32 %v5776, %v5777
        %v5780 = vrot.slane %v5776, 4
        %v5782 = vshrl.u32 %v5652, 16
        %v5784 = vrot.slane %v5782, 7
        %v5785 = vshll.u32 %v5652, 16
        %v5787 = vor.u32 %v5784, %v5785
        %v5788 = vsel %vm394, %v5780, %v5787
        %v5789 = vrot.slane %v5784, 4
        %v5791 = vshrl.u32 %v5653, 16
        %v5793 = vrot.slane %v5791, 7
        %v5794 = vshll.u32 %v5653, 16
        %v5796 = vor.u32 %v5793, %v5794
        %v5797 = vrot.slane %v5793, 4
        %v5799 = vshrl.u32 %v5654, 16
        %v5801 = vrot.slane %v5799, 7
        %v5802 = vshll.u32 %v5654, 16
        %v5804 = vor.u32 %v5801, %v5802
        %v5805 = vsel %vm394, %v5797, %v5804
        %v5806 = vrot.slane %v5801, 4
        %v5808 = vshrl.u32 %v5655, 16
        %v5810 = vrot.slane %v5808, 7
        %v5811 = vshll.u32 %v5655, 16
        %v5813 = vor.u32 %v5810, %v5811
        %v5814 = vrot.slane %v5810, 4
        %v5816 = vshrl.u32 %v5656, 16
        %v5818 = vrot.slane %v5816, 7
        %v5819 = vshll.u32 %v5656, 16
        %v5821 = vor.u32 %v5818, %v5819
        %v5822 = vsel %vm394, %v5814, %v5821
        %v5823 = vrot.slane %v5818, 4
        %v5825 = vshrl.u32 %v5657, 16
        %v5827 = vrot.slane %v5825, 7
        %v5828 = vshll.u32 %v5657, 16
        %v5830 = vor.u32 %v5827, %v5828
        %v5831 = vrot.slane %v5827, 4
        %v5833 = vshrl.u32 %v5658, 16
        %v5835 = vrot.slane %v5833, 7
        %v5836 = vshll.u32 %v5658, 16
        %v5838 = vor.u32 %v5835, %v5836
        %v5839 = vsel %vm394, %v5831, %v5838
        %v5840 = vrot.slane %v5835, 4
        %v5842 = vshrl.u32 %v5659, 16
        %v5844 = vrot.slane %v5842, 7
        %v5845 = vshll.u32 %v5659, 16
        %v5847 = vor.u32 %v5844, %v5845
        %v5848 = vrot.slane %v5844, 4
        %v5850 = vshrl.u32 %v5660, 16
        %v5852 = vrot.slane %v5850, 7
        %v5853 = vshll.u32 %v5660, 16
        %v5855 = vor.u32 %v5852, %v5853
        %v5856 = vsel %vm394, %v5848, %v5855
        %v5857 = vrot.slane %v5852, 4
        %v5859 = vshrl.u32 %v5661, 16
        %v5861 = vrot.slane %v5859, 7
        %v5862 = vshll.u32 %v5661, 16
        %v5864 = vor.u32 %v5861, %v5862
        %v5865 = vrot.slane %v5861, 4
        %v5867 = vshrl.u32 %v5662, 16
        %v5869 = vrot.slane %v5867, 7
        %v5870 = vshll.u32 %v5662, 16
        %v5872 = vor.u32 %v5869, %v5870
        %v5873 = vsel %vm394, %v5865, %v5872
        %v5874 = vrot.slane %v5869, 4
        %v5876 = vshrl.u32 %v5663, 16
        %v5878 = vrot.slane %v5876, 7
        %v5879 = vshll.u32 %v5663, 16
        %v5881 = vor.u32 %v5878, %v5879
        %v5882 = vrot.slane %v5878, 4
        %v5884 = vshrl.u32 %v5664, 16
        %v5886 = vrot.slane %v5884, 7
        %v5887 = vshll.u32 %v5664, 16
        %v5889 = vor.u32 %v5886, %v5887
        %v5890 = vsel %vm394, %v5882, %v5889
        %v5891 = vrot.slane %v5886, 4
        %v5893 = vshrl.u32 %v5665, 16
        %v5895 = vrot.slane %v5893, 7
        %v5896 = vshll.u32 %v5665, 16
        %v5898 = vor.u32 %v5895, %v5896
        %v5899 = vrot.slane %v5895, 4
        %v5901 = vshrl.u32 %v5666, 16
        %v5903 = vrot.slane %v5901, 7
        %v5904 = vshll.u32 %v5666, 16
        %v5906 = vor.u32 %v5903, %v5904
        %v5907 = vsel %vm394, %v5899, %v5906
        %v5908 = vrot.slane %v5903, 4
        %v5910 = vshrl.u32 %v5667, 16
        %v5912 = vrot.slane %v5910, 7
        %v5913 = vshll.u32 %v5667, 16
        %v5915 = vor.u32 %v5912, %v5913
        %v5916 = vrot.slane %v5912, 4
        %v5918 = vshrl.u32 %v5668, 16
        %v5920 = vrot.slane %v5918, 7
        %v5921 = vshll.u32 %v5668, 16
        %v5923 = vor.u32 %v5920, %v5921
        %v5924 = vsel %vm394, %v5916, %v5923
        %v5925 = vrot.slane %v5920, 4
        %v5927 = vshrl.u32 %v5669, 16
        %v5929 = vrot.slane %v5927, 7
        %v5930 = vshll.u32 %v5669, 16
        %v5932 = vor.u32 %v5929, %v5930
        %v5933 = vrot.slane %v5929, 4
        %v5935 = vshrl.u32 %v5670, 16
        %v5937 = vrot.slane %v5935, 7
        %v5938 = vshll.u32 %v5670, 16
        %v5940 = vor.u32 %v5937, %v5938
        %v5941 = vsel %vm394, %v5933, %v5940
        %v5942 = vrot.slane %v5937, 4
        %v5991 = vld [vmem:[%s259] sm:$0xf]
        %v5992 = vsel %vm716, %v5677, %v5991
        %5993 = vst [vmem:[%s259] sm:$0xf] %v5992
        %5994 = vst [vmem:[%s259 + $0x4] sm:$0xf] %v5686
        %v5995 = vld [vmem:[%s259 + $0x8] sm:$0x1]
        %v5996 = vsel %vm262, %v5687, %v5995
        %5997 = vst [vmem:[%s259 + $0x8] sm:$0x1] %v5996
        %v5998 = vld [vmem:[%s259 + $0xc] sm:$0xf]
        %v5999 = vsel %vm716, %v5694, %v5998
        %6000 = vst [vmem:[%s259 + $0xc] sm:$0xf] %v5999
        %6001 = vst [vmem:[%s259 + $0x10] sm:$0xf] %v5703
        %v6002 = vld [vmem:[%s259 + $0x14] sm:$0x1]
        %v6003 = vsel %vm262, %v5704, %v6002
        %6004 = vst [vmem:[%s259 + $0x14] sm:$0x1] %v6003
        %v6005 = vld [vmem:[%s259 + $0x18] sm:$0xf]
        %v6006 = vsel %vm716, %v5711, %v6005
        %6007 = vst [vmem:[%s259 + $0x18] sm:$0xf] %v6006
        %6008 = vst [vmem:[%s259 + $0x1c] sm:$0xf] %v5720
        %v6009 = vld [vmem:[%s259 + $0x20] sm:$0x1]
        %v6010 = vsel %vm262, %v5721, %v6009
        %6011 = vst [vmem:[%s259 + $0x20] sm:$0x1] %v6010
        %v6012 = vld [vmem:[%s259 + $0x24] sm:$0xf]
        %v6013 = vsel %vm716, %v5728, %v6012
        %6014 = vst [vmem:[%s259 + $0x24] sm:$0xf] %v6013
        %6015 = vst [vmem:[%s259 + $0x28] sm:$0xf] %v5737
        %v6016 = vld [vmem:[%s259 + $0x2c] sm:$0x1]
        %v6017 = vsel %vm262, %v5738, %v6016
        %6018 = vst [vmem:[%s259 + $0x2c] sm:$0x1] %v6017
        %v6019 = vld [vmem:[%s259 + $0x30] sm:$0xf]
        %v6020 = vsel %vm716, %v5745, %v6019
        %6021 = vst [vmem:[%s259 + $0x30] sm:$0xf] %v6020
        %6022 = vst [vmem:[%s259 + $0x34] sm:$0xf] %v5754
        %v6023 = vld [vmem:[%s259 + $0x38] sm:$0x1]
        %v6024 = vsel %vm262, %v5755, %v6023
        %6025 = vst [vmem:[%s259 + $0x38] sm:$0x1] %v6024
        %v6026 = vld [vmem:[%s259 + $0x3c] sm:$0xf]
        %v6027 = vsel %vm716, %v5762, %v6026
        %6028 = vst [vmem:[%s259 + $0x3c] sm:$0xf] %v6027
        %6029 = vst [vmem:[%s259 + $0x40] sm:$0xf] %v5771
        %v6030 = vld [vmem:[%s259 + $0x44] sm:$0x1]
        %v6031 = vsel %vm262, %v5772, %v6030
        %6032 = vst [vmem:[%s259 + $0x44] sm:$0x1] %v6031
        %v6033 = vld [vmem:[%s259 + $0x48] sm:$0xf]
        %v6034 = vsel %vm716, %v5779, %v6033
        %6035 = vst [vmem:[%s259 + $0x48] sm:$0xf] %v6034
        %6036 = vst [vmem:[%s259 + $0x4c] sm:$0xf] %v5788
        %v6037 = vld [vmem:[%s259 + $0x50] sm:$0x1]
        %v6038 = vsel %vm262, %v5789, %v6037
        %6039 = vst [vmem:[%s259 + $0x50] sm:$0x1] %v6038
        %v6040 = vld [vmem:[%s259 + $0x54] sm:$0xf]
        %v6041 = vsel %vm716, %v5796, %v6040
        %6042 = vst [vmem:[%s259 + $0x54] sm:$0xf] %v6041
        %6043 = vst [vmem:[%s259 + $0x58] sm:$0xf] %v5805
        %v6044 = vld [vmem:[%s259 + $0x5c] sm:$0x1]
        %v6045 = vsel %vm262, %v5806, %v6044
        %6046 = vst [vmem:[%s259 + $0x5c] sm:$0x1] %v6045
        %v6047 = vld [vmem:[%s259 + $0x60] sm:$0xf]
        %v6048 = vsel %vm716, %v5813, %v6047
        %6049 = vst [vmem:[%s259 + $0x60] sm:$0xf] %v6048
        %6050 = vst [vmem:[%s259 + $0x64] sm:$0xf] %v5822
        %v6051 = vld [vmem:[%s259 + $0x68] sm:$0x1]
        %v6052 = vsel %vm262, %v5823, %v6051
        %6053 = vst [vmem:[%s259 + $0x68] sm:$0x1] %v6052
        %v6054 = vld [vmem:[%s259 + $0x6c] sm:$0xf]
        %v6055 = vsel %vm716, %v5830, %v6054
        %6056 = vst [vmem:[%s259 + $0x6c] sm:$0xf] %v6055
        %6057 = vst [vmem:[%s259 + $0x70] sm:$0xf] %v5839
        %v6058 = vld [vmem:[%s259 + $0x74] sm:$0x1]
        %v6059 = vsel %vm262, %v5840, %v6058
        %6060 = vst [vmem:[%s259 + $0x74] sm:$0x1] %v6059
        %v6061 = vld [vmem:[%s259 + $0x78] sm:$0xf]
        %v6062 = vsel %vm716, %v5847, %v6061
        %6063 = vst [vmem:[%s259 + $0x78] sm:$0xf] %v6062
        %6064 = vst [vmem:[%s259 + $0x7c] sm:$0xf] %v5856
        %v6065 = vld [vmem:[%s259 + $0x80] sm:$0x1]
        %v6066 = vsel %vm262, %v5857, %v6065
        %6067 = vst [vmem:[%s259 + $0x80] sm:$0x1] %v6066
        %v6068 = vld [vmem:[%s259 + $0x84] sm:$0xf]
        %v6069 = vsel %vm716, %v5864, %v6068
        %6070 = vst [vmem:[%s259 + $0x84] sm:$0xf] %v6069
        %6071 = vst [vmem:[%s259 + $0x88] sm:$0xf] %v5873
        %v6072 = vld [vmem:[%s259 + $0x8c] sm:$0x1]
        %v6073 = vsel %vm262, %v5874, %v6072
        %6074 = vst [vmem:[%s259 + $0x8c] sm:$0x1] %v6073
        %v6075 = vld [vmem:[%s259 + $0x90] sm:$0xf]
        %v6076 = vsel %vm716, %v5881, %v6075
        %6077 = vst [vmem:[%s259 + $0x90] sm:$0xf] %v6076
        %6078 = vst [vmem:[%s259 + $0x94] sm:$0xf] %v5890
        %v6079 = vld [vmem:[%s259 + $0x98] sm:$0x1]
        %v6080 = vsel %vm262, %v5891, %v6079
        %6081 = vst [vmem:[%s259 + $0x98] sm:$0x1] %v6080
        %v6082 = vld [vmem:[%s259 + $0x9c] sm:$0xf]
        %v6083 = vsel %vm716, %v5898, %v6082
        %6084 = vst [vmem:[%s259 + $0x9c] sm:$0xf] %v6083
        %6085 = vst [vmem:[%s259 + $0xa0] sm:$0xf] %v5907
        %v6086 = vld [vmem:[%s259 + $0xa4] sm:$0x1]
        %v6087 = vsel %vm262, %v5908, %v6086
        %6088 = vst [vmem:[%s259 + $0xa4] sm:$0x1] %v6087
        %v6089 = vld [vmem:[%s259 + $0xa8] sm:$0xf]
        %v6090 = vsel %vm716, %v5915, %v6089
        %6091 = vst [vmem:[%s259 + $0xa8] sm:$0xf] %v6090
        %6092 = vst [vmem:[%s259 + $0xac] sm:$0xf] %v5924
        %v6093 = vld [vmem:[%s259 + $0xb0] sm:$0x1]
        %v6094 = vsel %vm262, %v5925, %v6093
        %6095 = vst [vmem:[%s259 + $0xb0] sm:$0x1] %v6094
        %v6096 = vld [vmem:[%s259 + $0xb4] sm:$0xf]
        %v6097 = vsel %vm716, %v5932, %v6096
        %6098 = vst [vmem:[%s259 + $0xb4] sm:$0xf] %v6097
        %6099 = vst [vmem:[%s259 + $0xb8] sm:$0xf] %v5941
        %v6100 = vld [vmem:[%s259 + $0xbc] sm:$0x1]
        %v6101 = vsel %vm262, %v5942, %v6100
        %6102 = vst [vmem:[%s259 + $0xbc] sm:$0x1] %v6101
        %v6103 = vld [vmem:[#allocation2] sm:$0xf]
        %v6104 = vld [vmem:[#allocation2 + $0x4] sm:$0xf]
        %v6105 = vld [vmem:[#allocation2 + $0xc] sm:$0xf]
        %v6106 = vld [vmem:[#allocation2 + $0x10] sm:$0xf]
        %v6107 = vld [vmem:[#allocation2 + $0x18] sm:$0xf]
        %v6108 = vld [vmem:[#allocation2 + $0x1c] sm:$0xf]
        %v6109 = vld [vmem:[#allocation2 + $0x24] sm:$0xf]
        %v6110 = vld [vmem:[#allocation2 + $0x28] sm:$0xf]
        %v6111 = vld [vmem:[#allocation2 + $0x30] sm:$0xf]
        %v6112 = vld [vmem:[#allocation2 + $0x34] sm:$0xf]
        %v6113 = vld [vmem:[#allocation2 + $0x3c] sm:$0xf]
        %v6114 = vld [vmem:[#allocation2 + $0x40] sm:$0xf]
        %v6115 = vld [vmem:[#allocation2 + $0x48] sm:$0xf]
        %v6116 = vld [vmem:[#allocation2 + $0x4c] sm:$0xf]
        %v6117 = vld [vmem:[#allocation2 + $0x54] sm:$0xf]
        %v6118 = vld [vmem:[#allocation2 + $0x58] sm:$0xf]
        %v6119 = vld [vmem:[#allocation2 + $0x60] sm:$0xf]
        %v6120 = vld [vmem:[#allocation2 + $0x64] sm:$0xf]
        %v6121 = vld [vmem:[#allocation2 + $0x6c] sm:$0xf]
        %v6122 = vld [vmem:[#allocation2 + $0x70] sm:$0xf]
        %v6123 = vld [vmem:[#allocation2 + $0x78] sm:$0xf]
        %v6124 = vld [vmem:[#allocation2 + $0x7c] sm:$0xf]
        %v6125 = vld [vmem:[#allocation2 + $0x84] sm:$0xf]
        %v6126 = vld [vmem:[#allocation2 + $0x88] sm:$0xf]
        %v6127 = vld [vmem:[#allocation2 + $0x90] sm:$0xf]
        %v6128 = vld [vmem:[#allocation2 + $0x94] sm:$0xf]
        %v6129 = vld [vmem:[#allocation2 + $0x9c] sm:$0xf]
        %v6130 = vld [vmem:[#allocation2 + $0xa0] sm:$0xf]
        %v6131 = vld [vmem:[#allocation2 + $0xa8] sm:$0xf]
        %v6132 = vld [vmem:[#allocation2 + $0xac] sm:$0xf]
        %v6133 = vld [vmem:[#allocation2 + $0xb4] sm:$0xf]
        %v6134 = vld [vmem:[#allocation2 + $0xb8] sm:$0xf]
        %6135 = vst [vmem:[#allocation3] sm:$0xf] %v6103
        %6136 = vst [vmem:[#allocation3 + $0x24] sm:$0xf] %v6104
        %6137 = vst [vmem:[#allocation3 + $0x48] sm:$0xf] %v6105
        %6138 = vst [vmem:[#allocation3 + $0x6c] sm:$0xf] %v6106
        %6139 = vst [vmem:[#allocation3 + $0x90] sm:$0xf] %v6107
        %6140 = vst [vmem:[#allocation3 + $0xb4] sm:$0xf] %v6108
        %6141 = vst [vmem:[#allocation3 + $0xd8] sm:$0xf] %v6109
        %6142 = vst [vmem:[#allocation3 + $0xfc] sm:$0xf] %v6110
        %6143 = vst [vmem:[#allocation3 + $0x120] sm:$0xf] %v6111
        %6144 = vst [vmem:[#allocation3 + $0x144] sm:$0xf] %v6112
        %6145 = vst [vmem:[#allocation3 + $0x168] sm:$0xf] %v6113
        %6146 = vst [vmem:[#allocation3 + $0x18c] sm:$0xf] %v6114
        %6147 = vst [vmem:[#allocation3 + $0x1b0] sm:$0xf] %v6115
        %6148 = vst [vmem:[#allocation3 + $0x1d4] sm:$0xf] %v6116
        %6149 = vst [vmem:[#allocation3 + $0x1f8] sm:$0xf] %v6117
        %6150 = vst [vmem:[#allocation3 + $0x21c] sm:$0xf] %v6118
        %6151 = vst [vmem:[#allocation3 + $0x240] sm:$0xf] %v6119
        %6152 = vst [vmem:[#allocation3 + $0x264] sm:$0xf] %v6120
        %6153 = vst [vmem:[#allocation3 + $0x288] sm:$0xf] %v6121
        %6154 = vst [vmem:[#allocation3 + $0x2ac] sm:$0xf] %v6122
        %6155 = vst [vmem:[#allocation3 + $0x2d0] sm:$0xf] %v6123
        %6156 = vst [vmem:[#allocation3 + $0x2f4] sm:$0xf] %v6124
        %6157 = vst [vmem:[#allocation3 + $0x318] sm:$0xf] %v6125
        %6158 = vst [vmem:[#allocation3 + $0x33c] sm:$0xf] %v6126
        %6159 = vst [vmem:[#allocation3 + $0x360] sm:$0xf] %v6127
        %6160 = vst [vmem:[#allocation3 + $0x384] sm:$0xf] %v6128
        %6161 = vst [vmem:[#allocation3 + $0x3a8] sm:$0xf] %v6129
        %6162 = vst [vmem:[#allocation3 + $0x3cc] sm:$0xf] %v6130
        %6163 = vst [vmem:[#allocation3 + $0x3f0] sm:$0xf] %v6131
        %6164 = vst [vmem:[#allocation3 + $0x414] sm:$0xf] %v6132
        %6165 = vst [vmem:[#allocation3 + $0x438] sm:$0xf] %v6133
        %6166 = vst [vmem:[#allocation3 + $0x45c] sm:$0xf] %v6134
        %v6167 = vld [vmem:[#allocation2] sm:$0xf]
        %v6168 = vld [vmem:[#allocation2 + $0x4] sm:$0xf]
        %v6169 = vld [vmem:[#allocation2 + $0x8] sm:$0x1]
        %v6170 = vld [vmem:[#allocation2 + $0xc] sm:$0xf]
        %v6171 = vld [vmem:[#allocation2 + $0x10] sm:$0xf]
        %v6172 = vld [vmem:[#allocation2 + $0x14] sm:$0x1]
        %v6173 = vld [vmem:[#allocation2 + $0x18] sm:$0xf]
        %v6174 = vld [vmem:[#allocation2 + $0x1c] sm:$0xf]
        %v6175 = vld [vmem:[#allocation2 + $0x20] sm:$0x1]
        %v6176 = vld [vmem:[#allocation2 + $0x24] sm:$0xf]
        %v6177 = vld [vmem:[#allocation2 + $0x28] sm:$0xf]
        %v6178 = vld [vmem:[#allocation2 + $0x2c] sm:$0x1]
        %v6179 = vld [vmem:[#allocation2 + $0x30] sm:$0xf]
        %v6180 = vld [vmem:[#allocation2 + $0x34] sm:$0xf]
        %v6181 = vld [vmem:[#allocation2 + $0x38] sm:$0x1]
        %v6182 = vld [vmem:[#allocation2 + $0x3c] sm:$0xf]
        %v6183 = vld [vmem:[#allocation2 + $0x40] sm:$0xf]
        %v6184 = vld [vmem:[#allocation2 + $0x44] sm:$0x1]
        %v6185 = vld [vmem:[#allocation2 + $0x48] sm:$0xf]
        %v6186 = vld [vmem:[#allocation2 + $0x4c] sm:$0xf]
        %v6187 = vld [vmem:[#allocation2 + $0x50] sm:$0x1]
        %v6188 = vld [vmem:[#allocation2 + $0x54] sm:$0xf]
        %v6189 = vld [vmem:[#allocation2 + $0x58] sm:$0xf]
        %v6190 = vld [vmem:[#allocation2 + $0x5c] sm:$0x1]
        %v6191 = vld [vmem:[#allocation2 + $0x60] sm:$0xf]
        %v6192 = vld [vmem:[#allocation2 + $0x64] sm:$0xf]
        %v6193 = vld [vmem:[#allocation2 + $0x68] sm:$0x1]
        %v6194 = vld [vmem:[#allocation2 + $0x6c] sm:$0xf]
        %v6195 = vld [vmem:[#allocation2 + $0x70] sm:$0xf]
        %v6196 = vld [vmem:[#allocation2 + $0x74] sm:$0x1]
        %v6197 = vld [vmem:[#allocation2 + $0x78] sm:$0xf]
        %v6198 = vld [vmem:[#allocation2 + $0x7c] sm:$0xf]
        %v6199 = vld [vmem:[#allocation2 + $0x80] sm:$0x1]
        %v6200 = vld [vmem:[#allocation2 + $0x84] sm:$0xf]
        %v6201 = vld [vmem:[#allocation2 + $0x88] sm:$0xf]
        %v6202 = vld [vmem:[#allocation2 + $0x8c] sm:$0x1]
        %v6203 = vld [vmem:[#allocation2 + $0x90] sm:$0xf]
        %v6204 = vld [vmem:[#allocation2 + $0x94] sm:$0xf]
        %v6205 = vld [vmem:[#allocation2 + $0x98] sm:$0x1]
        %v6206 = vld [vmem:[#allocation2 + $0x9c] sm:$0xf]
        %v6207 = vld [vmem:[#allocation2 + $0xa0] sm:$0xf]
        %v6208 = vld [vmem:[#allocation2 + $0xa4] sm:$0x1]
        %v6209 = vld [vmem:[#allocation2 + $0xa8] sm:$0xf]
        %v6210 = vld [vmem:[#allocation2 + $0xac] sm:$0xf]
        %v6211 = vld [vmem:[#allocation2 + $0xb0] sm:$0x1]
        %v6212 = vld [vmem:[#allocation2 + $0xb4] sm:$0xf]
        %v6213 = vld [vmem:[#allocation2 + $0xb8] sm:$0xf]
        %v6214 = vld [vmem:[#allocation2 + $0xbc] sm:$0x1]
        %v6216 = vshrl.u32 %v6167, 16
        %v6218 = vrot.slane %v6216, 4
        %v6219 = vshll.u32 %v6167, 16
        %v6221 = vrot.slane %v6219, 5
        %v6222 = vor.u32 %v6218, %v6221
        %v6223 = vrot.slane %v6222, 4
        %v6225 = vshll.u32 %v6168, 16
        %v6227 = vrot.slane %v6225, 5
        %v6228 = vsel %vm943, %v6223, %v6227
        %v6229 = vshrl.u32 %v6168, 16
        %v6231 = vrot.slane %v6229, 4
        %v6232 = vor.u32 %v6231, %v6227
        %v6233 = vrot.slane %v6232, 4
        %v6235 = vshll.u32 %v6169, 16
        %v6237 = vrot.slane %v6235, 5
        %v6238 = vsel %vm943, %v6233, %v6237
        %v6240 = vshrl.u32 %v6170, 16
        %v6242 = vrot.slane %v6240, 4
        %v6243 = vshll.u32 %v6170, 16
        %v6245 = vrot.slane %v6243, 5
        %v6246 = vor.u32 %v6242, %v6245
        %v6247 = vrot.slane %v6246, 4
        %v6249 = vshll.u32 %v6171, 16
        %v6251 = vrot.slane %v6249, 5
        %v6252 = vsel %vm943, %v6247, %v6251
        %v6253 = vshrl.u32 %v6171, 16
        %v6255 = vrot.slane %v6253, 4
        %v6256 = vor.u32 %v6255, %v6251
        %v6257 = vrot.slane %v6256, 4
        %v6259 = vshll.u32 %v6172, 16
        %v6261 = vrot.slane %v6259, 5
        %v6262 = vsel %vm943, %v6257, %v6261
        %v6264 = vshrl.u32 %v6173, 16
        %v6266 = vrot.slane %v6264, 4
        %v6267 = vshll.u32 %v6173, 16
        %v6269 = vrot.slane %v6267, 5
        %v6270 = vor.u32 %v6266, %v6269
        %v6271 = vrot.slane %v6270, 4
        %v6273 = vshll.u32 %v6174, 16
        %v6275 = vrot.slane %v6273, 5
        %v6276 = vsel %vm943, %v6271, %v6275
        %v6277 = vshrl.u32 %v6174, 16
        %v6279 = vrot.slane %v6277, 4
        %v6280 = vor.u32 %v6279, %v6275
        %v6281 = vrot.slane %v6280, 4
        %v6283 = vshll.u32 %v6175, 16
        %v6285 = vrot.slane %v6283, 5
        %v6286 = vsel %vm943, %v6281, %v6285
        %v6288 = vshrl.u32 %v6176, 16
        %v6290 = vrot.slane %v6288, 4
        %v6291 = vshll.u32 %v6176, 16
        %v6293 = vrot.slane %v6291, 5
        %v6294 = vor.u32 %v6290, %v6293
        %v6295 = vrot.slane %v6294, 4
        %v6297 = vshll.u32 %v6177, 16
        %v6299 = vrot.slane %v6297, 5
        %v6300 = vsel %vm943, %v6295, %v6299
        %v6301 = vshrl.u32 %v6177, 16
        %v6303 = vrot.slane %v6301, 4
        %v6304 = vor.u32 %v6303, %v6299
        %v6305 = vrot.slane %v6304, 4
        %v6307 = vshll.u32 %v6178, 16
        %v6309 = vrot.slane %v6307, 5
        %v6310 = vsel %vm943, %v6305, %v6309
        %v6312 = vshrl.u32 %v6179, 16
        %v6314 = vrot.slane %v6312, 4
        %v6315 = vshll.u32 %v6179, 16
        %v6317 = vrot.slane %v6315, 5
        %v6318 = vor.u32 %v6314, %v6317
        %v6319 = vrot.slane %v6318, 4
        %v6321 = vshll.u32 %v6180, 16
        %v6323 = vrot.slane %v6321, 5
        %v6324 = vsel %vm943, %v6319, %v6323
        %v6325 = vshrl.u32 %v6180, 16
        %v6327 = vrot.slane %v6325, 4
        %v6328 = vor.u32 %v6327, %v6323
        %v6329 = vrot.slane %v6328, 4
        %v6331 = vshll.u32 %v6181, 16
        %v6333 = vrot.slane %v6331, 5
        %v6334 = vsel %vm943, %v6329, %v6333
        %v6336 = vshrl.u32 %v6182, 16
        %v6338 = vrot.slane %v6336, 4
        %v6339 = vshll.u32 %v6182, 16
        %v6341 = vrot.slane %v6339, 5
        %v6342 = vor.u32 %v6338, %v6341
        %v6343 = vrot.slane %v6342, 4
        %v6345 = vshll.u32 %v6183, 16
        %v6347 = vrot.slane %v6345, 5
        %v6348 = vsel %vm943, %v6343, %v6347
        %v6349 = vshrl.u32 %v6183, 16
        %v6351 = vrot.slane %v6349, 4
        %v6352 = vor.u32 %v6351, %v6347
        %v6353 = vrot.slane %v6352, 4
        %v6355 = vshll.u32 %v6184, 16
        %v6357 = vrot.slane %v6355, 5
        %v6358 = vsel %vm943, %v6353, %v6357
        %v6360 = vshrl.u32 %v6185, 16
        %v6362 = vrot.slane %v6360, 4
        %v6363 = vshll.u32 %v6185, 16
        %v6365 = vrot.slane %v6363, 5
        %v6366 = vor.u32 %v6362, %v6365
        %v6367 = vrot.slane %v6366, 4
        %v6369 = vshll.u32 %v6186, 16
        %v6371 = vrot.slane %v6369, 5
        %v6372 = vsel %vm943, %v6367, %v6371
        %v6373 = vshrl.u32 %v6186, 16
        %v6375 = vrot.slane %v6373, 4
        %v6376 = vor.u32 %v6375, %v6371
        %v6377 = vrot.slane %v6376, 4
        %v6379 = vshll.u32 %v6187, 16
        %v6381 = vrot.slane %v6379, 5
        %v6382 = vsel %vm943, %v6377, %v6381
        %v6384 = vshrl.u32 %v6188, 16
        %v6386 = vrot.slane %v6384, 4
        %v6387 = vshll.u32 %v6188, 16
        %v6389 = vrot.slane %v6387, 5
        %v6390 = vor.u32 %v6386, %v6389
        %v6391 = vrot.slane %v6390, 4
        %v6393 = vshll.u32 %v6189, 16
        %v6395 = vrot.slane %v6393, 5
        %v6396 = vsel %vm943, %v6391, %v6395
        %v6397 = vshrl.u32 %v6189, 16
        %v6399 = vrot.slane %v6397, 4
        %v6400 = vor.u32 %v6399, %v6395
        %v6401 = vrot.slane %v6400, 4
        %v6403 = vshll.u32 %v6190, 16
        %v6405 = vrot.slane %v6403, 5
        %v6406 = vsel %vm943, %v6401, %v6405
        %v6408 = vshrl.u32 %v6191, 16
        %v6410 = vrot.slane %v6408, 4
        %v6411 = vshll.u32 %v6191, 16
        %v6413 = vrot.slane %v6411, 5
        %v6414 = vor.u32 %v6410, %v6413
        %v6415 = vrot.slane %v6414, 4
        %v6417 = vshll.u32 %v6192, 16
        %v6419 = vrot.slane %v6417, 5
        %v6420 = vsel %vm943, %v6415, %v6419
        %v6421 = vshrl.u32 %v6192, 16
        %v6423 = vrot.slane %v6421, 4
        %v6424 = vor.u32 %v6423, %v6419
        %v6425 = vrot.slane %v6424, 4
        %v6427 = vshll.u32 %v6193, 16
        %v6429 = vrot.slane %v6427, 5
        %v6430 = vsel %vm943, %v6425, %v6429
        %v6432 = vshrl.u32 %v6194, 16
        %v6434 = vrot.slane %v6432, 4
        %v6435 = vshll.u32 %v6194, 16
        %v6437 = vrot.slane %v6435, 5
        %v6438 = vor.u32 %v6434, %v6437
        %v6439 = vrot.slane %v6438, 4
        %v6441 = vshll.u32 %v6195, 16
        %v6443 = vrot.slane %v6441, 5
        %v6444 = vsel %vm943, %v6439, %v6443
        %v6445 = vshrl.u32 %v6195, 16
        %v6447 = vrot.slane %v6445, 4
        %v6448 = vor.u32 %v6447, %v6443
        %v6449 = vrot.slane %v6448, 4
        %v6451 = vshll.u32 %v6196, 16
        %v6453 = vrot.slane %v6451, 5
        %v6454 = vsel %vm943, %v6449, %v6453
        %v6456 = vshrl.u32 %v6197, 16
        %v6458 = vrot.slane %v6456, 4
        %v6459 = vshll.u32 %v6197, 16
        %v6461 = vrot.slane %v6459, 5
        %v6462 = vor.u32 %v6458, %v6461
        %v6463 = vrot.slane %v6462, 4
        %v6465 = vshll.u32 %v6198, 16
        %v6467 = vrot.slane %v6465, 5
        %v6468 = vsel %vm943, %v6463, %v6467
        %v6469 = vshrl.u32 %v6198, 16
        %v6471 = vrot.slane %v6469, 4
        %v6472 = vor.u32 %v6471, %v6467
        %v6473 = vrot.slane %v6472, 4
        %v6475 = vshll.u32 %v6199, 16
        %v6477 = vrot.slane %v6475, 5
        %v6478 = vsel %vm943, %v6473, %v6477
        %v6480 = vshrl.u32 %v6200, 16
        %v6482 = vrot.slane %v6480, 4
        %v6483 = vshll.u32 %v6200, 16
        %v6485 = vrot.slane %v6483, 5
        %v6486 = vor.u32 %v6482, %v6485
        %v6487 = vrot.slane %v6486, 4
        %v6489 = vshll.u32 %v6201, 16
        %v6491 = vrot.slane %v6489, 5
        %v6492 = vsel %vm943, %v6487, %v6491
        %v6493 = vshrl.u32 %v6201, 16
        %v6495 = vrot.slane %v6493, 4
        %v6496 = vor.u32 %v6495, %v6491
        %v6497 = vrot.slane %v6496, 4
        %v6499 = vshll.u32 %v6202, 16
        %v6501 = vrot.slane %v6499, 5
        %v6502 = vsel %vm943, %v6497, %v6501
        %v6504 = vshrl.u32 %v6203, 16
        %v6506 = vrot.slane %v6504, 4
        %v6507 = vshll.u32 %v6203, 16
        %v6509 = vrot.slane %v6507, 5
        %v6510 = vor.u32 %v6506, %v6509
        %v6511 = vrot.slane %v6510, 4
        %v6513 = vshll.u32 %v6204, 16
        %v6515 = vrot.slane %v6513, 5
        %v6516 = vsel %vm943, %v6511, %v6515
        %v6517 = vshrl.u32 %v6204, 16
        %v6519 = vrot.slane %v6517, 4
        %v6520 = vor.u32 %v6519, %v6515
        %v6521 = vrot.slane %v6520, 4
        %v6523 = vshll.u32 %v6205, 16
        %v6525 = vrot.slane %v6523, 5
        %v6526 = vsel %vm943, %v6521, %v6525
        %v6528 = vshrl.u32 %v6206, 16
        %v6530 = vrot.slane %v6528, 4
        %v6531 = vshll.u32 %v6206, 16
        %v6533 = vrot.slane %v6531, 5
        %v6534 = vor.u32 %v6530, %v6533
        %v6535 = vrot.slane %v6534, 4
        %v6537 = vshll.u32 %v6207, 16
        %v6539 = vrot.slane %v6537, 5
        %v6540 = vsel %vm943, %v6535, %v6539
        %v6541 = vshrl.u32 %v6207, 16
        %v6543 = vrot.slane %v6541, 4
        %v6544 = vor.u32 %v6543, %v6539
        %v6545 = vrot.slane %v6544, 4
        %v6547 = vshll.u32 %v6208, 16
        %v6549 = vrot.slane %v6547, 5
        %v6550 = vsel %vm943, %v6545, %v6549
        %v6552 = vshrl.u32 %v6209, 16
        %v6554 = vrot.slane %v6552, 4
        %v6555 = vshll.u32 %v6209, 16
        %v6557 = vrot.slane %v6555, 5
        %v6558 = vor.u32 %v6554, %v6557
        %v6559 = vrot.slane %v6558, 4
        %v6561 = vshll.u32 %v6210, 16
        %v6563 = vrot.slane %v6561, 5
        %v6564 = vsel %vm943, %v6559, %v6563
        %v6565 = vshrl.u32 %v6210, 16
        %v6567 = vrot.slane %v6565, 4
        %v6568 = vor.u32 %v6567, %v6563
        %v6569 = vrot.slane %v6568, 4
        %v6571 = vshll.u32 %v6211, 16
        %v6573 = vrot.slane %v6571, 5
        %v6574 = vsel %vm943, %v6569, %v6573
        %v6576 = vshrl.u32 %v6212, 16
        %v6578 = vrot.slane %v6576, 4
        %v6579 = vshll.u32 %v6212, 16
        %v6581 = vrot.slane %v6579, 5
        %v6582 = vor.u32 %v6578, %v6581
        %v6583 = vrot.slane %v6582, 4
        %v6585 = vshll.u32 %v6213, 16
        %v6587 = vrot.slane %v6585, 5
        %v6588 = vsel %vm943, %v6583, %v6587
        %v6589 = vshrl.u32 %v6213, 16
        %v6591 = vrot.slane %v6589, 4
        %v6592 = vor.u32 %v6591, %v6587
        %v6593 = vrot.slane %v6592, 4
        %v6595 = vshll.u32 %v6214, 16
        %v6597 = vrot.slane %v6595, 5
        %v6598 = vsel %vm943, %v6593, %v6597
        %6631 = vst [vmem:[#allocation3 + $0x4] sm:$0xf] %v6228
        %6632 = vst [vmem:[#allocation3 + $0x28] sm:$0xf] %v6238
        %6633 = vst [vmem:[#allocation3 + $0x4c] sm:$0xf] %v6252
        %6634 = vst [vmem:[#allocation3 + $0x70] sm:$0xf] %v6262
        %6635 = vst [vmem:[#allocation3 + $0x94] sm:$0xf] %v6276
        %6636 = vst [vmem:[#allocation3 + $0xb8] sm:$0xf] %v6286
        %6637 = vst [vmem:[#allocation3 + $0xdc] sm:$0xf] %v6300
        %6638 = vst [vmem:[#allocation3 + $0x100] sm:$0xf] %v6310
        %6639 = vst [vmem:[#allocation3 + $0x124] sm:$0xf] %v6324
        %6640 = vst [vmem:[#allocation3 + $0x148] sm:$0xf] %v6334
        %6641 = vst [vmem:[#allocation3 + $0x16c] sm:$0xf] %v6348
        %6642 = vst [vmem:[#allocation3 + $0x190] sm:$0xf] %v6358
        %6643 = vst [vmem:[#allocation3 + $0x1b4] sm:$0xf] %v6372
        %6644 = vst [vmem:[#allocation3 + $0x1d8] sm:$0xf] %v6382
        %6645 = vst [vmem:[#allocation3 + $0x1fc] sm:$0xf] %v6396
        %6646 = vst [vmem:[#allocation3 + $0x220] sm:$0xf] %v6406
        %6647 = vst [vmem:[#allocation3 + $0x244] sm:$0xf] %v6420
        %6648 = vst [vmem:[#allocation3 + $0x268] sm:$0xf] %v6430
        %6649 = vst [vmem:[#allocation3 + $0x28c] sm:$0xf] %v6444
        %6650 = vst [vmem:[#allocation3 + $0x2b0] sm:$0xf] %v6454
        %6651 = vst [vmem:[#allocation3 + $0x2d4] sm:$0xf] %v6468
        %6652 = vst [vmem:[#allocation3 + $0x2f8] sm:$0xf] %v6478
        %6653 = vst [vmem:[#allocation3 + $0x31c] sm:$0xf] %v6492
        %6654 = vst [vmem:[#allocation3 + $0x340] sm:$0xf] %v6502
        %6655 = vst [vmem:[#allocation3 + $0x364] sm:$0xf] %v6516
        %6656 = vst [vmem:[#allocation3 + $0x388] sm:$0xf] %v6526
        %6657 = vst [vmem:[#allocation3 + $0x3ac] sm:$0xf] %v6540
        %6658 = vst [vmem:[#allocation3 + $0x3d0] sm:$0xf] %v6550
        %6659 = vst [vmem:[#allocation3 + $0x3f4] sm:$0xf] %v6564
        %6660 = vst [vmem:[#allocation3 + $0x418] sm:$0xf] %v6574
        %6661 = vst [vmem:[#allocation3 + $0x43c] sm:$0xf] %v6588
        %6662 = vst [vmem:[#allocation3 + $0x460] sm:$0xf] %v6598
        %v6663 = vld [vmem:[#allocation2] sm:$0xe]
        %v6664 = vld [vmem:[#allocation2 + $0x4] sm:$0xf]
        %v6665 = vld [vmem:[#allocation2 + $0x8] sm:$0x1]
        %v6666 = vld [vmem:[#allocation2 + $0xc] sm:$0xe]
        %v6667 = vld [vmem:[#allocation2 + $0x10] sm:$0xf]
        %v6668 = vld [vmem:[#allocation2 + $0x14] sm:$0x1]
        %v6669 = vld [vmem:[#allocation2 + $0x18] sm:$0xe]
        %v6670 = vld [vmem:[#allocation2 + $0x1c] sm:$0xf]
        %v6671 = vld [vmem:[#allocation2 + $0x20] sm:$0x1]
        %v6672 = vld [vmem:[#allocation2 + $0x24] sm:$0xe]
        %v6673 = vld [vmem:[#allocation2 + $0x28] sm:$0xf]
        %v6674 = vld [vmem:[#allocation2 + $0x2c] sm:$0x1]
        %v6675 = vld [vmem:[#allocation2 + $0x30] sm:$0xe]
        %v6676 = vld [vmem:[#allocation2 + $0x34] sm:$0xf]
        %v6677 = vld [vmem:[#allocation2 + $0x38] sm:$0x1]
        %v6678 = vld [vmem:[#allocation2 + $0x3c] sm:$0xe]
        %v6679 = vld [vmem:[#allocation2 + $0x40] sm:$0xf]
        %v6680 = vld [vmem:[#allocation2 + $0x44] sm:$0x1]
        %v6681 = vld [vmem:[#allocation2 + $0x48] sm:$0xe]
        %v6682 = vld [vmem:[#allocation2 + $0x4c] sm:$0xf]
        %v6683 = vld [vmem:[#allocation2 + $0x50] sm:$0x1]
        %v6684 = vld [vmem:[#allocation2 + $0x54] sm:$0xe]
        %v6685 = vld [vmem:[#allocation2 + $0x58] sm:$0xf]
        %v6686 = vld [vmem:[#allocation2 + $0x5c] sm:$0x1]
        %v6687 = vld [vmem:[#allocation2 + $0x60] sm:$0xe]
        %v6688 = vld [vmem:[#allocation2 + $0x64] sm:$0xf]
        %v6689 = vld [vmem:[#allocation2 + $0x68] sm:$0x1]
        %v6690 = vld [vmem:[#allocation2 + $0x6c] sm:$0xe]
        %v6691 = vld [vmem:[#allocation2 + $0x70] sm:$0xf]
        %v6692 = vld [vmem:[#allocation2 + $0x74] sm:$0x1]
        %v6693 = vld [vmem:[#allocation2 + $0x78] sm:$0xe]
        %v6694 = vld [vmem:[#allocation2 + $0x7c] sm:$0xf]
        %v6695 = vld [vmem:[#allocation2 + $0x80] sm:$0x1]
        %v6696 = vld [vmem:[#allocation2 + $0x84] sm:$0xe]
        %v6697 = vld [vmem:[#allocation2 + $0x88] sm:$0xf]
        %v6698 = vld [vmem:[#allocation2 + $0x8c] sm:$0x1]
        %v6699 = vld [vmem:[#allocation2 + $0x90] sm:$0xe]
        %v6700 = vld [vmem:[#allocation2 + $0x94] sm:$0xf]
        %v6701 = vld [vmem:[#allocation2 + $0x98] sm:$0x1]
        %v6702 = vld [vmem:[#allocation2 + $0x9c] sm:$0xe]
        %v6703 = vld [vmem:[#allocation2 + $0xa0] sm:$0xf]
        %v6704 = vld [vmem:[#allocation2 + $0xa4] sm:$0x1]
        %v6705 = vld [vmem:[#allocation2 + $0xa8] sm:$0xe]
        %v6706 = vld [vmem:[#allocation2 + $0xac] sm:$0xf]
        %v6707 = vld [vmem:[#allocation2 + $0xb0] sm:$0x1]
        %v6708 = vld [vmem:[#allocation2 + $0xb4] sm:$0xe]
        %v6709 = vld [vmem:[#allocation2 + $0xb8] sm:$0xf]
        %v6710 = vld [vmem:[#allocation2 + $0xbc] sm:$0x1]
        %v6759 = vrot.slane %v6663, 5
        %v6760 = vrot.slane %v6759, 4
        %v6761 = vrot.slane %v6664, 5
        %v6762 = vsel %vm1490, %v6760, %v6761
        %v6763 = vrot.slane %v6761, 4
        %v6764 = vrot.slane %v6665, 5
        %v6765 = vsel %vm1490, %v6763, %v6764
        %v6766 = vrot.slane %v6666, 5
        %v6767 = vrot.slane %v6766, 4
        %v6768 = vrot.slane %v6667, 5
        %v6769 = vsel %vm1490, %v6767, %v6768
        %v6770 = vrot.slane %v6768, 4
        %v6771 = vrot.slane %v6668, 5
        %v6772 = vsel %vm1490, %v6770, %v6771
        %v6773 = vrot.slane %v6669, 5
        %v6774 = vrot.slane %v6773, 4
        %v6775 = vrot.slane %v6670, 5
        %v6776 = vsel %vm1490, %v6774, %v6775
        %v6777 = vrot.slane %v6775, 4
        %v6778 = vrot.slane %v6671, 5
        %v6779 = vsel %vm1490, %v6777, %v6778
        %v6780 = vrot.slane %v6672, 5
        %v6781 = vrot.slane %v6780, 4
        %v6782 = vrot.slane %v6673, 5
        %v6783 = vsel %vm1490, %v6781, %v6782
        %v6784 = vrot.slane %v6782, 4
        %v6785 = vrot.slane %v6674, 5
        %v6786 = vsel %vm1490, %v6784, %v6785
        %v6787 = vrot.slane %v6675, 5
        %v6788 = vrot.slane %v6787, 4
        %v6789 = vrot.slane %v6676, 5
        %v6790 = vsel %vm1490, %v6788, %v6789
        %v6791 = vrot.slane %v6789, 4
        %v6792 = vrot.slane %v6677, 5
        %v6793 = vsel %vm1490, %v6791, %v6792
        %v6794 = vrot.slane %v6678, 5
        %v6795 = vrot.slane %v6794, 4
        %v6796 = vrot.slane %v6679, 5
        %v6797 = vsel %vm1490, %v6795, %v6796
        %v6798 = vrot.slane %v6796, 4
        %v6799 = vrot.slane %v6680, 5
        %v6800 = vsel %vm1490, %v6798, %v6799
        %v6801 = vrot.slane %v6681, 5
        %v6802 = vrot.slane %v6801, 4
        %v6803 = vrot.slane %v6682, 5
        %v6804 = vsel %vm1490, %v6802, %v6803
        %v6805 = vrot.slane %v6803, 4
        %v6806 = vrot.slane %v6683, 5
        %v6807 = vsel %vm1490, %v6805, %v6806
        %v6808 = vrot.slane %v6684, 5
        %v6809 = vrot.slane %v6808, 4
        %v6810 = vrot.slane %v6685, 5
        %v6811 = vsel %vm1490, %v6809, %v6810
        %v6812 = vrot.slane %v6810, 4
        %v6813 = vrot.slane %v6686, 5
        %v6814 = vsel %vm1490, %v6812, %v6813
        %v6815 = vrot.slane %v6687, 5
        %v6816 = vrot.slane %v6815, 4
        %v6817 = vrot.slane %v6688, 5
        %v6818 = vsel %vm1490, %v6816, %v6817
        %v6819 = vrot.slane %v6817, 4
        %v6820 = vrot.slane %v6689, 5
        %v6821 = vsel %vm1490, %v6819, %v6820
        %v6822 = vrot.slane %v6690, 5
        %v6823 = vrot.slane %v6822, 4
        %v6824 = vrot.slane %v6691, 5
        %v6825 = vsel %vm1490, %v6823, %v6824
        %v6826 = vrot.slane %v6824, 4
        %v6827 = vrot.slane %v6692, 5
        %v6828 = vsel %vm1490, %v6826, %v6827
        %v6829 = vrot.slane %v6693, 5
        %v6830 = vrot.slane %v6829, 4
        %v6831 = vrot.slane %v6694, 5
        %v6832 = vsel %vm1490, %v6830, %v6831
        %v6833 = vrot.slane %v6831, 4
        %v6834 = vrot.slane %v6695, 5
        %v6835 = vsel %vm1490, %v6833, %v6834
        %v6836 = vrot.slane %v6696, 5
        %v6837 = vrot.slane %v6836, 4
        %v6838 = vrot.slane %v6697, 5
        %v6839 = vsel %vm1490, %v6837, %v6838
        %v6840 = vrot.slane %v6838, 4
        %v6841 = vrot.slane %v6698, 5
        %v6842 = vsel %vm1490, %v6840, %v6841
        %v6843 = vrot.slane %v6699, 5
        %v6844 = vrot.slane %v6843, 4
        %v6845 = vrot.slane %v6700, 5
        %v6846 = vsel %vm1490, %v6844, %v6845
        %v6847 = vrot.slane %v6845, 4
        %v6848 = vrot.slane %v6701, 5
        %v6849 = vsel %vm1490, %v6847, %v6848
        %v6850 = vrot.slane %v6702, 5
        %v6851 = vrot.slane %v6850, 4
        %v6852 = vrot.slane %v6703, 5
        %v6853 = vsel %vm1490, %v6851, %v6852
        %v6854 = vrot.slane %v6852, 4
        %v6855 = vrot.slane %v6704, 5
        %v6856 = vsel %vm1490, %v6854, %v6855
        %v6857 = vrot.slane %v6705, 5
        %v6858 = vrot.slane %v6857, 4
        %v6859 = vrot.slane %v6706, 5
        %v6860 = vsel %vm1490, %v6858, %v6859
        %v6861 = vrot.slane %v6859, 4
        %v6862 = vrot.slane %v6707, 5
        %v6863 = vsel %vm1490, %v6861, %v6862
        %v6864 = vrot.slane %v6708, 5
        %v6865 = vrot.slane %v6864, 4
        %v6866 = vrot.slane %v6709, 5
        %v6867 = vsel %vm1490, %v6865, %v6866
        %v6868 = vrot.slane %v6866, 4
        %v6869 = vrot.slane %v6710, 5
        %v6870 = vsel %vm1490, %v6868, %v6869
        %6903 = vst [vmem:[#allocation3 + $0x8] sm:$0xf] %v6762
        %6904 = vst [vmem:[#allocation3 + $0x2c] sm:$0xf] %v6765
        %6905 = vst [vmem:[#allocation3 + $0x50] sm:$0xf] %v6769
        %6906 = vst [vmem:[#allocation3 + $0x74] sm:$0xf] %v6772
        %6907 = vst [vmem:[#allocation3 + $0x98] sm:$0xf] %v6776
        %6908 = vst [vmem:[#allocation3 + $0xbc] sm:$0xf] %v6779
        %6909 = vst [vmem:[#allocation3 + $0xe0] sm:$0xf] %v6783
        %6910 = vst [vmem:[#allocation3 + $0x104] sm:$0xf] %v6786
        %6911 = vst [vmem:[#allocation3 + $0x128] sm:$0xf] %v6790
        %6912 = vst [vmem:[#allocation3 + $0x14c] sm:$0xf] %v6793
        %6913 = vst [vmem:[#allocation3 + $0x170] sm:$0xf] %v6797
        %6914 = vst [vmem:[#allocation3 + $0x194] sm:$0xf] %v6800
        %6915 = vst [vmem:[#allocation3 + $0x1b8] sm:$0xf] %v6804
        %6916 = vst [vmem:[#allocation3 + $0x1dc] sm:$0xf] %v6807
        %6917 = vst [vmem:[#allocation3 + $0x200] sm:$0xf] %v6811
        %6918 = vst [vmem:[#allocation3 + $0x224] sm:$0xf] %v6814
        %6919 = vst [vmem:[#allocation3 + $0x248] sm:$0xf] %v6818
        %6920 = vst [vmem:[#allocation3 + $0x26c] sm:$0xf] %v6821
        %6921 = vst [vmem:[#allocation3 + $0x290] sm:$0xf] %v6825
        %6922 = vst [vmem:[#allocation3 + $0x2b4] sm:$0xf] %v6828
        %6923 = vst [vmem:[#allocation3 + $0x2d8] sm:$0xf] %v6832
        %6924 = vst [vmem:[#allocation3 + $0x2fc] sm:$0xf] %v6835
        %6925 = vst [vmem:[#allocation3 + $0x320] sm:$0xf] %v6839
        %6926 = vst [vmem:[#allocation3 + $0x344] sm:$0xf] %v6842
        %6927 = vst [vmem:[#allocation3 + $0x368] sm:$0xf] %v6846
        %6928 = vst [vmem:[#allocation3 + $0x38c] sm:$0xf] %v6849
        %6929 = vst [vmem:[#allocation3 + $0x3b0] sm:$0xf] %v6853
        %6930 = vst [vmem:[#allocation3 + $0x3d4] sm:$0xf] %v6856
        %6931 = vst [vmem:[#allocation3 + $0x3f8] sm:$0xf] %v6860
        %6932 = vst [vmem:[#allocation3 + $0x41c] sm:$0xf] %v6863
        %6933 = vst [vmem:[#allocation3 + $0x440] sm:$0xf] %v6867
        %6934 = vst [vmem:[#allocation3 + $0x464] sm:$0xf] %v6870
        %v6935 = vld [vmem:[%s259] sm:$0xf]
        %v6936 = vld [vmem:[%s259 + $0x4] sm:$0xf]
        %v6937 = vld [vmem:[%s259 + $0xc] sm:$0xf]
        %v6938 = vld [vmem:[%s259 + $0x10] sm:$0xf]
        %v6939 = vld [vmem:[%s259 + $0x18] sm:$0xf]
        %v6940 = vld [vmem:[%s259 + $0x1c] sm:$0xf]
        %v6941 = vld [vmem:[%s259 + $0x24] sm:$0xf]
        %v6942 = vld [vmem:[%s259 + $0x28] sm:$0xf]
        %v6943 = vld [vmem:[%s259 + $0x30] sm:$0xf]
        %v6944 = vld [vmem:[%s259 + $0x34] sm:$0xf]
        %v6945 = vld [vmem:[%s259 + $0x3c] sm:$0xf]
        %v6946 = vld [vmem:[%s259 + $0x40] sm:$0xf]
        %v6947 = vld [vmem:[%s259 + $0x48] sm:$0xf]
        %v6948 = vld [vmem:[%s259 + $0x4c] sm:$0xf]
        %v6949 = vld [vmem:[%s259 + $0x54] sm:$0xf]
        %v6950 = vld [vmem:[%s259 + $0x58] sm:$0xf]
        %v6951 = vld [vmem:[%s259 + $0x60] sm:$0xf]
        %v6952 = vld [vmem:[%s259 + $0x64] sm:$0xf]
        %v6953 = vld [vmem:[%s259 + $0x6c] sm:$0xf]
        %v6954 = vld [vmem:[%s259 + $0x70] sm:$0xf]
        %v6955 = vld [vmem:[%s259 + $0x78] sm:$0xf]
        %v6956 = vld [vmem:[%s259 + $0x7c] sm:$0xf]
        %v6957 = vld [vmem:[%s259 + $0x84] sm:$0xf]
        %v6958 = vld [vmem:[%s259 + $0x88] sm:$0xf]
        %v6959 = vld [vmem:[%s259 + $0x90] sm:$0xf]
        %v6960 = vld [vmem:[%s259 + $0x94] sm:$0xf]
        %v6961 = vld [vmem:[%s259 + $0x9c] sm:$0xf]
        %v6962 = vld [vmem:[%s259 + $0xa0] sm:$0xf]
        %v6963 = vld [vmem:[%s259 + $0xa8] sm:$0xf]
        %v6964 = vld [vmem:[%s259 + $0xac] sm:$0xf]
        %v6965 = vld [vmem:[%s259 + $0xb4] sm:$0xf]
        %v6966 = vld [vmem:[%s259 + $0xb8] sm:$0xf]
        %6967 = vst [vmem:[#allocation3 + $0xc] sm:$0xf] %v6935
        %6968 = vst [vmem:[#allocation3 + $0x30] sm:$0xf] %v6936
        %6969 = vst [vmem:[#allocation3 + $0x54] sm:$0xf] %v6937
        %6970 = vst [vmem:[#allocation3 + $0x78] sm:$0xf] %v6938
        %6971 = vst [vmem:[#allocation3 + $0x9c] sm:$0xf] %v6939
        %6972 = vst [vmem:[#allocation3 + $0xc0] sm:$0xf] %v6940
        %6973 = vst [vmem:[#allocation3 + $0xe4] sm:$0xf] %v6941
        %6974 = vst [vmem:[#allocation3 + $0x108] sm:$0xf] %v6942
        %6975 = vst [vmem:[#allocation3 + $0x12c] sm:$0xf] %v6943
        %6976 = vst [vmem:[#allocation3 + $0x150] sm:$0xf] %v6944
        %6977 = vst [vmem:[#allocation3 + $0x174] sm:$0xf] %v6945
        %6978 = vst [vmem:[#allocation3 + $0x198] sm:$0xf] %v6946
        %6979 = vst [vmem:[#allocation3 + $0x1bc] sm:$0xf] %v6947
        %6980 = vst [vmem:[#allocation3 + $0x1e0] sm:$0xf] %v6948
        %6981 = vst [vmem:[#allocation3 + $0x204] sm:$0xf] %v6949
        %6982 = vst [vmem:[#allocation3 + $0x228] sm:$0xf] %v6950
        %6983 = vst [vmem:[#allocation3 + $0x24c] sm:$0xf] %v6951
        %6984 = vst [vmem:[#allocation3 + $0x270] sm:$0xf] %v6952
        %6985 = vst [vmem:[#allocation3 + $0x294] sm:$0xf] %v6953
        %6986 = vst [vmem:[#allocation3 + $0x2b8] sm:$0xf] %v6954
        %6987 = vst [vmem:[#allocation3 + $0x2dc] sm:$0xf] %v6955
        %6988 = vst [vmem:[#allocation3 + $0x300] sm:$0xf] %v6956
        %6989 = vst [vmem:[#allocation3 + $0x324] sm:$0xf] %v6957
        %6990 = vst [vmem:[#allocation3 + $0x348] sm:$0xf] %v6958
        %6991 = vst [vmem:[#allocation3 + $0x36c] sm:$0xf] %v6959
        %6992 = vst [vmem:[#allocation3 + $0x390] sm:$0xf] %v6960
        %6993 = vst [vmem:[#allocation3 + $0x3b4] sm:$0xf] %v6961
        %6994 = vst [vmem:[#allocation3 + $0x3d8] sm:$0xf] %v6962
        %6995 = vst [vmem:[#allocation3 + $0x3fc] sm:$0xf] %v6963
        %6996 = vst [vmem:[#allocation3 + $0x420] sm:$0xf] %v6964
        %6997 = vst [vmem:[#allocation3 + $0x444] sm:$0xf] %v6965
        %6998 = vst [vmem:[#allocation3 + $0x468] sm:$0xf] %v6966
        %v6999 = vld [vmem:[%s259] sm:$0xf]
        %v7000 = vld [vmem:[%s259 + $0x4] sm:$0xf]
        %v7001 = vld [vmem:[%s259 + $0x8] sm:$0x1]
        %v7002 = vld [vmem:[%s259 + $0xc] sm:$0xf]
        %v7003 = vld [vmem:[%s259 + $0x10] sm:$0xf]
        %v7004 = vld [vmem:[%s259 + $0x14] sm:$0x1]
        %v7005 = vld [vmem:[%s259 + $0x18] sm:$0xf]
        %v7006 = vld [vmem:[%s259 + $0x1c] sm:$0xf]
        %v7007 = vld [vmem:[%s259 + $0x20] sm:$0x1]
        %v7008 = vld [vmem:[%s259 + $0x24] sm:$0xf]
        %v7009 = vld [vmem:[%s259 + $0x28] sm:$0xf]
        %v7010 = vld [vmem:[%s259 + $0x2c] sm:$0x1]
        %v7011 = vld [vmem:[%s259 + $0x30] sm:$0xf]
        %v7012 = vld [vmem:[%s259 + $0x34] sm:$0xf]
        %v7013 = vld [vmem:[%s259 + $0x38] sm:$0x1]
        %v7014 = vld [vmem:[%s259 + $0x3c] sm:$0xf]
        %v7015 = vld [vmem:[%s259 + $0x40] sm:$0xf]
        %v7016 = vld [vmem:[%s259 + $0x44] sm:$0x1]
        %v7017 = vld [vmem:[%s259 + $0x48] sm:$0xf]
        %v7018 = vld [vmem:[%s259 + $0x4c] sm:$0xf]
        %v7019 = vld [vmem:[%s259 + $0x50] sm:$0x1]
        %v7020 = vld [vmem:[%s259 + $0x54] sm:$0xf]
        %v7021 = vld [vmem:[%s259 + $0x58] sm:$0xf]
        %v7022 = vld [vmem:[%s259 + $0x5c] sm:$0x1]
        %v7023 = vld [vmem:[%s259 + $0x60] sm:$0xf]
        %v7024 = vld [vmem:[%s259 + $0x64] sm:$0xf]
        %v7025 = vld [vmem:[%s259 + $0x68] sm:$0x1]
        %v7026 = vld [vmem:[%s259 + $0x6c] sm:$0xf]
        %v7027 = vld [vmem:[%s259 + $0x70] sm:$0xf]
        %v7028 = vld [vmem:[%s259 + $0x74] sm:$0x1]
        %v7029 = vld [vmem:[%s259 + $0x78] sm:$0xf]
        %v7030 = vld [vmem:[%s259 + $0x7c] sm:$0xf]
        %v7031 = vld [vmem:[%s259 + $0x80] sm:$0x1]
        %v7032 = vld [vmem:[%s259 + $0x84] sm:$0xf]
        %v7033 = vld [vmem:[%s259 + $0x88] sm:$0xf]
        %v7034 = vld [vmem:[%s259 + $0x8c] sm:$0x1]
        %v7035 = vld [vmem:[%s259 + $0x90] sm:$0xf]
        %v7036 = vld [vmem:[%s259 + $0x94] sm:$0xf]
        %v7037 = vld [vmem:[%s259 + $0x98] sm:$0x1]
        %v7038 = vld [vmem:[%s259 + $0x9c] sm:$0xf]
        %v7039 = vld [vmem:[%s259 + $0xa0] sm:$0xf]
        %v7040 = vld [vmem:[%s259 + $0xa4] sm:$0x1]
        %v7041 = vld [vmem:[%s259 + $0xa8] sm:$0xf]
        %v7042 = vld [vmem:[%s259 + $0xac] sm:$0xf]
        %v7043 = vld [vmem:[%s259 + $0xb0] sm:$0x1]
        %v7044 = vld [vmem:[%s259 + $0xb4] sm:$0xf]
        %v7045 = vld [vmem:[%s259 + $0xb8] sm:$0xf]
        %v7046 = vld [vmem:[%s259 + $0xbc] sm:$0x1]
        %v7048 = vshrl.u32 %v6999, 16
        %v7050 = vrot.slane %v7048, 4
        %v7051 = vshll.u32 %v6999, 16
        %v7053 = vrot.slane %v7051, 5
        %v7054 = vor.u32 %v7050, %v7053
        %v7055 = vrot.slane %v7054, 4
        %v7057 = vshll.u32 %v7000, 16
        %v7059 = vrot.slane %v7057, 5
        %v7060 = vsel %vm943, %v7055, %v7059
        %v7061 = vshrl.u32 %v7000, 16
        %v7063 = vrot.slane %v7061, 4
        %v7064 = vor.u32 %v7063, %v7059
        %v7065 = vrot.slane %v7064, 4
        %v7067 = vshll.u32 %v7001, 16
        %v7069 = vrot.slane %v7067, 5
        %v7070 = vsel %vm943, %v7065, %v7069
        %v7072 = vshrl.u32 %v7002, 16
        %v7074 = vrot.slane %v7072, 4
        %v7075 = vshll.u32 %v7002, 16
        %v7077 = vrot.slane %v7075, 5
        %v7078 = vor.u32 %v7074, %v7077
        %v7079 = vrot.slane %v7078, 4
        %v7081 = vshll.u32 %v7003, 16
        %v7083 = vrot.slane %v7081, 5
        %v7084 = vsel %vm943, %v7079, %v7083
        %v7085 = vshrl.u32 %v7003, 16
        %v7087 = vrot.slane %v7085, 4
        %v7088 = vor.u32 %v7087, %v7083
        %v7089 = vrot.slane %v7088, 4
        %v7091 = vshll.u32 %v7004, 16
        %v7093 = vrot.slane %v7091, 5
        %v7094 = vsel %vm943, %v7089, %v7093
        %v7096 = vshrl.u32 %v7005, 16
        %v7098 = vrot.slane %v7096, 4
        %v7099 = vshll.u32 %v7005, 16
        %v7101 = vrot.slane %v7099, 5
        %v7102 = vor.u32 %v7098, %v7101
        %v7103 = vrot.slane %v7102, 4
        %v7105 = vshll.u32 %v7006, 16
        %v7107 = vrot.slane %v7105, 5
        %v7108 = vsel %vm943, %v7103, %v7107
        %v7109 = vshrl.u32 %v7006, 16
        %v7111 = vrot.slane %v7109, 4
        %v7112 = vor.u32 %v7111, %v7107
        %v7113 = vrot.slane %v7112, 4
        %v7115 = vshll.u32 %v7007, 16
        %v7117 = vrot.slane %v7115, 5
        %v7118 = vsel %vm943, %v7113, %v7117
        %v7120 = vshrl.u32 %v7008, 16
        %v7122 = vrot.slane %v7120, 4
        %v7123 = vshll.u32 %v7008, 16
        %v7125 = vrot.slane %v7123, 5
        %v7126 = vor.u32 %v7122, %v7125
        %v7127 = vrot.slane %v7126, 4
        %v7129 = vshll.u32 %v7009, 16
        %v7131 = vrot.slane %v7129, 5
        %v7132 = vsel %vm943, %v7127, %v7131
        %v7133 = vshrl.u32 %v7009, 16
        %v7135 = vrot.slane %v7133, 4
        %v7136 = vor.u32 %v7135, %v7131
        %v7137 = vrot.slane %v7136, 4
        %v7139 = vshll.u32 %v7010, 16
        %v7141 = vrot.slane %v7139, 5
        %v7142 = vsel %vm943, %v7137, %v7141
        %v7144 = vshrl.u32 %v7011, 16
        %v7146 = vrot.slane %v7144, 4
        %v7147 = vshll.u32 %v7011, 16
        %v7149 = vrot.slane %v7147, 5
        %v7150 = vor.u32 %v7146, %v7149
        %v7151 = vrot.slane %v7150, 4
        %v7153 = vshll.u32 %v7012, 16
        %v7155 = vrot.slane %v7153, 5
        %v7156 = vsel %vm943, %v7151, %v7155
        %v7157 = vshrl.u32 %v7012, 16
        %v7159 = vrot.slane %v7157, 4
        %v7160 = vor.u32 %v7159, %v7155
        %v7161 = vrot.slane %v7160, 4
        %v7163 = vshll.u32 %v7013, 16
        %v7165 = vrot.slane %v7163, 5
        %v7166 = vsel %vm943, %v7161, %v7165
        %v7168 = vshrl.u32 %v7014, 16
        %v7170 = vrot.slane %v7168, 4
        %v7171 = vshll.u32 %v7014, 16
        %v7173 = vrot.slane %v7171, 5
        %v7174 = vor.u32 %v7170, %v7173
        %v7175 = vrot.slane %v7174, 4
        %v7177 = vshll.u32 %v7015, 16
        %v7179 = vrot.slane %v7177, 5
        %v7180 = vsel %vm943, %v7175, %v7179
        %v7181 = vshrl.u32 %v7015, 16
        %v7183 = vrot.slane %v7181, 4
        %v7184 = vor.u32 %v7183, %v7179
        %v7185 = vrot.slane %v7184, 4
        %v7187 = vshll.u32 %v7016, 16
        %v7189 = vrot.slane %v7187, 5
        %v7190 = vsel %vm943, %v7185, %v7189
        %v7192 = vshrl.u32 %v7017, 16
        %v7194 = vrot.slane %v7192, 4
        %v7195 = vshll.u32 %v7017, 16
        %v7197 = vrot.slane %v7195, 5
        %v7198 = vor.u32 %v7194, %v7197
        %v7199 = vrot.slane %v7198, 4
        %v7201 = vshll.u32 %v7018, 16
        %v7203 = vrot.slane %v7201, 5
        %v7204 = vsel %vm943, %v7199, %v7203
        %v7205 = vshrl.u32 %v7018, 16
        %v7207 = vrot.slane %v7205, 4
        %v7208 = vor.u32 %v7207, %v7203
        %v7209 = vrot.slane %v7208, 4
        %v7211 = vshll.u32 %v7019, 16
        %v7213 = vrot.slane %v7211, 5
        %v7214 = vsel %vm943, %v7209, %v7213
        %v7216 = vshrl.u32 %v7020, 16
        %v7218 = vrot.slane %v7216, 4
        %v7219 = vshll.u32 %v7020, 16
        %v7221 = vrot.slane %v7219, 5
        %v7222 = vor.u32 %v7218, %v7221
        %v7223 = vrot.slane %v7222, 4
        %v7225 = vshll.u32 %v7021, 16
        %v7227 = vrot.slane %v7225, 5
        %v7228 = vsel %vm943, %v7223, %v7227
        %v7229 = vshrl.u32 %v7021, 16
        %v7231 = vrot.slane %v7229, 4
        %v7232 = vor.u32 %v7231, %v7227
        %v7233 = vrot.slane %v7232, 4
        %v7235 = vshll.u32 %v7022, 16
        %v7237 = vrot.slane %v7235, 5
        %v7238 = vsel %vm943, %v7233, %v7237
        %v7240 = vshrl.u32 %v7023, 16
        %v7242 = vrot.slane %v7240, 4
        %v7243 = vshll.u32 %v7023, 16
        %v7245 = vrot.slane %v7243, 5
        %v7246 = vor.u32 %v7242, %v7245
        %v7247 = vrot.slane %v7246, 4
        %v7249 = vshll.u32 %v7024, 16
        %v7251 = vrot.slane %v7249, 5
        %v7252 = vsel %vm943, %v7247, %v7251
        %v7253 = vshrl.u32 %v7024, 16
        %v7255 = vrot.slane %v7253, 4
        %v7256 = vor.u32 %v7255, %v7251
        %v7257 = vrot.slane %v7256, 4
        %v7259 = vshll.u32 %v7025, 16
        %v7261 = vrot.slane %v7259, 5
        %v7262 = vsel %vm943, %v7257, %v7261
        %v7264 = vshrl.u32 %v7026, 16
        %v7266 = vrot.slane %v7264, 4
        %v7267 = vshll.u32 %v7026, 16
        %v7269 = vrot.slane %v7267, 5
        %v7270 = vor.u32 %v7266, %v7269
        %v7271 = vrot.slane %v7270, 4
        %v7273 = vshll.u32 %v7027, 16
        %v7275 = vrot.slane %v7273, 5
        %v7276 = vsel %vm943, %v7271, %v7275
        %v7277 = vshrl.u32 %v7027, 16
        %v7279 = vrot.slane %v7277, 4
        %v7280 = vor.u32 %v7279, %v7275
        %v7281 = vrot.slane %v7280, 4
        %v7283 = vshll.u32 %v7028, 16
        %v7285 = vrot.slane %v7283, 5
        %v7286 = vsel %vm943, %v7281, %v7285
        %v7288 = vshrl.u32 %v7029, 16
        %v7290 = vrot.slane %v7288, 4
        %v7291 = vshll.u32 %v7029, 16
        %v7293 = vrot.slane %v7291, 5
        %v7294 = vor.u32 %v7290, %v7293
        %v7295 = vrot.slane %v7294, 4
        %v7297 = vshll.u32 %v7030, 16
        %v7299 = vrot.slane %v7297, 5
        %v7300 = vsel %vm943, %v7295, %v7299
        %v7301 = vshrl.u32 %v7030, 16
        %v7303 = vrot.slane %v7301, 4
        %v7304 = vor.u32 %v7303, %v7299
        %v7305 = vrot.slane %v7304, 4
        %v7307 = vshll.u32 %v7031, 16
        %v7309 = vrot.slane %v7307, 5
        %v7310 = vsel %vm943, %v7305, %v7309
        %v7312 = vshrl.u32 %v7032, 16
        %v7314 = vrot.slane %v7312, 4
        %v7315 = vshll.u32 %v7032, 16
        %v7317 = vrot.slane %v7315, 5
        %v7318 = vor.u32 %v7314, %v7317
        %v7319 = vrot.slane %v7318, 4
        %v7321 = vshll.u32 %v7033, 16
        %v7323 = vrot.slane %v7321, 5
        %v7324 = vsel %vm943, %v7319, %v7323
        %v7325 = vshrl.u32 %v7033, 16
        %v7327 = vrot.slane %v7325, 4
        %v7328 = vor.u32 %v7327, %v7323
        %v7329 = vrot.slane %v7328, 4
        %v7331 = vshll.u32 %v7034, 16
        %v7333 = vrot.slane %v7331, 5
        %v7334 = vsel %vm943, %v7329, %v7333
        %v7336 = vshrl.u32 %v7035, 16
        %v7338 = vrot.slane %v7336, 4
        %v7339 = vshll.u32 %v7035, 16
        %v7341 = vrot.slane %v7339, 5
        %v7342 = vor.u32 %v7338, %v7341
        %v7343 = vrot.slane %v7342, 4
        %v7345 = vshll.u32 %v7036, 16
        %v7347 = vrot.slane %v7345, 5
        %v7348 = vsel %vm943, %v7343, %v7347
        %v7349 = vshrl.u32 %v7036, 16
        %v7351 = vrot.slane %v7349, 4
        %v7352 = vor.u32 %v7351, %v7347
        %v7353 = vrot.slane %v7352, 4
        %v7355 = vshll.u32 %v7037, 16
        %v7357 = vrot.slane %v7355, 5
        %v7358 = vsel %vm943, %v7353, %v7357
        %v7360 = vshrl.u32 %v7038, 16
        %v7362 = vrot.slane %v7360, 4
        %v7363 = vshll.u32 %v7038, 16
        %v7365 = vrot.slane %v7363, 5
        %v7366 = vor.u32 %v7362, %v7365
        %v7367 = vrot.slane %v7366, 4
        %v7369 = vshll.u32 %v7039, 16
        %v7371 = vrot.slane %v7369, 5
        %v7372 = vsel %vm943, %v7367, %v7371
        %v7373 = vshrl.u32 %v7039, 16
        %v7375 = vrot.slane %v7373, 4
        %v7376 = vor.u32 %v7375, %v7371
        %v7377 = vrot.slane %v7376, 4
        %v7379 = vshll.u32 %v7040, 16
        %v7381 = vrot.slane %v7379, 5
        %v7382 = vsel %vm943, %v7377, %v7381
        %v7384 = vshrl.u32 %v7041, 16
        %v7386 = vrot.slane %v7384, 4
        %v7387 = vshll.u32 %v7041, 16
        %v7389 = vrot.slane %v7387, 5
        %v7390 = vor.u32 %v7386, %v7389
        %v7391 = vrot.slane %v7390, 4
        %v7393 = vshll.u32 %v7042, 16
        %v7395 = vrot.slane %v7393, 5
        %v7396 = vsel %vm943, %v7391, %v7395
        %v7397 = vshrl.u32 %v7042, 16
        %v7399 = vrot.slane %v7397, 4
        %v7400 = vor.u32 %v7399, %v7395
        %v7401 = vrot.slane %v7400, 4
        %v7403 = vshll.u32 %v7043, 16
        %v7405 = vrot.slane %v7403, 5
        %v7406 = vsel %vm943, %v7401, %v7405
        %v7408 = vshrl.u32 %v7044, 16
        %v7410 = vrot.slane %v7408, 4
        %v7411 = vshll.u32 %v7044, 16
        %v7413 = vrot.slane %v7411, 5
        %v7414 = vor.u32 %v7410, %v7413
        %v7415 = vrot.slane %v7414, 4
        %v7417 = vshll.u32 %v7045, 16
        %v7419 = vrot.slane %v7417, 5
        %v7420 = vsel %vm943, %v7415, %v7419
        %v7421 = vshrl.u32 %v7045, 16
        %v7423 = vrot.slane %v7421, 4
        %v7424 = vor.u32 %v7423, %v7419
        %v7425 = vrot.slane %v7424, 4
        %v7427 = vshll.u32 %v7046, 16
        %v7429 = vrot.slane %v7427, 5
        %v7430 = vsel %vm943, %v7425, %v7429
        %7463 = vst [vmem:[#allocation3 + $0x10] sm:$0xf] %v7060
        %7464 = vst [vmem:[#allocation3 + $0x34] sm:$0xf] %v7070
        %7465 = vst [vmem:[#allocation3 + $0x58] sm:$0xf] %v7084
        %7466 = vst [vmem:[#allocation3 + $0x7c] sm:$0xf] %v7094
        %7467 = vst [vmem:[#allocation3 + $0xa0] sm:$0xf] %v7108
        %7468 = vst [vmem:[#allocation3 + $0xc4] sm:$0xf] %v7118
        %7469 = vst [vmem:[#allocation3 + $0xe8] sm:$0xf] %v7132
        %7470 = vst [vmem:[#allocation3 + $0x10c] sm:$0xf] %v7142
        %7471 = vst [vmem:[#allocation3 + $0x130] sm:$0xf] %v7156
        %7472 = vst [vmem:[#allocation3 + $0x154] sm:$0xf] %v7166
        %7473 = vst [vmem:[#allocation3 + $0x178] sm:$0xf] %v7180
        %7474 = vst [vmem:[#allocation3 + $0x19c] sm:$0xf] %v7190
        %7475 = vst [vmem:[#allocation3 + $0x1c0] sm:$0xf] %v7204
        %7476 = vst [vmem:[#allocation3 + $0x1e4] sm:$0xf] %v7214
        %7477 = vst [vmem:[#allocation3 + $0x208] sm:$0xf] %v7228
        %7478 = vst [vmem:[#allocation3 + $0x22c] sm:$0xf] %v7238
        %7479 = vst [vmem:[#allocation3 + $0x250] sm:$0xf] %v7252
        %7480 = vst [vmem:[#allocation3 + $0x274] sm:$0xf] %v7262
        %7481 = vst [vmem:[#allocation3 + $0x298] sm:$0xf] %v7276
        %7482 = vst [vmem:[#allocation3 + $0x2bc] sm:$0xf] %v7286
        %7483 = vst [vmem:[#allocation3 + $0x2e0] sm:$0xf] %v7300
        %7484 = vst [vmem:[#allocation3 + $0x304] sm:$0xf] %v7310
        %7485 = vst [vmem:[#allocation3 + $0x328] sm:$0xf] %v7324
        %7486 = vst [vmem:[#allocation3 + $0x34c] sm:$0xf] %v7334
        %7487 = vst [vmem:[#allocation3 + $0x370] sm:$0xf] %v7348
        %7488 = vst [vmem:[#allocation3 + $0x394] sm:$0xf] %v7358
        %7489 = vst [vmem:[#allocation3 + $0x3b8] sm:$0xf] %v7372
        %7490 = vst [vmem:[#allocation3 + $0x3dc] sm:$0xf] %v7382
        %7491 = vst [vmem:[#allocation3 + $0x400] sm:$0xf] %v7396
        %7492 = vst [vmem:[#allocation3 + $0x424] sm:$0xf] %v7406
        %7493 = vst [vmem:[#allocation3 + $0x448] sm:$0xf] %v7420
        %7494 = vst [vmem:[#allocation3 + $0x46c] sm:$0xf] %v7430
        %v7495 = vld [vmem:[%s259] sm:$0xe]
        %v7496 = vld [vmem:[%s259 + $0x4] sm:$0xf]
        %v7497 = vld [vmem:[%s259 + $0x8] sm:$0x1]
        %v7498 = vld [vmem:[%s259 + $0xc] sm:$0xe]
        %v7499 = vld [vmem:[%s259 + $0x10] sm:$0xf]
        %v7500 = vld [vmem:[%s259 + $0x14] sm:$0x1]
        %v7501 = vld [vmem:[%s259 + $0x18] sm:$0xe]
        %v7502 = vld [vmem:[%s259 + $0x1c] sm:$0xf]
        %v7503 = vld [vmem:[%s259 + $0x20] sm:$0x1]
        %v7504 = vld [vmem:[%s259 + $0x24] sm:$0xe]
        %v7505 = vld [vmem:[%s259 + $0x28] sm:$0xf]
        %v7506 = vld [vmem:[%s259 + $0x2c] sm:$0x1]
        %v7507 = vld [vmem:[%s259 + $0x30] sm:$0xe]
        %v7508 = vld [vmem:[%s259 + $0x34] sm:$0xf]
        %v7509 = vld [vmem:[%s259 + $0x38] sm:$0x1]
        %v7510 = vld [vmem:[%s259 + $0x3c] sm:$0xe]
        %v7511 = vld [vmem:[%s259 + $0x40] sm:$0xf]
        %v7512 = vld [vmem:[%s259 + $0x44] sm:$0x1]
        %v7513 = vld [vmem:[%s259 + $0x48] sm:$0xe]
        %v7514 = vld [vmem:[%s259 + $0x4c] sm:$0xf]
        %v7515 = vld [vmem:[%s259 + $0x50] sm:$0x1]
        %v7516 = vld [vmem:[%s259 + $0x54] sm:$0xe]
        %v7517 = vld [vmem:[%s259 + $0x58] sm:$0xf]
        %v7518 = vld [vmem:[%s259 + $0x5c] sm:$0x1]
        %v7519 = vld [vmem:[%s259 + $0x60] sm:$0xe]
        %v7520 = vld [vmem:[%s259 + $0x64] sm:$0xf]
        %v7521 = vld [vmem:[%s259 + $0x68] sm:$0x1]
        %v7522 = vld [vmem:[%s259 + $0x6c] sm:$0xe]
        %v7523 = vld [vmem:[%s259 + $0x70] sm:$0xf]
        %v7524 = vld [vmem:[%s259 + $0x74] sm:$0x1]
        %v7525 = vld [vmem:[%s259 + $0x78] sm:$0xe]
        %v7526 = vld [vmem:[%s259 + $0x7c] sm:$0xf]
        %v7527 = vld [vmem:[%s259 + $0x80] sm:$0x1]
        %v7528 = vld [vmem:[%s259 + $0x84] sm:$0xe]
        %v7529 = vld [vmem:[%s259 + $0x88] sm:$0xf]
        %v7530 = vld [vmem:[%s259 + $0x8c] sm:$0x1]
        %v7531 = vld [vmem:[%s259 + $0x90] sm:$0xe]
        %v7532 = vld [vmem:[%s259 + $0x94] sm:$0xf]
        %v7533 = vld [vmem:[%s259 + $0x98] sm:$0x1]
        %v7534 = vld [vmem:[%s259 + $0x9c] sm:$0xe]
        %v7535 = vld [vmem:[%s259 + $0xa0] sm:$0xf]
        %v7536 = vld [vmem:[%s259 + $0xa4] sm:$0x1]
        %v7537 = vld [vmem:[%s259 + $0xa8] sm:$0xe]
        %v7538 = vld [vmem:[%s259 + $0xac] sm:$0xf]
        %v7539 = vld [vmem:[%s259 + $0xb0] sm:$0x1]
        %v7540 = vld [vmem:[%s259 + $0xb4] sm:$0xe]
        %v7541 = vld [vmem:[%s259 + $0xb8] sm:$0xf]
        %v7542 = vld [vmem:[%s259 + $0xbc] sm:$0x1]
        %v7591 = vrot.slane %v7495, 5
        %v7592 = vrot.slane %v7591, 4
        %v7593 = vrot.slane %v7496, 5
        %v7594 = vsel %vm1490, %v7592, %v7593
        %v7595 = vrot.slane %v7593, 4
        %v7596 = vrot.slane %v7497, 5
        %v7597 = vsel %vm1490, %v7595, %v7596
        %v7598 = vrot.slane %v7498, 5
        %v7599 = vrot.slane %v7598, 4
        %v7600 = vrot.slane %v7499, 5
        %v7601 = vsel %vm1490, %v7599, %v7600
        %v7602 = vrot.slane %v7600, 4
        %v7603 = vrot.slane %v7500, 5
        %v7604 = vsel %vm1490, %v7602, %v7603
        %v7605 = vrot.slane %v7501, 5
        %v7606 = vrot.slane %v7605, 4
        %v7607 = vrot.slane %v7502, 5
        %v7608 = vsel %vm1490, %v7606, %v7607
        %v7609 = vrot.slane %v7607, 4
        %v7610 = vrot.slane %v7503, 5
        %v7611 = vsel %vm1490, %v7609, %v7610
        %v7612 = vrot.slane %v7504, 5
        %v7613 = vrot.slane %v7612, 4
        %v7614 = vrot.slane %v7505, 5
        %v7615 = vsel %vm1490, %v7613, %v7614
        %v7616 = vrot.slane %v7614, 4
        %v7617 = vrot.slane %v7506, 5
        %v7618 = vsel %vm1490, %v7616, %v7617
        %v7619 = vrot.slane %v7507, 5
        %v7620 = vrot.slane %v7619, 4
        %v7621 = vrot.slane %v7508, 5
        %v7622 = vsel %vm1490, %v7620, %v7621
        %v7623 = vrot.slane %v7621, 4
        %v7624 = vrot.slane %v7509, 5
        %v7625 = vsel %vm1490, %v7623, %v7624
        %v7626 = vrot.slane %v7510, 5
        %v7627 = vrot.slane %v7626, 4
        %v7628 = vrot.slane %v7511, 5
        %v7629 = vsel %vm1490, %v7627, %v7628
        %v7630 = vrot.slane %v7628, 4
        %v7631 = vrot.slane %v7512, 5
        %v7632 = vsel %vm1490, %v7630, %v7631
        %v7633 = vrot.slane %v7513, 5
        %v7634 = vrot.slane %v7633, 4
        %v7635 = vrot.slane %v7514, 5
        %v7636 = vsel %vm1490, %v7634, %v7635
        %v7637 = vrot.slane %v7635, 4
        %v7638 = vrot.slane %v7515, 5
        %v7639 = vsel %vm1490, %v7637, %v7638
        %v7640 = vrot.slane %v7516, 5
        %v7641 = vrot.slane %v7640, 4
        %v7642 = vrot.slane %v7517, 5
        %v7643 = vsel %vm1490, %v7641, %v7642
        %v7644 = vrot.slane %v7642, 4
        %v7645 = vrot.slane %v7518, 5
        %v7646 = vsel %vm1490, %v7644, %v7645
        %v7647 = vrot.slane %v7519, 5
        %v7648 = vrot.slane %v7647, 4
        %v7649 = vrot.slane %v7520, 5
        %v7650 = vsel %vm1490, %v7648, %v7649
        %v7651 = vrot.slane %v7649, 4
        %v7652 = vrot.slane %v7521, 5
        %v7653 = vsel %vm1490, %v7651, %v7652
        %v7654 = vrot.slane %v7522, 5
        %v7655 = vrot.slane %v7654, 4
        %v7656 = vrot.slane %v7523, 5
        %v7657 = vsel %vm1490, %v7655, %v7656
        %v7658 = vrot.slane %v7656, 4
        %v7659 = vrot.slane %v7524, 5
        %v7660 = vsel %vm1490, %v7658, %v7659
        %v7661 = vrot.slane %v7525, 5
        %v7662 = vrot.slane %v7661, 4
        %v7663 = vrot.slane %v7526, 5
        %v7664 = vsel %vm1490, %v7662, %v7663
        %v7665 = vrot.slane %v7663, 4
        %v7666 = vrot.slane %v7527, 5
        %v7667 = vsel %vm1490, %v7665, %v7666
        %v7668 = vrot.slane %v7528, 5
        %v7669 = vrot.slane %v7668, 4
        %v7670 = vrot.slane %v7529, 5
        %v7671 = vsel %vm1490, %v7669, %v7670
        %v7672 = vrot.slane %v7670, 4
        %v7673 = vrot.slane %v7530, 5
        %v7674 = vsel %vm1490, %v7672, %v7673
        %v7675 = vrot.slane %v7531, 5
        %v7676 = vrot.slane %v7675, 4
        %v7677 = vrot.slane %v7532, 5
        %v7678 = vsel %vm1490, %v7676, %v7677
        %v7679 = vrot.slane %v7677, 4
        %v7680 = vrot.slane %v7533, 5
        %v7681 = vsel %vm1490, %v7679, %v7680
        %v7682 = vrot.slane %v7534, 5
        %v7683 = vrot.slane %v7682, 4
        %v7684 = vrot.slane %v7535, 5
        %v7685 = vsel %vm1490, %v7683, %v7684
        %v7686 = vrot.slane %v7684, 4
        %v7687 = vrot.slane %v7536, 5
        %v7688 = vsel %vm1490, %v7686, %v7687
        %v7689 = vrot.slane %v7537, 5
        %v7690 = vrot.slane %v7689, 4
        %v7691 = vrot.slane %v7538, 5
        %v7692 = vsel %vm1490, %v7690, %v7691
        %v7693 = vrot.slane %v7691, 4
        %v7694 = vrot.slane %v7539, 5
        %v7695 = vsel %vm1490, %v7693, %v7694
        %v7696 = vrot.slane %v7540, 5
        %v7697 = vrot.slane %v7696, 4
        %v7698 = vrot.slane %v7541, 5
        %v7699 = vsel %vm1490, %v7697, %v7698
        %v7700 = vrot.slane %v7698, 4
        %v7701 = vrot.slane %v7542, 5
        %v7702 = vsel %vm1490, %v7700, %v7701
        %7735 = vst [vmem:[#allocation3 + $0x14] sm:$0xf] %v7594
        %7736 = vst [vmem:[#allocation3 + $0x38] sm:$0xf] %v7597
        %7737 = vst [vmem:[#allocation3 + $0x5c] sm:$0xf] %v7601
        %7738 = vst [vmem:[#allocation3 + $0x80] sm:$0xf] %v7604
        %7739 = vst [vmem:[#allocation3 + $0xa4] sm:$0xf] %v7608
        %7740 = vst [vmem:[#allocation3 + $0xc8] sm:$0xf] %v7611
        %7741 = vst [vmem:[#allocation3 + $0xec] sm:$0xf] %v7615
        %7742 = vst [vmem:[#allocation3 + $0x110] sm:$0xf] %v7618
        %7743 = vst [vmem:[#allocation3 + $0x134] sm:$0xf] %v7622
        %7744 = vst [vmem:[#allocation3 + $0x158] sm:$0xf] %v7625
        %7745 = vst [vmem:[#allocation3 + $0x17c] sm:$0xf] %v7629
        %7746 = vst [vmem:[#allocation3 + $0x1a0] sm:$0xf] %v7632
        %7747 = vst [vmem:[#allocation3 + $0x1c4] sm:$0xf] %v7636
        %7748 = vst [vmem:[#allocation3 + $0x1e8] sm:$0xf] %v7639
        %7749 = vst [vmem:[#allocation3 + $0x20c] sm:$0xf] %v7643
        %7750 = vst [vmem:[#allocation3 + $0x230] sm:$0xf] %v7646
        %7751 = vst [vmem:[#allocation3 + $0x254] sm:$0xf] %v7650
        %7752 = vst [vmem:[#allocation3 + $0x278] sm:$0xf] %v7653
        %7753 = vst [vmem:[#allocation3 + $0x29c] sm:$0xf] %v7657
        %7754 = vst [vmem:[#allocation3 + $0x2c0] sm:$0xf] %v7660
        %7755 = vst [vmem:[#allocation3 + $0x2e4] sm:$0xf] %v7664
        %7756 = vst [vmem:[#allocation3 + $0x308] sm:$0xf] %v7667
        %7757 = vst [vmem:[#allocation3 + $0x32c] sm:$0xf] %v7671
        %7758 = vst [vmem:[#allocation3 + $0x350] sm:$0xf] %v7674
        %7759 = vst [vmem:[#allocation3 + $0x374] sm:$0xf] %v7678
        %7760 = vst [vmem:[#allocation3 + $0x398] sm:$0xf] %v7681
        %7761 = vst [vmem:[#allocation3 + $0x3bc] sm:$0xf] %v7685
        %7762 = vst [vmem:[#allocation3 + $0x3e0] sm:$0xf] %v7688
        %7763 = vst [vmem:[#allocation3 + $0x404] sm:$0xf] %v7692
        %7764 = vst [vmem:[#allocation3 + $0x428] sm:$0xf] %v7695
        %7765 = vst [vmem:[#allocation3 + $0x44c] sm:$0xf] %v7699
        %7766 = vst [vmem:[#allocation3 + $0x470] sm:$0xf] %v7702
        %v7767 = vld [vmem:[%s2499] sm:$0xf]
        %v7768 = vld [vmem:[%s2499 + $0x4] sm:$0xf]
        %v7769 = vld [vmem:[%s2499 + $0xc] sm:$0xf]
        %v7770 = vld [vmem:[%s2499 + $0x10] sm:$0xf]
        %v7771 = vld [vmem:[%s2499 + $0x18] sm:$0xf]
        %v7772 = vld [vmem:[%s2499 + $0x1c] sm:$0xf]
        %v7773 = vld [vmem:[%s2499 + $0x24] sm:$0xf]
        %v7774 = vld [vmem:[%s2499 + $0x28] sm:$0xf]
        %v7775 = vld [vmem:[%s2499 + $0x30] sm:$0xf]
        %v7776 = vld [vmem:[%s2499 + $0x34] sm:$0xf]
        %v7777 = vld [vmem:[%s2499 + $0x3c] sm:$0xf]
        %v7778 = vld [vmem:[%s2499 + $0x40] sm:$0xf]
        %v7779 = vld [vmem:[%s2499 + $0x48] sm:$0xf]
        %v7780 = vld [vmem:[%s2499 + $0x4c] sm:$0xf]
        %v7781 = vld [vmem:[%s2499 + $0x54] sm:$0xf]
        %v7782 = vld [vmem:[%s2499 + $0x58] sm:$0xf]
        %v7783 = vld [vmem:[%s2499 + $0x60] sm:$0xf]
        %v7784 = vld [vmem:[%s2499 + $0x64] sm:$0xf]
        %v7785 = vld [vmem:[%s2499 + $0x6c] sm:$0xf]
        %v7786 = vld [vmem:[%s2499 + $0x70] sm:$0xf]
        %v7787 = vld [vmem:[%s2499 + $0x78] sm:$0xf]
        %v7788 = vld [vmem:[%s2499 + $0x7c] sm:$0xf]
        %v7789 = vld [vmem:[%s2499 + $0x84] sm:$0xf]
        %v7790 = vld [vmem:[%s2499 + $0x88] sm:$0xf]
        %v7791 = vld [vmem:[%s2499 + $0x90] sm:$0xf]
        %v7792 = vld [vmem:[%s2499 + $0x94] sm:$0xf]
        %v7793 = vld [vmem:[%s2499 + $0x9c] sm:$0xf]
        %v7794 = vld [vmem:[%s2499 + $0xa0] sm:$0xf]
        %v7795 = vld [vmem:[%s2499 + $0xa8] sm:$0xf]
        %v7796 = vld [vmem:[%s2499 + $0xac] sm:$0xf]
        %v7797 = vld [vmem:[%s2499 + $0xb4] sm:$0xf]
        %v7798 = vld [vmem:[%s2499 + $0xb8] sm:$0xf]
        %7799 = vst [vmem:[#allocation3 + $0x18] sm:$0xf] %v7767
        %7800 = vst [vmem:[#allocation3 + $0x3c] sm:$0xf] %v7768
        %7801 = vst [vmem:[#allocation3 + $0x60] sm:$0xf] %v7769
        %7802 = vst [vmem:[#allocation3 + $0x84] sm:$0xf] %v7770
        %7803 = vst [vmem:[#allocation3 + $0xa8] sm:$0xf] %v7771
        %7804 = vst [vmem:[#allocation3 + $0xcc] sm:$0xf] %v7772
        %7805 = vst [vmem:[#allocation3 + $0xf0] sm:$0xf] %v7773
        %7806 = vst [vmem:[#allocation3 + $0x114] sm:$0xf] %v7774
        %7807 = vst [vmem:[#allocation3 + $0x138] sm:$0xf] %v7775
        %7808 = vst [vmem:[#allocation3 + $0x15c] sm:$0xf] %v7776
        %7809 = vst [vmem:[#allocation3 + $0x180] sm:$0xf] %v7777
        %7810 = vst [vmem:[#allocation3 + $0x1a4] sm:$0xf] %v7778
        %7811 = vst [vmem:[#allocation3 + $0x1c8] sm:$0xf] %v7779
        %7812 = vst [vmem:[#allocation3 + $0x1ec] sm:$0xf] %v7780
        %7813 = vst [vmem:[#allocation3 + $0x210] sm:$0xf] %v7781
        %7814 = vst [vmem:[#allocation3 + $0x234] sm:$0xf] %v7782
        %7815 = vst [vmem:[#allocation3 + $0x258] sm:$0xf] %v7783
        %7816 = vst [vmem:[#allocation3 + $0x27c] sm:$0xf] %v7784
        %7817 = vst [vmem:[#allocation3 + $0x2a0] sm:$0xf] %v7785
        %7818 = vst [vmem:[#allocation3 + $0x2c4] sm:$0xf] %v7786
        %7819 = vst [vmem:[#allocation3 + $0x2e8] sm:$0xf] %v7787
        %7820 = vst [vmem:[#allocation3 + $0x30c] sm:$0xf] %v7788
        %7821 = vst [vmem:[#allocation3 + $0x330] sm:$0xf] %v7789
        %7822 = vst [vmem:[#allocation3 + $0x354] sm:$0xf] %v7790
        %7823 = vst [vmem:[#allocation3 + $0x378] sm:$0xf] %v7791
        %7824 = vst [vmem:[#allocation3 + $0x39c] sm:$0xf] %v7792
        %7825 = vst [vmem:[#allocation3 + $0x3c0] sm:$0xf] %v7793
        %7826 = vst [vmem:[#allocation3 + $0x3e4] sm:$0xf] %v7794
        %7827 = vst [vmem:[#allocation3 + $0x408] sm:$0xf] %v7795
        %7828 = vst [vmem:[#allocation3 + $0x42c] sm:$0xf] %v7796
        %7829 = vst [vmem:[#allocation3 + $0x450] sm:$0xf] %v7797
        %7830 = vst [vmem:[#allocation3 + $0x474] sm:$0xf] %v7798
        %v7831 = vld [vmem:[%s2499] sm:$0xf]
        %v7832 = vld [vmem:[%s2499 + $0x4] sm:$0xf]
        %v7833 = vld [vmem:[%s2499 + $0x8] sm:$0x1]
        %v7834 = vld [vmem:[%s2499 + $0xc] sm:$0xf]
        %v7835 = vld [vmem:[%s2499 + $0x10] sm:$0xf]
        %v7836 = vld [vmem:[%s2499 + $0x14] sm:$0x1]
        %v7837 = vld [vmem:[%s2499 + $0x18] sm:$0xf]
        %v7838 = vld [vmem:[%s2499 + $0x1c] sm:$0xf]
        %v7839 = vld [vmem:[%s2499 + $0x20] sm:$0x1]
        %v7840 = vld [vmem:[%s2499 + $0x24] sm:$0xf]
        %v7841 = vld [vmem:[%s2499 + $0x28] sm:$0xf]
        %v7842 = vld [vmem:[%s2499 + $0x2c] sm:$0x1]
        %v7843 = vld [vmem:[%s2499 + $0x30] sm:$0xf]
        %v7844 = vld [vmem:[%s2499 + $0x34] sm:$0xf]
        %v7845 = vld [vmem:[%s2499 + $0x38] sm:$0x1]
        %v7846 = vld [vmem:[%s2499 + $0x3c] sm:$0xf]
        %v7847 = vld [vmem:[%s2499 + $0x40] sm:$0xf]
        %v7848 = vld [vmem:[%s2499 + $0x44] sm:$0x1]
        %v7849 = vld [vmem:[%s2499 + $0x48] sm:$0xf]
        %v7850 = vld [vmem:[%s2499 + $0x4c] sm:$0xf]
        %v7851 = vld [vmem:[%s2499 + $0x50] sm:$0x1]
        %v7852 = vld [vmem:[%s2499 + $0x54] sm:$0xf]
        %v7853 = vld [vmem:[%s2499 + $0x58] sm:$0xf]
        %v7854 = vld [vmem:[%s2499 + $0x5c] sm:$0x1]
        %v7855 = vld [vmem:[%s2499 + $0x60] sm:$0xf]
        %v7856 = vld [vmem:[%s2499 + $0x64] sm:$0xf]
        %v7857 = vld [vmem:[%s2499 + $0x68] sm:$0x1]
        %v7858 = vld [vmem:[%s2499 + $0x6c] sm:$0xf]
        %v7859 = vld [vmem:[%s2499 + $0x70] sm:$0xf]
        %v7860 = vld [vmem:[%s2499 + $0x74] sm:$0x1]
        %v7861 = vld [vmem:[%s2499 + $0x78] sm:$0xf]
        %v7862 = vld [vmem:[%s2499 + $0x7c] sm:$0xf]
        %v7863 = vld [vmem:[%s2499 + $0x80] sm:$0x1]
        %v7864 = vld [vmem:[%s2499 + $0x84] sm:$0xf]
        %v7865 = vld [vmem:[%s2499 + $0x88] sm:$0xf]
        %v7866 = vld [vmem:[%s2499 + $0x8c] sm:$0x1]
        %v7867 = vld [vmem:[%s2499 + $0x90] sm:$0xf]
        %v7868 = vld [vmem:[%s2499 + $0x94] sm:$0xf]
        %v7869 = vld [vmem:[%s2499 + $0x98] sm:$0x1]
        %v7870 = vld [vmem:[%s2499 + $0x9c] sm:$0xf]
        %v7871 = vld [vmem:[%s2499 + $0xa0] sm:$0xf]
        %v7872 = vld [vmem:[%s2499 + $0xa4] sm:$0x1]
        %v7873 = vld [vmem:[%s2499 + $0xa8] sm:$0xf]
        %v7874 = vld [vmem:[%s2499 + $0xac] sm:$0xf]
        %v7875 = vld [vmem:[%s2499 + $0xb0] sm:$0x1]
        %v7876 = vld [vmem:[%s2499 + $0xb4] sm:$0xf]
        %v7877 = vld [vmem:[%s2499 + $0xb8] sm:$0xf]
        %v7878 = vld [vmem:[%s2499 + $0xbc] sm:$0x1]
        %v7880 = vshrl.u32 %v7831, 16
        %v7882 = vrot.slane %v7880, 4
        %v7883 = vshll.u32 %v7831, 16
        %v7885 = vrot.slane %v7883, 5
        %v7886 = vor.u32 %v7882, %v7885
        %v7887 = vrot.slane %v7886, 4
        %v7889 = vshll.u32 %v7832, 16
        %v7891 = vrot.slane %v7889, 5
        %v7892 = vsel %vm943, %v7887, %v7891
        %v7893 = vshrl.u32 %v7832, 16
        %v7895 = vrot.slane %v7893, 4
        %v7896 = vor.u32 %v7895, %v7891
        %v7897 = vrot.slane %v7896, 4
        %v7899 = vshll.u32 %v7833, 16
        %v7901 = vrot.slane %v7899, 5
        %v7902 = vsel %vm943, %v7897, %v7901
        %v7904 = vshrl.u32 %v7834, 16
        %v7906 = vrot.slane %v7904, 4
        %v7907 = vshll.u32 %v7834, 16
        %v7909 = vrot.slane %v7907, 5
        %v7910 = vor.u32 %v7906, %v7909
        %v7911 = vrot.slane %v7910, 4
        %v7913 = vshll.u32 %v7835, 16
        %v7915 = vrot.slane %v7913, 5
        %v7916 = vsel %vm943, %v7911, %v7915
        %v7917 = vshrl.u32 %v7835, 16
        %v7919 = vrot.slane %v7917, 4
        %v7920 = vor.u32 %v7919, %v7915
        %v7921 = vrot.slane %v7920, 4
        %v7923 = vshll.u32 %v7836, 16
        %v7925 = vrot.slane %v7923, 5
        %v7926 = vsel %vm943, %v7921, %v7925
        %v7928 = vshrl.u32 %v7837, 16
        %v7930 = vrot.slane %v7928, 4
        %v7931 = vshll.u32 %v7837, 16
        %v7933 = vrot.slane %v7931, 5
        %v7934 = vor.u32 %v7930, %v7933
        %v7935 = vrot.slane %v7934, 4
        %v7937 = vshll.u32 %v7838, 16
        %v7939 = vrot.slane %v7937, 5
        %v7940 = vsel %vm943, %v7935, %v7939
        %v7941 = vshrl.u32 %v7838, 16
        %v7943 = vrot.slane %v7941, 4
        %v7944 = vor.u32 %v7943, %v7939
        %v7945 = vrot.slane %v7944, 4
        %v7947 = vshll.u32 %v7839, 16
        %v7949 = vrot.slane %v7947, 5
        %v7950 = vsel %vm943, %v7945, %v7949
        %v7952 = vshrl.u32 %v7840, 16
        %v7954 = vrot.slane %v7952, 4
        %v7955 = vshll.u32 %v7840, 16
        %v7957 = vrot.slane %v7955, 5
        %v7958 = vor.u32 %v7954, %v7957
        %v7959 = vrot.slane %v7958, 4
        %v7961 = vshll.u32 %v7841, 16
        %v7963 = vrot.slane %v7961, 5
        %v7964 = vsel %vm943, %v7959, %v7963
        %v7965 = vshrl.u32 %v7841, 16
        %v7967 = vrot.slane %v7965, 4
        %v7968 = vor.u32 %v7967, %v7963
        %v7969 = vrot.slane %v7968, 4
        %v7971 = vshll.u32 %v7842, 16
        %v7973 = vrot.slane %v7971, 5
        %v7974 = vsel %vm943, %v7969, %v7973
        %v7976 = vshrl.u32 %v7843, 16
        %v7978 = vrot.slane %v7976, 4
        %v7979 = vshll.u32 %v7843, 16
        %v7981 = vrot.slane %v7979, 5
        %v7982 = vor.u32 %v7978, %v7981
        %v7983 = vrot.slane %v7982, 4
        %v7985 = vshll.u32 %v7844, 16
        %v7987 = vrot.slane %v7985, 5
        %v7988 = vsel %vm943, %v7983, %v7987
        %v7989 = vshrl.u32 %v7844, 16
        %v7991 = vrot.slane %v7989, 4
        %v7992 = vor.u32 %v7991, %v7987
        %v7993 = vrot.slane %v7992, 4
        %v7995 = vshll.u32 %v7845, 16
        %v7997 = vrot.slane %v7995, 5
        %v7998 = vsel %vm943, %v7993, %v7997
        %v8000 = vshrl.u32 %v7846, 16
        %v8002 = vrot.slane %v8000, 4
        %v8003 = vshll.u32 %v7846, 16
        %v8005 = vrot.slane %v8003, 5
        %v8006 = vor.u32 %v8002, %v8005
        %v8007 = vrot.slane %v8006, 4
        %v8009 = vshll.u32 %v7847, 16
        %v8011 = vrot.slane %v8009, 5
        %v8012 = vsel %vm943, %v8007, %v8011
        %v8013 = vshrl.u32 %v7847, 16
        %v8015 = vrot.slane %v8013, 4
        %v8016 = vor.u32 %v8015, %v8011
        %v8017 = vrot.slane %v8016, 4
        %v8019 = vshll.u32 %v7848, 16
        %v8021 = vrot.slane %v8019, 5
        %v8022 = vsel %vm943, %v8017, %v8021
        %v8024 = vshrl.u32 %v7849, 16
        %v8026 = vrot.slane %v8024, 4
        %v8027 = vshll.u32 %v7849, 16
        %v8029 = vrot.slane %v8027, 5
        %v8030 = vor.u32 %v8026, %v8029
        %v8031 = vrot.slane %v8030, 4
        %v8033 = vshll.u32 %v7850, 16
        %v8035 = vrot.slane %v8033, 5
        %v8036 = vsel %vm943, %v8031, %v8035
        %v8037 = vshrl.u32 %v7850, 16
        %v8039 = vrot.slane %v8037, 4
        %v8040 = vor.u32 %v8039, %v8035
        %v8041 = vrot.slane %v8040, 4
        %v8043 = vshll.u32 %v7851, 16
        %v8045 = vrot.slane %v8043, 5
        %v8046 = vsel %vm943, %v8041, %v8045
        %v8048 = vshrl.u32 %v7852, 16
        %v8050 = vrot.slane %v8048, 4
        %v8051 = vshll.u32 %v7852, 16
        %v8053 = vrot.slane %v8051, 5
        %v8054 = vor.u32 %v8050, %v8053
        %v8055 = vrot.slane %v8054, 4
        %v8057 = vshll.u32 %v7853, 16
        %v8059 = vrot.slane %v8057, 5
        %v8060 = vsel %vm943, %v8055, %v8059
        %v8061 = vshrl.u32 %v7853, 16
        %v8063 = vrot.slane %v8061, 4
        %v8064 = vor.u32 %v8063, %v8059
        %v8065 = vrot.slane %v8064, 4
        %v8067 = vshll.u32 %v7854, 16
        %v8069 = vrot.slane %v8067, 5
        %v8070 = vsel %vm943, %v8065, %v8069
        %v8072 = vshrl.u32 %v7855, 16
        %v8074 = vrot.slane %v8072, 4
        %v8075 = vshll.u32 %v7855, 16
        %v8077 = vrot.slane %v8075, 5
        %v8078 = vor.u32 %v8074, %v8077
        %v8079 = vrot.slane %v8078, 4
        %v8081 = vshll.u32 %v7856, 16
        %v8083 = vrot.slane %v8081, 5
        %v8084 = vsel %vm943, %v8079, %v8083
        %v8085 = vshrl.u32 %v7856, 16
        %v8087 = vrot.slane %v8085, 4
        %v8088 = vor.u32 %v8087, %v8083
        %v8089 = vrot.slane %v8088, 4
        %v8091 = vshll.u32 %v7857, 16
        %v8093 = vrot.slane %v8091, 5
        %v8094 = vsel %vm943, %v8089, %v8093
        %v8096 = vshrl.u32 %v7858, 16
        %v8098 = vrot.slane %v8096, 4
        %v8099 = vshll.u32 %v7858, 16
        %v8101 = vrot.slane %v8099, 5
        %v8102 = vor.u32 %v8098, %v8101
        %v8103 = vrot.slane %v8102, 4
        %v8105 = vshll.u32 %v7859, 16
        %v8107 = vrot.slane %v8105, 5
        %v8108 = vsel %vm943, %v8103, %v8107
        %v8109 = vshrl.u32 %v7859, 16
        %v8111 = vrot.slane %v8109, 4
        %v8112 = vor.u32 %v8111, %v8107
        %v8113 = vrot.slane %v8112, 4
        %v8115 = vshll.u32 %v7860, 16
        %v8117 = vrot.slane %v8115, 5
        %v8118 = vsel %vm943, %v8113, %v8117
        %v8120 = vshrl.u32 %v7861, 16
        %v8122 = vrot.slane %v8120, 4
        %v8123 = vshll.u32 %v7861, 16
        %v8125 = vrot.slane %v8123, 5
        %v8126 = vor.u32 %v8122, %v8125
        %v8127 = vrot.slane %v8126, 4
        %v8129 = vshll.u32 %v7862, 16
        %v8131 = vrot.slane %v8129, 5
        %v8132 = vsel %vm943, %v8127, %v8131
        %v8133 = vshrl.u32 %v7862, 16
        %v8135 = vrot.slane %v8133, 4
        %v8136 = vor.u32 %v8135, %v8131
        %v8137 = vrot.slane %v8136, 4
        %v8139 = vshll.u32 %v7863, 16
        %v8141 = vrot.slane %v8139, 5
        %v8142 = vsel %vm943, %v8137, %v8141
        %v8144 = vshrl.u32 %v7864, 16
        %v8146 = vrot.slane %v8144, 4
        %v8147 = vshll.u32 %v7864, 16
        %v8149 = vrot.slane %v8147, 5
        %v8150 = vor.u32 %v8146, %v8149
        %v8151 = vrot.slane %v8150, 4
        %v8153 = vshll.u32 %v7865, 16
        %v8155 = vrot.slane %v8153, 5
        %v8156 = vsel %vm943, %v8151, %v8155
        %v8157 = vshrl.u32 %v7865, 16
        %v8159 = vrot.slane %v8157, 4
        %v8160 = vor.u32 %v8159, %v8155
        %v8161 = vrot.slane %v8160, 4
        %v8163 = vshll.u32 %v7866, 16
        %v8165 = vrot.slane %v8163, 5
        %v8166 = vsel %vm943, %v8161, %v8165
        %v8168 = vshrl.u32 %v7867, 16
        %v8170 = vrot.slane %v8168, 4
        %v8171 = vshll.u32 %v7867, 16
        %v8173 = vrot.slane %v8171, 5
        %v8174 = vor.u32 %v8170, %v8173
        %v8175 = vrot.slane %v8174, 4
        %v8177 = vshll.u32 %v7868, 16
        %v8179 = vrot.slane %v8177, 5
        %v8180 = vsel %vm943, %v8175, %v8179
        %v8181 = vshrl.u32 %v7868, 16
        %v8183 = vrot.slane %v8181, 4
        %v8184 = vor.u32 %v8183, %v8179
        %v8185 = vrot.slane %v8184, 4
        %v8187 = vshll.u32 %v7869, 16
        %v8189 = vrot.slane %v8187, 5
        %v8190 = vsel %vm943, %v8185, %v8189
        %v8192 = vshrl.u32 %v7870, 16
        %v8194 = vrot.slane %v8192, 4
        %v8195 = vshll.u32 %v7870, 16
        %v8197 = vrot.slane %v8195, 5
        %v8198 = vor.u32 %v8194, %v8197
        %v8199 = vrot.slane %v8198, 4
        %v8201 = vshll.u32 %v7871, 16
        %v8203 = vrot.slane %v8201, 5
        %v8204 = vsel %vm943, %v8199, %v8203
        %v8205 = vshrl.u32 %v7871, 16
        %v8207 = vrot.slane %v8205, 4
        %v8208 = vor.u32 %v8207, %v8203
        %v8209 = vrot.slane %v8208, 4
        %v8211 = vshll.u32 %v7872, 16
        %v8213 = vrot.slane %v8211, 5
        %v8214 = vsel %vm943, %v8209, %v8213
        %v8216 = vshrl.u32 %v7873, 16
        %v8218 = vrot.slane %v8216, 4
        %v8219 = vshll.u32 %v7873, 16
        %v8221 = vrot.slane %v8219, 5
        %v8222 = vor.u32 %v8218, %v8221
        %v8223 = vrot.slane %v8222, 4
        %v8225 = vshll.u32 %v7874, 16
        %v8227 = vrot.slane %v8225, 5
        %v8228 = vsel %vm943, %v8223, %v8227
        %v8229 = vshrl.u32 %v7874, 16
        %v8231 = vrot.slane %v8229, 4
        %v8232 = vor.u32 %v8231, %v8227
        %v8233 = vrot.slane %v8232, 4
        %v8235 = vshll.u32 %v7875, 16
        %v8237 = vrot.slane %v8235, 5
        %v8238 = vsel %vm943, %v8233, %v8237
        %v8240 = vshrl.u32 %v7876, 16
        %v8242 = vrot.slane %v8240, 4
        %v8243 = vshll.u32 %v7876, 16
        %v8245 = vrot.slane %v8243, 5
        %v8246 = vor.u32 %v8242, %v8245
        %v8247 = vrot.slane %v8246, 4
        %v8249 = vshll.u32 %v7877, 16
        %v8251 = vrot.slane %v8249, 5
        %v8252 = vsel %vm943, %v8247, %v8251
        %v8253 = vshrl.u32 %v7877, 16
        %v8255 = vrot.slane %v8253, 4
        %v8256 = vor.u32 %v8255, %v8251
        %v8257 = vrot.slane %v8256, 4
        %v8259 = vshll.u32 %v7878, 16
        %v8261 = vrot.slane %v8259, 5
        %v8262 = vsel %vm943, %v8257, %v8261
        %8295 = vst [vmem:[#allocation3 + $0x1c] sm:$0xf] %v7892
        %8296 = vst [vmem:[#allocation3 + $0x40] sm:$0xf] %v7902
        %8297 = vst [vmem:[#allocation3 + $0x64] sm:$0xf] %v7916
        %8298 = vst [vmem:[#allocation3 + $0x88] sm:$0xf] %v7926
        %8299 = vst [vmem:[#allocation3 + $0xac] sm:$0xf] %v7940
        %8300 = vst [vmem:[#allocation3 + $0xd0] sm:$0xf] %v7950
        %8301 = vst [vmem:[#allocation3 + $0xf4] sm:$0xf] %v7964
        %8302 = vst [vmem:[#allocation3 + $0x118] sm:$0xf] %v7974
        %8303 = vst [vmem:[#allocation3 + $0x13c] sm:$0xf] %v7988
        %8304 = vst [vmem:[#allocation3 + $0x160] sm:$0xf] %v7998
        %8305 = vst [vmem:[#allocation3 + $0x184] sm:$0xf] %v8012
        %8306 = vst [vmem:[#allocation3 + $0x1a8] sm:$0xf] %v8022
        %8307 = vst [vmem:[#allocation3 + $0x1cc] sm:$0xf] %v8036
        %8308 = vst [vmem:[#allocation3 + $0x1f0] sm:$0xf] %v8046
        %8309 = vst [vmem:[#allocation3 + $0x214] sm:$0xf] %v8060
        %8310 = vst [vmem:[#allocation3 + $0x238] sm:$0xf] %v8070
        %8311 = vst [vmem:[#allocation3 + $0x25c] sm:$0xf] %v8084
        %8312 = vst [vmem:[#allocation3 + $0x280] sm:$0xf] %v8094
        %8313 = vst [vmem:[#allocation3 + $0x2a4] sm:$0xf] %v8108
        %8314 = vst [vmem:[#allocation3 + $0x2c8] sm:$0xf] %v8118
        %8315 = vst [vmem:[#allocation3 + $0x2ec] sm:$0xf] %v8132
        %8316 = vst [vmem:[#allocation3 + $0x310] sm:$0xf] %v8142
        %8317 = vst [vmem:[#allocation3 + $0x334] sm:$0xf] %v8156
        %8318 = vst [vmem:[#allocation3 + $0x358] sm:$0xf] %v8166
        %8319 = vst [vmem:[#allocation3 + $0x37c] sm:$0xf] %v8180
        %8320 = vst [vmem:[#allocation3 + $0x3a0] sm:$0xf] %v8190
        %8321 = vst [vmem:[#allocation3 + $0x3c4] sm:$0xf] %v8204
        %8322 = vst [vmem:[#allocation3 + $0x3e8] sm:$0xf] %v8214
        %8323 = vst [vmem:[#allocation3 + $0x40c] sm:$0xf] %v8228
        %8324 = vst [vmem:[#allocation3 + $0x430] sm:$0xf] %v8238
        %8325 = vst [vmem:[#allocation3 + $0x454] sm:$0xf] %v8252
        %8326 = vst [vmem:[#allocation3 + $0x478] sm:$0xf] %v8262
        %v8327 = vld [vmem:[%s2499] sm:$0xe]
        %v8328 = vld [vmem:[%s2499 + $0x4] sm:$0xf]
        %v8329 = vld [vmem:[%s2499 + $0x8] sm:$0x1]
        %v8330 = vld [vmem:[%s2499 + $0xc] sm:$0xe]
        %v8331 = vld [vmem:[%s2499 + $0x10] sm:$0xf]
        %v8332 = vld [vmem:[%s2499 + $0x14] sm:$0x1]
        %v8333 = vld [vmem:[%s2499 + $0x18] sm:$0xe]
        %v8334 = vld [vmem:[%s2499 + $0x1c] sm:$0xf]
        %v8335 = vld [vmem:[%s2499 + $0x20] sm:$0x1]
        %v8336 = vld [vmem:[%s2499 + $0x24] sm:$0xe]
        %v8337 = vld [vmem:[%s2499 + $0x28] sm:$0xf]
        %v8338 = vld [vmem:[%s2499 + $0x2c] sm:$0x1]
        %v8339 = vld [vmem:[%s2499 + $0x30] sm:$0xe]
        %v8340 = vld [vmem:[%s2499 + $0x34] sm:$0xf]
        %v8341 = vld [vmem:[%s2499 + $0x38] sm:$0x1]
        %v8342 = vld [vmem:[%s2499 + $0x3c] sm:$0xe]
        %v8343 = vld [vmem:[%s2499 + $0x40] sm:$0xf]
        %v8344 = vld [vmem:[%s2499 + $0x44] sm:$0x1]
        %v8345 = vld [vmem:[%s2499 + $0x48] sm:$0xe]
        %v8346 = vld [vmem:[%s2499 + $0x4c] sm:$0xf]
        %v8347 = vld [vmem:[%s2499 + $0x50] sm:$0x1]
        %v8348 = vld [vmem:[%s2499 + $0x54] sm:$0xe]
        %v8349 = vld [vmem:[%s2499 + $0x58] sm:$0xf]
        %v8350 = vld [vmem:[%s2499 + $0x5c] sm:$0x1]
        %v8351 = vld [vmem:[%s2499 + $0x60] sm:$0xe]
        %v8352 = vld [vmem:[%s2499 + $0x64] sm:$0xf]
        %v8353 = vld [vmem:[%s2499 + $0x68] sm:$0x1]
        %v8354 = vld [vmem:[%s2499 + $0x6c] sm:$0xe]
        %v8355 = vld [vmem:[%s2499 + $0x70] sm:$0xf]
        %v8356 = vld [vmem:[%s2499 + $0x74] sm:$0x1]
        %v8357 = vld [vmem:[%s2499 + $0x78] sm:$0xe]
        %v8358 = vld [vmem:[%s2499 + $0x7c] sm:$0xf]
        %v8359 = vld [vmem:[%s2499 + $0x80] sm:$0x1]
        %v8360 = vld [vmem:[%s2499 + $0x84] sm:$0xe]
        %v8361 = vld [vmem:[%s2499 + $0x88] sm:$0xf]
        %v8362 = vld [vmem:[%s2499 + $0x8c] sm:$0x1]
        %v8363 = vld [vmem:[%s2499 + $0x90] sm:$0xe]
        %v8364 = vld [vmem:[%s2499 + $0x94] sm:$0xf]
        %v8365 = vld [vmem:[%s2499 + $0x98] sm:$0x1]
        %v8366 = vld [vmem:[%s2499 + $0x9c] sm:$0xe]
        %v8367 = vld [vmem:[%s2499 + $0xa0] sm:$0xf]
        %v8368 = vld [vmem:[%s2499 + $0xa4] sm:$0x1]
        %v8369 = vld [vmem:[%s2499 + $0xa8] sm:$0xe]
        %v8370 = vld [vmem:[%s2499 + $0xac] sm:$0xf]
        %v8371 = vld [vmem:[%s2499 + $0xb0] sm:$0x1]
        %v8372 = vld [vmem:[%s2499 + $0xb4] sm:$0xe]
        %v8373 = vld [vmem:[%s2499 + $0xb8] sm:$0xf]
        %v8374 = vld [vmem:[%s2499 + $0xbc] sm:$0x1]
        %v8423 = vrot.slane %v8327, 5
        %v8424 = vrot.slane %v8423, 4
        %v8425 = vrot.slane %v8328, 5
        %v8426 = vsel %vm1490, %v8424, %v8425
        %v8427 = vrot.slane %v8425, 4
        %v8428 = vrot.slane %v8329, 5
        %v8429 = vsel %vm1490, %v8427, %v8428
        %v8430 = vrot.slane %v8330, 5
        %v8431 = vrot.slane %v8430, 4
        %v8432 = vrot.slane %v8331, 5
        %v8433 = vsel %vm1490, %v8431, %v8432
        %v8434 = vrot.slane %v8432, 4
        %v8435 = vrot.slane %v8332, 5
        %v8436 = vsel %vm1490, %v8434, %v8435
        %v8437 = vrot.slane %v8333, 5
        %v8438 = vrot.slane %v8437, 4
        %v8439 = vrot.slane %v8334, 5
        %v8440 = vsel %vm1490, %v8438, %v8439
        %v8441 = vrot.slane %v8439, 4
        %v8442 = vrot.slane %v8335, 5
        %v8443 = vsel %vm1490, %v8441, %v8442
        %v8444 = vrot.slane %v8336, 5
        %v8445 = vrot.slane %v8444, 4
        %v8446 = vrot.slane %v8337, 5
        %v8447 = vsel %vm1490, %v8445, %v8446
        %v8448 = vrot.slane %v8446, 4
        %v8449 = vrot.slane %v8338, 5
        %v8450 = vsel %vm1490, %v8448, %v8449
        %v8451 = vrot.slane %v8339, 5
        %v8452 = vrot.slane %v8451, 4
        %v8453 = vrot.slane %v8340, 5
        %v8454 = vsel %vm1490, %v8452, %v8453
        %v8455 = vrot.slane %v8453, 4
        %v8456 = vrot.slane %v8341, 5
        %v8457 = vsel %vm1490, %v8455, %v8456
        %v8458 = vrot.slane %v8342, 5
        %v8459 = vrot.slane %v8458, 4
        %v8460 = vrot.slane %v8343, 5
        %v8461 = vsel %vm1490, %v8459, %v8460
        %v8462 = vrot.slane %v8460, 4
        %v8463 = vrot.slane %v8344, 5
        %v8464 = vsel %vm1490, %v8462, %v8463
        %v8465 = vrot.slane %v8345, 5
        %v8466 = vrot.slane %v8465, 4
        %v8467 = vrot.slane %v8346, 5
        %v8468 = vsel %vm1490, %v8466, %v8467
        %v8469 = vrot.slane %v8467, 4
        %v8470 = vrot.slane %v8347, 5
        %v8471 = vsel %vm1490, %v8469, %v8470
        %v8472 = vrot.slane %v8348, 5
        %v8473 = vrot.slane %v8472, 4
        %v8474 = vrot.slane %v8349, 5
        %v8475 = vsel %vm1490, %v8473, %v8474
        %v8476 = vrot.slane %v8474, 4
        %v8477 = vrot.slane %v8350, 5
        %v8478 = vsel %vm1490, %v8476, %v8477
        %v8479 = vrot.slane %v8351, 5
        %v8480 = vrot.slane %v8479, 4
        %v8481 = vrot.slane %v8352, 5
        %v8482 = vsel %vm1490, %v8480, %v8481
        %v8483 = vrot.slane %v8481, 4
        %v8484 = vrot.slane %v8353, 5
        %v8485 = vsel %vm1490, %v8483, %v8484
        %v8486 = vrot.slane %v8354, 5
        %v8487 = vrot.slane %v8486, 4
        %v8488 = vrot.slane %v8355, 5
        %v8489 = vsel %vm1490, %v8487, %v8488
        %v8490 = vrot.slane %v8488, 4
        %v8491 = vrot.slane %v8356, 5
        %v8492 = vsel %vm1490, %v8490, %v8491
        %v8493 = vrot.slane %v8357, 5
        %v8494 = vrot.slane %v8493, 4
        %v8495 = vrot.slane %v8358, 5
        %v8496 = vsel %vm1490, %v8494, %v8495
        %v8497 = vrot.slane %v8495, 4
        %v8498 = vrot.slane %v8359, 5
        %v8499 = vsel %vm1490, %v8497, %v8498
        %v8500 = vrot.slane %v8360, 5
        %v8501 = vrot.slane %v8500, 4
        %v8502 = vrot.slane %v8361, 5
        %v8503 = vsel %vm1490, %v8501, %v8502
        %v8504 = vrot.slane %v8502, 4
        %v8505 = vrot.slane %v8362, 5
        %v8506 = vsel %vm1490, %v8504, %v8505
        %v8507 = vrot.slane %v8363, 5
        %v8508 = vrot.slane %v8507, 4
        %v8509 = vrot.slane %v8364, 5
        %v8510 = vsel %vm1490, %v8508, %v8509
        %v8511 = vrot.slane %v8509, 4
        %v8512 = vrot.slane %v8365, 5
        %v8513 = vsel %vm1490, %v8511, %v8512
        %v8514 = vrot.slane %v8366, 5
        %v8515 = vrot.slane %v8514, 4
        %v8516 = vrot.slane %v8367, 5
        %v8517 = vsel %vm1490, %v8515, %v8516
        %v8518 = vrot.slane %v8516, 4
        %v8519 = vrot.slane %v8368, 5
        %v8520 = vsel %vm1490, %v8518, %v8519
        %v8521 = vrot.slane %v8369, 5
        %v8522 = vrot.slane %v8521, 4
        %v8523 = vrot.slane %v8370, 5
        %v8524 = vsel %vm1490, %v8522, %v8523
        %v8525 = vrot.slane %v8523, 4
        %v8526 = vrot.slane %v8371, 5
        %v8527 = vsel %vm1490, %v8525, %v8526
        %v8528 = vrot.slane %v8372, 5
        %v8529 = vrot.slane %v8528, 4
        %v8530 = vrot.slane %v8373, 5
        %v8531 = vsel %vm1490, %v8529, %v8530
        %v8532 = vrot.slane %v8530, 4
        %v8533 = vrot.slane %v8374, 5
        %v8534 = vsel %vm1490, %v8532, %v8533
        %8567 = vst [vmem:[#allocation3 + $0x20] sm:$0xf] %v8426
        %8568 = vst [vmem:[#allocation3 + $0x44] sm:$0xf] %v8429
        %8569 = vst [vmem:[#allocation3 + $0x68] sm:$0xf] %v8433
        %8570 = vst [vmem:[#allocation3 + $0x8c] sm:$0xf] %v8436
        %8571 = vst [vmem:[#allocation3 + $0xb0] sm:$0xf] %v8440
        %8572 = vst [vmem:[#allocation3 + $0xd4] sm:$0xf] %v8443
        %8573 = vst [vmem:[#allocation3 + $0xf8] sm:$0xf] %v8447
        %8574 = vst [vmem:[#allocation3 + $0x11c] sm:$0xf] %v8450
        %8575 = vst [vmem:[#allocation3 + $0x140] sm:$0xf] %v8454
        %8576 = vst [vmem:[#allocation3 + $0x164] sm:$0xf] %v8457
        %8577 = vst [vmem:[#allocation3 + $0x188] sm:$0xf] %v8461
        %8578 = vst [vmem:[#allocation3 + $0x1ac] sm:$0xf] %v8464
        %8579 = vst [vmem:[#allocation3 + $0x1d0] sm:$0xf] %v8468
        %8580 = vst [vmem:[#allocation3 + $0x1f4] sm:$0xf] %v8471
        %8581 = vst [vmem:[#allocation3 + $0x218] sm:$0xf] %v8475
        %8582 = vst [vmem:[#allocation3 + $0x23c] sm:$0xf] %v8478
        %8583 = vst [vmem:[#allocation3 + $0x260] sm:$0xf] %v8482
        %8584 = vst [vmem:[#allocation3 + $0x284] sm:$0xf] %v8485
        %8585 = vst [vmem:[#allocation3 + $0x2a8] sm:$0xf] %v8489
        %8586 = vst [vmem:[#allocation3 + $0x2cc] sm:$0xf] %v8492
        %8587 = vst [vmem:[#allocation3 + $0x2f0] sm:$0xf] %v8496
        %8588 = vst [vmem:[#allocation3 + $0x314] sm:$0xf] %v8499
        %8589 = vst [vmem:[#allocation3 + $0x338] sm:$0xf] %v8503
        %8590 = vst [vmem:[#allocation3 + $0x35c] sm:$0xf] %v8506
        %8591 = vst [vmem:[#allocation3 + $0x380] sm:$0xf] %v8510
        %8592 = vst [vmem:[#allocation3 + $0x3a4] sm:$0xf] %v8513
        %8593 = vst [vmem:[#allocation3 + $0x3c8] sm:$0xf] %v8517
        %8594 = vst [vmem:[#allocation3 + $0x3ec] sm:$0xf] %v8520
        %8595 = vst [vmem:[#allocation3 + $0x410] sm:$0xf] %v8524
        %8596 = vst [vmem:[#allocation3 + $0x434] sm:$0xf] %v8527
        %8597 = vst [vmem:[#allocation3 + $0x458] sm:$0xf] %v8531
        %8598 = vst [vmem:[#allocation3 + $0x47c] sm:$0xf] %v8534
        %v8599 = vld [vmem:[#allocation3] sm:$0xff]
        %v8600 = vld [vmem:[#allocation3 + $0x8] sm:$0xff]
        %v8601 = vld [vmem:[#allocation3 + $0x10] sm:$0xff]
        %v8602 = vld [vmem:[#allocation3 + $0x18] sm:$0xff]
        %v8603 = vld [vmem:[#allocation3 + $0x20] sm:$0xf]
        %v8604 = vld [vmem:[#allocation3 + $0x24] sm:$0xff]
        %v8605 = vld [vmem:[#allocation3 + $0x2c] sm:$0xff]
        %v8606 = vld [vmem:[#allocation3 + $0x34] sm:$0xff]
        %v8607 = vld [vmem:[#allocation3 + $0x3c] sm:$0xff]
        %v8608 = vld [vmem:[#allocation3 + $0x44] sm:$0xf]
        %v8609 = vld [vmem:[#allocation3 + $0x48] sm:$0xff]
        %v8610 = vld [vmem:[#allocation3 + $0x50] sm:$0xff]
        %v8611 = vld [vmem:[#allocation3 + $0x58] sm:$0xff]
        %v8612 = vld [vmem:[#allocation3 + $0x60] sm:$0xff]
        %v8613 = vld [vmem:[#allocation3 + $0x68] sm:$0xf]
        %v8614 = vld [vmem:[#allocation3 + $0x6c] sm:$0xff]
        %v8615 = vld [vmem:[#allocation3 + $0x74] sm:$0xff]
        %v8616 = vld [vmem:[#allocation3 + $0x7c] sm:$0xff]
        %v8617 = vld [vmem:[#allocation3 + $0x84] sm:$0xff]
        %v8618 = vld [vmem:[#allocation3 + $0x8c] sm:$0xf]
        %v8619 = vld [vmem:[#allocation3 + $0x90] sm:$0xff]
        %v8620 = vld [vmem:[#allocation3 + $0x98] sm:$0xff]
        %v8621 = vld [vmem:[#allocation3 + $0xa0] sm:$0xff]
        %v8622 = vld [vmem:[#allocation3 + $0xa8] sm:$0xff]
        %v8623 = vld [vmem:[#allocation3 + $0xb0] sm:$0xf]
        %v8624 = vld [vmem:[#allocation3 + $0xb4] sm:$0xff]
        %v8625 = vld [vmem:[#allocation3 + $0xbc] sm:$0xff]
        %v8626 = vld [vmem:[#allocation3 + $0xc4] sm:$0xff]
        %v8627 = vld [vmem:[#allocation3 + $0xcc] sm:$0xff]
        %v8628 = vld [vmem:[#allocation3 + $0xd4] sm:$0xf]
        %v8629 = vld [vmem:[#allocation3 + $0xd8] sm:$0xff]
        %v8630 = vld [vmem:[#allocation3 + $0xe0] sm:$0xff]
        %v8631 = vld [vmem:[#allocation3 + $0xe8] sm:$0xff]
        %v8632 = vld [vmem:[#allocation3 + $0xf0] sm:$0xff]
        %v8633 = vld [vmem:[#allocation3 + $0xf8] sm:$0xf]
        %v8634 = vld [vmem:[#allocation3 + $0xfc] sm:$0xff]
        %v8635 = vld [vmem:[#allocation3 + $0x104] sm:$0xff]
        %v8636 = vld [vmem:[#allocation3 + $0x10c] sm:$0xff]
        %v8637 = vld [vmem:[#allocation3 + $0x114] sm:$0xff]
        %v8638 = vld [vmem:[#allocation3 + $0x11c] sm:$0xf]
        %v8639 = vld [vmem:[#allocation3 + $0x120] sm:$0xff]
        %v8640 = vld [vmem:[#allocation3 + $0x128] sm:$0xff]
        %v8641 = vld [vmem:[#allocation3 + $0x130] sm:$0xff]
        %v8642 = vld [vmem:[#allocation3 + $0x138] sm:$0xff]
        %v8643 = vld [vmem:[#allocation3 + $0x140] sm:$0xf]
        %v8644 = vld [vmem:[#allocation3 + $0x144] sm:$0xff]
        %v8645 = vld [vmem:[#allocation3 + $0x14c] sm:$0xff]
        %v8646 = vld [vmem:[#allocation3 + $0x154] sm:$0xff]
        %v8647 = vld [vmem:[#allocation3 + $0x15c] sm:$0xff]
        %v8648 = vld [vmem:[#allocation3 + $0x164] sm:$0xf]
        %v8649 = vld [vmem:[#allocation3 + $0x168] sm:$0xff]
        %v8650 = vld [vmem:[#allocation3 + $0x170] sm:$0xff]
        %v8651 = vld [vmem:[#allocation3 + $0x178] sm:$0xff]
        %v8652 = vld [vmem:[#allocation3 + $0x180] sm:$0xff]
        %v8653 = vld [vmem:[#allocation3 + $0x188] sm:$0xf]
        %v8654 = vld [vmem:[#allocation3 + $0x18c] sm:$0xff]
        %v8655 = vld [vmem:[#allocation3 + $0x194] sm:$0xff]
        %v8656 = vld [vmem:[#allocation3 + $0x19c] sm:$0xff]
        %v8657 = vld [vmem:[#allocation3 + $0x1a4] sm:$0xff]
        %v8658 = vld [vmem:[#allocation3 + $0x1ac] sm:$0xf]
        %v8659 = vld [vmem:[#allocation3 + $0x1b0] sm:$0xff]
        %v8660 = vld [vmem:[#allocation3 + $0x1b8] sm:$0xff]
        %v8661 = vld [vmem:[#allocation3 + $0x1c0] sm:$0xff]
        %v8662 = vld [vmem:[#allocation3 + $0x1c8] sm:$0xff]
        %v8663 = vld [vmem:[#allocation3 + $0x1d0] sm:$0xf]
        %v8664 = vld [vmem:[#allocation3 + $0x1d4] sm:$0xff]
        %v8665 = vld [vmem:[#allocation3 + $0x1dc] sm:$0xff]
        %v8666 = vld [vmem:[#allocation3 + $0x1e4] sm:$0xff]
        %v8667 = vld [vmem:[#allocation3 + $0x1ec] sm:$0xff]
        %v8668 = vld [vmem:[#allocation3 + $0x1f4] sm:$0xf]
        %v8669 = vld [vmem:[#allocation3 + $0x1f8] sm:$0xff]
        %v8670 = vld [vmem:[#allocation3 + $0x200] sm:$0xff]
        %v8671 = vld [vmem:[#allocation3 + $0x208] sm:$0xff]
        %v8672 = vld [vmem:[#allocation3 + $0x210] sm:$0xff]
        %v8673 = vld [vmem:[#allocation3 + $0x218] sm:$0xf]
        %v8674 = vld [vmem:[#allocation3 + $0x21c] sm:$0xff]
        %v8675 = vld [vmem:[#allocation3 + $0x224] sm:$0xff]
        %v8676 = vld [vmem:[#allocation3 + $0x22c] sm:$0xff]
        %v8677 = vld [vmem:[#allocation3 + $0x234] sm:$0xff]
        %v8678 = vld [vmem:[#allocation3 + $0x23c] sm:$0xf]
        %v8679 = vld [vmem:[#allocation3 + $0x240] sm:$0xff]
        %v8680 = vld [vmem:[#allocation3 + $0x248] sm:$0xff]
        %v8681 = vld [vmem:[#allocation3 + $0x250] sm:$0xff]
        %v8682 = vld [vmem:[#allocation3 + $0x258] sm:$0xff]
        %v8683 = vld [vmem:[#allocation3 + $0x260] sm:$0xf]
        %v8684 = vld [vmem:[#allocation3 + $0x264] sm:$0xff]
        %v8685 = vld [vmem:[#allocation3 + $0x26c] sm:$0xff]
        %v8686 = vld [vmem:[#allocation3 + $0x274] sm:$0xff]
        %v8687 = vld [vmem:[#allocation3 + $0x27c] sm:$0xff]
        %v8688 = vld [vmem:[#allocation3 + $0x284] sm:$0xf]
        %v8689 = vld [vmem:[#allocation3 + $0x288] sm:$0xff]
        %v8690 = vld [vmem:[#allocation3 + $0x290] sm:$0xff]
        %v8691 = vld [vmem:[#allocation3 + $0x298] sm:$0xff]
        %v8692 = vld [vmem:[#allocation3 + $0x2a0] sm:$0xff]
        %v8693 = vld [vmem:[#allocation3 + $0x2a8] sm:$0xf]
        %v8694 = vld [vmem:[#allocation3 + $0x2ac] sm:$0xff]
        %v8695 = vld [vmem:[#allocation3 + $0x2b4] sm:$0xff]
        %v8696 = vld [vmem:[#allocation3 + $0x2bc] sm:$0xff]
        %v8697 = vld [vmem:[#allocation3 + $0x2c4] sm:$0xff]
        %v8698 = vld [vmem:[#allocation3 + $0x2cc] sm:$0xf]
        %v8699 = vld [vmem:[#allocation3 + $0x2d0] sm:$0xff]
        %v8700 = vld [vmem:[#allocation3 + $0x2d8] sm:$0xff]
        %v8701 = vld [vmem:[#allocation3 + $0x2e0] sm:$0xff]
        %v8702 = vld [vmem:[#allocation3 + $0x2e8] sm:$0xff]
        %v8703 = vld [vmem:[#allocation3 + $0x2f0] sm:$0xf]
        %v8704 = vld [vmem:[#allocation3 + $0x2f4] sm:$0xff]
        %v8705 = vld [vmem:[#allocation3 + $0x2fc] sm:$0xff]
        %v8706 = vld [vmem:[#allocation3 + $0x304] sm:$0xff]
        %v8707 = vld [vmem:[#allocation3 + $0x30c] sm:$0xff]
        %v8708 = vld [vmem:[#allocation3 + $0x314] sm:$0xf]
        %v8709 = vld [vmem:[#allocation3 + $0x318] sm:$0xff]
        %v8710 = vld [vmem:[#allocation3 + $0x320] sm:$0xff]
        %v8711 = vld [vmem:[#allocation3 + $0x328] sm:$0xff]
        %v8712 = vld [vmem:[#allocation3 + $0x330] sm:$0xff]
        %v8713 = vld [vmem:[#allocation3 + $0x338] sm:$0xf]
        %v8714 = vld [vmem:[#allocation3 + $0x33c] sm:$0xff]
        %v8715 = vld [vmem:[#allocation3 + $0x344] sm:$0xff]
        %v8716 = vld [vmem:[#allocation3 + $0x34c] sm:$0xff]
        %v8717 = vld [vmem:[#allocation3 + $0x354] sm:$0xff]
        %v8718 = vld [vmem:[#allocation3 + $0x35c] sm:$0xf]
        %v8719 = vld [vmem:[#allocation3 + $0x360] sm:$0xff]
        %v8720 = vld [vmem:[#allocation3 + $0x368] sm:$0xff]
        %v8721 = vld [vmem:[#allocation3 + $0x370] sm:$0xff]
        %v8722 = vld [vmem:[#allocation3 + $0x378] sm:$0xff]
        %v8723 = vld [vmem:[#allocation3 + $0x380] sm:$0xf]
        %v8724 = vld [vmem:[#allocation3 + $0x384] sm:$0xff]
        %v8725 = vld [vmem:[#allocation3 + $0x38c] sm:$0xff]
        %v8726 = vld [vmem:[#allocation3 + $0x394] sm:$0xff]
        %v8727 = vld [vmem:[#allocation3 + $0x39c] sm:$0xff]
        %v8728 = vld [vmem:[#allocation3 + $0x3a4] sm:$0xf]
        %v8729 = vld [vmem:[#allocation3 + $0x3a8] sm:$0xff]
        %v8730 = vld [vmem:[#allocation3 + $0x3b0] sm:$0xff]
        %v8731 = vld [vmem:[#allocation3 + $0x3b8] sm:$0xff]
        %v8732 = vld [vmem:[#allocation3 + $0x3c0] sm:$0xff]
        %v8733 = vld [vmem:[#allocation3 + $0x3c8] sm:$0xf]
        %v8734 = vld [vmem:[#allocation3 + $0x3cc] sm:$0xff]
        %v8735 = vld [vmem:[#allocation3 + $0x3d4] sm:$0xff]
        %v8736 = vld [vmem:[#allocation3 + $0x3dc] sm:$0xff]
        %v8737 = vld [vmem:[#allocation3 + $0x3e4] sm:$0xff]
        %v8738 = vld [vmem:[#allocation3 + $0x3ec] sm:$0xf]
        %v8739 = vld [vmem:[#allocation3 + $0x3f0] sm:$0xff]
        %v8740 = vld [vmem:[#allocation3 + $0x3f8] sm:$0xff]
        %v8741 = vld [vmem:[#allocation3 + $0x400] sm:$0xff]
        %v8742 = vld [vmem:[#allocation3 + $0x408] sm:$0xff]
        %v8743 = vld [vmem:[#allocation3 + $0x410] sm:$0xf]
        %v8744 = vld [vmem:[#allocation3 + $0x414] sm:$0xff]
        %v8745 = vld [vmem:[#allocation3 + $0x41c] sm:$0xff]
        %v8746 = vld [vmem:[#allocation3 + $0x424] sm:$0xff]
        %v8747 = vld [vmem:[#allocation3 + $0x42c] sm:$0xff]
        %v8748 = vld [vmem:[#allocation3 + $0x434] sm:$0xf]
        %v8749 = vld [vmem:[#allocation3 + $0x438] sm:$0xff]
        %v8750 = vld [vmem:[#allocation3 + $0x440] sm:$0xff]
        %v8751 = vld [vmem:[#allocation3 + $0x448] sm:$0xff]
        %v8752 = vld [vmem:[#allocation3 + $0x450] sm:$0xff]
        %v8753 = vld [vmem:[#allocation3 + $0x458] sm:$0xf]
        %v8754 = vld [vmem:[#allocation3 + $0x45c] sm:$0xff]
        %v8755 = vld [vmem:[#allocation3 + $0x464] sm:$0xff]
        %v8756 = vld [vmem:[#allocation3 + $0x46c] sm:$0xff]
        %v8757 = vld [vmem:[#allocation3 + $0x474] sm:$0xff]
        %v8758 = vld [vmem:[#allocation3 + $0x47c] sm:$0xf]
        %v8759 = vld [vmem:[#allocation9] sm:$0xf]
        %v8760 = vld [vmem:[#allocation9 + $0x4] sm:$0xf]
        %v8761 = vld [vmem:[#allocation9 + $0x8] sm:$0xf]
        %v8762 = vld [vmem:[#allocation9 + $0xc] sm:$0xf]
        %v8763 = vld [vmem:[#allocation9 + $0x10] sm:$0xf]
        %v8764 = vld [vmem:[#allocation9 + $0x14] sm:$0xf]
        %v8765 = vld [vmem:[#allocation9 + $0x18] sm:$0xf]
        %v8766 = vld [vmem:[#allocation9 + $0x1c] sm:$0xf]
        %v8767 = vld [vmem:[#allocation9 + $0x20] sm:$0xf]
        %v8768 = vld [vmem:[#allocation9 + $0x24] sm:$0xf]
        %v8769 = vld [vmem:[#allocation9 + $0x28] sm:$0xf]
        %v8770 = vld [vmem:[#allocation9 + $0x2c] sm:$0xf]
        %v8771 = vld [vmem:[#allocation9 + $0x30] sm:$0xf]
        %v8772 = vld [vmem:[#allocation9 + $0x34] sm:$0xf]
        %v8773 = vld [vmem:[#allocation9 + $0x38] sm:$0xf]
        %v8774 = vld [vmem:[#allocation9 + $0x3c] sm:$0xf]
        %v8775 = vld [vmem:[#allocation9 + $0x40] sm:$0xf]
        %v8776 = vld [vmem:[#allocation9 + $0x44] sm:$0xf]
        %v8777 = vld [vmem:[#allocation9 + $0x48] sm:$0xf]
        %v8778 = vld [vmem:[#allocation9 + $0x4c] sm:$0xf]
        %v8779 = vld [vmem:[#allocation9 + $0x50] sm:$0xf]
        %v8780 = vld [vmem:[#allocation9 + $0x54] sm:$0xf]
        %v8781 = vld [vmem:[#allocation9 + $0x58] sm:$0xf]
        %v8782 = vld [vmem:[#allocation9 + $0x5c] sm:$0xf]
        %v8783 = vld [vmem:[#allocation9 + $0x60] sm:$0xf]
        %v8784 = vld [vmem:[#allocation9 + $0x64] sm:$0xf]
        %v8785 = vld [vmem:[#allocation9 + $0x68] sm:$0xf]
        %v8786 = vld [vmem:[#allocation9 + $0x6c] sm:$0xf]
        %v8787 = vld [vmem:[#allocation9 + $0x70] sm:$0xf]
        %v8788 = vld [vmem:[#allocation9 + $0x74] sm:$0xf]
        %v8789 = vld [vmem:[#allocation9 + $0x78] sm:$0xf]
        %v8790 = vld [vmem:[#allocation9 + $0x7c] sm:$0xf]
        %v8791 = vld [vmem:[#allocation9 + $0x80] sm:$0xf]
        %v8792 = vld [vmem:[#allocation9 + $0x84] sm:$0xf]
        %v8793 = vld [vmem:[#allocation9 + $0x88] sm:$0xf]
        %v8794 = vld [vmem:[#allocation9 + $0x8c] sm:$0xf]
        %v8795 = vld [vmem:[#allocation9 + $0x90] sm:$0xf]
        %v8796 = vld [vmem:[#allocation9 + $0x94] sm:$0xf]
        %v8797 = vld [vmem:[#allocation9 + $0x98] sm:$0xf]
        %v8798 = vld [vmem:[#allocation9 + $0x9c] sm:$0xf]
        %v8799 = vld [vmem:[#allocation9 + $0xa0] sm:$0xf]
        %v8800 = vld [vmem:[#allocation9 + $0xa4] sm:$0xf]
        %v8801 = vld [vmem:[#allocation9 + $0xa8] sm:$0xf]
        %v8802 = vld [vmem:[#allocation9 + $0xac] sm:$0xf]
        %v8803 = vld [vmem:[#allocation9 + $0xb0] sm:$0xf]
        %v8804 = vld [vmem:[#allocation9 + $0xb4] sm:$0xf]
        %v8805 = vld [vmem:[#allocation9 + $0xb8] sm:$0xf]
        %v8806 = vld [vmem:[#allocation9 + $0xbc] sm:$0xf]
        %v8807 = vld [vmem:[#allocation9 + $0xc0] sm:$0xf]
        %v8808 = vld [vmem:[#allocation9 + $0xc4] sm:$0xf]
        %v8809 = vld [vmem:[#allocation9 + $0xc8] sm:$0xf]
        %v8810 = vld [vmem:[#allocation9 + $0xcc] sm:$0xf]
        %v8811 = vld [vmem:[#allocation9 + $0xd0] sm:$0xf]
        %v8812 = vld [vmem:[#allocation9 + $0xd4] sm:$0xf]
        %v8813 = vld [vmem:[#allocation9 + $0xd8] sm:$0xf]
        %v8814 = vld [vmem:[#allocation9 + $0xdc] sm:$0xf]
        %v8815 = vld [vmem:[#allocation9 + $0xe0] sm:$0xf]
        %v8816 = vld [vmem:[#allocation9 + $0xe4] sm:$0xf]
        %v8817 = vld [vmem:[#allocation9 + $0xe8] sm:$0xf]
        %v8818 = vld [vmem:[#allocation9 + $0xec] sm:$0xf]
        %v8819 = vld [vmem:[#allocation9 + $0xf0] sm:$0xf]
        %v8820 = vld [vmem:[#allocation9 + $0xf4] sm:$0xf]
        %v8821 = vld [vmem:[#allocation9 + $0xf8] sm:$0xf]
        %v8822 = vld [vmem:[#allocation9 + $0xfc] sm:$0xf]
        %v8823 = vld [vmem:[#allocation9 + $0x100] sm:$0xf]
        %v8824 = vld [vmem:[#allocation9 + $0x104] sm:$0xf]
        %v8825 = vld [vmem:[#allocation9 + $0x108] sm:$0xf]
        %v8826 = vld [vmem:[#allocation9 + $0x10c] sm:$0xf]
        %v8827 = vld [vmem:[#allocation9 + $0x110] sm:$0xf]
        %v8828 = vld [vmem:[#allocation9 + $0x114] sm:$0xf]
        %v8829 = vld [vmem:[#allocation9 + $0x118] sm:$0xf]
        %v8830 = vld [vmem:[#allocation9 + $0x11c] sm:$0xf]
        %v8831 = vld [vmem:[#allocation9 + $0x120] sm:$0xf]
        %v8832 = vld [vmem:[#allocation9 + $0x124] sm:$0xf]
        %v8833 = vld [vmem:[#allocation9 + $0x128] sm:$0xf]
        %v8834 = vld [vmem:[#allocation9 + $0x12c] sm:$0xf]
        %v8835 = vld [vmem:[#allocation9 + $0x130] sm:$0xf]
        %v8836 = vld [vmem:[#allocation9 + $0x134] sm:$0xf]
        %v8837 = vld [vmem:[#allocation9 + $0x138] sm:$0xf]
        %v8838 = vld [vmem:[#allocation9 + $0x13c] sm:$0xf]
        %v8839 = vld [vmem:[#allocation9 + $0x140] sm:$0xf]
        %v8840 = vld [vmem:[#allocation9 + $0x144] sm:$0xf]
        %v8841 = vld [vmem:[#allocation9 + $0x148] sm:$0xf]
        %v8842 = vld [vmem:[#allocation9 + $0x14c] sm:$0xf]
        %v8843 = vld [vmem:[#allocation9 + $0x150] sm:$0xf]
        %v8844 = vld [vmem:[#allocation9 + $0x154] sm:$0xf]
        %v8845 = vld [vmem:[#allocation9 + $0x158] sm:$0xf]
        %v8846 = vld [vmem:[#allocation9 + $0x15c] sm:$0xf]
        %v8847 = vld [vmem:[#allocation9 + $0x160] sm:$0xf]
        %v8848 = vld [vmem:[#allocation9 + $0x164] sm:$0xf]
        %v8849 = vld [vmem:[#allocation9 + $0x168] sm:$0xf]
        %v8850 = vld [vmem:[#allocation9 + $0x16c] sm:$0xf]
        %v8851 = vld [vmem:[#allocation9 + $0x170] sm:$0xf]
        %v8852 = vld [vmem:[#allocation9 + $0x174] sm:$0xf]
        %v8853 = vld [vmem:[#allocation9 + $0x178] sm:$0xf]
        %v8854 = vld [vmem:[#allocation9 + $0x17c] sm:$0xf]
        %v8855 = vld [vmem:[#allocation9 + $0x180] sm:$0xf]
        %v8856 = vld [vmem:[#allocation9 + $0x184] sm:$0xf]
        %v8857 = vld [vmem:[#allocation9 + $0x188] sm:$0xf]
        %v8858 = vld [vmem:[#allocation9 + $0x18c] sm:$0xf]
        %v8859 = vld [vmem:[#allocation9 + $0x190] sm:$0xf]
        %v8860 = vld [vmem:[#allocation9 + $0x194] sm:$0xf]
        %v8861 = vld [vmem:[#allocation9 + $0x198] sm:$0xf]
        %v8862 = vld [vmem:[#allocation9 + $0x19c] sm:$0xf]
        %v8863 = vld [vmem:[#allocation9 + $0x1a0] sm:$0xf]
        %v8864 = vld [vmem:[#allocation9 + $0x1a4] sm:$0xf]
        %v8865 = vld [vmem:[#allocation9 + $0x1a8] sm:$0xf]
        %v8866 = vld [vmem:[#allocation9 + $0x1ac] sm:$0xf]
        %v8867 = vld [vmem:[#allocation9 + $0x1b0] sm:$0xf]
        %v8868 = vld [vmem:[#allocation9 + $0x1b4] sm:$0xf]
        %v8869 = vld [vmem:[#allocation9 + $0x1b8] sm:$0xf]
        %v8870 = vld [vmem:[#allocation9 + $0x1bc] sm:$0xf]
        %v8871 = vld [vmem:[#allocation9 + $0x1c0] sm:$0xf]
        %v8872 = vld [vmem:[#allocation9 + $0x1c4] sm:$0xf]
        %v8873 = vld [vmem:[#allocation9 + $0x1c8] sm:$0xf]
        %v8874 = vld [vmem:[#allocation9 + $0x1cc] sm:$0xf]
        %v8875 = vld [vmem:[#allocation9 + $0x1d0] sm:$0xf]
        %v8876 = vld [vmem:[#allocation9 + $0x1d4] sm:$0xf]
        %v8877 = vld [vmem:[#allocation9 + $0x1d8] sm:$0xf]
        %v8878 = vld [vmem:[#allocation9 + $0x1dc] sm:$0xf]
        %v8879 = vld [vmem:[#allocation9 + $0x1e0] sm:$0xf]
        %v8880 = vld [vmem:[#allocation9 + $0x1e4] sm:$0xf]
        %v8881 = vld [vmem:[#allocation9 + $0x1e8] sm:$0xf]
        %v8882 = vld [vmem:[#allocation9 + $0x1ec] sm:$0xf]
        %v8883 = vld [vmem:[#allocation9 + $0x1f0] sm:$0xf]
        %v8884 = vld [vmem:[#allocation9 + $0x1f4] sm:$0xf]
        %v8885 = vld [vmem:[#allocation9 + $0x1f8] sm:$0xf]
        %v8886 = vld [vmem:[#allocation9 + $0x1fc] sm:$0xf]
        %v8887 = vld [vmem:[#allocation9 + $0x200] sm:$0xf]
        %v8888 = vld [vmem:[#allocation9 + $0x204] sm:$0xf]
        %v8889 = vld [vmem:[#allocation9 + $0x208] sm:$0xf]
        %v8890 = vld [vmem:[#allocation9 + $0x20c] sm:$0xf]
        %v8891 = vld [vmem:[#allocation9 + $0x210] sm:$0xf]
        %v8892 = vld [vmem:[#allocation9 + $0x214] sm:$0xf]
        %v8893 = vld [vmem:[#allocation9 + $0x218] sm:$0xf]
        %v8894 = vld [vmem:[#allocation9 + $0x21c] sm:$0xf]
        %v8895 = vld [vmem:[#allocation9 + $0x220] sm:$0xf]
        %v8896 = vld [vmem:[#allocation9 + $0x224] sm:$0xf]
        %v8897 = vld [vmem:[#allocation9 + $0x228] sm:$0xf]
        %v8898 = vld [vmem:[#allocation9 + $0x22c] sm:$0xf]
        %v8899 = vld [vmem:[#allocation9 + $0x230] sm:$0xf]
        %v8900 = vld [vmem:[#allocation9 + $0x234] sm:$0xf]
        %v8901 = vld [vmem:[#allocation9 + $0x238] sm:$0xf]
        %v8902 = vld [vmem:[#allocation9 + $0x23c] sm:$0xf]
        %v8903 = vld [vmem:[%s3 + $0x1] sm:$0x1]
        %v8904 = vperm.slane %v8903, 0
        %v9065 = vunpack.c.l.b16 %v8599
        %v9066 = vunpack.c.h.b16 %v8599
        %v9067 = vunpack.c.l.b16 %v8600
        %v9068 = vunpack.c.h.b16 %v8600
        %v9069 = vunpack.c.l.b16 %v8601
        %v9070 = vunpack.c.h.b16 %v8601
        %v9071 = vunpack.c.l.b16 %v8602
        %v9072 = vunpack.c.h.b16 %v8602
        %v9073 = vunpack.c.l.b16 %v8603
        %v9074 = vunpack.c.l.b16 %v8604
        %v9075 = vunpack.c.h.b16 %v8604
        %v9076 = vunpack.c.l.b16 %v8605
        %v9077 = vunpack.c.h.b16 %v8605
        %v9078 = vunpack.c.l.b16 %v8606
        %v9079 = vunpack.c.h.b16 %v8606
        %v9080 = vunpack.c.l.b16 %v8607
        %v9081 = vunpack.c.h.b16 %v8607
        %v9082 = vunpack.c.l.b16 %v8608
        %v9083 = vunpack.c.l.b16 %v8609
        %v9084 = vunpack.c.h.b16 %v8609
        %v9085 = vunpack.c.l.b16 %v8610
        %v9086 = vunpack.c.h.b16 %v8610
        %v9087 = vunpack.c.l.b16 %v8611
        %v9088 = vunpack.c.h.b16 %v8611
        %v9089 = vunpack.c.l.b16 %v8612
        %v9090 = vunpack.c.h.b16 %v8612
        %v9091 = vunpack.c.l.b16 %v8613
        %v9092 = vunpack.c.l.b16 %v8614
        %v9093 = vunpack.c.h.b16 %v8614
        %v9094 = vunpack.c.l.b16 %v8615
        %v9095 = vunpack.c.h.b16 %v8615
        %v9096 = vunpack.c.l.b16 %v8616
        %v9097 = vunpack.c.h.b16 %v8616
        %v9098 = vunpack.c.l.b16 %v8617
        %v9099 = vunpack.c.h.b16 %v8617
        %v9100 = vunpack.c.l.b16 %v8618
        %v9101 = vunpack.c.l.b16 %v8619
        %v9102 = vunpack.c.h.b16 %v8619
        %v9103 = vunpack.c.l.b16 %v8620
        %v9104 = vunpack.c.h.b16 %v8620
        %v9105 = vunpack.c.l.b16 %v8621
        %v9106 = vunpack.c.h.b16 %v8621
        %v9107 = vunpack.c.l.b16 %v8622
        %v9108 = vunpack.c.h.b16 %v8622
        %v9109 = vunpack.c.l.b16 %v8623
        %v9110 = vunpack.c.l.b16 %v8624
        %v9111 = vunpack.c.h.b16 %v8624
        %v9112 = vunpack.c.l.b16 %v8625
        %v9113 = vunpack.c.h.b16 %v8625
        %v9114 = vunpack.c.l.b16 %v8626
        %v9115 = vunpack.c.h.b16 %v8626
        %v9116 = vunpack.c.l.b16 %v8627
        %v9117 = vunpack.c.h.b16 %v8627
        %v9118 = vunpack.c.l.b16 %v8628
        %v9119 = vunpack.c.l.b16 %v8629
        %v9120 = vunpack.c.h.b16 %v8629
        %v9121 = vunpack.c.l.b16 %v8630
        %v9122 = vunpack.c.h.b16 %v8630
        %v9123 = vunpack.c.l.b16 %v8631
        %v9124 = vunpack.c.h.b16 %v8631
        %v9125 = vunpack.c.l.b16 %v8632
        %v9126 = vunpack.c.h.b16 %v8632
        %v9127 = vunpack.c.l.b16 %v8633
        %v9128 = vunpack.c.l.b16 %v8634
        %v9129 = vunpack.c.h.b16 %v8634
        %v9130 = vunpack.c.l.b16 %v8635
        %v9131 = vunpack.c.h.b16 %v8635
        %v9132 = vunpack.c.l.b16 %v8636
        %v9133 = vunpack.c.h.b16 %v8636
        %v9134 = vunpack.c.l.b16 %v8637
        %v9135 = vunpack.c.h.b16 %v8637
        %v9136 = vunpack.c.l.b16 %v8638
        %v9137 = vunpack.c.l.b16 %v8639
        %v9138 = vunpack.c.h.b16 %v8639
        %v9139 = vunpack.c.l.b16 %v8640
        %v9140 = vunpack.c.h.b16 %v8640
        %v9141 = vunpack.c.l.b16 %v8641
        %v9142 = vunpack.c.h.b16 %v8641
        %v9143 = vunpack.c.l.b16 %v8642
        %v9144 = vunpack.c.h.b16 %v8642
        %v9145 = vunpack.c.l.b16 %v8643
        %v9146 = vunpack.c.l.b16 %v8644
        %v9147 = vunpack.c.h.b16 %v8644
        %v9148 = vunpack.c.l.b16 %v8645
        %v9149 = vunpack.c.h.b16 %v8645
        %v9150 = vunpack.c.l.b16 %v8646
        %v9151 = vunpack.c.h.b16 %v8646
        %v9152 = vunpack.c.l.b16 %v8647
        %v9153 = vunpack.c.h.b16 %v8647
        %v9154 = vunpack.c.l.b16 %v8648
        %v9155 = vunpack.c.l.b16 %v8649
        %v9156 = vunpack.c.h.b16 %v8649
        %v9157 = vunpack.c.l.b16 %v8650
        %v9158 = vunpack.c.h.b16 %v8650
        %v9159 = vunpack.c.l.b16 %v8651
        %v9160 = vunpack.c.h.b16 %v8651
        %v9161 = vunpack.c.l.b16 %v8652
        %v9162 = vunpack.c.h.b16 %v8652
        %v9163 = vunpack.c.l.b16 %v8653
        %v9164 = vunpack.c.l.b16 %v8654
        %v9165 = vunpack.c.h.b16 %v8654
        %v9166 = vunpack.c.l.b16 %v8655
        %v9167 = vunpack.c.h.b16 %v8655
        %v9168 = vunpack.c.l.b16 %v8656
        %v9169 = vunpack.c.h.b16 %v8656
        %v9170 = vunpack.c.l.b16 %v8657
        %v9171 = vunpack.c.h.b16 %v8657
        %v9172 = vunpack.c.l.b16 %v8658
        %v9173 = vunpack.c.l.b16 %v8659
        %v9174 = vunpack.c.h.b16 %v8659
        %v9175 = vunpack.c.l.b16 %v8660
        %v9176 = vunpack.c.h.b16 %v8660
        %v9177 = vunpack.c.l.b16 %v8661
        %v9178 = vunpack.c.h.b16 %v8661
        %v9179 = vunpack.c.l.b16 %v8662
        %v9180 = vunpack.c.h.b16 %v8662
        %v9181 = vunpack.c.l.b16 %v8663
        %v9182 = vunpack.c.l.b16 %v8664
        %v9183 = vunpack.c.h.b16 %v8664
        %v9184 = vunpack.c.l.b16 %v8665
        %v9185 = vunpack.c.h.b16 %v8665
        %v9186 = vunpack.c.l.b16 %v8666
        %v9187 = vunpack.c.h.b16 %v8666
        %v9188 = vunpack.c.l.b16 %v8667
        %v9189 = vunpack.c.h.b16 %v8667
        %v9190 = vunpack.c.l.b16 %v8668
        %v9191 = vunpack.c.l.b16 %v8669
        %v9192 = vunpack.c.h.b16 %v8669
        %v9193 = vunpack.c.l.b16 %v8670
        %v9194 = vunpack.c.h.b16 %v8670
        %v9195 = vunpack.c.l.b16 %v8671
        %v9196 = vunpack.c.h.b16 %v8671
        %v9197 = vunpack.c.l.b16 %v8672
        %v9198 = vunpack.c.h.b16 %v8672
        %v9199 = vunpack.c.l.b16 %v8673
        %v9200 = vunpack.c.l.b16 %v8674
        %v9201 = vunpack.c.h.b16 %v8674
        %v9202 = vunpack.c.l.b16 %v8675
        %v9203 = vunpack.c.h.b16 %v8675
        %v9204 = vunpack.c.l.b16 %v8676
        %v9205 = vunpack.c.h.b16 %v8676
        %v9206 = vunpack.c.l.b16 %v8677
        %v9207 = vunpack.c.h.b16 %v8677
        %v9208 = vunpack.c.l.b16 %v8678
        %v9209 = vunpack.c.l.b16 %v8679
        %v9210 = vunpack.c.h.b16 %v8679
        %v9211 = vunpack.c.l.b16 %v8680
        %v9212 = vunpack.c.h.b16 %v8680
        %v9213 = vunpack.c.l.b16 %v8681
        %v9214 = vunpack.c.h.b16 %v8681
        %v9215 = vunpack.c.l.b16 %v8682
        %v9216 = vunpack.c.h.b16 %v8682
        %v9217 = vunpack.c.l.b16 %v8683
        %v9218 = vunpack.c.l.b16 %v8684
        %v9219 = vunpack.c.h.b16 %v8684
        %v9220 = vunpack.c.l.b16 %v8685
        %v9221 = vunpack.c.h.b16 %v8685
        %v9222 = vunpack.c.l.b16 %v8686
        %v9223 = vunpack.c.h.b16 %v8686
        %v9224 = vunpack.c.l.b16 %v8687
        %v9225 = vunpack.c.h.b16 %v8687
        %v9226 = vunpack.c.l.b16 %v8688
        %v9227 = vunpack.c.l.b16 %v8689
        %v9228 = vunpack.c.h.b16 %v8689
        %v9229 = vunpack.c.l.b16 %v8690
        %v9230 = vunpack.c.h.b16 %v8690
        %v9231 = vunpack.c.l.b16 %v8691
        %v9232 = vunpack.c.h.b16 %v8691
        %v9233 = vunpack.c.l.b16 %v8692
        %v9234 = vunpack.c.h.b16 %v8692
        %v9235 = vunpack.c.l.b16 %v8693
        %v9236 = vunpack.c.l.b16 %v8694
        %v9237 = vunpack.c.h.b16 %v8694
        %v9238 = vunpack.c.l.b16 %v8695
        %v9239 = vunpack.c.h.b16 %v8695
        %v9240 = vunpack.c.l.b16 %v8696
        %v9241 = vunpack.c.h.b16 %v8696
        %v9242 = vunpack.c.l.b16 %v8697
        %v9243 = vunpack.c.h.b16 %v8697
        %v9244 = vunpack.c.l.b16 %v8698
        %v9245 = vunpack.c.l.b16 %v8699
        %v9246 = vunpack.c.h.b16 %v8699
        %v9247 = vunpack.c.l.b16 %v8700
        %v9248 = vunpack.c.h.b16 %v8700
        %v9249 = vunpack.c.l.b16 %v8701
        %v9250 = vunpack.c.h.b16 %v8701
        %v9251 = vunpack.c.l.b16 %v8702
        %v9252 = vunpack.c.h.b16 %v8702
        %v9253 = vunpack.c.l.b16 %v8703
        %v9254 = vunpack.c.l.b16 %v8704
        %v9255 = vunpack.c.h.b16 %v8704
        %v9256 = vunpack.c.l.b16 %v8705
        %v9257 = vunpack.c.h.b16 %v8705
        %v9258 = vunpack.c.l.b16 %v8706
        %v9259 = vunpack.c.h.b16 %v8706
        %v9260 = vunpack.c.l.b16 %v8707
        %v9261 = vunpack.c.h.b16 %v8707
        %v9262 = vunpack.c.l.b16 %v8708
        %v9263 = vunpack.c.l.b16 %v8709
        %v9264 = vunpack.c.h.b16 %v8709
        %v9265 = vunpack.c.l.b16 %v8710
        %v9266 = vunpack.c.h.b16 %v8710
        %v9267 = vunpack.c.l.b16 %v8711
        %v9268 = vunpack.c.h.b16 %v8711
        %v9269 = vunpack.c.l.b16 %v8712
        %v9270 = vunpack.c.h.b16 %v8712
        %v9271 = vunpack.c.l.b16 %v8713
        %v9272 = vunpack.c.l.b16 %v8714
        %v9273 = vunpack.c.h.b16 %v8714
        %v9274 = vunpack.c.l.b16 %v8715
        %v9275 = vunpack.c.h.b16 %v8715
        %v9276 = vunpack.c.l.b16 %v8716
        %v9277 = vunpack.c.h.b16 %v8716
        %v9278 = vunpack.c.l.b16 %v8717
        %v9279 = vunpack.c.h.b16 %v8717
        %v9280 = vunpack.c.l.b16 %v8718
        %v9281 = vunpack.c.l.b16 %v8719
        %v9282 = vunpack.c.h.b16 %v8719
        %v9283 = vunpack.c.l.b16 %v8720
        %v9284 = vunpack.c.h.b16 %v8720
        %v9285 = vunpack.c.l.b16 %v8721
        %v9286 = vunpack.c.h.b16 %v8721
        %v9287 = vunpack.c.l.b16 %v8722
        %v9288 = vunpack.c.h.b16 %v8722
        %v9289 = vunpack.c.l.b16 %v8723
        %v9290 = vunpack.c.l.b16 %v8724
        %v9291 = vunpack.c.h.b16 %v8724
        %v9292 = vunpack.c.l.b16 %v8725
        %v9293 = vunpack.c.h.b16 %v8725
        %v9294 = vunpack.c.l.b16 %v8726
        %v9295 = vunpack.c.h.b16 %v8726
        %v9296 = vunpack.c.l.b16 %v8727
        %v9297 = vunpack.c.h.b16 %v8727
        %v9298 = vunpack.c.l.b16 %v8728
        %v9299 = vunpack.c.l.b16 %v8729
        %v9300 = vunpack.c.h.b16 %v8729
        %v9301 = vunpack.c.l.b16 %v8730
        %v9302 = vunpack.c.h.b16 %v8730
        %v9303 = vunpack.c.l.b16 %v8731
        %v9304 = vunpack.c.h.b16 %v8731
        %v9305 = vunpack.c.l.b16 %v8732
        %v9306 = vunpack.c.h.b16 %v8732
        %v9307 = vunpack.c.l.b16 %v8733
        %v9308 = vunpack.c.l.b16 %v8734
        %v9309 = vunpack.c.h.b16 %v8734
        %v9310 = vunpack.c.l.b16 %v8735
        %v9311 = vunpack.c.h.b16 %v8735
        %v9312 = vunpack.c.l.b16 %v8736
        %v9313 = vunpack.c.h.b16 %v8736
        %v9314 = vunpack.c.l.b16 %v8737
        %v9315 = vunpack.c.h.b16 %v8737
        %v9316 = vunpack.c.l.b16 %v8738
        %v9317 = vunpack.c.l.b16 %v8739
        %v9318 = vunpack.c.h.b16 %v8739
        %v9319 = vunpack.c.l.b16 %v8740
        %v9320 = vunpack.c.h.b16 %v8740
        %v9321 = vunpack.c.l.b16 %v8741
        %v9322 = vunpack.c.h.b16 %v8741
        %v9323 = vunpack.c.l.b16 %v8742
        %v9324 = vunpack.c.h.b16 %v8742
        %v9325 = vunpack.c.l.b16 %v8743
        %v9326 = vunpack.c.l.b16 %v8744
        %v9327 = vunpack.c.h.b16 %v8744
        %v9328 = vunpack.c.l.b16 %v8745
        %v9329 = vunpack.c.h.b16 %v8745
        %v9330 = vunpack.c.l.b16 %v8746
        %v9331 = vunpack.c.h.b16 %v8746
        %v9332 = vunpack.c.l.b16 %v8747
        %v9333 = vunpack.c.h.b16 %v8747
        %v9334 = vunpack.c.l.b16 %v8748
        %v9335 = vunpack.c.l.b16 %v8749
        %v9336 = vunpack.c.h.b16 %v8749
        %v9337 = vunpack.c.l.b16 %v8750
        %v9338 = vunpack.c.h.b16 %v8750
        %v9339 = vunpack.c.l.b16 %v8751
        %v9340 = vunpack.c.h.b16 %v8751
        %v9341 = vunpack.c.l.b16 %v8752
        %v9342 = vunpack.c.h.b16 %v8752
        %v9343 = vunpack.c.l.b16 %v8753
        %v9344 = vunpack.c.l.b16 %v8754
        %v9345 = vunpack.c.h.b16 %v8754
        %v9346 = vunpack.c.l.b16 %v8755
        %v9347 = vunpack.c.h.b16 %v8755
        %v9348 = vunpack.c.l.b16 %v8756
        %v9349 = vunpack.c.h.b16 %v8756
        %v9350 = vunpack.c.l.b16 %v8757
        %v9351 = vunpack.c.h.b16 %v8757
        %v9352 = vunpack.c.l.b16 %v8758
        %v9353 = vpack.c.b16 %v9074, %v9065
        %v9354 = vpack.c.b16 %v9075, %v9066
        %v9355 = vpack.c.b16 %v9076, %v9067
        %v9356 = vpack.c.b16 %v9077, %v9068
        %v9357 = vpack.c.b16 %v9078, %v9069
        %v9358 = vpack.c.b16 %v9079, %v9070
        %v9359 = vpack.c.b16 %v9080, %v9071
        %v9360 = vpack.c.b16 %v9081, %v9072
        %v9361 = vpack.c.b16 %v9082, %v9073
        %v9362 = vpack.c.b16 %v9092, %v9083
        %v9363 = vpack.c.b16 %v9093, %v9084
        %v9364 = vpack.c.b16 %v9094, %v9085
        %v9365 = vpack.c.b16 %v9095, %v9086
        %v9366 = vpack.c.b16 %v9096, %v9087
        %v9367 = vpack.c.b16 %v9097, %v9088
        %v9368 = vpack.c.b16 %v9098, %v9089
        %v9369 = vpack.c.b16 %v9099, %v9090
        %v9370 = vpack.c.b16 %v9100, %v9091
        %v9371 = vpack.c.b16 %v9110, %v9101
        %v9372 = vpack.c.b16 %v9111, %v9102
        %v9373 = vpack.c.b16 %v9112, %v9103
        %v9374 = vpack.c.b16 %v9113, %v9104
        %v9375 = vpack.c.b16 %v9114, %v9105
        %v9376 = vpack.c.b16 %v9115, %v9106
        %v9377 = vpack.c.b16 %v9116, %v9107
        %v9378 = vpack.c.b16 %v9117, %v9108
        %v9379 = vpack.c.b16 %v9118, %v9109
        %v9380 = vpack.c.b16 %v9128, %v9119
        %v9381 = vpack.c.b16 %v9129, %v9120
        %v9382 = vpack.c.b16 %v9130, %v9121
        %v9383 = vpack.c.b16 %v9131, %v9122
        %v9384 = vpack.c.b16 %v9132, %v9123
        %v9385 = vpack.c.b16 %v9133, %v9124
        %v9386 = vpack.c.b16 %v9134, %v9125
        %v9387 = vpack.c.b16 %v9135, %v9126
        %v9388 = vpack.c.b16 %v9136, %v9127
        %v9389 = vpack.c.b16 %v9146, %v9137
        %v9390 = vpack.c.b16 %v9147, %v9138
        %v9391 = vpack.c.b16 %v9148, %v9139
        %v9392 = vpack.c.b16 %v9149, %v9140
        %v9393 = vpack.c.b16 %v9150, %v9141
        %v9394 = vpack.c.b16 %v9151, %v9142
        %v9395 = vpack.c.b16 %v9152, %v9143
        %v9396 = vpack.c.b16 %v9153, %v9144
        %v9397 = vpack.c.b16 %v9154, %v9145
        %v9398 = vpack.c.b16 %v9164, %v9155
        %v9399 = vpack.c.b16 %v9165, %v9156
        %v9400 = vpack.c.b16 %v9166, %v9157
        %v9401 = vpack.c.b16 %v9167, %v9158
        %v9402 = vpack.c.b16 %v9168, %v9159
        %v9403 = vpack.c.b16 %v9169, %v9160
        %v9404 = vpack.c.b16 %v9170, %v9161
        %v9405 = vpack.c.b16 %v9171, %v9162
        %v9406 = vpack.c.b16 %v9172, %v9163
        %v9407 = vpack.c.b16 %v9182, %v9173
        %v9408 = vpack.c.b16 %v9183, %v9174
        %v9409 = vpack.c.b16 %v9184, %v9175
        %v9410 = vpack.c.b16 %v9185, %v9176
        %v9411 = vpack.c.b16 %v9186, %v9177
        %v9412 = vpack.c.b16 %v9187, %v9178
        %v9413 = vpack.c.b16 %v9188, %v9179
        %v9414 = vpack.c.b16 %v9189, %v9180
        %v9415 = vpack.c.b16 %v9190, %v9181
        %v9416 = vpack.c.b16 %v9200, %v9191
        %v9417 = vpack.c.b16 %v9201, %v9192
        %v9418 = vpack.c.b16 %v9202, %v9193
        %v9419 = vpack.c.b16 %v9203, %v9194
        %v9420 = vpack.c.b16 %v9204, %v9195
        %v9421 = vpack.c.b16 %v9205, %v9196
        %v9422 = vpack.c.b16 %v9206, %v9197
        %v9423 = vpack.c.b16 %v9207, %v9198
        %v9424 = vpack.c.b16 %v9208, %v9199
        %v9425 = vpack.c.b16 %v9218, %v9209
        %v9426 = vpack.c.b16 %v9219, %v9210
        %v9427 = vpack.c.b16 %v9220, %v9211
        %v9428 = vpack.c.b16 %v9221, %v9212
        %v9429 = vpack.c.b16 %v9222, %v9213
        %v9430 = vpack.c.b16 %v9223, %v9214
        %v9431 = vpack.c.b16 %v9224, %v9215
        %v9432 = vpack.c.b16 %v9225, %v9216
        %v9433 = vpack.c.b16 %v9226, %v9217
        %v9434 = vpack.c.b16 %v9236, %v9227
        %v9435 = vpack.c.b16 %v9237, %v9228
        %v9436 = vpack.c.b16 %v9238, %v9229
        %v9437 = vpack.c.b16 %v9239, %v9230
        %v9438 = vpack.c.b16 %v9240, %v9231
        %v9439 = vpack.c.b16 %v9241, %v9232
        %v9440 = vpack.c.b16 %v9242, %v9233
        %v9441 = vpack.c.b16 %v9243, %v9234
        %v9442 = vpack.c.b16 %v9244, %v9235
        %v9443 = vpack.c.b16 %v9254, %v9245
        %v9444 = vpack.c.b16 %v9255, %v9246
        %v9445 = vpack.c.b16 %v9256, %v9247
        %v9446 = vpack.c.b16 %v9257, %v9248
        %v9447 = vpack.c.b16 %v9258, %v9249
        %v9448 = vpack.c.b16 %v9259, %v9250
        %v9449 = vpack.c.b16 %v9260, %v9251
        %v9450 = vpack.c.b16 %v9261, %v9252
        %v9451 = vpack.c.b16 %v9262, %v9253
        %v9452 = vpack.c.b16 %v9272, %v9263
        %v9453 = vpack.c.b16 %v9273, %v9264
        %v9454 = vpack.c.b16 %v9274, %v9265
        %v9455 = vpack.c.b16 %v9275, %v9266
        %v9456 = vpack.c.b16 %v9276, %v9267
        %v9457 = vpack.c.b16 %v9277, %v9268
        %v9458 = vpack.c.b16 %v9278, %v9269
        %v9459 = vpack.c.b16 %v9279, %v9270
        %v9460 = vpack.c.b16 %v9280, %v9271
        %v9461 = vpack.c.b16 %v9290, %v9281
        %v9462 = vpack.c.b16 %v9291, %v9282
        %v9463 = vpack.c.b16 %v9292, %v9283
        %v9464 = vpack.c.b16 %v9293, %v9284
        %v9465 = vpack.c.b16 %v9294, %v9285
        %v9466 = vpack.c.b16 %v9295, %v9286
        %v9467 = vpack.c.b16 %v9296, %v9287
        %v9468 = vpack.c.b16 %v9297, %v9288
        %v9469 = vpack.c.b16 %v9298, %v9289
        %v9470 = vpack.c.b16 %v9308, %v9299
        %v9471 = vpack.c.b16 %v9309, %v9300
        %v9472 = vpack.c.b16 %v9310, %v9301
        %v9473 = vpack.c.b16 %v9311, %v9302
        %v9474 = vpack.c.b16 %v9312, %v9303
        %v9475 = vpack.c.b16 %v9313, %v9304
        %v9476 = vpack.c.b16 %v9314, %v9305
        %v9477 = vpack.c.b16 %v9315, %v9306
        %v9478 = vpack.c.b16 %v9316, %v9307
        %v9479 = vpack.c.b16 %v9326, %v9317
        %v9480 = vpack.c.b16 %v9327, %v9318
        %v9481 = vpack.c.b16 %v9328, %v9319
        %v9482 = vpack.c.b16 %v9329, %v9320
        %v9483 = vpack.c.b16 %v9330, %v9321
        %v9484 = vpack.c.b16 %v9331, %v9322
        %v9485 = vpack.c.b16 %v9332, %v9323
        %v9486 = vpack.c.b16 %v9333, %v9324
        %v9487 = vpack.c.b16 %v9334, %v9325
        %v9488 = vpack.c.b16 %v9344, %v9335
        %v9489 = vpack.c.b16 %v9345, %v9336
        %v9490 = vpack.c.b16 %v9346, %v9337
        %v9491 = vpack.c.b16 %v9347, %v9338
        %v9492 = vpack.c.b16 %v9348, %v9339
        %v9493 = vpack.c.b16 %v9349, %v9340
        %v9494 = vpack.c.b16 %v9350, %v9341
        %v9495 = vpack.c.b16 %v9351, %v9342
        %v9496 = vpack.c.b16 %v9352, %v9343
        %v9785 = vunpack.c.l.b16 %v8759
        %v9786 = vunpack.c.l.b16 %v8760
        %v9787 = vunpack.c.l.b16 %v8761
        %v9788 = vunpack.c.l.b16 %v8762
        %v9789 = vunpack.c.l.b16 %v8763
        %v9790 = vunpack.c.l.b16 %v8764
        %v9791 = vunpack.c.l.b16 %v8765
        %v9792 = vunpack.c.l.b16 %v8766
        %v9793 = vunpack.c.l.b16 %v8767
        %v9794 = vunpack.c.l.b16 %v8768
        %v9795 = vunpack.c.l.b16 %v8769
        %v9796 = vunpack.c.l.b16 %v8770
        %v9797 = vunpack.c.l.b16 %v8771
        %v9798 = vunpack.c.l.b16 %v8772
        %v9799 = vunpack.c.l.b16 %v8773
        %v9800 = vunpack.c.l.b16 %v8774
        %v9801 = vunpack.c.l.b16 %v8775
        %v9802 = vunpack.c.l.b16 %v8776
        %v9803 = vunpack.c.l.b16 %v8777
        %v9804 = vunpack.c.l.b16 %v8778
        %v9805 = vunpack.c.l.b16 %v8779
        %v9806 = vunpack.c.l.b16 %v8780
        %v9807 = vunpack.c.l.b16 %v8781
        %v9808 = vunpack.c.l.b16 %v8782
        %v9809 = vunpack.c.l.b16 %v8783
        %v9810 = vunpack.c.l.b16 %v8784
        %v9811 = vunpack.c.l.b16 %v8785
        %v9812 = vunpack.c.l.b16 %v8786
        %v9813 = vunpack.c.l.b16 %v8787
        %v9814 = vunpack.c.l.b16 %v8788
        %v9815 = vunpack.c.l.b16 %v8789
        %v9816 = vunpack.c.l.b16 %v8790
        %v9817 = vunpack.c.l.b16 %v8791
        %v9818 = vunpack.c.l.b16 %v8792
        %v9819 = vunpack.c.l.b16 %v8793
        %v9820 = vunpack.c.l.b16 %v8794
        %v9821 = vunpack.c.l.b16 %v8795
        %v9822 = vunpack.c.l.b16 %v8796
        %v9823 = vunpack.c.l.b16 %v8797
        %v9824 = vunpack.c.l.b16 %v8798
        %v9825 = vunpack.c.l.b16 %v8799
        %v9826 = vunpack.c.l.b16 %v8800
        %v9827 = vunpack.c.l.b16 %v8801
        %v9828 = vunpack.c.l.b16 %v8802
        %v9829 = vunpack.c.l.b16 %v8803
        %v9830 = vunpack.c.l.b16 %v8804
        %v9831 = vunpack.c.l.b16 %v8805
        %v9832 = vunpack.c.l.b16 %v8806
        %v9833 = vunpack.c.l.b16 %v8807
        %v9834 = vunpack.c.l.b16 %v8808
        %v9835 = vunpack.c.l.b16 %v8809
        %v9836 = vunpack.c.l.b16 %v8810
        %v9837 = vunpack.c.l.b16 %v8811
        %v9838 = vunpack.c.l.b16 %v8812
        %v9839 = vunpack.c.l.b16 %v8813
        %v9840 = vunpack.c.l.b16 %v8814
        %v9841 = vunpack.c.l.b16 %v8815
        %v9842 = vunpack.c.l.b16 %v8816
        %v9843 = vunpack.c.l.b16 %v8817
        %v9844 = vunpack.c.l.b16 %v8818
        %v9845 = vunpack.c.l.b16 %v8819
        %v9846 = vunpack.c.l.b16 %v8820
        %v9847 = vunpack.c.l.b16 %v8821
        %v9848 = vunpack.c.l.b16 %v8822
        %v9849 = vunpack.c.l.b16 %v8823
        %v9850 = vunpack.c.l.b16 %v8824
        %v9851 = vunpack.c.l.b16 %v8825
        %v9852 = vunpack.c.l.b16 %v8826
        %v9853 = vunpack.c.l.b16 %v8827
        %v9854 = vunpack.c.l.b16 %v8828
        %v9855 = vunpack.c.l.b16 %v8829
        %v9856 = vunpack.c.l.b16 %v8830
        %v9857 = vunpack.c.l.b16 %v8831
        %v9858 = vunpack.c.l.b16 %v8832
        %v9859 = vunpack.c.l.b16 %v8833
        %v9860 = vunpack.c.l.b16 %v8834
        %v9861 = vunpack.c.l.b16 %v8835
        %v9862 = vunpack.c.l.b16 %v8836
        %v9863 = vunpack.c.l.b16 %v8837
        %v9864 = vunpack.c.l.b16 %v8838
        %v9865 = vunpack.c.l.b16 %v8839
        %v9866 = vunpack.c.l.b16 %v8840
        %v9867 = vunpack.c.l.b16 %v8841
        %v9868 = vunpack.c.l.b16 %v8842
        %v9869 = vunpack.c.l.b16 %v8843
        %v9870 = vunpack.c.l.b16 %v8844
        %v9871 = vunpack.c.l.b16 %v8845
        %v9872 = vunpack.c.l.b16 %v8846
        %v9873 = vunpack.c.l.b16 %v8847
        %v9874 = vunpack.c.l.b16 %v8848
        %v9875 = vunpack.c.l.b16 %v8849
        %v9876 = vunpack.c.l.b16 %v8850
        %v9877 = vunpack.c.l.b16 %v8851
        %v9878 = vunpack.c.l.b16 %v8852
        %v9879 = vunpack.c.l.b16 %v8853
        %v9880 = vunpack.c.l.b16 %v8854
        %v9881 = vunpack.c.l.b16 %v8855
        %v9882 = vunpack.c.l.b16 %v8856
        %v9883 = vunpack.c.l.b16 %v8857
        %v9884 = vunpack.c.l.b16 %v8858
        %v9885 = vunpack.c.l.b16 %v8859
        %v9886 = vunpack.c.l.b16 %v8860
        %v9887 = vunpack.c.l.b16 %v8861
        %v9888 = vunpack.c.l.b16 %v8862
        %v9889 = vunpack.c.l.b16 %v8863
        %v9890 = vunpack.c.l.b16 %v8864
        %v9891 = vunpack.c.l.b16 %v8865
        %v9892 = vunpack.c.l.b16 %v8866
        %v9893 = vunpack.c.l.b16 %v8867
        %v9894 = vunpack.c.l.b16 %v8868
        %v9895 = vunpack.c.l.b16 %v8869
        %v9896 = vunpack.c.l.b16 %v8870
        %v9897 = vunpack.c.l.b16 %v8871
        %v9898 = vunpack.c.l.b16 %v8872
        %v9899 = vunpack.c.l.b16 %v8873
        %v9900 = vunpack.c.l.b16 %v8874
        %v9901 = vunpack.c.l.b16 %v8875
        %v9902 = vunpack.c.l.b16 %v8876
        %v9903 = vunpack.c.l.b16 %v8877
        %v9904 = vunpack.c.l.b16 %v8878
        %v9905 = vunpack.c.l.b16 %v8879
        %v9906 = vunpack.c.l.b16 %v8880
        %v9907 = vunpack.c.l.b16 %v8881
        %v9908 = vunpack.c.l.b16 %v8882
        %v9909 = vunpack.c.l.b16 %v8883
        %v9910 = vunpack.c.l.b16 %v8884
        %v9911 = vunpack.c.l.b16 %v8885
        %v9912 = vunpack.c.l.b16 %v8886
        %v9913 = vunpack.c.l.b16 %v8887
        %v9914 = vunpack.c.l.b16 %v8888
        %v9915 = vunpack.c.l.b16 %v8889
        %v9916 = vunpack.c.l.b16 %v8890
        %v9917 = vunpack.c.l.b16 %v8891
        %v9918 = vunpack.c.l.b16 %v8892
        %v9919 = vunpack.c.l.b16 %v8893
        %v9920 = vunpack.c.l.b16 %v8894
        %v9921 = vunpack.c.l.b16 %v8895
        %v9922 = vunpack.c.l.b16 %v8896
        %v9923 = vunpack.c.l.b16 %v8897
        %v9924 = vunpack.c.l.b16 %v8898
        %v9925 = vunpack.c.l.b16 %v8899
        %v9926 = vunpack.c.l.b16 %v8900
        %v9927 = vunpack.c.l.b16 %v8901
        %v9928 = vunpack.c.l.b16 %v8902
        %v9929 = vpack.c.b16 %v9786, %v9785
        %v9930 = vpack.c.b16 %v9788, %v9787
        %v9931 = vpack.c.b16 %v9790, %v9789
        %v9932 = vpack.c.b16 %v9792, %v9791
        %v9933 = vpack.c.b16 %v9794, %v9793
        %v9934 = vpack.c.b16 %v9796, %v9795
        %v9935 = vpack.c.b16 %v9798, %v9797
        %v9936 = vpack.c.b16 %v9800, %v9799
        %v9937 = vpack.c.b16 %v9802, %v9801
        %v9938 = vpack.c.b16 %v9804, %v9803
        %v9939 = vpack.c.b16 %v9806, %v9805
        %v9940 = vpack.c.b16 %v9808, %v9807
        %v9941 = vpack.c.b16 %v9810, %v9809
        %v9942 = vpack.c.b16 %v9812, %v9811
        %v9943 = vpack.c.b16 %v9814, %v9813
        %v9944 = vpack.c.b16 %v9816, %v9815
        %v9945 = vpack.c.b16 %v9818, %v9817
        %v9946 = vpack.c.b16 %v9820, %v9819
        %v9947 = vpack.c.b16 %v9822, %v9821
        %v9948 = vpack.c.b16 %v9824, %v9823
        %v9949 = vpack.c.b16 %v9826, %v9825
        %v9950 = vpack.c.b16 %v9828, %v9827
        %v9951 = vpack.c.b16 %v9830, %v9829
        %v9952 = vpack.c.b16 %v9832, %v9831
        %v9953 = vpack.c.b16 %v9834, %v9833
        %v9954 = vpack.c.b16 %v9836, %v9835
        %v9955 = vpack.c.b16 %v9838, %v9837
        %v9956 = vpack.c.b16 %v9840, %v9839
        %v9957 = vpack.c.b16 %v9842, %v9841
        %v9958 = vpack.c.b16 %v9844, %v9843
        %v9959 = vpack.c.b16 %v9846, %v9845
        %v9960 = vpack.c.b16 %v9848, %v9847
        %v9961 = vpack.c.b16 %v9850, %v9849
        %v9962 = vpack.c.b16 %v9852, %v9851
        %v9963 = vpack.c.b16 %v9854, %v9853
        %v9964 = vpack.c.b16 %v9856, %v9855
        %v9965 = vpack.c.b16 %v9858, %v9857
        %v9966 = vpack.c.b16 %v9860, %v9859
        %v9967 = vpack.c.b16 %v9862, %v9861
        %v9968 = vpack.c.b16 %v9864, %v9863
        %v9969 = vpack.c.b16 %v9866, %v9865
        %v9970 = vpack.c.b16 %v9868, %v9867
        %v9971 = vpack.c.b16 %v9870, %v9869
        %v9972 = vpack.c.b16 %v9872, %v9871
        %v9973 = vpack.c.b16 %v9874, %v9873
        %v9974 = vpack.c.b16 %v9876, %v9875
        %v9975 = vpack.c.b16 %v9878, %v9877
        %v9976 = vpack.c.b16 %v9880, %v9879
        %v9977 = vpack.c.b16 %v9882, %v9881
        %v9978 = vpack.c.b16 %v9884, %v9883
        %v9979 = vpack.c.b16 %v9886, %v9885
        %v9980 = vpack.c.b16 %v9888, %v9887
        %v9981 = vpack.c.b16 %v9890, %v9889
        %v9982 = vpack.c.b16 %v9892, %v9891
        %v9983 = vpack.c.b16 %v9894, %v9893
        %v9984 = vpack.c.b16 %v9896, %v9895
        %v9985 = vpack.c.b16 %v9898, %v9897
        %v9986 = vpack.c.b16 %v9900, %v9899
        %v9987 = vpack.c.b16 %v9902, %v9901
        %v9988 = vpack.c.b16 %v9904, %v9903
        %v9989 = vpack.c.b16 %v9906, %v9905
        %v9990 = vpack.c.b16 %v9908, %v9907
        %v9991 = vpack.c.b16 %v9910, %v9909
        %v9992 = vpack.c.b16 %v9912, %v9911
        %v9993 = vpack.c.b16 %v9914, %v9913
        %v9994 = vpack.c.b16 %v9916, %v9915
        %v9995 = vpack.c.b16 %v9918, %v9917
        %v9996 = vpack.c.b16 %v9920, %v9919
        %v9997 = vpack.c.b16 %v9922, %v9921
        %v9998 = vpack.c.b16 %v9924, %v9923
        %v9999 = vpack.c.b16 %v9926, %v9925
        %v10000 = vpack.c.b16 %v9928, %v9927
        %10073 = vmatpush.bf16.msra.mxu0 %v9936
        %10074 = vmatpush.bf16.msra.mxu0 %v9935
        %10075 = vmatpush.bf16.msra.mxu0 %v9934
        %10076 = vmatpush.bf16.msra.mxu0 %v9933
        %10077 = vmatpush.bf16.msra.mxu0 %v9932
        %10078 = vmatpush.bf16.msra.mxu0 %v9931
        %10079 = vmatpush.bf16.msra.mxu0 %v9930
        %10080 = vmatpush.bf16.msra.mxu0 %v9929
        %10081 = vmatmul.bf16.gmra.mxu0 %v9353
        %v10082 = vpop.f32.mrf.mxu0
        %v10083 = vadd.f32 %v8904, %v10082
        %v10084 = vpop.f32.mrf.mxu0
        %v10085 = vadd.f32 %v8904, %v10084
        %10086 = vmatmul.bf16.gmra.mxu0 %v9362
        %v10087 = vpop.f32.mrf.mxu0
        %v10088 = vadd.f32 %v8904, %v10087
        %v10089 = vpop.f32.mrf.mxu0
        %v10090 = vadd.f32 %v8904, %v10089
        %10091 = vmatmul.bf16.gmra.mxu0 %v9371
        %v10092 = vpop.f32.mrf.mxu0
        %v10093 = vadd.f32 %v8904, %v10092
        %v10094 = vpop.f32.mrf.mxu0
        %v10095 = vadd.f32 %v8904, %v10094
        %10096 = vmatmul.bf16.gmra.mxu0 %v9380
        %v10097 = vpop.f32.mrf.mxu0
        %v10098 = vadd.f32 %v8904, %v10097
        %v10099 = vpop.f32.mrf.mxu0
        %v10100 = vadd.f32 %v8904, %v10099
        %10101 = vmatmul.bf16.gmra.mxu0 %v9389
        %v10102 = vpop.f32.mrf.mxu0
        %v10103 = vadd.f32 %v8904, %v10102
        %v10104 = vpop.f32.mrf.mxu0
        %v10105 = vadd.f32 %v8904, %v10104
        %10106 = vmatmul.bf16.gmra.mxu0 %v9398
        %v10107 = vpop.f32.mrf.mxu0
        %v10108 = vadd.f32 %v8904, %v10107
        %v10109 = vpop.f32.mrf.mxu0
        %v10110 = vadd.f32 %v8904, %v10109
        %10111 = vmatmul.bf16.gmra.mxu0 %v9407
        %v10112 = vpop.f32.mrf.mxu0
        %v10113 = vadd.f32 %v8904, %v10112
        %v10114 = vpop.f32.mrf.mxu0
        %v10115 = vadd.f32 %v8904, %v10114
        %10116 = vmatmul.bf16.gmra.mxu0 %v9416
        %v10117 = vpop.f32.mrf.mxu0
        %v10118 = vadd.f32 %v8904, %v10117
        %v10119 = vpop.f32.mrf.mxu0
        %v10120 = vadd.f32 %v8904, %v10119
        %10121 = vmatmul.bf16.gmra.mxu0 %v9425
        %v10122 = vpop.f32.mrf.mxu0
        %v10123 = vadd.f32 %v8904, %v10122
        %v10124 = vpop.f32.mrf.mxu0
        %v10125 = vadd.f32 %v8904, %v10124
        %10126 = vmatmul.bf16.gmra.mxu0 %v9434
        %v10127 = vpop.f32.mrf.mxu0
        %v10128 = vadd.f32 %v8904, %v10127
        %v10129 = vpop.f32.mrf.mxu0
        %v10130 = vadd.f32 %v8904, %v10129
        %10131 = vmatmul.bf16.gmra.mxu0 %v9443
        %v10132 = vpop.f32.mrf.mxu0
        %v10133 = vadd.f32 %v8904, %v10132
        %v10134 = vpop.f32.mrf.mxu0
        %v10135 = vadd.f32 %v8904, %v10134
        %10136 = vmatmul.bf16.gmra.mxu0 %v9452
        %v10137 = vpop.f32.mrf.mxu0
        %v10138 = vadd.f32 %v8904, %v10137
        %v10139 = vpop.f32.mrf.mxu0
        %v10140 = vadd.f32 %v8904, %v10139
        %10141 = vmatmul.bf16.gmra.mxu0 %v9461
        %v10142 = vpop.f32.mrf.mxu0
        %v10143 = vadd.f32 %v8904, %v10142
        %v10144 = vpop.f32.mrf.mxu0
        %v10145 = vadd.f32 %v8904, %v10144
        %10146 = vmatmul.bf16.gmra.mxu0 %v9470
        %v10147 = vpop.f32.mrf.mxu0
        %v10148 = vadd.f32 %v8904, %v10147
        %v10149 = vpop.f32.mrf.mxu0
        %v10150 = vadd.f32 %v8904, %v10149
        %10151 = vmatmul.bf16.gmra.mxu0 %v9479
        %v10152 = vpop.f32.mrf.mxu0
        %v10153 = vadd.f32 %v8904, %v10152
        %v10154 = vpop.f32.mrf.mxu0
        %v10155 = vadd.f32 %v8904, %v10154
        %10156 = vmatmul.bf16.gmra.mxu0 %v9488
        %v10157 = vpop.f32.mrf.mxu0
        %v10158 = vadd.f32 %v8904, %v10157
        %v10159 = vpop.f32.mrf.mxu0
        %v10160 = vadd.f32 %v8904, %v10159
        %10161 = vdwg.mxu0
        %10162 = vmatpush.bf16.msra.mxu0 %v9944
        %10163 = vmatpush.bf16.msra.mxu0 %v9943
        %10164 = vmatpush.bf16.msra.mxu0 %v9942
        %10165 = vmatpush.bf16.msra.mxu0 %v9941
        %10166 = vmatpush.bf16.msra.mxu0 %v9940
        %10167 = vmatpush.bf16.msra.mxu0 %v9939
        %10168 = vmatpush.bf16.msra.mxu0 %v9938
        %10169 = vmatpush.bf16.msra.mxu0 %v9937
        %10170 = vmatmul.bf16.gmra.mxu0 %v9354
        %v10171 = vpop.f32.mrf.mxu0
        %v10172 = vadd.f32 %v10083, %v10171
        %v10173 = vpop.f32.mrf.mxu0
        %v10174 = vadd.f32 %v10085, %v10173
        %10175 = vmatmul.bf16.gmra.mxu0 %v9363
        %v10176 = vpop.f32.mrf.mxu0
        %v10177 = vadd.f32 %v10088, %v10176
        %v10178 = vpop.f32.mrf.mxu0
        %v10179 = vadd.f32 %v10090, %v10178
        %10180 = vmatmul.bf16.gmra.mxu0 %v9372
        %v10181 = vpop.f32.mrf.mxu0
        %v10182 = vadd.f32 %v10093, %v10181
        %v10183 = vpop.f32.mrf.mxu0
        %v10184 = vadd.f32 %v10095, %v10183
        %10185 = vmatmul.bf16.gmra.mxu0 %v9381
        %v10186 = vpop.f32.mrf.mxu0
        %v10187 = vadd.f32 %v10098, %v10186
        %v10188 = vpop.f32.mrf.mxu0
        %v10189 = vadd.f32 %v10100, %v10188
        %10190 = vmatmul.bf16.gmra.mxu0 %v9390
        %v10191 = vpop.f32.mrf.mxu0
        %v10192 = vadd.f32 %v10103, %v10191
        %v10193 = vpop.f32.mrf.mxu0
        %v10194 = vadd.f32 %v10105, %v10193
        %10195 = vmatmul.bf16.gmra.mxu0 %v9399
        %v10196 = vpop.f32.mrf.mxu0
        %v10197 = vadd.f32 %v10108, %v10196
        %v10198 = vpop.f32.mrf.mxu0
        %v10199 = vadd.f32 %v10110, %v10198
        %10200 = vmatmul.bf16.gmra.mxu0 %v9408
        %v10201 = vpop.f32.mrf.mxu0
        %v10202 = vadd.f32 %v10113, %v10201
        %v10203 = vpop.f32.mrf.mxu0
        %v10204 = vadd.f32 %v10115, %v10203
        %10205 = vmatmul.bf16.gmra.mxu0 %v9417
        %v10206 = vpop.f32.mrf.mxu0
        %v10207 = vadd.f32 %v10118, %v10206
        %v10208 = vpop.f32.mrf.mxu0
        %v10209 = vadd.f32 %v10120, %v10208
        %10210 = vmatmul.bf16.gmra.mxu0 %v9426
        %v10211 = vpop.f32.mrf.mxu0
        %v10212 = vadd.f32 %v10123, %v10211
        %v10213 = vpop.f32.mrf.mxu0
        %v10214 = vadd.f32 %v10125, %v10213
        %10215 = vmatmul.bf16.gmra.mxu0 %v9435
        %v10216 = vpop.f32.mrf.mxu0
        %v10217 = vadd.f32 %v10128, %v10216
        %v10218 = vpop.f32.mrf.mxu0
        %v10219 = vadd.f32 %v10130, %v10218
        %10220 = vmatmul.bf16.gmra.mxu0 %v9444
        %v10221 = vpop.f32.mrf.mxu0
        %v10222 = vadd.f32 %v10133, %v10221
        %v10223 = vpop.f32.mrf.mxu0
        %v10224 = vadd.f32 %v10135, %v10223
        %10225 = vmatmul.bf16.gmra.mxu0 %v9453
        %v10226 = vpop.f32.mrf.mxu0
        %v10227 = vadd.f32 %v10138, %v10226
        %v10228 = vpop.f32.mrf.mxu0
        %v10229 = vadd.f32 %v10140, %v10228
        %10230 = vmatmul.bf16.gmra.mxu0 %v9462
        %v10231 = vpop.f32.mrf.mxu0
        %v10232 = vadd.f32 %v10143, %v10231
        %v10233 = vpop.f32.mrf.mxu0
        %v10234 = vadd.f32 %v10145, %v10233
        %10235 = vmatmul.bf16.gmra.mxu0 %v9471
        %v10236 = vpop.f32.mrf.mxu0
        %v10237 = vadd.f32 %v10148, %v10236
        %v10238 = vpop.f32.mrf.mxu0
        %v10239 = vadd.f32 %v10150, %v10238
        %10240 = vmatmul.bf16.gmra.mxu0 %v9480
        %v10241 = vpop.f32.mrf.mxu0
        %v10242 = vadd.f32 %v10153, %v10241
        %v10243 = vpop.f32.mrf.mxu0
        %v10244 = vadd.f32 %v10155, %v10243
        %10245 = vmatmul.bf16.gmra.mxu0 %v9489
        %v10246 = vpop.f32.mrf.mxu0
        %v10247 = vadd.f32 %v10158, %v10246
        %v10248 = vpop.f32.mrf.mxu0
        %v10249 = vadd.f32 %v10160, %v10248
        %10250 = vdwg.mxu0
        %10251 = vmatpush.bf16.msra.mxu0 %v9952
        %10252 = vmatpush.bf16.msra.mxu0 %v9951
        %10253 = vmatpush.bf16.msra.mxu0 %v9950
        %10254 = vmatpush.bf16.msra.mxu0 %v9949
        %10255 = vmatpush.bf16.msra.mxu0 %v9948
        %10256 = vmatpush.bf16.msra.mxu0 %v9947
        %10257 = vmatpush.bf16.msra.mxu0 %v9946
        %10258 = vmatpush.bf16.msra.mxu0 %v9945
        %10259 = vmatmul.bf16.gmra.mxu0 %v9355
        %v10260 = vpop.f32.mrf.mxu0
        %v10261 = vadd.f32 %v10172, %v10260
        %v10262 = vpop.f32.mrf.mxu0
        %v10263 = vadd.f32 %v10174, %v10262
        %10264 = vmatmul.bf16.gmra.mxu0 %v9364
        %v10265 = vpop.f32.mrf.mxu0
        %v10266 = vadd.f32 %v10177, %v10265
        %v10267 = vpop.f32.mrf.mxu0
        %v10268 = vadd.f32 %v10179, %v10267
        %10269 = vmatmul.bf16.gmra.mxu0 %v9373
        %v10270 = vpop.f32.mrf.mxu0
        %v10271 = vadd.f32 %v10182, %v10270
        %v10272 = vpop.f32.mrf.mxu0
        %v10273 = vadd.f32 %v10184, %v10272
        %10274 = vmatmul.bf16.gmra.mxu0 %v9382
        %v10275 = vpop.f32.mrf.mxu0
        %v10276 = vadd.f32 %v10187, %v10275
        %v10277 = vpop.f32.mrf.mxu0
        %v10278 = vadd.f32 %v10189, %v10277
        %10279 = vmatmul.bf16.gmra.mxu0 %v9391
        %v10280 = vpop.f32.mrf.mxu0
        %v10281 = vadd.f32 %v10192, %v10280
        %v10282 = vpop.f32.mrf.mxu0
        %v10283 = vadd.f32 %v10194, %v10282
        %10284 = vmatmul.bf16.gmra.mxu0 %v9400
        %v10285 = vpop.f32.mrf.mxu0
        %v10286 = vadd.f32 %v10197, %v10285
        %v10287 = vpop.f32.mrf.mxu0
        %v10288 = vadd.f32 %v10199, %v10287
        %10289 = vmatmul.bf16.gmra.mxu0 %v9409
        %v10290 = vpop.f32.mrf.mxu0
        %v10291 = vadd.f32 %v10202, %v10290
        %v10292 = vpop.f32.mrf.mxu0
        %v10293 = vadd.f32 %v10204, %v10292
        %10294 = vmatmul.bf16.gmra.mxu0 %v9418
        %v10295 = vpop.f32.mrf.mxu0
        %v10296 = vadd.f32 %v10207, %v10295
        %v10297 = vpop.f32.mrf.mxu0
        %v10298 = vadd.f32 %v10209, %v10297
        %10299 = vmatmul.bf16.gmra.mxu0 %v9427
        %v10300 = vpop.f32.mrf.mxu0
        %v10301 = vadd.f32 %v10212, %v10300
        %v10302 = vpop.f32.mrf.mxu0
        %v10303 = vadd.f32 %v10214, %v10302
        %10304 = vmatmul.bf16.gmra.mxu0 %v9436
        %v10305 = vpop.f32.mrf.mxu0
        %v10306 = vadd.f32 %v10217, %v10305
        %v10307 = vpop.f32.mrf.mxu0
        %v10308 = vadd.f32 %v10219, %v10307
        %10309 = vmatmul.bf16.gmra.mxu0 %v9445
        %v10310 = vpop.f32.mrf.mxu0
        %v10311 = vadd.f32 %v10222, %v10310
        %v10312 = vpop.f32.mrf.mxu0
        %v10313 = vadd.f32 %v10224, %v10312
        %10314 = vmatmul.bf16.gmra.mxu0 %v9454
        %v10315 = vpop.f32.mrf.mxu0
        %v10316 = vadd.f32 %v10227, %v10315
        %v10317 = vpop.f32.mrf.mxu0
        %v10318 = vadd.f32 %v10229, %v10317
        %10319 = vmatmul.bf16.gmra.mxu0 %v9463
        %v10320 = vpop.f32.mrf.mxu0
        %v10321 = vadd.f32 %v10232, %v10320
        %v10322 = vpop.f32.mrf.mxu0
        %v10323 = vadd.f32 %v10234, %v10322
        %10324 = vmatmul.bf16.gmra.mxu0 %v9472
        %v10325 = vpop.f32.mrf.mxu0
        %v10326 = vadd.f32 %v10237, %v10325
        %v10327 = vpop.f32.mrf.mxu0
        %v10328 = vadd.f32 %v10239, %v10327
        %10329 = vmatmul.bf16.gmra.mxu0 %v9481
        %v10330 = vpop.f32.mrf.mxu0
        %v10331 = vadd.f32 %v10242, %v10330
        %v10332 = vpop.f32.mrf.mxu0
        %v10333 = vadd.f32 %v10244, %v10332
        %10334 = vmatmul.bf16.gmra.mxu0 %v9490
        %v10335 = vpop.f32.mrf.mxu0
        %v10336 = vadd.f32 %v10247, %v10335
        %v10337 = vpop.f32.mrf.mxu0
        %v10338 = vadd.f32 %v10249, %v10337
        %10339 = vdwg.mxu0
        %10340 = vmatpush.bf16.msra.mxu0 %v9960
        %10341 = vmatpush.bf16.msra.mxu0 %v9959
        %10342 = vmatpush.bf16.msra.mxu0 %v9958
        %10343 = vmatpush.bf16.msra.mxu0 %v9957
        %10344 = vmatpush.bf16.msra.mxu0 %v9956
        %10345 = vmatpush.bf16.msra.mxu0 %v9955
        %10346 = vmatpush.bf16.msra.mxu0 %v9954
        %10347 = vmatpush.bf16.msra.mxu0 %v9953
        %10348 = vmatmul.bf16.gmra.mxu0 %v9356
        %v10349 = vpop.f32.mrf.mxu0
        %v10350 = vadd.f32 %v10261, %v10349
        %v10351 = vpop.f32.mrf.mxu0
        %v10352 = vadd.f32 %v10263, %v10351
        %10353 = vmatmul.bf16.gmra.mxu0 %v9365
        %v10354 = vpop.f32.mrf.mxu0
        %v10355 = vadd.f32 %v10266, %v10354
        %v10356 = vpop.f32.mrf.mxu0
        %v10357 = vadd.f32 %v10268, %v10356
        %10358 = vmatmul.bf16.gmra.mxu0 %v9374
        %v10359 = vpop.f32.mrf.mxu0
        %v10360 = vadd.f32 %v10271, %v10359
        %v10361 = vpop.f32.mrf.mxu0
        %v10362 = vadd.f32 %v10273, %v10361
        %10363 = vmatmul.bf16.gmra.mxu0 %v9383
        %v10364 = vpop.f32.mrf.mxu0
        %v10365 = vadd.f32 %v10276, %v10364
        %v10366 = vpop.f32.mrf.mxu0
        %v10367 = vadd.f32 %v10278, %v10366
        %10368 = vmatmul.bf16.gmra.mxu0 %v9392
        %v10369 = vpop.f32.mrf.mxu0
        %v10370 = vadd.f32 %v10281, %v10369
        %v10371 = vpop.f32.mrf.mxu0
        %v10372 = vadd.f32 %v10283, %v10371
        %10373 = vmatmul.bf16.gmra.mxu0 %v9401
        %v10374 = vpop.f32.mrf.mxu0
        %v10375 = vadd.f32 %v10286, %v10374
        %v10376 = vpop.f32.mrf.mxu0
        %v10377 = vadd.f32 %v10288, %v10376
        %10378 = vmatmul.bf16.gmra.mxu0 %v9410
        %v10379 = vpop.f32.mrf.mxu0
        %v10380 = vadd.f32 %v10291, %v10379
        %v10381 = vpop.f32.mrf.mxu0
        %v10382 = vadd.f32 %v10293, %v10381
        %10383 = vmatmul.bf16.gmra.mxu0 %v9419
        %v10384 = vpop.f32.mrf.mxu0
        %v10385 = vadd.f32 %v10296, %v10384
        %v10386 = vpop.f32.mrf.mxu0
        %v10387 = vadd.f32 %v10298, %v10386
        %10388 = vmatmul.bf16.gmra.mxu0 %v9428
        %v10389 = vpop.f32.mrf.mxu0
        %v10390 = vadd.f32 %v10301, %v10389
        %v10391 = vpop.f32.mrf.mxu0
        %v10392 = vadd.f32 %v10303, %v10391
        %10393 = vmatmul.bf16.gmra.mxu0 %v9437
        %v10394 = vpop.f32.mrf.mxu0
        %v10395 = vadd.f32 %v10306, %v10394
        %v10396 = vpop.f32.mrf.mxu0
        %v10397 = vadd.f32 %v10308, %v10396
        %10398 = vmatmul.bf16.gmra.mxu0 %v9446
        %v10399 = vpop.f32.mrf.mxu0
        %v10400 = vadd.f32 %v10311, %v10399
        %v10401 = vpop.f32.mrf.mxu0
        %v10402 = vadd.f32 %v10313, %v10401
        %10403 = vmatmul.bf16.gmra.mxu0 %v9455
        %v10404 = vpop.f32.mrf.mxu0
        %v10405 = vadd.f32 %v10316, %v10404
        %v10406 = vpop.f32.mrf.mxu0
        %v10407 = vadd.f32 %v10318, %v10406
        %10408 = vmatmul.bf16.gmra.mxu0 %v9464
        %v10409 = vpop.f32.mrf.mxu0
        %v10410 = vadd.f32 %v10321, %v10409
        %v10411 = vpop.f32.mrf.mxu0
        %v10412 = vadd.f32 %v10323, %v10411
        %10413 = vmatmul.bf16.gmra.mxu0 %v9473
        %v10414 = vpop.f32.mrf.mxu0
        %v10415 = vadd.f32 %v10326, %v10414
        %v10416 = vpop.f32.mrf.mxu0
        %v10417 = vadd.f32 %v10328, %v10416
        %10418 = vmatmul.bf16.gmra.mxu0 %v9482
        %v10419 = vpop.f32.mrf.mxu0
        %v10420 = vadd.f32 %v10331, %v10419
        %v10421 = vpop.f32.mrf.mxu0
        %v10422 = vadd.f32 %v10333, %v10421
        %10423 = vmatmul.bf16.gmra.mxu0 %v9491
        %v10424 = vpop.f32.mrf.mxu0
        %v10425 = vadd.f32 %v10336, %v10424
        %v10426 = vpop.f32.mrf.mxu0
        %v10427 = vadd.f32 %v10338, %v10426
        %10428 = vdwg.mxu0
        %10429 = vmatpush.bf16.msra.mxu0 %v9968
        %10430 = vmatpush.bf16.msra.mxu0 %v9967
        %10431 = vmatpush.bf16.msra.mxu0 %v9966
        %10432 = vmatpush.bf16.msra.mxu0 %v9965
        %10433 = vmatpush.bf16.msra.mxu0 %v9964
        %10434 = vmatpush.bf16.msra.mxu0 %v9963
        %10435 = vmatpush.bf16.msra.mxu0 %v9962
        %10436 = vmatpush.bf16.msra.mxu0 %v9961
        %10437 = vmatmul.bf16.gmra.mxu0 %v9357
        %v10438 = vpop.f32.mrf.mxu0
        %v10439 = vadd.f32 %v10350, %v10438
        %v10440 = vpop.f32.mrf.mxu0
        %v10441 = vadd.f32 %v10352, %v10440
        %10442 = vmatmul.bf16.gmra.mxu0 %v9366
        %v10443 = vpop.f32.mrf.mxu0
        %v10444 = vadd.f32 %v10355, %v10443
        %v10445 = vpop.f32.mrf.mxu0
        %v10446 = vadd.f32 %v10357, %v10445
        %10447 = vmatmul.bf16.gmra.mxu0 %v9375
        %v10448 = vpop.f32.mrf.mxu0
        %v10449 = vadd.f32 %v10360, %v10448
        %v10450 = vpop.f32.mrf.mxu0
        %v10451 = vadd.f32 %v10362, %v10450
        %10452 = vmatmul.bf16.gmra.mxu0 %v9384
        %v10453 = vpop.f32.mrf.mxu0
        %v10454 = vadd.f32 %v10365, %v10453
        %v10455 = vpop.f32.mrf.mxu0
        %v10456 = vadd.f32 %v10367, %v10455
        %10457 = vmatmul.bf16.gmra.mxu0 %v9393
        %v10458 = vpop.f32.mrf.mxu0
        %v10459 = vadd.f32 %v10370, %v10458
        %v10460 = vpop.f32.mrf.mxu0
        %v10461 = vadd.f32 %v10372, %v10460
        %10462 = vmatmul.bf16.gmra.mxu0 %v9402
        %v10463 = vpop.f32.mrf.mxu0
        %v10464 = vadd.f32 %v10375, %v10463
        %v10465 = vpop.f32.mrf.mxu0
        %v10466 = vadd.f32 %v10377, %v10465
        %10467 = vmatmul.bf16.gmra.mxu0 %v9411
        %v10468 = vpop.f32.mrf.mxu0
        %v10469 = vadd.f32 %v10380, %v10468
        %v10470 = vpop.f32.mrf.mxu0
        %v10471 = vadd.f32 %v10382, %v10470
        %10472 = vmatmul.bf16.gmra.mxu0 %v9420
        %v10473 = vpop.f32.mrf.mxu0
        %v10474 = vadd.f32 %v10385, %v10473
        %v10475 = vpop.f32.mrf.mxu0
        %v10476 = vadd.f32 %v10387, %v10475
        %10477 = vmatmul.bf16.gmra.mxu0 %v9429
        %v10478 = vpop.f32.mrf.mxu0
        %v10479 = vadd.f32 %v10390, %v10478
        %v10480 = vpop.f32.mrf.mxu0
        %v10481 = vadd.f32 %v10392, %v10480
        %10482 = vmatmul.bf16.gmra.mxu0 %v9438
        %v10483 = vpop.f32.mrf.mxu0
        %v10484 = vadd.f32 %v10395, %v10483
        %v10485 = vpop.f32.mrf.mxu0
        %v10486 = vadd.f32 %v10397, %v10485
        %10487 = vmatmul.bf16.gmra.mxu0 %v9447
        %v10488 = vpop.f32.mrf.mxu0
        %v10489 = vadd.f32 %v10400, %v10488
        %v10490 = vpop.f32.mrf.mxu0
        %v10491 = vadd.f32 %v10402, %v10490
        %10492 = vmatmul.bf16.gmra.mxu0 %v9456
        %v10493 = vpop.f32.mrf.mxu0
        %v10494 = vadd.f32 %v10405, %v10493
        %v10495 = vpop.f32.mrf.mxu0
        %v10496 = vadd.f32 %v10407, %v10495
        %10497 = vmatmul.bf16.gmra.mxu0 %v9465
        %v10498 = vpop.f32.mrf.mxu0
        %v10499 = vadd.f32 %v10410, %v10498
        %v10500 = vpop.f32.mrf.mxu0
        %v10501 = vadd.f32 %v10412, %v10500
        %10502 = vmatmul.bf16.gmra.mxu0 %v9474
        %v10503 = vpop.f32.mrf.mxu0
        %v10504 = vadd.f32 %v10415, %v10503
        %v10505 = vpop.f32.mrf.mxu0
        %v10506 = vadd.f32 %v10417, %v10505
        %10507 = vmatmul.bf16.gmra.mxu0 %v9483
        %v10508 = vpop.f32.mrf.mxu0
        %v10509 = vadd.f32 %v10420, %v10508
        %v10510 = vpop.f32.mrf.mxu0
        %v10511 = vadd.f32 %v10422, %v10510
        %10512 = vmatmul.bf16.gmra.mxu0 %v9492
        %v10513 = vpop.f32.mrf.mxu0
        %v10514 = vadd.f32 %v10425, %v10513
        %v10515 = vpop.f32.mrf.mxu0
        %v10516 = vadd.f32 %v10427, %v10515
        %10517 = vdwg.mxu0
        %10518 = vmatpush.bf16.msra.mxu0 %v9976
        %10519 = vmatpush.bf16.msra.mxu0 %v9975
        %10520 = vmatpush.bf16.msra.mxu0 %v9974
        %10521 = vmatpush.bf16.msra.mxu0 %v9973
        %10522 = vmatpush.bf16.msra.mxu0 %v9972
        %10523 = vmatpush.bf16.msra.mxu0 %v9971
        %10524 = vmatpush.bf16.msra.mxu0 %v9970
        %10525 = vmatpush.bf16.msra.mxu0 %v9969
        %10526 = vmatmul.bf16.gmra.mxu0 %v9358
        %v10527 = vpop.f32.mrf.mxu0
        %v10528 = vadd.f32 %v10439, %v10527
        %v10529 = vpop.f32.mrf.mxu0
        %v10530 = vadd.f32 %v10441, %v10529
        %10531 = vmatmul.bf16.gmra.mxu0 %v9367
        %v10532 = vpop.f32.mrf.mxu0
        %v10533 = vadd.f32 %v10444, %v10532
        %v10534 = vpop.f32.mrf.mxu0
        %v10535 = vadd.f32 %v10446, %v10534
        %10536 = vmatmul.bf16.gmra.mxu0 %v9376
        %v10537 = vpop.f32.mrf.mxu0
        %v10538 = vadd.f32 %v10449, %v10537
        %v10539 = vpop.f32.mrf.mxu0
        %v10540 = vadd.f32 %v10451, %v10539
        %10541 = vmatmul.bf16.gmra.mxu0 %v9385
        %v10542 = vpop.f32.mrf.mxu0
        %v10543 = vadd.f32 %v10454, %v10542
        %v10544 = vpop.f32.mrf.mxu0
        %v10545 = vadd.f32 %v10456, %v10544
        %10546 = vmatmul.bf16.gmra.mxu0 %v9394
        %v10547 = vpop.f32.mrf.mxu0
        %v10548 = vadd.f32 %v10459, %v10547
        %v10549 = vpop.f32.mrf.mxu0
        %v10550 = vadd.f32 %v10461, %v10549
        %10551 = vmatmul.bf16.gmra.mxu0 %v9403
        %v10552 = vpop.f32.mrf.mxu0
        %v10553 = vadd.f32 %v10464, %v10552
        %v10554 = vpop.f32.mrf.mxu0
        %v10555 = vadd.f32 %v10466, %v10554
        %10556 = vmatmul.bf16.gmra.mxu0 %v9412
        %v10557 = vpop.f32.mrf.mxu0
        %v10558 = vadd.f32 %v10469, %v10557
        %v10559 = vpop.f32.mrf.mxu0
        %v10560 = vadd.f32 %v10471, %v10559
        %10561 = vmatmul.bf16.gmra.mxu0 %v9421
        %v10562 = vpop.f32.mrf.mxu0
        %v10563 = vadd.f32 %v10474, %v10562
        %v10564 = vpop.f32.mrf.mxu0
        %v10565 = vadd.f32 %v10476, %v10564
        %10566 = vmatmul.bf16.gmra.mxu0 %v9430
        %v10567 = vpop.f32.mrf.mxu0
        %v10568 = vadd.f32 %v10479, %v10567
        %v10569 = vpop.f32.mrf.mxu0
        %v10570 = vadd.f32 %v10481, %v10569
        %10571 = vmatmul.bf16.gmra.mxu0 %v9439
        %v10572 = vpop.f32.mrf.mxu0
        %v10573 = vadd.f32 %v10484, %v10572
        %v10574 = vpop.f32.mrf.mxu0
        %v10575 = vadd.f32 %v10486, %v10574
        %10576 = vmatmul.bf16.gmra.mxu0 %v9448
        %v10577 = vpop.f32.mrf.mxu0
        %v10578 = vadd.f32 %v10489, %v10577
        %v10579 = vpop.f32.mrf.mxu0
        %v10580 = vadd.f32 %v10491, %v10579
        %10581 = vmatmul.bf16.gmra.mxu0 %v9457
        %v10582 = vpop.f32.mrf.mxu0
        %v10583 = vadd.f32 %v10494, %v10582
        %v10584 = vpop.f32.mrf.mxu0
        %v10585 = vadd.f32 %v10496, %v10584
        %10586 = vmatmul.bf16.gmra.mxu0 %v9466
        %v10587 = vpop.f32.mrf.mxu0
        %v10588 = vadd.f32 %v10499, %v10587
        %v10589 = vpop.f32.mrf.mxu0
        %v10590 = vadd.f32 %v10501, %v10589
        %10591 = vmatmul.bf16.gmra.mxu0 %v9475
        %v10592 = vpop.f32.mrf.mxu0
        %v10593 = vadd.f32 %v10504, %v10592
        %v10594 = vpop.f32.mrf.mxu0
        %v10595 = vadd.f32 %v10506, %v10594
        %10596 = vmatmul.bf16.gmra.mxu0 %v9484
        %v10597 = vpop.f32.mrf.mxu0
        %v10598 = vadd.f32 %v10509, %v10597
        %v10599 = vpop.f32.mrf.mxu0
        %v10600 = vadd.f32 %v10511, %v10599
        %10601 = vmatmul.bf16.gmra.mxu0 %v9493
        %v10602 = vpop.f32.mrf.mxu0
        %v10603 = vadd.f32 %v10514, %v10602
        %v10604 = vpop.f32.mrf.mxu0
        %v10605 = vadd.f32 %v10516, %v10604
        %10606 = vdwg.mxu0
        %10607 = vmatpush.bf16.msra.mxu0 %v9984
        %10608 = vmatpush.bf16.msra.mxu0 %v9983
        %10609 = vmatpush.bf16.msra.mxu0 %v9982
        %10610 = vmatpush.bf16.msra.mxu0 %v9981
        %10611 = vmatpush.bf16.msra.mxu0 %v9980
        %10612 = vmatpush.bf16.msra.mxu0 %v9979
        %10613 = vmatpush.bf16.msra.mxu0 %v9978
        %10614 = vmatpush.bf16.msra.mxu0 %v9977
        %10615 = vmatmul.bf16.gmra.mxu0 %v9359
        %v10616 = vpop.f32.mrf.mxu0
        %v10617 = vadd.f32 %v10528, %v10616
        %v10618 = vpop.f32.mrf.mxu0
        %v10619 = vadd.f32 %v10530, %v10618
        %10620 = vmatmul.bf16.gmra.mxu0 %v9368
        %v10621 = vpop.f32.mrf.mxu0
        %v10622 = vadd.f32 %v10533, %v10621
        %v10623 = vpop.f32.mrf.mxu0
        %v10624 = vadd.f32 %v10535, %v10623
        %10625 = vmatmul.bf16.gmra.mxu0 %v9377
        %v10626 = vpop.f32.mrf.mxu0
        %v10627 = vadd.f32 %v10538, %v10626
        %v10628 = vpop.f32.mrf.mxu0
        %v10629 = vadd.f32 %v10540, %v10628
        %10630 = vmatmul.bf16.gmra.mxu0 %v9386
        %v10631 = vpop.f32.mrf.mxu0
        %v10632 = vadd.f32 %v10543, %v10631
        %v10633 = vpop.f32.mrf.mxu0
        %v10634 = vadd.f32 %v10545, %v10633
        %10635 = vmatmul.bf16.gmra.mxu0 %v9395
        %v10636 = vpop.f32.mrf.mxu0
        %v10637 = vadd.f32 %v10548, %v10636
        %v10638 = vpop.f32.mrf.mxu0
        %v10639 = vadd.f32 %v10550, %v10638
        %10640 = vmatmul.bf16.gmra.mxu0 %v9404
        %v10641 = vpop.f32.mrf.mxu0
        %v10642 = vadd.f32 %v10553, %v10641
        %v10643 = vpop.f32.mrf.mxu0
        %v10644 = vadd.f32 %v10555, %v10643
        %10645 = vmatmul.bf16.gmra.mxu0 %v9413
        %v10646 = vpop.f32.mrf.mxu0
        %v10647 = vadd.f32 %v10558, %v10646
        %v10648 = vpop.f32.mrf.mxu0
        %v10649 = vadd.f32 %v10560, %v10648
        %10650 = vmatmul.bf16.gmra.mxu0 %v9422
        %v10651 = vpop.f32.mrf.mxu0
        %v10652 = vadd.f32 %v10563, %v10651
        %v10653 = vpop.f32.mrf.mxu0
        %v10654 = vadd.f32 %v10565, %v10653
        %10655 = vmatmul.bf16.gmra.mxu0 %v9431
        %v10656 = vpop.f32.mrf.mxu0
        %v10657 = vadd.f32 %v10568, %v10656
        %v10658 = vpop.f32.mrf.mxu0
        %v10659 = vadd.f32 %v10570, %v10658
        %10660 = vmatmul.bf16.gmra.mxu0 %v9440
        %v10661 = vpop.f32.mrf.mxu0
        %v10662 = vadd.f32 %v10573, %v10661
        %v10663 = vpop.f32.mrf.mxu0
        %v10664 = vadd.f32 %v10575, %v10663
        %10665 = vmatmul.bf16.gmra.mxu0 %v9449
        %v10666 = vpop.f32.mrf.mxu0
        %v10667 = vadd.f32 %v10578, %v10666
        %v10668 = vpop.f32.mrf.mxu0
        %v10669 = vadd.f32 %v10580, %v10668
        %10670 = vmatmul.bf16.gmra.mxu0 %v9458
        %v10671 = vpop.f32.mrf.mxu0
        %v10672 = vadd.f32 %v10583, %v10671
        %v10673 = vpop.f32.mrf.mxu0
        %v10674 = vadd.f32 %v10585, %v10673
        %10675 = vmatmul.bf16.gmra.mxu0 %v9467
        %v10676 = vpop.f32.mrf.mxu0
        %v10677 = vadd.f32 %v10588, %v10676
        %v10678 = vpop.f32.mrf.mxu0
        %v10679 = vadd.f32 %v10590, %v10678
        %10680 = vmatmul.bf16.gmra.mxu0 %v9476
        %v10681 = vpop.f32.mrf.mxu0
        %v10682 = vadd.f32 %v10593, %v10681
        %v10683 = vpop.f32.mrf.mxu0
        %v10684 = vadd.f32 %v10595, %v10683
        %10685 = vmatmul.bf16.gmra.mxu0 %v9485
        %v10686 = vpop.f32.mrf.mxu0
        %v10687 = vadd.f32 %v10598, %v10686
        %v10688 = vpop.f32.mrf.mxu0
        %v10689 = vadd.f32 %v10600, %v10688
        %10690 = vmatmul.bf16.gmra.mxu0 %v9494
        %v10691 = vpop.f32.mrf.mxu0
        %v10692 = vadd.f32 %v10603, %v10691
        %v10693 = vpop.f32.mrf.mxu0
        %v10694 = vadd.f32 %v10605, %v10693
        %10695 = vdwg.mxu0
        %10696 = vmatpush.bf16.msra.mxu0 %v9992
        %10697 = vmatpush.bf16.msra.mxu0 %v9991
        %10698 = vmatpush.bf16.msra.mxu0 %v9990
        %10699 = vmatpush.bf16.msra.mxu0 %v9989
        %10700 = vmatpush.bf16.msra.mxu0 %v9988
        %10701 = vmatpush.bf16.msra.mxu0 %v9987
        %10702 = vmatpush.bf16.msra.mxu0 %v9986
        %10703 = vmatpush.bf16.msra.mxu0 %v9985
        %10704 = vmatmul.bf16.gmra.mxu0 %v9360
        %v10705 = vpop.f32.mrf.mxu0
        %v10706 = vadd.f32 %v10617, %v10705
        %v10707 = vpop.f32.mrf.mxu0
        %v10708 = vadd.f32 %v10619, %v10707
        %10709 = vmatmul.bf16.gmra.mxu0 %v9369
        %v10710 = vpop.f32.mrf.mxu0
        %v10711 = vadd.f32 %v10622, %v10710
        %v10712 = vpop.f32.mrf.mxu0
        %v10713 = vadd.f32 %v10624, %v10712
        %10714 = vmatmul.bf16.gmra.mxu0 %v9378
        %v10715 = vpop.f32.mrf.mxu0
        %v10716 = vadd.f32 %v10627, %v10715
        %v10717 = vpop.f32.mrf.mxu0
        %v10718 = vadd.f32 %v10629, %v10717
        %10719 = vmatmul.bf16.gmra.mxu0 %v9387
        %v10720 = vpop.f32.mrf.mxu0
        %v10721 = vadd.f32 %v10632, %v10720
        %v10722 = vpop.f32.mrf.mxu0
        %v10723 = vadd.f32 %v10634, %v10722
        %10724 = vmatmul.bf16.gmra.mxu0 %v9396
        %v10725 = vpop.f32.mrf.mxu0
        %v10726 = vadd.f32 %v10637, %v10725
        %v10727 = vpop.f32.mrf.mxu0
        %v10728 = vadd.f32 %v10639, %v10727
        %10729 = vmatmul.bf16.gmra.mxu0 %v9405
        %v10730 = vpop.f32.mrf.mxu0
        %v10731 = vadd.f32 %v10642, %v10730
        %v10732 = vpop.f32.mrf.mxu0
        %v10733 = vadd.f32 %v10644, %v10732
        %10734 = vmatmul.bf16.gmra.mxu0 %v9414
        %v10735 = vpop.f32.mrf.mxu0
        %v10736 = vadd.f32 %v10647, %v10735
        %v10737 = vpop.f32.mrf.mxu0
        %v10738 = vadd.f32 %v10649, %v10737
        %10739 = vmatmul.bf16.gmra.mxu0 %v9423
        %v10740 = vpop.f32.mrf.mxu0
        %v10741 = vadd.f32 %v10652, %v10740
        %v10742 = vpop.f32.mrf.mxu0
        %v10743 = vadd.f32 %v10654, %v10742
        %10744 = vmatmul.bf16.gmra.mxu0 %v9432
        %v10745 = vpop.f32.mrf.mxu0
        %v10746 = vadd.f32 %v10657, %v10745
        %v10747 = vpop.f32.mrf.mxu0
        %v10748 = vadd.f32 %v10659, %v10747
        %10749 = vmatmul.bf16.gmra.mxu0 %v9441
        %v10750 = vpop.f32.mrf.mxu0
        %v10751 = vadd.f32 %v10662, %v10750
        %v10752 = vpop.f32.mrf.mxu0
        %v10753 = vadd.f32 %v10664, %v10752
        %10754 = vmatmul.bf16.gmra.mxu0 %v9450
        %v10755 = vpop.f32.mrf.mxu0
        %v10756 = vadd.f32 %v10667, %v10755
        %v10757 = vpop.f32.mrf.mxu0
        %v10758 = vadd.f32 %v10669, %v10757
        %10759 = vmatmul.bf16.gmra.mxu0 %v9459
        %v10760 = vpop.f32.mrf.mxu0
        %v10761 = vadd.f32 %v10672, %v10760
        %v10762 = vpop.f32.mrf.mxu0
        %v10763 = vadd.f32 %v10674, %v10762
        %10764 = vmatmul.bf16.gmra.mxu0 %v9468
        %v10765 = vpop.f32.mrf.mxu0
        %v10766 = vadd.f32 %v10677, %v10765
        %v10767 = vpop.f32.mrf.mxu0
        %v10768 = vadd.f32 %v10679, %v10767
        %10769 = vmatmul.bf16.gmra.mxu0 %v9477
        %v10770 = vpop.f32.mrf.mxu0
        %v10771 = vadd.f32 %v10682, %v10770
        %v10772 = vpop.f32.mrf.mxu0
        %v10773 = vadd.f32 %v10684, %v10772
        %10774 = vmatmul.bf16.gmra.mxu0 %v9486
        %v10775 = vpop.f32.mrf.mxu0
        %v10776 = vadd.f32 %v10687, %v10775
        %v10777 = vpop.f32.mrf.mxu0
        %v10778 = vadd.f32 %v10689, %v10777
        %10779 = vmatmul.bf16.gmra.mxu0 %v9495
        %v10780 = vpop.f32.mrf.mxu0
        %v10781 = vadd.f32 %v10692, %v10780
        %v10782 = vpop.f32.mrf.mxu0
        %v10783 = vadd.f32 %v10694, %v10782
        %10784 = vdwg.mxu0
        %10785 = vmatpush.bf16.msra.mxu0 %v10000
        %10786 = vmatpush.bf16.msra.mxu0 %v9999
        %10787 = vmatpush.bf16.msra.mxu0 %v9998
        %10788 = vmatpush.bf16.msra.mxu0 %v9997
        %10789 = vmatpush.bf16.msra.mxu0 %v9996
        %10790 = vmatpush.bf16.msra.mxu0 %v9995
        %10791 = vmatpush.bf16.msra.mxu0 %v9994
        %10792 = vmatpush.bf16.msra.mxu0 %v9993
        %10793 = vmatmul.bf16.gmra.mxu0 %v9361
        %v10794 = vpop.f32.mrf.mxu0
        %v10795 = vadd.f32 %v10706, %v10794
        %v10796 = vpop.f32.mrf.mxu0
        %v10797 = vadd.f32 %v10708, %v10796
        %10798 = vmatmul.bf16.gmra.mxu0 %v9370
        %v10799 = vpop.f32.mrf.mxu0
        %v10800 = vadd.f32 %v10711, %v10799
        %v10801 = vpop.f32.mrf.mxu0
        %v10802 = vadd.f32 %v10713, %v10801
        %10803 = vmatmul.bf16.gmra.mxu0 %v9379
        %v10804 = vpop.f32.mrf.mxu0
        %v10805 = vadd.f32 %v10716, %v10804
        %v10806 = vpop.f32.mrf.mxu0
        %v10807 = vadd.f32 %v10718, %v10806
        %10808 = vmatmul.bf16.gmra.mxu0 %v9388
        %v10809 = vpop.f32.mrf.mxu0
        %v10810 = vadd.f32 %v10721, %v10809
        %v10811 = vpop.f32.mrf.mxu0
        %v10812 = vadd.f32 %v10723, %v10811
        %10813 = vmatmul.bf16.gmra.mxu0 %v9397
        %v10814 = vpop.f32.mrf.mxu0
        %v10815 = vadd.f32 %v10726, %v10814
        %v10816 = vpop.f32.mrf.mxu0
        %v10817 = vadd.f32 %v10728, %v10816
        %10818 = vmatmul.bf16.gmra.mxu0 %v9406
        %v10819 = vpop.f32.mrf.mxu0
        %v10820 = vadd.f32 %v10731, %v10819
        %v10821 = vpop.f32.mrf.mxu0
        %v10822 = vadd.f32 %v10733, %v10821
        %10823 = vmatmul.bf16.gmra.mxu0 %v9415
        %v10824 = vpop.f32.mrf.mxu0
        %v10825 = vadd.f32 %v10736, %v10824
        %v10826 = vpop.f32.mrf.mxu0
        %v10827 = vadd.f32 %v10738, %v10826
        %10828 = vmatmul.bf16.gmra.mxu0 %v9424
        %v10829 = vpop.f32.mrf.mxu0
        %v10830 = vadd.f32 %v10741, %v10829
        %v10831 = vpop.f32.mrf.mxu0
        %v10832 = vadd.f32 %v10743, %v10831
        %10833 = vmatmul.bf16.gmra.mxu0 %v9433
        %v10834 = vpop.f32.mrf.mxu0
        %v10835 = vadd.f32 %v10746, %v10834
        %v10836 = vpop.f32.mrf.mxu0
        %v10837 = vadd.f32 %v10748, %v10836
        %10838 = vmatmul.bf16.gmra.mxu0 %v9442
        %v10839 = vpop.f32.mrf.mxu0
        %v10840 = vadd.f32 %v10751, %v10839
        %v10841 = vpop.f32.mrf.mxu0
        %v10842 = vadd.f32 %v10753, %v10841
        %10843 = vmatmul.bf16.gmra.mxu0 %v9451
        %v10844 = vpop.f32.mrf.mxu0
        %v10845 = vadd.f32 %v10756, %v10844
        %v10846 = vpop.f32.mrf.mxu0
        %v10847 = vadd.f32 %v10758, %v10846
        %10848 = vmatmul.bf16.gmra.mxu0 %v9460
        %v10849 = vpop.f32.mrf.mxu0
        %v10850 = vadd.f32 %v10761, %v10849
        %v10851 = vpop.f32.mrf.mxu0
        %v10852 = vadd.f32 %v10763, %v10851
        %10853 = vmatmul.bf16.gmra.mxu0 %v9469
        %v10854 = vpop.f32.mrf.mxu0
        %v10855 = vadd.f32 %v10766, %v10854
        %v10856 = vpop.f32.mrf.mxu0
        %v10857 = vadd.f32 %v10768, %v10856
        %10858 = vmatmul.bf16.gmra.mxu0 %v9478
        %v10859 = vpop.f32.mrf.mxu0
        %v10860 = vadd.f32 %v10771, %v10859
        %v10861 = vpop.f32.mrf.mxu0
        %v10862 = vadd.f32 %v10773, %v10861
        %10863 = vmatmul.bf16.gmra.mxu0 %v9487
        %v10864 = vpop.f32.mrf.mxu0
        %v10865 = vadd.f32 %v10776, %v10864
        %v10866 = vpop.f32.mrf.mxu0
        %v10867 = vadd.f32 %v10778, %v10866
        %10868 = vmatmul.bf16.gmra.mxu0 %v9496
        %v10869 = vpop.f32.mrf.mxu0
        %v10870 = vadd.f32 %v10781, %v10869
        %v10871 = vpop.f32.mrf.mxu0
        %v10872 = vadd.f32 %v10783, %v10871
        %10873 = vdwg.mxu0
        %v10874 = vmax.f32 %v10795, 0.0
        %v10875 = vmax.f32 %v10797, 0.0
        %v10876 = vmax.f32 %v10800, 0.0
        %v10877 = vmax.f32 %v10802, 0.0
        %v10878 = vmax.f32 %v10805, 0.0
        %v10879 = vmax.f32 %v10807, 0.0
        %v10880 = vmax.f32 %v10810, 0.0
        %v10881 = vmax.f32 %v10812, 0.0
        %v10882 = vmax.f32 %v10815, 0.0
        %v10883 = vmax.f32 %v10817, 0.0
        %v10884 = vmax.f32 %v10820, 0.0
        %v10885 = vmax.f32 %v10822, 0.0
        %v10886 = vmax.f32 %v10825, 0.0
        %v10887 = vmax.f32 %v10827, 0.0
        %v10888 = vmax.f32 %v10830, 0.0
        %v10889 = vmax.f32 %v10832, 0.0
        %v10890 = vmax.f32 %v10835, 0.0
        %v10891 = vmax.f32 %v10837, 0.0
        %v10892 = vmax.f32 %v10840, 0.0
        %v10893 = vmax.f32 %v10842, 0.0
        %v10894 = vmax.f32 %v10845, 0.0
        %v10895 = vmax.f32 %v10847, 0.0
        %v10896 = vmax.f32 %v10850, 0.0
        %v10897 = vmax.f32 %v10852, 0.0
        %v10898 = vmax.f32 %v10855, 0.0
        %v10899 = vmax.f32 %v10857, 0.0
        %v10900 = vmax.f32 %v10860, 0.0
        %v10901 = vmax.f32 %v10862, 0.0
        %v10902 = vmax.f32 %v10865, 0.0
        %v10903 = vmax.f32 %v10867, 0.0
        %v10904 = vmax.f32 %v10870, 0.0
        %v10905 = vmax.f32 %v10872, 0.0
        %10906 = vst [vmem:[%s250] sm:$0xff] %v10874
        %10907 = vst [vmem:[%s250 + $0x8] sm:$0xff] %v10875
        %10908 = vst [vmem:[%s250 + $0x10] sm:$0xff] %v10876
        %10909 = vst [vmem:[%s250 + $0x18] sm:$0xff] %v10877
        %10910 = vst [vmem:[%s250 + $0x20] sm:$0xff] %v10878
        %10911 = vst [vmem:[%s250 + $0x28] sm:$0xff] %v10879
        %10912 = vst [vmem:[%s250 + $0x30] sm:$0xff] %v10880
        %10913 = vst [vmem:[%s250 + $0x38] sm:$0xff] %v10881
        %10914 = vst [vmem:[%s250 + $0x40] sm:$0xff] %v10882
        %10915 = vst [vmem:[%s250 + $0x48] sm:$0xff] %v10883
        %10916 = vst [vmem:[%s250 + $0x50] sm:$0xff] %v10884
        %10917 = vst [vmem:[%s250 + $0x58] sm:$0xff] %v10885
        %10918 = vst [vmem:[%s250 + $0x60] sm:$0xff] %v10886
        %10919 = vst [vmem:[%s250 + $0x68] sm:$0xff] %v10887
        %10920 = vst [vmem:[%s250 + $0x70] sm:$0xff] %v10888
        %10921 = vst [vmem:[%s250 + $0x78] sm:$0xff] %v10889
        %10922 = vst [vmem:[%s250 + $0x80] sm:$0xff] %v10890
        %10923 = vst [vmem:[%s250 + $0x88] sm:$0xff] %v10891
        %10924 = vst [vmem:[%s250 + $0x90] sm:$0xff] %v10892
        %10925 = vst [vmem:[%s250 + $0x98] sm:$0xff] %v10893
        %10926 = vst [vmem:[%s250 + $0xa0] sm:$0xff] %v10894
        %10927 = vst [vmem:[%s250 + $0xa8] sm:$0xff] %v10895
        %10928 = vst [vmem:[%s250 + $0xb0] sm:$0xff] %v10896
        %10929 = vst [vmem:[%s250 + $0xb8] sm:$0xff] %v10897
        %10930 = vst [vmem:[%s250 + $0xc0] sm:$0xff] %v10898
        %10931 = vst [vmem:[%s250 + $0xc8] sm:$0xff] %v10899
        %10932 = vst [vmem:[%s250 + $0xd0] sm:$0xff] %v10900
        %10933 = vst [vmem:[%s250 + $0xd8] sm:$0xff] %v10901
        %10934 = vst [vmem:[%s250 + $0xe0] sm:$0xff] %v10902
        %10935 = vst [vmem:[%s250 + $0xe8] sm:$0xff] %v10903
        %10936 = vst [vmem:[%s250 + $0xf0] sm:$0xff] %v10904
        %10937 = vst [vmem:[%s250 + $0xf8] sm:$0xff] %v10905
        %s10938 = sand.u32 %s119, 1
        %s10939 = scalar_lea.sflag [#allocation6], %s10938
        %s10940 = sand.u32 %s119, 1
        %s10941 = smul.addr %s10940, 256
        %s10942 = scalar_lea.vmem [#allocation10], %s10941
        // Predicated region
        $region49: #{tpu_custom_call.1} parent=35 // pred_check
          %p10943 = pneg %p129
        $region50: #{tpu_custom_call.1} parent=35 // pred_check_branch
          %10945 = sbr.rel (%p10943) target = $region52
        $region51: #{tpu_custom_call.1} parent=35 // pred_region
          %10947 = vsyncadd %s10939, 0
          %s10948 = smul.addr %s22, 32
          %s10949 = smul.addr %s10948, 8
          %s10950 = scalar_lea.hbm %s4, %s10949
          %s10951 = sshll.u32 %s10942, 4
          %s10952 = int_to_ptr.vmem [resolvable:$true] %s10951
          %s10953 = sshll.u32 %s10950, 4
          %s10954 = int_to_ptr.hbm [resolvable:$true] %s10953
          %10959 = dma.vmem_to_hbm [thread:$0]  %s10952, 4096, %s10954, %s10939, 128, 128, 8
        $region52: #{tpu_custom_call.1} parent=35 // pred_fallthru
          _
      $region36: #{tpu_custom_call.1} parent=5 // pred_fallthru
        _
      %p10960 = scmp.le.s32.totalorder 2, %s17
      // Predicated region
      $region53: #{tpu_custom_call.1} parent=5 // pred_check
        %p10961 = pneg %p10960
      $region54: #{tpu_custom_call.1} parent=5 // pred_check_branch
        %10963 = sbr.rel (%p10961) target = $region56
      $region55: #{tpu_custom_call.1} parent=5 // pred_region
        %s10964 = ssub.s32 %s17, 2
        // Predicated region
        $region57: #{tpu_custom_call.1} parent=55 // pred_check
          %p10965 = pneg %p135
        $region58: #{tpu_custom_call.1} parent=55 // pred_check_branch
          %10967 = sbr.rel (%p10965) target = $region60
        $region59: #{tpu_custom_call.1} parent=55 // pred_region
          %s10968 = sand.u32 %s120, 1
          %s10969 = scalar_lea.sflag [#allocation6], %s10968
          %s10970 = sand.u32 %s120, 1
          %s10971 = smul.addr %s10970, 256
          %s10972 = scalar_lea.vmem [#allocation10], %s10971
          %10974 = dma.done %s10969, 4096
        $region60: #{tpu_custom_call.1} parent=55 // pred_fallthru
          _
      $region56: #{tpu_custom_call.1} parent=5 // pred_fallthru
        _
    $region6: #{tpu_custom_call.1} parent=1 // loop_footer
      %s21 = sadd.s32 1, %s17
    $region7: #{tpu_custom_call.1} parent=1 // loop_footer_branch
      %16 = sbr.rel target = $region3
    $region8: #{tpu_custom_call.1} parent=1 // loop_exit
      _
    %10975 = vsyncpa [#allocation5], 1
    %s10976 = scalar_lea.sflag [#allocation5], 1
    %10977 = vsyncpa %s10976, 1
    %10978 = vsyncpa [#allocation8], 1
    %10979 = vsyncpa [#allocation6], 1
    %s10980 = scalar_lea.sflag [#allocation6], 1
    %10981 = vsyncpa %s10980, 1

</llo_original>
